<compile_context>
chip_gen: v5e
topology: v5e:2x2
jax: 0.10.0
libtpu: 0.0.40
codegen_flags: <defaults>
</compile_context>

<pallas_src>
import math
from functools import partial

import jax
import jax.numpy as jnp
from jax.experimental import pallas as pl
from jax.experimental.pallas import tpu as pltpu

# ----------------------------- config (small test sizes) -----------------------------
NUM_VQ = 64          # torch default 1024 (kept small for the test)
EMBED_DIM = 64       # torch default 512
CLIP_DIM = 64        # torch default 512
BLOCK_SIZE = 16
NUM_LAYERS = 2       # per-stage; total blocks = 2 * NUM_LAYERS (base + head)
N_HEAD = 8
FC_RATE = 4
LN_EPS = 1e-5
NEG_INF = -1e9
COMPUTE_DTYPE = jnp.bfloat16   # MXU operand dtype for large matmuls (f32 accumulate)


# ----------------------------- small shared helpers -----------------------------
def _mm(a, b):
    """MXU matmul: bf16 (or f32) operands, f32 accumulation."""
    return jnp.dot(a.astype(COMPUTE_DTYPE), b.astype(COMPUTE_DTYPE),
                   preferred_element_type=jnp.float32)


def _layernorm(x, g, b):
    mu = jnp.mean(x, axis=-1, keepdims=True)
    var = jnp.mean(jnp.square(x - mu), axis=-1, keepdims=True)
    return (x - mu) * jax.lax.rsqrt(var + LN_EPS) * g + b


def _full_spec(a):
    """Whole-array VMEM block with a constant index map (works for any grid arity)."""
    r = a.ndim
    return pl.BlockSpec(a.shape, lambda *_, _r=r: (0,) * _r)


# ----------------------------- fused transformer kernel -----------------------------
# grid = (B, NL): batch parallel across cores, layers sequential ("arbitrary") with the
# activation carried in VMEM scratch and per-layer weights pipelined by BlockSpec.
def _transformer_kernel(x_ref,
                        ln1g_ref, ln1b_ref, ln2g_ref, ln2b_ref,
                        wqkv_ref, bqkv_ref, wo_ref, bo_ref,
                        wfc1_ref, bfc1_ref, wfc2_ref, bfc2_ref,
                        lnfg_ref, lnfb_ref, headw_ref,
                        o_ref, xs_ref, *, n_head, n_layers):
    l = pl.program_id(1)

    @pl.when(l == 0)
    def _():
        xs_ref[...] = x_ref[0].astype(jnp.float32)

    x = xs_ref[...]                                        # (T, E) f32 carry
    T, E = x.shape
    dh = E // n_head
    scale = 1.0 / math.sqrt(dh)

    # causal additive mask built in-kernel (no HBM input, a few free VPU ops)
    row = jax.lax.broadcasted_iota(jnp.int32, (T, T), 0)
    col = jax.lax.broadcasted_iota(jnp.int32, (T, T), 1)
    maskb = jnp.where(col <= row, jnp.float32(0.0), jnp.float32(NEG_INF))

    # ---- attention ----
    h = _layernorm(x, ln1g_ref[0], ln1b_ref[0])
    qkv = _mm(h, wqkv_ref[0]) + bqkv_ref[0]                # (T, 3E) fused QKV, bias once
    q = qkv[:, :E].reshape(T, n_head, dh).astype(COMPUTE_DTYPE)
    k = qkv[:, E:2 * E].reshape(T, n_head, dh).astype(COMPUTE_DTYPE)
    v = qkv[:, 2 * E:].reshape(T, n_head, dh).astype(COMPUTE_DTYPE)
    # head-batched score / context matmuls (bf16 operands, f32 accumulate)
    att = jnp.einsum('qhd,khd->hqk', q, k,
                     preferred_element_type=jnp.float32) * scale + maskb[None]
    att = att - jnp.max(att, axis=-1, keepdims=True)
    p = jnp.exp(att)
    p = p * pl.reciprocal(jnp.sum(p, axis=-1, keepdims=True), approx=True)
    y = jnp.einsum('hqk,khd->qhd', p.astype(COMPUTE_DTYPE), v,
                   preferred_element_type=jnp.float32).reshape(T, E)
    x = x + _mm(y, wo_ref[0]) + bo_ref[0]

    # ---- MLP ----
    h = _layernorm(x, ln2g_ref[0], ln2b_ref[0])
    h = _mm(h, wfc1_ref[0]) + bfc1_ref[0]
    # TODO(synk): torch nn.GELU() is exact erf GELU; tanh approximation used here.
    h = jax.nn.gelu(h, approximate=True)
    x = x + _mm(h, wfc2_ref[0]) + bfc2_ref[0]

    xs_ref[...] = x

    @pl.when(l == n_layers - 1)
    def _():
        hh = _layernorm(x, lnfg_ref[...], lnfb_ref[...])
        o_ref[0] = _mm(hh, headw_ref[...]).astype(o_ref.dtype)   # (T, NPAD) lane-dense


_TF_KEYS = ('ln1_g', 'ln1_b', 'ln2_g', 'ln2_b', 'wqkv', 'bqkv', 'wo', 'bo',
            'fc1_w', 'fc1_b', 'fc2_w', 'fc2_b', 'lnf_g', 'lnf_b', 'head_w')


def transformer_forward(tf, x):
    """Base blocks + head blocks + ln_f + classifier head in one pallas_call."""
    B, T, E = x.shape
    NL = tf['wqkv'].shape[0]
    H = tf['fc1_w'].shape[-1]
    npad = tf['head_w'].shape[-1]

    def per_layer(tail):     # weight blocked along the layer grid axis
        return pl.BlockSpec((1,) + tail, lambda b, l: (l,) + (0,) * len(tail))

    def const_spec(shape):   # whole array, constant index (fetched once)
        return pl.BlockSpec(shape, lambda b, l: (0,) * len(shape))

    in_specs = [
        pl.BlockSpec((1, T, E), lambda b, l: (b, 0, 0)),            # x
        per_layer((1, E)), per_layer((1, E)),                        # ln1 g, b
        per_layer((1, E)), per_layer((1, E)),                        # ln2 g, b
        per_layer((E, 3 * E)), per_layer((1, 3 * E)),                # wqkv, bqkv
        per_layer((E, E)), per_layer((1, E)),                        # wo, bo
        per_layer((E, H)), per_layer((1, H)),                        # fc1
        per_layer((H, E)), per_layer((1, E)),                        # fc2
        const_spec((1, E)), const_spec((1, E)),                      # ln_f g, b
        const_spec((E, npad)),                                       # head (lane-padded)
    ]
    weights = [tf[k] for k in _TF_KEYS]
    logits = pl.pallas_call(
        partial(_transformer_kernel, n_head=N_HEAD, n_layers=NL),
        out_shape=jax.ShapeDtypeStruct((B, T, npad), jnp.float32),
        grid=(B, NL),
        in_specs=in_specs,
        out_specs=pl.BlockSpec((1, T, npad), lambda b, l: (b, 0, 0)),
        scratch_shapes=[pltpu.VMEM((T, E), jnp.float32)],            # activation carry
        compiler_params=pltpu.CompilerParams(
            dimension_semantics=("parallel", "arbitrary"),
            vmem_limit_bytes=32 * 1024 * 1024),
    )(x, *weights)
    return logits[:, :, :NUM_VQ + 1]   # strip classifier-head lane padding


# ----------------------------- fused root-motion encoder kernel -----------------------------
def _shift_rows(x, s):
    """out[i] = x[i - s] (zero outside range); s>0 shifts content down (zero-pad top)."""
    if s == 0:
        return x
    L, C = x.shape
    z = jnp.zeros((abs(s), C), x.dtype)
    if s > 0:
        return jnp.concatenate([z, x[:L - s]], axis=0)
    return jnp.concatenate([x[-s:], z], axis=0)


def _conv(x, w_ref, b_ref, pad, dil=1):
    """Channels-last Conv1d (stride 1) as K shifted matmuls; activation cast once."""
    xc = x.astype(COMPUTE_DTYPE)
    K = w_ref.shape[0]
    y = b_ref[...].astype(jnp.float32)                     # (1, Cout) broadcasts
    for k in range(K):
        y = y + jnp.dot(_shift_rows(xc, pad - k * dil),
                        w_ref[k].astype(COMPUTE_DTYPE),
                        preferred_element_type=jnp.float32)
    return y


def _downsample2(h):
    """Exact stride-2 row selection (keep rows 0,2,4,...) via a contiguous reshape."""
    L, C = h.shape
    return h.reshape(L // 2, 2, C)[:, 0, :]


def _resblock(h, wa_ref, ba_ref, wb_ref, bb_ref):
    # ResConv1DBlock: relu -> conv(k3, pad=dilation=1) -> relu -> conv(k1) -> + residual
    t = jnp.maximum(h, 0.0)
    t = _conv(t, wa_ref, ba_ref, pad=1)
    t = jnp.maximum(t, 0.0)
    t = _conv(t, wb_ref, bb_ref, pad=0)
    return h + t


def _encoder_kernel(x_ref,
                    w0_ref, b0_ref,
                    wd0_ref, bd0_ref, wra0_ref, bra0_ref, wrb0_ref, brb0_ref,
                    wd1_ref, bd1_ref, wra1_ref, bra1_ref, wrb1_ref, brb1_ref,
                    wout_ref, bout_ref,
                    o_ref):
    x = x_ref[0].astype(jnp.float32)                                 # (L, 4)
    h = jnp.maximum(_conv(x, w0_ref, b0_ref, pad=1), 0.0)            # Conv1d(4,E,3,1,1)+ReLU
    # down block 0: Conv1d(E,E,4,stride=2,pad=1) == stride-1 taps + exact even-row select
    h = _downsample2(_conv(h, wd0_ref, bd0_ref, pad=1))              # (L/2, E)
    h = _resblock(h, wra0_ref, bra0_ref, wrb0_ref, brb0_ref)
    # down block 1
    h = _downsample2(_conv(h, wd1_ref, bd1_ref, pad=1))              # (L/4, E)
    h = _resblock(h, wra1_ref, bra1_ref, wrb1_ref, brb1_ref)
    h = _conv(h, wout_ref, bout_ref, pad=1)                          # Conv1d(E,E,3,1,1)
    o_ref[0] = h.astype(o_ref.dtype)


_ENC_KEYS = ('conv0', 'down0', 'res0_c1', 'res0_c2', 'down1', 'res1_c1', 'res1_c2', 'conv_out')


def root_encoder_forward(enc, x_nlc):
    """Encoder(4, E, down_t=2, stride_t=2, width=E, depth=1, dilation_growth_rate=3, relu)."""
    B, L, cin = x_nlc.shape
    E = EMBED_DIM
    assert L % 4 == 0
    weights = []
    for name in _ENC_KEYS:
        weights += [enc[name]['w'], enc[name]['b']]
    return pl.pallas_call(
        _encoder_kernel,
        out_shape=jax.ShapeDtypeStruct((B, L // 4, E), x_nlc.dtype),
        grid=(B,),
        in_specs=[pl.BlockSpec((1, L, cin), lambda b: (b, 0, 0))]
                 + [_full_spec(w) for w in weights],
        out_specs=pl.BlockSpec((1, L // 4, E), lambda b: (b, 0, 0)),
        compiler_params=pltpu.CompilerParams(dimension_semantics=("parallel",)),
    )(x_nlc, *weights)


# ----------------------------- model glue (plain JAX) -----------------------------
def pe_table(length, channels):
    """tensor2tensor-style timing signal (sin half | cos half), as in T2M-GPT pos_encoding."""
    num_t = channels // 2
    pos = jnp.arange(length, dtype=jnp.float32)[:, None]
    log_inc = math.log(10000.0) / max(num_t - 1, 1)
    inv = jnp.exp(jnp.arange(num_t, dtype=jnp.float32) * (-log_inc))
    st = pos * inv[None, :]
    return jnp.concatenate([jnp.sin(st), jnp.cos(st)], axis=1)


def _mask_cond_root(cond, prob, force, rng):
    if force:
        return jnp.ones_like(cond) * 100.0
    elif prob > 0.0:
        bs = cond.shape[0]
        m = jax.random.bernoulli(rng, prob, (bs,)).astype(cond.dtype).reshape(bs, 1, 1)
        return cond * (1.0 - m) + jnp.ones_like(cond) * 100.0 * m
    return cond


def _mask_cond_text(cond, prob, force, rng):
    if force:
        return jnp.zeros_like(cond)
    elif prob > 0.0:
        bs = cond.shape[0]
        m = jax.random.bernoulli(rng, prob, (bs,)).astype(cond.dtype).reshape(bs, 1)
        return cond * (1.0 - m)
    return cond


def t2m_forward(params, idx, clip_feature, root_motion,
                text_cond_prob=0.0, root_cond_prob=0.0,
                force_mask_text=False, force_mask_root=False, rng=None):
    E = EMBED_DIM
    if rng is None:
        rng = jax.random.PRNGKey(42)
    # tiny (B, clip_dim) x (clip_dim, E) cond embedding: plain XLA glue (no kernel launch)
    cond = clip_feature @ params['cond_w'] + params['cond_b']                # (B, E)
    if idx is None or (isinstance(idx, (list, tuple)) and len(idx) == 0):
        token_embeddings = cond[:, None, :]
    else:
        b, t = idx.shape
        assert 2 * t <= BLOCK_SIZE, 'Cannot forward, model block size is exhausted.'
        tok = jnp.take(params['tok_emb'], idx, axis=0)                       # embedding gather (XLA glue)
        root = root_encoder_forward(params['enc'], root_motion)[:, :t, :]    # (b, t, E)
        root = _mask_cond_root(root, root_cond_prob, force_mask_root, rng)
        _ = _mask_cond_text(cond, text_cond_prob, force_mask_text, rng)      # dead code in torch, mirrored
        interleaved = jnp.stack([tok, root], axis=2).reshape(b, 2 * t, E)
        token_embeddings = jnp.concatenate([cond[:, None, :], interleaved], axis=1)
    T = token_embeddings.shape[1]
    x = token_embeddings + pe_table(BLOCK_SIZE, E)[:T][None]                 # PositionEmbedding (dropout 0)
    return transformer_forward(params['tf'], x)                              # single fused kernel


# ----------------------------- deterministic parameter init -----------------------------
def init_params(key):
    E, H = EMBED_DIM, FC_RATE * EMBED_DIM
    NL = 2 * NUM_LAYERS                       # base blocks + head blocks, applied sequentially
    npad = ((NUM_VQ + 1 + 127) // 128) * 128  # lane-dense classifier head width
    keys = iter(jax.random.split(key, 64))

    def nrm(shape, std=0.02, dtype=jnp.float32):
        return (std * jax.random.normal(next(keys), shape, jnp.float32)).astype(dtype)

    CD = COMPUTE_DTYPE  # large matmul weights stored in the MXU operand dtype (bf16)
    tf = {
        'ln1_g': jnp.ones((NL, 1, E), jnp.float32), 'ln1_b': jnp.zeros((NL, 1, E), jnp.float32),
        'ln2_g': jnp.ones((NL, 1, E), jnp.float32), 'ln2_b': jnp.zeros((NL, 1, E), jnp.float32),
        'wqkv': nrm((NL, E, 3 * E), dtype=CD), 'bqkv': jnp.zeros((NL, 1, 3 * E), jnp.float32),
        'wo': nrm((NL, E, E), dtype=CD), 'bo': jnp.zeros((NL, 1, E), jnp.float32),
        'fc1_w': nrm((NL, E, H), dtype=CD), 'fc1_b': jnp.zeros((NL, 1, H), jnp.float32),
        'fc2_w': nrm((NL, H, E), dtype=CD), 'fc2_b': jnp.zeros((NL, 1, E), jnp.float32),
        'lnf_g': jnp.ones((1, E), jnp.float32), 'lnf_b': jnp.zeros((1, E), jnp.float32),
        # head (no bias), zero-padded to a lane multiple; sliced back outside the kernel
        'head_w': jnp.pad(nrm((E, NUM_VQ + 1)),
                          ((0, 0), (0, npad - (NUM_VQ + 1)))).astype(CD),
    }

    def conv_p(cin, cout, k):
        # tap-major (K, Cin, Cout) layout, equivalent to torch's (Cout, Cin, K)
        return {'w': nrm((k, cin, cout), dtype=CD), 'b': jnp.zeros((1, cout), jnp.float32)}

    enc = {
        'conv0': conv_p(4, E, 3),
        'down0': conv_p(E, E, 4), 'res0_c1': conv_p(E, E, 3), 'res0_c2': conv_p(E, E, 1),
        'down1': conv_p(E, E, 4), 'res1_c1': conv_p(E, E, 3), 'res1_c2': conv_p(E, E, 1),
        'conv_out': conv_p(E, E, 3),
    }
    return {
        'tok_emb': nrm((NUM_VQ + 2, E)),
        'cond_w': nrm((CLIP_DIM, E)), 'cond_b': jnp.zeros((E,), jnp.float32),
        'enc': enc,
        'tf': tf,
    }


# ----------------------------- main -----------------------------
if __name__ == "__main__":
    key = jax.random.PRNGKey(0)
    kp, kidx, kclip, kroot = jax.random.split(key, 4)

    params = init_params(kp)

    B, t, L = 2, 4, 16                 # 2*t <= block_size, L % 4 == 0, L/4 >= t
    idx = jax.random.randint(kidx, (B, t), 0, NUM_VQ, dtype=jnp.int32)
    clip_feature = jax.random.normal(kclip, (B, CLIP_DIM), jnp.float32)
    root_motion = jax.random.normal(kroot, (B, L, 4), jnp.float32)   # channels-last (see layout note)

    fwd = jax.jit(partial(t2m_forward, params,
                          text_cond_prob=0.0, root_cond_prob=0.0,
                          force_mask_text=False, force_mask_root=False))
    logits = fwd(idx, clip_feature, root_motion)
    jax.block_until_ready(logits)
    assert logits.shape == (B, 2 * t + 1, NUM_VQ + 1)
    assert bool(jnp.all(jnp.isfinite(logits)))
    print("KERNEL_OK")
</pallas_src>

<mosaic_0001>
module attributes {stable_mosaic.version = 11 : i64} {
  func.func @_encoder_kernel(%arg0: i32, %arg1: memref<1x16x4xf32, #tpu.memory_space<vmem>>, %arg2: memref<3x4x64xbf16, #tpu.memory_space<vmem>>, %arg3: memref<1x64xf32, #tpu.memory_space<vmem>>, %arg4: memref<4x64x64xbf16, #tpu.memory_space<vmem>>, %arg5: memref<1x64xf32, #tpu.memory_space<vmem>>, %arg6: memref<3x64x64xbf16, #tpu.memory_space<vmem>>, %arg7: memref<1x64xf32, #tpu.memory_space<vmem>>, %arg8: memref<1x64x64xbf16, #tpu.memory_space<vmem>>, %arg9: memref<1x64xf32, #tpu.memory_space<vmem>>, %arg10: memref<4x64x64xbf16, #tpu.memory_space<vmem>>, %arg11: memref<1x64xf32, #tpu.memory_space<vmem>>, %arg12: memref<3x64x64xbf16, #tpu.memory_space<vmem>>, %arg13: memref<1x64xf32, #tpu.memory_space<vmem>>, %arg14: memref<1x64x64xbf16, #tpu.memory_space<vmem>>, %arg15: memref<1x64xf32, #tpu.memory_space<vmem>>, %arg16: memref<3x64x64xbf16, #tpu.memory_space<vmem>>, %arg17: memref<1x64xf32, #tpu.memory_space<vmem>>, %arg18: memref<1x4x64xf32, #tpu.memory_space<vmem>>) attributes {dimension_semantics = [#tpu.dimension_semantics<parallel>], iteration_bounds = array<i64: 2>, scalar_prefetch = 0 : i64, scratch_operands = 0 : i64, tpu.core_type = #tpu.core_type<tc>, window_params = [{transform_indices = @transform_0, window_bounds = array<i64: 1, 16, 4>}, {pipeline_mode = #tpu.pipeline_mode<synchronous>, transform_indices = @transform_1, window_bounds = array<i64: 3, 4, 64>}, {pipeline_mode = #tpu.pipeline_mode<synchronous>, transform_indices = @transform_2, window_bounds = array<i64: 1, 64>}, {pipeline_mode = #tpu.pipeline_mode<synchronous>, transform_indices = @transform_3, window_bounds = array<i64: 4, 64, 64>}, {pipeline_mode = #tpu.pipeline_mode<synchronous>, transform_indices = @transform_4, window_bounds = array<i64: 1, 64>}, {pipeline_mode = #tpu.pipeline_mode<synchronous>, transform_indices = @transform_5, window_bounds = array<i64: 3, 64, 64>}, {pipeline_mode = #tpu.pipeline_mode<synchronous>, transform_indices = @transform_6, window_bounds = array<i64: 1, 64>}, {pipeline_mode = #tpu.pipeline_mode<synchronous>, transform_indices = @transform_7, window_bounds = array<i64: 1, 64, 64>}, {pipeline_mode = #tpu.pipeline_mode<synchronous>, transform_indices = @transform_8, window_bounds = array<i64: 1, 64>}, {pipeline_mode = #tpu.pipeline_mode<synchronous>, transform_indices = @transform_9, window_bounds = array<i64: 4, 64, 64>}, {pipeline_mode = #tpu.pipeline_mode<synchronous>, transform_indices = @transform_10, window_bounds = array<i64: 1, 64>}, {pipeline_mode = #tpu.pipeline_mode<synchronous>, transform_indices = @transform_11, window_bounds = array<i64: 3, 64, 64>}, {pipeline_mode = #tpu.pipeline_mode<synchronous>, transform_indices = @transform_12, window_bounds = array<i64: 1, 64>}, {pipeline_mode = #tpu.pipeline_mode<synchronous>, transform_indices = @transform_13, window_bounds = array<i64: 1, 64, 64>}, {pipeline_mode = #tpu.pipeline_mode<synchronous>, transform_indices = @transform_14, window_bounds = array<i64: 1, 64>}, {pipeline_mode = #tpu.pipeline_mode<synchronous>, transform_indices = @transform_15, window_bounds = array<i64: 3, 64, 64>}, {pipeline_mode = #tpu.pipeline_mode<synchronous>, transform_indices = @transform_16, window_bounds = array<i64: 1, 64>}, {transform_indices = @transform_17, window_bounds = array<i64: 1, 4, 64>}]} {
    %c0 = arith.constant 0 : index
    %c0_0 = arith.constant 0 : index
    %c0_1 = arith.constant 0 : index
    %0 = vector.load %arg1[%c0, %c0_0, %c0_1] : memref<1x16x4xf32, #tpu.memory_space<vmem>>, vector<1x16x4xf32>
    %1 = vector.shape_cast %0 : vector<1x16x4xf32> to vector<16x4xf32>
    %2 = arith.truncf %1 : vector<16x4xf32> to vector<16x4xbf16>
    %c0_2 = arith.constant 0 : index
    %c0_3 = arith.constant 0 : index
    %3 = vector.load %arg3[%c0_2, %c0_3] : memref<1x64xf32, #tpu.memory_space<vmem>>, vector<1x64xf32>
    %cst = arith.constant 0.000000e+00 : bf16
    %4 = vector.broadcast %cst : bf16 to vector<1x4xbf16>
    %5 = vector.extract_strided_slice %2 {offsets = [0, 0], sizes = [15, 4], strides = [1, 1]} : vector<16x4xbf16> to vector<15x4xbf16>
    %6 = tpu.concatenate %4, %5 in 0 : vector<1x4xbf16>, vector<15x4xbf16> -> vector<16x4xbf16>
    %c0_4 = arith.constant 0 : index
    %c0_5 = arith.constant 0 : index
    %c0_6 = arith.constant 0 : index
    %7 = vector.load %arg2[%c0_4, %c0_5, %c0_6] : memref<3x4x64xbf16, #tpu.memory_space<vmem>>, vector<1x4x64xbf16>
    %8 = vector.shape_cast %7 : vector<1x4x64xbf16> to vector<4x64xbf16>
    %cst_7 = arith.constant dense<0.000000e+00> : vector<16x64xf32>
    %9 = tpu.matmul %6, %8, %cst_7 {dimension_numbers = #tpu.dot_dimension_numbers<[1], [0], [0], [1], [0, 0, 1, 1], [], []>} : vector<16x4xbf16>, vector<4x64xbf16>, vector<16x64xf32> -> vector<16x64xf32>
    %10 = vector.broadcast %3 : vector<1x64xf32> to vector<16x64xf32>
    %11 = arith.addf %10, %9 : vector<16x64xf32>
    %c1 = arith.constant 1 : index
    %c0_8 = arith.constant 0 : index
    %c0_9 = arith.constant 0 : index
    %12 = vector.load %arg2[%c1, %c0_8, %c0_9] : memref<3x4x64xbf16, #tpu.memory_space<vmem>>, vector<1x4x64xbf16>
    %13 = vector.shape_cast %12 : vector<1x4x64xbf16> to vector<4x64xbf16>
    %cst_10 = arith.constant dense<0.000000e+00> : vector<16x64xf32>
    %14 = tpu.matmul %2, %13, %cst_10 {dimension_numbers = #tpu.dot_dimension_numbers<[1], [0], [0], [1], [0, 0, 1, 1], [], []>} : vector<16x4xbf16>, vector<4x64xbf16>, vector<16x64xf32> -> vector<16x64xf32>
    %15 = arith.addf %11, %14 : vector<16x64xf32>
    %cst_11 = arith.constant 0.000000e+00 : bf16
    %16 = vector.broadcast %cst_11 : bf16 to vector<1x4xbf16>
    %17 = vector.extract_strided_slice %2 {offsets = [1, 0], sizes = [15, 4], strides = [1, 1]} : vector<16x4xbf16> to vector<15x4xbf16>
    %18 = tpu.concatenate %17, %16 in 0 : vector<15x4xbf16>, vector<1x4xbf16> -> vector<16x4xbf16>
    %c2 = arith.constant 2 : index
    %c0_12 = arith.constant 0 : index
    %c0_13 = arith.constant 0 : index
    %19 = vector.load %arg2[%c2, %c0_12, %c0_13] : memref<3x4x64xbf16, #tpu.memory_space<vmem>>, vector<1x4x64xbf16>
    %20 = vector.shape_cast %19 : vector<1x4x64xbf16> to vector<4x64xbf16>
    %cst_14 = arith.constant dense<0.000000e+00> : vector<16x64xf32>
    %21 = tpu.matmul %18, %20, %cst_14 {dimension_numbers = #tpu.dot_dimension_numbers<[1], [0], [0], [1], [0, 0, 1, 1], [], []>} : vector<16x4xbf16>, vector<4x64xbf16>, vector<16x64xf32> -> vector<16x64xf32>
    %22 = arith.addf %15, %21 : vector<16x64xf32>
    %cst_15 = arith.constant 0.000000e+00 : f32
    %23 = vector.broadcast %cst_15 : f32 to vector<16x64xf32>
    %24 = arith.maximumf %22, %23 : vector<16x64xf32>
    %25 = arith.truncf %24 : vector<16x64xf32> to vector<16x64xbf16>
    %c0_16 = arith.constant 0 : index
    %c0_17 = arith.constant 0 : index
    %26 = vector.load %arg5[%c0_16, %c0_17] : memref<1x64xf32, #tpu.memory_space<vmem>>, vector<1x64xf32>
    %cst_18 = arith.constant 0.000000e+00 : bf16
    %27 = vector.broadcast %cst_18 : bf16 to vector<1x64xbf16>
    %28 = vector.extract_strided_slice %25 {offsets = [0, 0], sizes = [15, 64], strides = [1, 1]} : vector<16x64xbf16> to vector<15x64xbf16>
    %29 = tpu.concatenate %27, %28 in 0 : vector<1x64xbf16>, vector<15x64xbf16> -> vector<16x64xbf16>
    %c0_19 = arith.constant 0 : index
    %c0_20 = arith.constant 0 : index
    %c0_21 = arith.constant 0 : index
    %30 = vector.load %arg4[%c0_19, %c0_20, %c0_21] : memref<4x64x64xbf16, #tpu.memory_space<vmem>>, vector<1x64x64xbf16>
    %31 = vector.shape_cast %30 : vector<1x64x64xbf16> to vector<64x64xbf16>
    %cst_22 = arith.constant dense<0.000000e+00> : vector<16x64xf32>
    %32 = tpu.matmul %29, %31, %cst_22 {dimension_numbers = #tpu.dot_dimension_numbers<[1], [0], [0], [1], [0, 0, 1, 1], [], []>} : vector<16x64xbf16>, vector<64x64xbf16>, vector<16x64xf32> -> vector<16x64xf32>
    %33 = vector.broadcast %26 : vector<1x64xf32> to vector<16x64xf32>
    %34 = arith.addf %33, %32 : vector<16x64xf32>
    %c1_23 = arith.constant 1 : index
    %c0_24 = arith.constant 0 : index
    %c0_25 = arith.constant 0 : index
    %35 = vector.load %arg4[%c1_23, %c0_24, %c0_25] : memref<4x64x64xbf16, #tpu.memory_space<vmem>>, vector<1x64x64xbf16>
    %36 = vector.shape_cast %35 : vector<1x64x64xbf16> to vector<64x64xbf16>
    %cst_26 = arith.constant dense<0.000000e+00> : vector<16x64xf32>
    %37 = tpu.matmul %25, %36, %cst_26 {dimension_numbers = #tpu.dot_dimension_numbers<[1], [0], [0], [1], [0, 0, 1, 1], [], []>} : vector<16x64xbf16>, vector<64x64xbf16>, vector<16x64xf32> -> vector<16x64xf32>
    %38 = arith.addf %34, %37 : vector<16x64xf32>
    %cst_27 = arith.constant 0.000000e+00 : bf16
    %39 = vector.broadcast %cst_27 : bf16 to vector<1x64xbf16>
    %40 = vector.extract_strided_slice %25 {offsets = [1, 0], sizes = [15, 64], strides = [1, 1]} : vector<16x64xbf16> to vector<15x64xbf16>
    %41 = tpu.concatenate %40, %39 in 0 : vector<15x64xbf16>, vector<1x64xbf16> -> vector<16x64xbf16>
    %c2_28 = arith.constant 2 : index
    %c0_29 = arith.constant 0 : index
    %c0_30 = arith.constant 0 : index
    %42 = vector.load %arg4[%c2_28, %c0_29, %c0_30] : memref<4x64x64xbf16, #tpu.memory_space<vmem>>, vector<1x64x64xbf16>
    %43 = vector.shape_cast %42 : vector<1x64x64xbf16> to vector<64x64xbf16>
    %cst_31 = arith.constant dense<0.000000e+00> : vector<16x64xf32>
    %44 = tpu.matmul %41, %43, %cst_31 {dimension_numbers = #tpu.dot_dimension_numbers<[1], [0], [0], [1], [0, 0, 1, 1], [], []>} : vector<16x64xbf16>, vector<64x64xbf16>, vector<16x64xf32> -> vector<16x64xf32>
    %45 = arith.addf %38, %44 : vector<16x64xf32>
    %cst_32 = arith.constant 0.000000e+00 : bf16
    %46 = vector.broadcast %cst_32 : bf16 to vector<2x64xbf16>
    %47 = vector.extract_strided_slice %25 {offsets = [2, 0], sizes = [14, 64], strides = [1, 1]} : vector<16x64xbf16> to vector<14x64xbf16>
    %48 = tpu.concatenate %47, %46 in 0 : vector<14x64xbf16>, vector<2x64xbf16> -> vector<16x64xbf16>
    %c3 = arith.constant 3 : index
    %c0_33 = arith.constant 0 : index
    %c0_34 = arith.constant 0 : index
    %49 = vector.load %arg4[%c3, %c0_33, %c0_34] : memref<4x64x64xbf16, #tpu.memory_space<vmem>>, vector<1x64x64xbf16>
    %50 = vector.shape_cast %49 : vector<1x64x64xbf16> to vector<64x64xbf16>
    %cst_35 = arith.constant dense<0.000000e+00> : vector<16x64xf32>
    %51 = tpu.matmul %48, %50, %cst_35 {dimension_numbers = #tpu.dot_dimension_numbers<[1], [0], [0], [1], [0, 0, 1, 1], [], []>} : vector<16x64xbf16>, vector<64x64xbf16>, vector<16x64xf32> -> vector<16x64xf32>
    %52 = arith.addf %45, %51 : vector<16x64xf32>
    %53 = vector.shape_cast %52 : vector<16x64xf32> to vector<8x2x64xf32>
    %54 = vector.extract_strided_slice %53 {offsets = [0, 0, 0], sizes = [8, 1, 64], strides = [1, 1, 1]} : vector<8x2x64xf32> to vector<8x1x64xf32>
    %55 = vector.shape_cast %54 : vector<8x1x64xf32> to vector<8x64xf32>
    %cst_36 = arith.constant 0.000000e+00 : f32
    %56 = vector.broadcast %cst_36 : f32 to vector<8x64xf32>
    %57 = arith.maximumf %55, %56 : vector<8x64xf32>
    %58 = arith.truncf %57 : vector<8x64xf32> to vector<8x64xbf16>
    %c0_37 = arith.constant 0 : index
    %c0_38 = arith.constant 0 : index
    %59 = vector.load %arg7[%c0_37, %c0_38] : memref<1x64xf32, #tpu.memory_space<vmem>>, vector<1x64xf32>
    %cst_39 = arith.constant 0.000000e+00 : bf16
    %60 = vector.broadcast %cst_39 : bf16 to vector<1x64xbf16>
    %61 = vector.extract_strided_slice %58 {offsets = [0, 0], sizes = [7, 64], strides = [1, 1]} : vector<8x64xbf16> to vector<7x64xbf16>
    %62 = tpu.concatenate %60, %61 in 0 : vector<1x64xbf16>, vector<7x64xbf16> -> vector<8x64xbf16>
    %c0_40 = arith.constant 0 : index
    %c0_41 = arith.constant 0 : index
    %c0_42 = arith.constant 0 : index
    %63 = vector.load %arg6[%c0_40, %c0_41, %c0_42] : memref<3x64x64xbf16, #tpu.memory_space<vmem>>, vector<1x64x64xbf16>
    %64 = vector.shape_cast %63 : vector<1x64x64xbf16> to vector<64x64xbf16>
    %cst_43 = arith.constant dense<0.000000e+00> : vector<8x64xf32>
    %65 = tpu.matmul %62, %64, %cst_43 {dimension_numbers = #tpu.dot_dimension_numbers<[1], [0], [0], [1], [0, 0, 1, 1], [], []>} : vector<8x64xbf16>, vector<64x64xbf16>, vector<8x64xf32> -> vector<8x64xf32>
    %66 = vector.broadcast %59 : vector<1x64xf32> to vector<8x64xf32>
    %67 = arith.addf %66, %65 : vector<8x64xf32>
    %c1_44 = arith.constant 1 : index
    %c0_45 = arith.constant 0 : index
    %c0_46 = arith.constant 0 : index
    %68 = vector.load %arg6[%c1_44, %c0_45, %c0_46] : memref<3x64x64xbf16, #tpu.memory_space<vmem>>, vector<1x64x64xbf16>
    %69 = vector.shape_cast %68 : vector<1x64x64xbf16> to vector<64x64xbf16>
    %cst_47 = arith.constant dense<0.000000e+00> : vector<8x64xf32>
    %70 = tpu.matmul %58, %69, %cst_47 {dimension_numbers = #tpu.dot_dimension_numbers<[1], [0], [0], [1], [0, 0, 1, 1], [], []>} : vector<8x64xbf16>, vector<64x64xbf16>, vector<8x64xf32> -> vector<8x64xf32>
    %71 = arith.addf %67, %70 : vector<8x64xf32>
    %cst_48 = arith.constant 0.000000e+00 : bf16
    %72 = vector.broadcast %cst_48 : bf16 to vector<1x64xbf16>
    %73 = vector.extract_strided_slice %58 {offsets = [1, 0], sizes = [7, 64], strides = [1, 1]} : vector<8x64xbf16> to vector<7x64xbf16>
    %74 = tpu.concatenate %73, %72 in 0 : vector<7x64xbf16>, vector<1x64xbf16> -> vector<8x64xbf16>
    %c2_49 = arith.constant 2 : index
    %c0_50 = arith.constant 0 : index
    %c0_51 = arith.constant 0 : index
    %75 = vector.load %arg6[%c2_49, %c0_50, %c0_51] : memref<3x64x64xbf16, #tpu.memory_space<vmem>>, vector<1x64x64xbf16>
    %76 = vector.shape_cast %75 : vector<1x64x64xbf16> to vector<64x64xbf16>
    %cst_52 = arith.constant dense<0.000000e+00> : vector<8x64xf32>
    %77 = tpu.matmul %74, %76, %cst_52 {dimension_numbers = #tpu.dot_dimension_numbers<[1], [0], [0], [1], [0, 0, 1, 1], [], []>} : vector<8x64xbf16>, vector<64x64xbf16>, vector<8x64xf32> -> vector<8x64xf32>
    %78 = arith.addf %71, %77 : vector<8x64xf32>
    %cst_53 = arith.constant 0.000000e+00 : f32
    %79 = vector.broadcast %cst_53 : f32 to vector<8x64xf32>
    %80 = arith.maximumf %78, %79 : vector<8x64xf32>
    %81 = arith.truncf %80 : vector<8x64xf32> to vector<8x64xbf16>
    %c0_54 = arith.constant 0 : index
    %c0_55 = arith.constant 0 : index
    %82 = vector.load %arg9[%c0_54, %c0_55] : memref<1x64xf32, #tpu.memory_space<vmem>>, vector<1x64xf32>
    %c0_56 = arith.constant 0 : index
    %c0_57 = arith.constant 0 : index
    %c0_58 = arith.constant 0 : index
    %83 = vector.load %arg8[%c0_56, %c0_57, %c0_58] : memref<1x64x64xbf16, #tpu.memory_space<vmem>>, vector<1x64x64xbf16>
    %84 = vector.shape_cast %83 : vector<1x64x64xbf16> to vector<64x64xbf16>
    %cst_59 = arith.constant dense<0.000000e+00> : vector<8x64xf32>
    %85 = tpu.matmul %81, %84, %cst_59 {dimension_numbers = #tpu.dot_dimension_numbers<[1], [0], [0], [1], [0, 0, 1, 1], [], []>} : vector<8x64xbf16>, vector<64x64xbf16>, vector<8x64xf32> -> vector<8x64xf32>
    %86 = vector.broadcast %82 : vector<1x64xf32> to vector<8x64xf32>
    %87 = arith.addf %86, %85 : vector<8x64xf32>
    %88 = arith.addf %55, %87 : vector<8x64xf32>
    %89 = arith.truncf %88 : vector<8x64xf32> to vector<8x64xbf16>
    %c0_60 = arith.constant 0 : index
    %c0_61 = arith.constant 0 : index
    %90 = vector.load %arg11[%c0_60, %c0_61] : memref<1x64xf32, #tpu.memory_space<vmem>>, vector<1x64xf32>
    %cst_62 = arith.constant 0.000000e+00 : bf16
    %91 = vector.broadcast %cst_62 : bf16 to vector<1x64xbf16>
    %92 = vector.extract_strided_slice %89 {offsets = [0, 0], sizes = [7, 64], strides = [1, 1]} : vector<8x64xbf16> to vector<7x64xbf16>
    %93 = tpu.concatenate %91, %92 in 0 : vector<1x64xbf16>, vector<7x64xbf16> -> vector<8x64xbf16>
    %c0_63 = arith.constant 0 : index
    %c0_64 = arith.constant 0 : index
    %c0_65 = arith.constant 0 : index
    %94 = vector.load %arg10[%c0_63, %c0_64, %c0_65] : memref<4x64x64xbf16, #tpu.memory_space<vmem>>, vector<1x64x64xbf16>
    %95 = vector.shape_cast %94 : vector<1x64x64xbf16> to vector<64x64xbf16>
    %cst_66 = arith.constant dense<0.000000e+00> : vector<8x64xf32>
    %96 = tpu.matmul %93, %95, %cst_66 {dimension_numbers = #tpu.dot_dimension_numbers<[1], [0], [0], [1], [0, 0, 1, 1], [], []>} : vector<8x64xbf16>, vector<64x64xbf16>, vector<8x64xf32> -> vector<8x64xf32>
    %97 = vector.broadcast %90 : vector<1x64xf32> to vector<8x64xf32>
    %98 = arith.addf %97, %96 : vector<8x64xf32>
    %c1_67 = arith.constant 1 : index
    %c0_68 = arith.constant 0 : index
    %c0_69 = arith.constant 0 : index
    %99 = vector.load %arg10[%c1_67, %c0_68, %c0_69] : memref<4x64x64xbf16, #tpu.memory_space<vmem>>, vector<1x64x64xbf16>
    %100 = vector.shape_cast %99 : vector<1x64x64xbf16> to vector<64x64xbf16>
    %cst_70 = arith.constant dense<0.000000e+00> : vector<8x64xf32>
    %101 = tpu.matmul %89, %100, %cst_70 {dimension_numbers = #tpu.dot_dimension_numbers<[1], [0], [0], [1], [0, 0, 1, 1], [], []>} : vector<8x64xbf16>, vector<64x64xbf16>, vector<8x64xf32> -> vector<8x64xf32>
    %102 = arith.addf %98, %101 : vector<8x64xf32>
    %cst_71 = arith.constant 0.000000e+00 : bf16
    %103 = vector.broadcast %cst_71 : bf16 to vector<1x64xbf16>
    %104 = vector.extract_strided_slice %89 {offsets = [1, 0], sizes = [7, 64], strides = [1, 1]} : vector<8x64xbf16> to vector<7x64xbf16>
    %105 = tpu.concatenate %104, %103 in 0 : vector<7x64xbf16>, vector<1x64xbf16> -> vector<8x64xbf16>
    %c2_72 = arith.constant 2 : index
    %c0_73 = arith.constant 0 : index
    %c0_74 = arith.constant 0 : index
    %106 = vector.load %arg10[%c2_72, %c0_73, %c0_74] : memref<4x64x64xbf16, #tpu.memory_space<vmem>>, vector<1x64x64xbf16>
    %107 = vector.shape_cast %106 : vector<1x64x64xbf16> to vector<64x64xbf16>
    %cst_75 = arith.constant dense<0.000000e+00> : vector<8x64xf32>
    %108 = tpu.matmul %105, %107, %cst_75 {dimension_numbers = #tpu.dot_dimension_numbers<[1], [0], [0], [1], [0, 0, 1, 1], [], []>} : vector<8x64xbf16>, vector<64x64xbf16>, vector<8x64xf32> -> vector<8x64xf32>
    %109 = arith.addf %102, %108 : vector<8x64xf32>
    %cst_76 = arith.constant 0.000000e+00 : bf16
    %110 = vector.broadcast %cst_76 : bf16 to vector<2x64xbf16>
    %111 = vector.extract_strided_slice %89 {offsets = [2, 0], sizes = [6, 64], strides = [1, 1]} : vector<8x64xbf16> to vector<6x64xbf16>
    %112 = tpu.concatenate %111, %110 in 0 : vector<6x64xbf16>, vector<2x64xbf16> -> vector<8x64xbf16>
    %c3_77 = arith.constant 3 : index
    %c0_78 = arith.constant 0 : index
    %c0_79 = arith.constant 0 : index
    %113 = vector.load %arg10[%c3_77, %c0_78, %c0_79] : memref<4x64x64xbf16, #tpu.memory_space<vmem>>, vector<1x64x64xbf16>
    %114 = vector.shape_cast %113 : vector<1x64x64xbf16> to vector<64x64xbf16>
    %cst_80 = arith.constant dense<0.000000e+00> : vector<8x64xf32>
    %115 = tpu.matmul %112, %114, %cst_80 {dimension_numbers = #tpu.dot_dimension_numbers<[1], [0], [0], [1], [0, 0, 1, 1], [], []>} : vector<8x64xbf16>, vector<64x64xbf16>, vector<8x64xf32> -> vector<8x64xf32>
    %116 = arith.addf %109, %115 : vector<8x64xf32>
    %117 = vector.shape_cast %116 : vector<8x64xf32> to vector<4x2x64xf32>
    %118 = vector.extract_strided_slice %117 {offsets = [0, 0, 0], sizes = [4, 1, 64], strides = [1, 1, 1]} : vector<4x2x64xf32> to vector<4x1x64xf32>
    %119 = vector.shape_cast %118 : vector<4x1x64xf32> to vector<4x64xf32>
    %cst_81 = arith.constant 0.000000e+00 : f32
    %120 = vector.broadcast %cst_81 : f32 to vector<4x64xf32>
    %121 = arith.maximumf %119, %120 : vector<4x64xf32>
    %122 = arith.truncf %121 : vector<4x64xf32> to vector<4x64xbf16>
    %c0_82 = arith.constant 0 : index
    %c0_83 = arith.constant 0 : index
    %123 = vector.load %arg13[%c0_82, %c0_83] : memref<1x64xf32, #tpu.memory_space<vmem>>, vector<1x64xf32>
    %cst_84 = arith.constant 0.000000e+00 : bf16
    %124 = vector.broadcast %cst_84 : bf16 to vector<1x64xbf16>
    %125 = vector.extract_strided_slice %122 {offsets = [0, 0], sizes = [3, 64], strides = [1, 1]} : vector<4x64xbf16> to vector<3x64xbf16>
    %126 = tpu.concatenate %124, %125 in 0 : vector<1x64xbf16>, vector<3x64xbf16> -> vector<4x64xbf16>
    %c0_85 = arith.constant 0 : index
    %c0_86 = arith.constant 0 : index
    %c0_87 = arith.constant 0 : index
    %127 = vector.load %arg12[%c0_85, %c0_86, %c0_87] : memref<3x64x64xbf16, #tpu.memory_space<vmem>>, vector<1x64x64xbf16>
    %128 = vector.shape_cast %127 : vector<1x64x64xbf16> to vector<64x64xbf16>
    %cst_88 = arith.constant dense<0.000000e+00> : vector<4x64xf32>
    %129 = tpu.matmul %126, %128, %cst_88 {dimension_numbers = #tpu.dot_dimension_numbers<[1], [0], [0], [1], [0, 0, 1, 1], [], []>} : vector<4x64xbf16>, vector<64x64xbf16>, vector<4x64xf32> -> vector<4x64xf32>
    %130 = vector.broadcast %123 : vector<1x64xf32> to vector<4x64xf32>
    %131 = arith.addf %130, %129 : vector<4x64xf32>
    %c1_89 = arith.constant 1 : index
    %c0_90 = arith.constant 0 : index
    %c0_91 = arith.constant 0 : index
    %132 = vector.load %arg12[%c1_89, %c0_90, %c0_91] : memref<3x64x64xbf16, #tpu.memory_space<vmem>>, vector<1x64x64xbf16>
    %133 = vector.shape_cast %132 : vector<1x64x64xbf16> to vector<64x64xbf16>
    %cst_92 = arith.constant dense<0.000000e+00> : vector<4x64xf32>
    %134 = tpu.matmul %122, %133, %cst_92 {dimension_numbers = #tpu.dot_dimension_numbers<[1], [0], [0], [1], [0, 0, 1, 1], [], []>} : vector<4x64xbf16>, vector<64x64xbf16>, vector<4x64xf32> -> vector<4x64xf32>
    %135 = arith.addf %131, %134 : vector<4x64xf32>
    %cst_93 = arith.constant 0.000000e+00 : bf16
    %136 = vector.broadcast %cst_93 : bf16 to vector<1x64xbf16>
    %137 = vector.extract_strided_slice %122 {offsets = [1, 0], sizes = [3, 64], strides = [1, 1]} : vector<4x64xbf16> to vector<3x64xbf16>
    %138 = tpu.concatenate %137, %136 in 0 : vector<3x64xbf16>, vector<1x64xbf16> -> vector<4x64xbf16>
    %c2_94 = arith.constant 2 : index
    %c0_95 = arith.constant 0 : index
    %c0_96 = arith.constant 0 : index
    %139 = vector.load %arg12[%c2_94, %c0_95, %c0_96] : memref<3x64x64xbf16, #tpu.memory_space<vmem>>, vector<1x64x64xbf16>
    %140 = vector.shape_cast %139 : vector<1x64x64xbf16> to vector<64x64xbf16>
    %cst_97 = arith.constant dense<0.000000e+00> : vector<4x64xf32>
    %141 = tpu.matmul %138, %140, %cst_97 {dimension_numbers = #tpu.dot_dimension_numbers<[1], [0], [0], [1], [0, 0, 1, 1], [], []>} : vector<4x64xbf16>, vector<64x64xbf16>, vector<4x64xf32> -> vector<4x64xf32>
    %142 = arith.addf %135, %141 : vector<4x64xf32>
    %cst_98 = arith.constant 0.000000e+00 : f32
    %143 = vector.broadcast %cst_98 : f32 to vector<4x64xf32>
    %144 = arith.maximumf %142, %143 : vector<4x64xf32>
    %145 = arith.truncf %144 : vector<4x64xf32> to vector<4x64xbf16>
    %c0_99 = arith.constant 0 : index
    %c0_100 = arith.constant 0 : index
    %146 = vector.load %arg15[%c0_99, %c0_100] : memref<1x64xf32, #tpu.memory_space<vmem>>, vector<1x64xf32>
    %c0_101 = arith.constant 0 : index
    %c0_102 = arith.constant 0 : index
    %c0_103 = arith.constant 0 : index
    %147 = vector.load %arg14[%c0_101, %c0_102, %c0_103] : memref<1x64x64xbf16, #tpu.memory_space<vmem>>, vector<1x64x64xbf16>
    %148 = vector.shape_cast %147 : vector<1x64x64xbf16> to vector<64x64xbf16>
    %cst_104 = arith.constant dense<0.000000e+00> : vector<4x64xf32>
    %149 = tpu.matmul %145, %148, %cst_104 {dimension_numbers = #tpu.dot_dimension_numbers<[1], [0], [0], [1], [0, 0, 1, 1], [], []>} : vector<4x64xbf16>, vector<64x64xbf16>, vector<4x64xf32> -> vector<4x64xf32>
    %150 = vector.broadcast %146 : vector<1x64xf32> to vector<4x64xf32>
    %151 = arith.addf %150, %149 : vector<4x64xf32>
    %152 = arith.addf %119, %151 : vector<4x64xf32>
    %153 = arith.truncf %152 : vector<4x64xf32> to vector<4x64xbf16>
    %c0_105 = arith.constant 0 : index
    %c0_106 = arith.constant 0 : index
    %154 = vector.load %arg17[%c0_105, %c0_106] : memref<1x64xf32, #tpu.memory_space<vmem>>, vector<1x64xf32>
    %cst_107 = arith.constant 0.000000e+00 : bf16
    %155 = vector.broadcast %cst_107 : bf16 to vector<1x64xbf16>
    %156 = vector.extract_strided_slice %153 {offsets = [0, 0], sizes = [3, 64], strides = [1, 1]} : vector<4x64xbf16> to vector<3x64xbf16>
    %157 = tpu.concatenate %155, %156 in 0 : vector<1x64xbf16>, vector<3x64xbf16> -> vector<4x64xbf16>
    %c0_108 = arith.constant 0 : index
    %c0_109 = arith.constant 0 : index
    %c0_110 = arith.constant 0 : index
    %158 = vector.load %arg16[%c0_108, %c0_109, %c0_110] : memref<3x64x64xbf16, #tpu.memory_space<vmem>>, vector<1x64x64xbf16>
    %159 = vector.shape_cast %158 : vector<1x64x64xbf16> to vector<64x64xbf16>
    %cst_111 = arith.constant dense<0.000000e+00> : vector<4x64xf32>
    %160 = tpu.matmul %157, %159, %cst_111 {dimension_numbers = #tpu.dot_dimension_numbers<[1], [0], [0], [1], [0, 0, 1, 1], [], []>} : vector<4x64xbf16>, vector<64x64xbf16>, vector<4x64xf32> -> vector<4x64xf32>
    %161 = vector.broadcast %154 : vector<1x64xf32> to vector<4x64xf32>
    %162 = arith.addf %161, %160 : vector<4x64xf32>
    %c1_112 = arith.constant 1 : index
    %c0_113 = arith.constant 0 : index
    %c0_114 = arith.constant 0 : index
    %163 = vector.load %arg16[%c1_112, %c0_113, %c0_114] : memref<3x64x64xbf16, #tpu.memory_space<vmem>>, vector<1x64x64xbf16>
    %164 = vector.shape_cast %163 : vector<1x64x64xbf16> to vector<64x64xbf16>
    %cst_115 = arith.constant dense<0.000000e+00> : vector<4x64xf32>
    %165 = tpu.matmul %153, %164, %cst_115 {dimension_numbers = #tpu.dot_dimension_numbers<[1], [0], [0], [1], [0, 0, 1, 1], [], []>} : vector<4x64xbf16>, vector<64x64xbf16>, vector<4x64xf32> -> vector<4x64xf32>
    %166 = arith.addf %162, %165 : vector<4x64xf32>
    %cst_116 = arith.constant 0.000000e+00 : bf16
    %167 = vector.broadcast %cst_116 : bf16 to vector<1x64xbf16>
    %168 = vector.extract_strided_slice %153 {offsets = [1, 0], sizes = [3, 64], strides = [1, 1]} : vector<4x64xbf16> to vector<3x64xbf16>
    %169 = tpu.concatenate %168, %167 in 0 : vector<3x64xbf16>, vector<1x64xbf16> -> vector<4x64xbf16>
    %c2_117 = arith.constant 2 : index
    %c0_118 = arith.constant 0 : index
    %c0_119 = arith.constant 0 : index
    %170 = vector.load %arg16[%c2_117, %c0_118, %c0_119] : memref<3x64x64xbf16, #tpu.memory_space<vmem>>, vector<1x64x64xbf16>
    %171 = vector.shape_cast %170 : vector<1x64x64xbf16> to vector<64x64xbf16>
    %cst_120 = arith.constant dense<0.000000e+00> : vector<4x64xf32>
    %172 = tpu.matmul %169, %171, %cst_120 {dimension_numbers = #tpu.dot_dimension_numbers<[1], [0], [0], [1], [0, 0, 1, 1], [], []>} : vector<4x64xbf16>, vector<64x64xbf16>, vector<4x64xf32> -> vector<4x64xf32>
    %173 = arith.addf %166, %172 : vector<4x64xf32>
    %c0_121 = arith.constant 0 : index
    %c0_122 = arith.constant 0 : index
    %c0_123 = arith.constant 0 : index
    %174 = vector.load %arg18[%c0_121, %c0_122, %c0_123] : memref<1x4x64xf32, #tpu.memory_space<vmem>>, vector<1x4x64xf32>
    %175 = vector.shape_cast %174 : vector<1x4x64xf32> to vector<4x64xf32>
    %176 = vector.shape_cast %173 : vector<4x64xf32> to vector<1x4x64xf32>
    tpu.vector_store %arg18[%c0_121, %c0_122, %c0_123], %176 {strides = array<i32>} : memref<1x4x64xf32, #tpu.memory_space<vmem>>, vector<1x4x64xf32>,
    return
  }
  func.func @transform_0(%arg0: i32) -> (i32, i32, i32) {
    %c0_i32 = arith.constant 0 : i32
    %c0_i32_0 = arith.constant 0 : i32
    %c0_i32_1 = arith.constant 0 : i32
    return %arg0, %c0_i32, %c0_i32_0 : i32, i32, i32
  }
  func.func @transform_1(%arg0: i32) -> (i32, i32, i32) {
    %c0_i32 = arith.constant 0 : i32
    %c0_i32_0 = arith.constant 0 : i32
    %c0_i32_1 = arith.constant 0 : i32
    %c0_i32_2 = arith.constant 0 : i32
    return %c0_i32, %c0_i32_0, %c0_i32_1 : i32, i32, i32
  }
  func.func @transform_2(%arg0: i32) -> (i32, i32) {
    %c0_i32 = arith.constant 0 : i32
    %c0_i32_0 = arith.constant 0 : i32
    %c0_i32_1 = arith.constant 0 : i32
    return %c0_i32, %c0_i32_0 : i32, i32
  }
  func.func @transform_3(%arg0: i32) -> (i32, i32, i32) {
    %c0_i32 = arith.constant 0 : i32
    %c0_i32_0 = arith.constant 0 : i32
    %c0_i32_1 = arith.constant 0 : i32
    %c0_i32_2 = arith.constant 0 : i32
    return %c0_i32, %c0_i32_0, %c0_i32_1 : i32, i32, i32
  }
  func.func @transform_4(%arg0: i32) -> (i32, i32) {
    %c0_i32 = arith.constant 0 : i32
    %c0_i32_0 = arith.constant 0 : i32
    %c0_i32_1 = arith.constant 0 : i32
    return %c0_i32, %c0_i32_0 : i32, i32
  }
  func.func @transform_5(%arg0: i32) -> (i32, i32, i32) {
    %c0_i32 = arith.constant 0 : i32
    %c0_i32_0 = arith.constant 0 : i32
    %c0_i32_1 = arith.constant 0 : i32
    %c0_i32_2 = arith.constant 0 : i32
    return %c0_i32, %c0_i32_0, %c0_i32_1 : i32, i32, i32
  }
  func.func @transform_6(%arg0: i32) -> (i32, i32) {
    %c0_i32 = arith.constant 0 : i32
    %c0_i32_0 = arith.constant 0 : i32
    %c0_i32_1 = arith.constant 0 : i32
    return %c0_i32, %c0_i32_0 : i32, i32
  }
  func.func @transform_7(%arg0: i32) -> (i32, i32, i32) {
    %c0_i32 = arith.constant 0 : i32
    %c0_i32_0 = arith.constant 0 : i32
    %c0_i32_1 = arith.constant 0 : i32
    %c0_i32_2 = arith.constant 0 : i32
    return %c0_i32, %c0_i32_0, %c0_i32_1 : i32, i32, i32
  }
  func.func @transform_8(%arg0: i32) -> (i32, i32) {
    %c0_i32 = arith.constant 0 : i32
    %c0_i32_0 = arith.constant 0 : i32
    %c0_i32_1 = arith.constant 0 : i32
    return %c0_i32, %c0_i32_0 : i32, i32
  }
  func.func @transform_9(%arg0: i32) -> (i32, i32, i32) {
    %c0_i32 = arith.constant 0 : i32
    %c0_i32_0 = arith.constant 0 : i32
    %c0_i32_1 = arith.constant 0 : i32
    %c0_i32_2 = arith.constant 0 : i32
    return %c0_i32, %c0_i32_0, %c0_i32_1 : i32, i32, i32
  }
  func.func @transform_10(%arg0: i32) -> (i32, i32) {
    %c0_i32 = arith.constant 0 : i32
    %c0_i32_0 = arith.constant 0 : i32
    %c0_i32_1 = arith.constant 0 : i32
    return %c0_i32, %c0_i32_0 : i32, i32
  }
  func.func @transform_11(%arg0: i32) -> (i32, i32, i32) {
    %c0_i32 = arith.constant 0 : i32
    %c0_i32_0 = arith.constant 0 : i32
    %c0_i32_1 = arith.constant 0 : i32
    %c0_i32_2 = arith.constant 0 : i32
    return %c0_i32, %c0_i32_0, %c0_i32_1 : i32, i32, i32
  }
  func.func @transform_12(%arg0: i32) -> (i32, i32) {
    %c0_i32 = arith.constant 0 : i32
    %c0_i32_0 = arith.constant 0 : i32
    %c0_i32_1 = arith.constant 0 : i32
    return %c0_i32, %c0_i32_0 : i32, i32
  }
  func.func @transform_13(%arg0: i32) -> (i32, i32, i32) {
    %c0_i32 = arith.constant 0 : i32
    %c0_i32_0 = arith.constant 0 : i32
    %c0_i32_1 = arith.constant 0 : i32
    %c0_i32_2 = arith.constant 0 : i32
    return %c0_i32, %c0_i32_0, %c0_i32_1 : i32, i32, i32
  }
  func.func @transform_14(%arg0: i32) -> (i32, i32) {
    %c0_i32 = arith.constant 0 : i32
    %c0_i32_0 = arith.constant 0 : i32
    %c0_i32_1 = arith.constant 0 : i32
    return %c0_i32, %c0_i32_0 : i32, i32
  }
  func.func @transform_15(%arg0: i32) -> (i32, i32, i32) {
    %c0_i32 = arith.constant 0 : i32
    %c0_i32_0 = arith.constant 0 : i32
    %c0_i32_1 = arith.constant 0 : i32
    %c0_i32_2 = arith.constant 0 : i32
    return %c0_i32, %c0_i32_0, %c0_i32_1 : i32, i32, i32
  }
  func.func @transform_16(%arg0: i32) -> (i32, i32) {
    %c0_i32 = arith.constant 0 : i32
    %c0_i32_0 = arith.constant 0 : i32
    %c0_i32_1 = arith.constant 0 : i32
    return %c0_i32, %c0_i32_0 : i32, i32
  }
  func.func @transform_17(%arg0: i32) -> (i32, i32, i32) {
    %c0_i32 = arith.constant 0 : i32
    %c0_i32_0 = arith.constant 0 : i32
    %c0_i32_1 = arith.constant 0 : i32
    return %arg0, %c0_i32, %c0_i32_0 : i32, i32, i32
  }
}

module attributes {stable_mosaic.version = 11 : i64} {
  func.func @_transformer_kernel(%arg0: i32, %arg1: i32, %arg2: memref<1x9x64xf32, #tpu.memory_space<vmem>>, %arg3: memref<1x1x64xf32, #tpu.memory_space<vmem>>, %arg4: memref<1x1x64xf32, #tpu.memory_space<vmem>>, %arg5: memref<1x1x64xf32, #tpu.memory_space<vmem>>, %arg6: memref<1x1x64xf32, #tpu.memory_space<vmem>>, %arg7: memref<1x64x192xbf16, #tpu.memory_space<vmem>>, %arg8: memref<1x1x192xf32, #tpu.memory_space<vmem>>, %arg9: memref<1x64x64xbf16, #tpu.memory_space<vmem>>, %arg10: memref<1x1x64xf32, #tpu.memory_space<vmem>>, %arg11: memref<1x64x256xbf16, #tpu.memory_space<vmem>>, %arg12: memref<1x1x256xf32, #tpu.memory_space<vmem>>, %arg13: memref<1x256x64xbf16, #tpu.memory_space<vmem>>, %arg14: memref<1x1x64xf32, #tpu.memory_space<vmem>>, %arg15: memref<1x64xf32, #tpu.memory_space<vmem>>, %arg16: memref<1x64xf32, #tpu.memory_space<vmem>>, %arg17: memref<64x128xbf16, #tpu.memory_space<vmem>>, %arg18: memref<1x9x128xf32, #tpu.memory_space<vmem>>, %arg19: memref<9x64xf32, #tpu.memory_space<vmem>>) attributes {dimension_semantics = [#tpu.dimension_semantics<parallel>, #tpu.dimension_semantics<arbitrary>], iteration_bounds = array<i64: 2, 4>, scalar_prefetch = 0 : i64, scratch_operands = 1 : i64, tpu.core_type = #tpu.core_type<tc>, window_params = [{transform_indices = @transform_0, window_bounds = array<i64: 1, 9, 64>}, {transform_indices = @transform_1, window_bounds = array<i64: 1, 1, 64>}, {transform_indices = @transform_2, window_bounds = array<i64: 1, 1, 64>}, {transform_indices = @transform_3, window_bounds = array<i64: 1, 1, 64>}, {transform_indices = @transform_4, window_bounds = array<i64: 1, 1, 64>}, {transform_indices = @transform_5, window_bounds = array<i64: 1, 64, 192>}, {transform_indices = @transform_6, window_bounds = array<i64: 1, 1, 192>}, {transform_indices = @transform_7, window_bounds = array<i64: 1, 64, 64>}, {transform_indices = @transform_8, window_bounds = array<i64: 1, 1, 64>}, {transform_indices = @transform_9, window_bounds = array<i64: 1, 64, 256>}, {transform_indices = @transform_10, window_bounds = array<i64: 1, 1, 256>}, {transform_indices = @transform_11, window_bounds = array<i64: 1, 256, 64>}, {transform_indices = @transform_12, window_bounds = array<i64: 1, 1, 64>}, {pipeline_mode = #tpu.pipeline_mode<synchronous>, transform_indices = @transform_13, window_bounds = array<i64: 1, 64>}, {pipeline_mode = #tpu.pipeline_mode<synchronous>, transform_indices = @transform_14, window_bounds = array<i64: 1, 64>}, {pipeline_mode = #tpu.pipeline_mode<synchronous>, transform_indices = @transform_15, window_bounds = array<i64: 64, 128>}, {transform_indices = @transform_16, window_bounds = array<i64: 1, 9, 128>}]} {
    %c0_i32 = arith.constant 0 : i32
    %0 = arith.cmpi eq, %arg1, %c0_i32 : i32
    %1 = arith.extui %0 : i1 to i32
    %c0_i32_0 = arith.constant 0 : i32
    %2 = arith.cmpi ne, %1, %c0_i32_0 : i32
    scf.if %2 {
      %c0_65 = arith.constant 0 : index
      %c0_66 = arith.constant 0 : index
      %c0_67 = arith.constant 0 : index
      %142 = vector.load %arg2[%c0_65, %c0_66, %c0_67] : memref<1x9x64xf32, #tpu.memory_space<vmem>>, vector<1x9x64xf32>
      %143 = vector.shape_cast %142 : vector<1x9x64xf32> to vector<9x64xf32>
      %c0_68 = arith.constant 0 : index
      %c0_69 = arith.constant 0 : index
      %144 = vector.load %arg19[%c0_68, %c0_69] : memref<9x64xf32, #tpu.memory_space<vmem>>, vector<9x64xf32>
      tpu.vector_store %arg19[%c0_68, %c0_69], %143 {strides = array<i32>} : memref<9x64xf32, #tpu.memory_space<vmem>>, vector<9x64xf32>,
    } else {
    }
    %c0 = arith.constant 0 : index
    %c0_1 = arith.constant 0 : index
    %3 = vector.load %arg19[%c0, %c0_1] : memref<9x64xf32, #tpu.memory_space<vmem>>, vector<9x64xf32>
    %4 = tpu.iota {dimensions = array<i32: 0>} : vector<9x9xi32>
    %5 = tpu.iota {dimensions = array<i32: 1>} : vector<9x9xi32>
    %6 = arith.cmpi sle, %5, %4 : vector<9x9xi32>
    %cst = arith.constant 0.000000e+00 : f32
    %cst_2 = arith.constant -1.000000e+09 : f32
    %7 = vector.broadcast %cst : f32 to vector<9x9xf32>
    %8 = vector.broadcast %cst_2 : f32 to vector<9x9xf32>
    %9 = arith.select %6, %7, %8 : vector<9x9xi1>, vector<9x9xf32>
    %c0_3 = arith.constant 0 : index
    %c0_4 = arith.constant 0 : index
    %c0_5 = arith.constant 0 : index
    %10 = vector.load %arg3[%c0_3, %c0_4, %c0_5] : memref<1x1x64xf32, #tpu.memory_space<vmem>>, vector<1x1x64xf32>
    %11 = vector.shape_cast %10 : vector<1x1x64xf32> to vector<1x64xf32>
    %c0_6 = arith.constant 0 : index
    %c0_7 = arith.constant 0 : index
    %c0_8 = arith.constant 0 : index
    %12 = vector.load %arg4[%c0_6, %c0_7, %c0_8] : memref<1x1x64xf32, #tpu.memory_space<vmem>>, vector<1x1x64xf32>
    %13 = vector.shape_cast %12 : vector<1x1x64xf32> to vector<1x64xf32>
    %cst_9 = arith.constant dense<0.000000e+00> : vector<9xf32>
    %14 = vector.multi_reduction <add>, %3, %cst_9 [1] : vector<9x64xf32> to vector<9xf32>
    %15 = vector.shape_cast %14 : vector<9xf32> to vector<9x1xf32>
    %cst_10 = arith.constant 6.400000e+01 : f32
    %16 = vector.broadcast %cst_10 : f32 to vector<9x1xf32>
    %17 = arith.divf %15, %16 : vector<9x1xf32>
    %18 = vector.broadcast %17 : vector<9x1xf32> to vector<9x64xf32>
    %19 = arith.subf %3, %18 : vector<9x64xf32>
    %20 = arith.mulf %19, %19 : vector<9x64xf32>
    %cst_11 = arith.constant dense<0.000000e+00> : vector<9xf32>
    %21 = vector.multi_reduction <add>, %20, %cst_11 [1] : vector<9x64xf32> to vector<9xf32>
    %22 = vector.shape_cast %21 : vector<9xf32> to vector<9x1xf32>
    %cst_12 = arith.constant 6.400000e+01 : f32
    %23 = vector.broadcast %cst_12 : f32 to vector<9x1xf32>
    %24 = arith.divf %22, %23 : vector<9x1xf32>
    %25 = vector.broadcast %17 : vector<9x1xf32> to vector<9x64xf32>
    %26 = arith.subf %3, %25 : vector<9x64xf32>
    %cst_13 = arith.constant 9.99999974E-6 : f32
    %27 = vector.broadcast %cst_13 : f32 to vector<9x1xf32>
    %28 = arith.addf %24, %27 : vector<9x1xf32>
    %29 = math.rsqrt %28 : vector<9x1xf32>
    %30 = vector.broadcast %29 : vector<9x1xf32> to vector<9x64xf32>
    %31 = arith.mulf %26, %30 : vector<9x64xf32>
    %32 = vector.broadcast %11 : vector<1x64xf32> to vector<9x64xf32>
    %33 = arith.mulf %31, %32 : vector<9x64xf32>
    %34 = vector.broadcast %13 : vector<1x64xf32> to vector<9x64xf32>
    %35 = arith.addf %33, %34 : vector<9x64xf32>
    %c0_14 = arith.constant 0 : index
    %c0_15 = arith.constant 0 : index
    %c0_16 = arith.constant 0 : index
    %36 = vector.load %arg7[%c0_14, %c0_15, %c0_16] : memref<1x64x192xbf16, #tpu.memory_space<vmem>>, vector<1x64x192xbf16>
    %37 = vector.shape_cast %36 : vector<1x64x192xbf16> to vector<64x192xbf16>
    %38 = arith.truncf %35 : vector<9x64xf32> to vector<9x64xbf16>
    %cst_17 = arith.constant dense<0.000000e+00> : vector<9x192xf32>
    %39 = tpu.matmul %38, %37, %cst_17 {dimension_numbers = #tpu.dot_dimension_numbers<[1], [0], [0], [1], [0, 0, 1, 1], [], []>} : vector<9x64xbf16>, vector<64x192xbf16>, vector<9x192xf32> -> vector<9x192xf32>
    %c0_18 = arith.constant 0 : index
    %c0_19 = arith.constant 0 : index
    %c0_20 = arith.constant 0 : index
    %40 = vector.load %arg8[%c0_18, %c0_19, %c0_20] : memref<1x1x192xf32, #tpu.memory_space<vmem>>, vector<1x1x192xf32>
    %41 = vector.shape_cast %40 : vector<1x1x192xf32> to vector<1x192xf32>
    %42 = vector.broadcast %41 : vector<1x192xf32> to vector<9x192xf32>
    %43 = arith.addf %39, %42 : vector<9x192xf32>
    %44 = vector.extract_strided_slice %43 {offsets = [0, 0], sizes = [9, 64], strides = [1, 1]} : vector<9x192xf32> to vector<9x64xf32>
    %45 = vector.shape_cast %44 : vector<9x64xf32> to vector<9x8x8xf32>
    %46 = arith.truncf %45 : vector<9x8x8xf32> to vector<9x8x8xbf16>
    %47 = vector.extract_strided_slice %43 {offsets = [0, 64], sizes = [9, 64], strides = [1, 1]} : vector<9x192xf32> to vector<9x64xf32>
    %48 = vector.shape_cast %47 : vector<9x64xf32> to vector<9x8x8xf32>
    %49 = arith.truncf %48 : vector<9x8x8xf32> to vector<9x8x8xbf16>
    %50 = vector.extract_strided_slice %43 {offsets = [0, 128], sizes = [9, 64], strides = [1, 1]} : vector<9x192xf32> to vector<9x64xf32>
    %51 = vector.shape_cast %50 : vector<9x64xf32> to vector<9x8x8xf32>
    %52 = arith.truncf %51 : vector<9x8x8xf32> to vector<9x8x8xbf16>
    "tpu.trace_start"() <{level = 10 : i32, message = "qhd,khd->hqk"}> : () -> ()
    %cst_21 = arith.constant dense<0.000000e+00> : vector<8x9x9xf32>
    %53 = tpu.matmul %46, %49, %cst_21 {dimension_numbers = #tpu.dot_dimension_numbers<[2], [2], [0], [0], [0, 1, 0, 0, 1, 0], [1], [1]>} : vector<9x8x8xbf16>, vector<9x8x8xbf16>, vector<8x9x9xf32> -> vector<8x9x9xf32>
    "tpu.trace_stop"() : () -> ()
    %cst_22 = arith.constant 0.353553385 : f32
    %54 = vector.broadcast %cst_22 : f32 to vector<8x9x9xf32>
    %55 = arith.mulf %53, %54 : vector<8x9x9xf32>
    %56 = vector.shape_cast %9 : vector<9x9xf32> to vector<1x9x9xf32>
    %57 = vector.broadcast %56 : vector<1x9x9xf32> to vector<8x9x9xf32>
    %58 = arith.addf %55, %57 : vector<8x9x9xf32>
    %cst_23 = arith.constant dense<0xFF800000> : vector<8x9xf32>
    %59 = vector.multi_reduction <maximumf>, %58, %cst_23 [2] : vector<8x9x9xf32> to vector<8x9xf32>
    %60 = vector.shape_cast %59 : vector<8x9xf32> to vector<8x9x1xf32>
    %61 = vector.broadcast %60 : vector<8x9x1xf32> to vector<8x9x9xf32>
    %62 = arith.subf %58, %61 : vector<8x9x9xf32>
    %63 = math.exp %62 : vector<8x9x9xf32>
    %cst_24 = arith.constant dense<0.000000e+00> : vector<8x9xf32>
    %64 = vector.multi_reduction <add>, %63, %cst_24 [2] : vector<8x9x9xf32> to vector<8x9xf32>
    %65 = vector.shape_cast %64 : vector<8x9xf32> to vector<8x9x1xf32>
    %66 = tpu.reciprocal %65 {approx = true} : vector<8x9x1xf32> -> vector<8x9x1xf32>
    %67 = vector.broadcast %66 : vector<8x9x1xf32> to vector<8x9x9xf32>
    %68 = arith.mulf %63, %67 : vector<8x9x9xf32>
    %69 = arith.truncf %68 : vector<8x9x9xf32> to vector<8x9x9xbf16>
    "tpu.trace_start"() <{level = 10 : i32, message = "hqk,khd->qhd"}> : () -> ()
    %cst_25 = arith.constant dense<0.000000e+00> : vector<8x8x9xf32>
    %70 = tpu.matmul %52, %69, %cst_25 {dimension_numbers = #tpu.dot_dimension_numbers<[0], [2], [2], [1], [0, 1, 0, 2, 1, 1], [1], [0]>} : vector<9x8x8xbf16>, vector<8x9x9xbf16>, vector<8x8x9xf32> -> vector<8x8x9xf32>
    %71 = tpu.transpose %70, [2, 0, 1] : vector<8x8x9xf32> -> vector<9x8x8xf32>
    "tpu.trace_stop"() : () -> ()
    %72 = vector.shape_cast %71 : vector<9x8x8xf32> to vector<9x64xf32>
    %c0_26 = arith.constant 0 : index
    %c0_27 = arith.constant 0 : index
    %c0_28 = arith.constant 0 : index
    %73 = vector.load %arg9[%c0_26, %c0_27, %c0_28] : memref<1x64x64xbf16, #tpu.memory_space<vmem>>, vector<1x64x64xbf16>
    %74 = vector.shape_cast %73 : vector<1x64x64xbf16> to vector<64x64xbf16>
    %75 = arith.truncf %72 : vector<9x64xf32> to vector<9x64xbf16>
    %cst_29 = arith.constant dense<0.000000e+00> : vector<9x64xf32>
    %76 = tpu.matmul %75, %74, %cst_29 {dimension_numbers = #tpu.dot_dimension_numbers<[1], [0], [0], [1], [0, 0, 1, 1], [], []>} : vector<9x64xbf16>, vector<64x64xbf16>, vector<9x64xf32> -> vector<9x64xf32>
    %77 = arith.addf %3, %76 : vector<9x64xf32>
    %c0_30 = arith.constant 0 : index
    %c0_31 = arith.constant 0 : index
    %c0_32 = arith.constant 0 : index
    %78 = vector.load %arg10[%c0_30, %c0_31, %c0_32] : memref<1x1x64xf32, #tpu.memory_space<vmem>>, vector<1x1x64xf32>
    %79 = vector.shape_cast %78 : vector<1x1x64xf32> to vector<1x64xf32>
    %80 = vector.broadcast %79 : vector<1x64xf32> to vector<9x64xf32>
    %81 = arith.addf %77, %80 : vector<9x64xf32>
    %c0_33 = arith.constant 0 : index
    %c0_34 = arith.constant 0 : index
    %c0_35 = arith.constant 0 : index
    %82 = vector.load %arg5[%c0_33, %c0_34, %c0_35] : memref<1x1x64xf32, #tpu.memory_space<vmem>>, vector<1x1x64xf32>
    %83 = vector.shape_cast %82 : vector<1x1x64xf32> to vector<1x64xf32>
    %c0_36 = arith.constant 0 : index
    %c0_37 = arith.constant 0 : index
    %c0_38 = arith.constant 0 : index
    %84 = vector.load %arg6[%c0_36, %c0_37, %c0_38] : memref<1x1x64xf32, #tpu.memory_space<vmem>>, vector<1x1x64xf32>
    %85 = vector.shape_cast %84 : vector<1x1x64xf32> to vector<1x64xf32>
    %cst_39 = arith.constant dense<0.000000e+00> : vector<9xf32>
    %86 = vector.multi_reduction <add>, %81, %cst_39 [1] : vector<9x64xf32> to vector<9xf32>
    %87 = vector.shape_cast %86 : vector<9xf32> to vector<9x1xf32>
    %cst_40 = arith.constant 6.400000e+01 : f32
    %88 = vector.broadcast %cst_40 : f32 to vector<9x1xf32>
    %89 = arith.divf %87, %88 : vector<9x1xf32>
    %90 = vector.broadcast %89 : vector<9x1xf32> to vector<9x64xf32>
    %91 = arith.subf %81, %90 : vector<9x64xf32>
    %92 = arith.mulf %91, %91 : vector<9x64xf32>
    %cst_41 = arith.constant dense<0.000000e+00> : vector<9xf32>
    %93 = vector.multi_reduction <add>, %92, %cst_41 [1] : vector<9x64xf32> to vector<9xf32>
    %94 = vector.shape_cast %93 : vector<9xf32> to vector<9x1xf32>
    %cst_42 = arith.constant 6.400000e+01 : f32
    %95 = vector.broadcast %cst_42 : f32 to vector<9x1xf32>
    %96 = arith.divf %94, %95 : vector<9x1xf32>
    %97 = vector.broadcast %89 : vector<9x1xf32> to vector<9x64xf32>
    %98 = arith.subf %81, %97 : vector<9x64xf32>
    %cst_43 = arith.constant 9.99999974E-6 : f32
    %99 = vector.broadcast %cst_43 : f32 to vector<9x1xf32>
    %100 = arith.addf %96, %99 : vector<9x1xf32>
    %101 = math.rsqrt %100 : vector<9x1xf32>
    %102 = vector.broadcast %101 : vector<9x1xf32> to vector<9x64xf32>
    %103 = arith.mulf %98, %102 : vector<9x64xf32>
    %104 = vector.broadcast %83 : vector<1x64xf32> to vector<9x64xf32>
    %105 = arith.mulf %103, %104 : vector<9x64xf32>
    %106 = vector.broadcast %85 : vector<1x64xf32> to vector<9x64xf32>
    %107 = arith.addf %105, %106 : vector<9x64xf32>
    %c0_44 = arith.constant 0 : index
    %c0_45 = arith.constant 0 : index
    %c0_46 = arith.constant 0 : index
    %108 = vector.load %arg11[%c0_44, %c0_45, %c0_46] : memref<1x64x256xbf16, #tpu.memory_space<vmem>>, vector<1x64x256xbf16>
    %109 = vector.shape_cast %108 : vector<1x64x256xbf16> to vector<64x256xbf16>
    %110 = arith.truncf %107 : vector<9x64xf32> to vector<9x64xbf16>
    %cst_47 = arith.constant dense<0.000000e+00> : vector<9x256xf32>
    %111 = tpu.matmul %110, %109, %cst_47 {dimension_numbers = #tpu.dot_dimension_numbers<[1], [0], [0], [1], [0, 0, 1, 1], [], []>} : vector<9x64xbf16>, vector<64x256xbf16>, vector<9x256xf32> -> vector<9x256xf32>
    %c0_48 = arith.constant 0 : index
    %c0_49 = arith.constant 0 : index
    %c0_50 = arith.constant 0 : index
    %112 = vector.load %arg12[%c0_48, %c0_49, %c0_50] : memref<1x1x256xf32, #tpu.memory_space<vmem>>, vector<1x1x256xf32>
    %113 = vector.shape_cast %112 : vector<1x1x256xf32> to vector<1x256xf32>
    %114 = vector.broadcast %113 : vector<1x256xf32> to vector<9x256xf32>
    %115 = arith.addf %111, %114 : vector<9x256xf32>
    %116 = arith.mulf %115, %115 : vector<9x256xf32>
    %117 = arith.mulf %115, %116 : vector<9x256xf32>
    %cst_51 = arith.constant 4.471500e-02 : f32
    %118 = vector.broadcast %cst_51 : f32 to vector<9x256xf32>
    %119 = arith.mulf %118, %117 : vector<9x256xf32>
    %120 = arith.addf %115, %119 : vector<9x256xf32>
    %cst_52 = arith.constant 0.797884583 : f32
    %121 = vector.broadcast %cst_52 : f32 to vector<9x256xf32>
    %122 = arith.mulf %121, %120 : vector<9x256xf32>
    %123 = math.tanh %122 : vector<9x256xf32>
    %cst_53 = arith.constant 1.000000e+00 : f32
    %124 = vector.broadcast %cst_53 : f32 to vector<9x256xf32>
    %125 = arith.addf %124, %123 : vector<9x256xf32>
    %cst_54 = arith.constant 5.000000e-01 : f32
    %126 = vector.broadcast %cst_54 : f32 to vector<9x256xf32>
    %127 = arith.mulf %126, %125 : vector<9x256xf32>
    %128 = arith.mulf %115, %127 : vector<9x256xf32>
    %c0_55 = arith.constant 0 : index
    %c0_56 = arith.constant 0 : index
    %c0_57 = arith.constant 0 : index
    %129 = vector.load %arg13[%c0_55, %c0_56, %c0_57] : memref<1x256x64xbf16, #tpu.memory_space<vmem>>, vector<1x256x64xbf16>
    %130 = vector.shape_cast %129 : vector<1x256x64xbf16> to vector<256x64xbf16>
    %131 = arith.truncf %128 : vector<9x256xf32> to vector<9x256xbf16>
    %cst_58 = arith.constant dense<0.000000e+00> : vector<9x64xf32>
    %132 = tpu.matmul %131, %130, %cst_58 {dimension_numbers = #tpu.dot_dimension_numbers<[1], [0], [0], [1], [0, 0, 1, 1], [], []>} : vector<9x256xbf16>, vector<256x64xbf16>, vector<9x64xf32> -> vector<9x64xf32>
    %133 = arith.addf %81, %132 : vector<9x64xf32>
    %c0_59 = arith.constant 0 : index
    %c0_60 = arith.constant 0 : index
    %c0_61 = arith.constant 0 : index
    %134 = vector.load %arg14[%c0_59, %c0_60, %c0_61] : memref<1x1x64xf32, #tpu.memory_space<vmem>>, vector<1x1x64xf32>
    %135 = vector.shape_cast %134 : vector<1x1x64xf32> to vector<1x64xf32>
    %136 = vector.broadcast %135 : vector<1x64xf32> to vector<9x64xf32>
    %137 = arith.addf %133, %136 : vector<9x64xf32>
    %c0_62 = arith.constant 0 : index
    %c0_63 = arith.constant 0 : index
    %138 = vector.load %arg19[%c0_62, %c0_63] : memref<9x64xf32, #tpu.memory_space<vmem>>, vector<9x64xf32>
    tpu.vector_store %arg19[%c0_62, %c0_63], %137 {strides = array<i32>} : memref<9x64xf32, #tpu.memory_space<vmem>>, vector<9x64xf32>,
    %c3_i32 = arith.constant 3 : i32
    %139 = arith.cmpi eq, %arg1, %c3_i32 : i32
    %140 = arith.extui %139 : i1 to i32
    %c0_i32_64 = arith.constant 0 : i32
    %141 = arith.cmpi ne, %140, %c0_i32_64 : i32
    scf.if %141 {
      %c0_65 = arith.constant 0 : index
      %c0_66 = arith.constant 0 : index
      %142 = vector.load %arg15[%c0_65, %c0_66] : memref<1x64xf32, #tpu.memory_space<vmem>>, vector<1x64xf32>
      %c0_67 = arith.constant 0 : index
      %c0_68 = arith.constant 0 : index
      %143 = vector.load %arg16[%c0_67, %c0_68] : memref<1x64xf32, #tpu.memory_space<vmem>>, vector<1x64xf32>
      %cst_69 = arith.constant dense<0.000000e+00> : vector<9xf32>
      %144 = vector.multi_reduction <add>, %137, %cst_69 [1] : vector<9x64xf32> to vector<9xf32>
      %145 = vector.shape_cast %144 : vector<9xf32> to vector<9x1xf32>
      %cst_70 = arith.constant 6.400000e+01 : f32
      %146 = vector.broadcast %cst_70 : f32 to vector<9x1xf32>
      %147 = arith.divf %145, %146 : vector<9x1xf32>
      %148 = vector.broadcast %147 : vector<9x1xf32> to vector<9x64xf32>
      %149 = arith.subf %137, %148 : vector<9x64xf32>
      %150 = arith.mulf %149, %149 : vector<9x64xf32>
      %cst_71 = arith.constant dense<0.000000e+00> : vector<9xf32>
      %151 = vector.multi_reduction <add>, %150, %cst_71 [1] : vector<9x64xf32> to vector<9xf32>
      %152 = vector.shape_cast %151 : vector<9xf32> to vector<9x1xf32>
      %cst_72 = arith.constant 6.400000e+01 : f32
      %153 = vector.broadcast %cst_72 : f32 to vector<9x1xf32>
      %154 = arith.divf %152, %153 : vector<9x1xf32>
      %155 = vector.broadcast %147 : vector<9x1xf32> to vector<9x64xf32>
      %156 = arith.subf %137, %155 : vector<9x64xf32>
      %cst_73 = arith.constant 9.99999974E-6 : f32
      %157 = vector.broadcast %cst_73 : f32 to vector<9x1xf32>
      %158 = arith.addf %154, %157 : vector<9x1xf32>
      %159 = math.rsqrt %158 : vector<9x1xf32>
      %160 = vector.broadcast %159 : vector<9x1xf32> to vector<9x64xf32>
      %161 = arith.mulf %156, %160 : vector<9x64xf32>
      %162 = vector.broadcast %142 : vector<1x64xf32> to vector<9x64xf32>
      %163 = arith.mulf %161, %162 : vector<9x64xf32>
      %164 = vector.broadcast %143 : vector<1x64xf32> to vector<9x64xf32>
      %165 = arith.addf %163, %164 : vector<9x64xf32>
      %c0_74 = arith.constant 0 : index
      %c0_75 = arith.constant 0 : index
      %166 = vector.load %arg17[%c0_74, %c0_75] : memref<64x128xbf16, #tpu.memory_space<vmem>>, vector<64x128xbf16>
      %167 = arith.truncf %165 : vector<9x64xf32> to vector<9x64xbf16>
      %cst_76 = arith.constant dense<0.000000e+00> : vector<9x128xf32>
      %168 = tpu.matmul %167, %166, %cst_76 {dimension_numbers = #tpu.dot_dimension_numbers<[1], [0], [0], [1], [0, 0, 1, 1], [], []>} : vector<9x64xbf16>, vector<64x128xbf16>, vector<9x128xf32> -> vector<9x128xf32>
      %c0_77 = arith.constant 0 : index
      %c0_78 = arith.constant 0 : index
      %c0_79 = arith.constant 0 : index
      %169 = vector.load %arg18[%c0_77, %c0_78, %c0_79] : memref<1x9x128xf32, #tpu.memory_space<vmem>>, vector<1x9x128xf32>
      %170 = vector.shape_cast %169 : vector<1x9x128xf32> to vector<9x128xf32>
      %171 = vector.shape_cast %168 : vector<9x128xf32> to vector<1x9x128xf32>
      tpu.vector_store %arg18[%c0_77, %c0_78, %c0_79], %171 {strides = array<i32>} : memref<1x9x128xf32, #tpu.memory_space<vmem>>, vector<1x9x128xf32>,
    } else {
    }
    return
  }
  func.func @transform_0(%arg0: i32, %arg1: i32) -> (i32, i32, i32) {
    %c0_i32 = arith.constant 0 : i32
    %c0_i32_0 = arith.constant 0 : i32
    %c0_i32_1 = arith.constant 0 : i32
    return %arg0, %c0_i32, %c0_i32_0 : i32, i32, i32
  }
  func.func @transform_1(%arg0: i32, %arg1: i32) -> (i32, i32, i32) {
    %c0_i32 = arith.constant 0 : i32
    %c0_i32_0 = arith.constant 0 : i32
    %c0_i32_1 = arith.constant 0 : i32
    return %arg1, %c0_i32, %c0_i32_0 : i32, i32, i32
  }
  func.func @transform_2(%arg0: i32, %arg1: i32) -> (i32, i32, i32) {
    %c0_i32 = arith.constant 0 : i32
    %c0_i32_0 = arith.constant 0 : i32
    %c0_i32_1 = arith.constant 0 : i32
    return %arg1, %c0_i32, %c0_i32_0 : i32, i32, i32
  }
  func.func @transform_3(%arg0: i32, %arg1: i32) -> (i32, i32, i32) {
    %c0_i32 = arith.constant 0 : i32
    %c0_i32_0 = arith.constant 0 : i32
    %c0_i32_1 = arith.constant 0 : i32
    return %arg1, %c0_i32, %c0_i32_0 : i32, i32, i32
  }
  func.func @transform_4(%arg0: i32, %arg1: i32) -> (i32, i32, i32) {
    %c0_i32 = arith.constant 0 : i32
    %c0_i32_0 = arith.constant 0 : i32
    %c0_i32_1 = arith.constant 0 : i32
    return %arg1, %c0_i32, %c0_i32_0 : i32, i32, i32
  }
  func.func @transform_5(%arg0: i32, %arg1: i32) -> (i32, i32, i32) {
    %c0_i32 = arith.constant 0 : i32
    %c0_i32_0 = arith.constant 0 : i32
    %c0_i32_1 = arith.constant 0 : i32
    return %arg1, %c0_i32, %c0_i32_0 : i32, i32, i32
  }
  func.func @transform_6(%arg0: i32, %arg1: i32) -> (i32, i32, i32) {
    %c0_i32 = arith.constant 0 : i32
    %c0_i32_0 = arith.constant 0 : i32
    %c0_i32_1 = arith.constant 0 : i32
    return %arg1, %c0_i32, %c0_i32_0 : i32, i32, i32
  }
  func.func @transform_7(%arg0: i32, %arg1: i32) -> (i32, i32, i32) {
    %c0_i32 = arith.constant 0 : i32
    %c0_i32_0 = arith.constant 0 : i32
    %c0_i32_1 = arith.constant 0 : i32
    return %arg1, %c0_i32, %c0_i32_0 : i32, i32, i32
  }
  func.func @transform_8(%arg0: i32, %arg1: i32) -> (i32, i32, i32) {
    %c0_i32 = arith.constant 0 : i32
    %c0_i32_0 = arith.constant 0 : i32
    %c0_i32_1 = arith.constant 0 : i32
    return %arg1, %c0_i32, %c0_i32_0 : i32, i32, i32
  }
  func.func @transform_9(%arg0: i32, %arg1: i32) -> (i32, i32, i32) {
    %c0_i32 = arith.constant 0 : i32
    %c0_i32_0 = arith.constant 0 : i32
    %c0_i32_1 = arith.constant 0 : i32
    return %arg1, %c0_i32, %c0_i32_0 : i32, i32, i32
  }
  func.func @transform_10(%arg0: i32, %arg1: i32) -> (i32, i32, i32) {
    %c0_i32 = arith.constant 0 : i32
    %c0_i32_0 = arith.constant 0 : i32
    %c0_i32_1 = arith.constant 0 : i32
    return %arg1, %c0_i32, %c0_i32_0 : i32, i32, i32
  }
  func.func @transform_11(%arg0: i32, %arg1: i32) -> (i32, i32, i32) {
    %c0_i32 = arith.constant 0 : i32
    %c0_i32_0 = arith.constant 0 : i32
    %c0_i32_1 = arith.constant 0 : i32
    return %arg1, %c0_i32, %c0_i32_0 : i32, i32, i32
  }
  func.func @transform_12(%arg0: i32, %arg1: i32) -> (i32, i32, i32) {
    %c0_i32 = arith.constant 0 : i32
    %c0_i32_0 = arith.constant 0 : i32
    %c0_i32_1 = arith.constant 0 : i32
    return %arg1, %c0_i32, %c0_i32_0 : i32, i32, i32
  }
  func.func @transform_13(%arg0: i32, %arg1: i32) -> (i32, i32) {
    %c0_i32 = arith.constant 0 : i32
    %c0_i32_0 = arith.constant 0 : i32
    %c0_i32_1 = arith.constant 0 : i32
    return %c0_i32, %c0_i32_0 : i32, i32
  }
  func.func @transform_14(%arg0: i32, %arg1: i32) -> (i32, i32) {
    %c0_i32 = arith.constant 0 : i32
    %c0_i32_0 = arith.constant 0 : i32
    %c0_i32_1 = arith.constant 0 : i32
    return %c0_i32, %c0_i32_0 : i32, i32
  }
  func.func @transform_15(%arg0: i32, %arg1: i32) -> (i32, i32) {
    %c0_i32 = arith.constant 0 : i32
    %c0_i32_0 = arith.constant 0 : i32
    %c0_i32_1 = arith.constant 0 : i32
    return %c0_i32, %c0_i32_0 : i32, i32
  }
  func.func @transform_16(%arg0: i32, %arg1: i32) -> (i32, i32, i32) {
    %c0_i32 = arith.constant 0 : i32
    %c0_i32_0 = arith.constant 0 : i32
    %c0_i32_1 = arith.constant 0 : i32
    return %arg0, %c0_i32, %c0_i32_0 : i32, i32, i32
  }
}

</mosaic_0001>

<llo_original>
// kernel: t2m_forward.2
$region0: #{t2m_forward.2}
  #allocation0 [shape = 'u32[]', space=smem, size = 0x4, offset = 0x4, fixed_abs, tag = 'smem constant byte address 0x4 - core index']
  #allocation1 [shape = 'u32[72,128]{1,0:T(1,128)}', space=vmem, size = 0x9000, scoped, tag = 'internal scratch']
  %s0 = inlined_call_operand.vmem [shape: f32[2,16,4], index: 0, kind: input, shape index: {}]
  %s1 = inlined_call_operand.vmem [shape: bf16[3,4,64], index: 1, kind: input, shape index: {}]
  %s2 = inlined_call_operand.vmem [shape: f32[1,64], index: 2, kind: input, shape index: {}, may-alias: {2,4,6,8,10,12,14,16}]
  %s3 = inlined_call_operand.hbm [shape: bf16[4,64,64], index: 3, kind: input, shape index: {}]
  %s4 = inlined_call_operand.vmem [shape: f32[1,64], index: 4, kind: input, shape index: {}, may-alias: {2,4,6,8,10,12,14,16}]
  %s5 = inlined_call_operand.hbm [shape: bf16[3,64,64], index: 5, kind: input, shape index: {}]
  %s6 = inlined_call_operand.vmem [shape: f32[1,64], index: 6, kind: input, shape index: {}, may-alias: {2,4,6,8,10,12,14,16}]
  %s7 = inlined_call_operand.vmem [shape: bf16[1,64,64], index: 7, kind: input, shape index: {}]
  %s8 = inlined_call_operand.vmem [shape: f32[1,64], index: 8, kind: input, shape index: {}, may-alias: {2,4,6,8,10,12,14,16}]
  %s9 = inlined_call_operand.hbm [shape: bf16[4,64,64], index: 9, kind: input, shape index: {}]
  %s10 = inlined_call_operand.vmem [shape: f32[1,64], index: 10, kind: input, shape index: {}, may-alias: {2,4,6,8,10,12,14,16}]
  %s11 = inlined_call_operand.hbm [shape: bf16[3,64,64], index: 11, kind: input, shape index: {}]
  %s12 = inlined_call_operand.vmem [shape: f32[1,64], index: 12, kind: input, shape index: {}, may-alias: {2,4,6,8,10,12,14,16}]
  %s13 = inlined_call_operand.hbm [shape: bf16[1,64,64], index: 13, kind: input, shape index: {}]
  %s14 = inlined_call_operand.vmem [shape: f32[1,64], index: 14, kind: input, shape index: {}, may-alias: {2,4,6,8,10,12,14,16}]
  %s15 = inlined_call_operand.hbm [shape: bf16[3,64,64], index: 15, kind: input, shape index: {}]
  %s16 = inlined_call_operand.vmem [shape: f32[1,64], index: 16, kind: input, shape index: {}, may-alias: {2,4,6,8,10,12,14,16}]
  %s17 = inlined_call_operand.vmem [shape: f32[2,4,64], index: 17, kind: output, shape index: {}]
  %s18 = sld [smem:[#allocation0]]
  $region125: #{t2m_forward.2} parent=0
    _
  %s20 = ssub.s32 1, %s18
  %s21 = scalar_select 0, %s20, %s18
  $region1: #{t2m_forward.2} parent=0
    #allocation2 [shape = 'u8[65536]{0}', space=vmem, size = 0x10000, scoped, tag = 'input window, operand 3, single buffered']
    #allocation3 [shape = 's32[2]{0}', space=sflag, size = 0x8, scoped, tag = 'scoped memory for t2m_forward.2']
    #allocation4 [shape = 'u8[49152]{0}', space=vmem, size = 0xc000, scoped, tag = 'input window, operand 5, single buffered']
    #allocation5 [shape = 's32[1]{0}', space=sflag, size = 0x4, scoped, tag = 'scoped memory for t2m_forward.2']
    #allocation6 [shape = 'u8[65536]{0}', space=vmem, size = 0x10000, scoped, tag = 'input window, operand 9, single buffered']
    #allocation7 [shape = 'u8[49152]{0}', space=vmem, size = 0xc000, scoped, tag = 'input window, operand 11, single buffered']
    #allocation8 [shape = 's32[1]{0}', space=sflag, size = 0x4, scoped, tag = 'scoped memory for t2m_forward.2']
    #allocation9 [shape = 'u8[16384]{0}', space=vmem, size = 0x4000, scoped, tag = 'input window, operand 13, single buffered']
    #allocation10 [shape = 'u8[49152]{0}', space=vmem, size = 0xc000, scoped, tag = 'input window, operand 15, single buffered']
    #allocation11 [shape = 's32[1]{0}', space=sflag, size = 0x4, scoped, tag = 'scoped memory for t2m_forward.2']
    %22 = vsyncpa [#allocation3], 0
    %23 = vsyncpa [#allocation5], 0
    %24 = vsyncpa [#allocation8], 0
    %25 = vsyncpa [#allocation11], 0
    loop: start=0, step=1, limit=4
    $region2: #{t2m_forward.2} parent=1 // loop_pre_header
      _
    $region3: #{t2m_forward.2} parent=1 // loop_header
      %s27 = sphi 0, %s31
      %p28 = scmp.ge.s32.totalorder %s27, 4
      %s37 = sphi 0, %s39
      %s40 = sphi 0, %s37
      %s41 = sphi 0, %s40
      %s57 = sphi 0, %s41
      %s61 = sphi 0, %s61
      %s63 = sphi 0, %s61
      %s64 = sphi 0, %s63
      %s78 = sphi 0, %s64
      %s82 = sphi 0, %s82
      %s84 = sphi 0, %s82
      %s85 = sphi 0, %s84
      %s99 = sphi 0, %s85
      %s103 = sphi 0, %s103
      %s105 = sphi 0, %s103
      %s106 = sphi 0, %s105
      %s120 = sphi 0, %s106
      %s124 = sphi 0, %s124
      %s126 = sphi 0, %s124
      %s127 = sphi 0, %s126
      %s141 = sphi 0, %s127
      %s145 = sphi 0, %s145
      %s147 = sphi 0, %s145
      %s148 = sphi 0, %s147
      %s162 = sphi 0, %s148
      %s166 = sphi 0, %s166
      %s168 = sphi 0, %s166
      %s169 = sphi 0, %s168
      %s183 = sphi 0, %s169
      %s187 = sphi 0, %s187
      %s189 = sphi 0, %s187
      %s190 = sphi 0, %s189
      %s204 = sphi 0, %s190
      %s208 = sphi 0, %s208
      %s210 = sphi 0, %s208
      %s211 = sphi 0, %s210
      %s225 = sphi 0, %s211
      %s229 = sphi 0, %s229
      %s231 = sphi 0, %s229
      %s232 = sphi 0, %s231
      %s246 = sphi 0, %s232
      %s250 = sphi 0, %s250
      %s252 = sphi 0, %s250
      %s253 = sphi 0, %s252
      %s267 = sphi 0, %s253
      %s271 = sphi 0, %s271
      %s273 = sphi 0, %s271
      %s274 = sphi 0, %s273
      %s288 = sphi 0, %s274
      %s292 = sphi 0, %s292
      %s294 = sphi 0, %s292
      %s295 = sphi 0, %s294
      %s309 = sphi 0, %s295
      %s313 = sphi 0, %s313
      %s315 = sphi 0, %s313
      %s316 = sphi 0, %s315
      %s330 = sphi 0, %s316
      %s334 = sphi 0, %s334
      %s336 = sphi 0, %s334
      %s337 = sphi 0, %s336
      %s351 = sphi 0, %s337
      %s355 = sphi 0, %s355
      %s357 = sphi 0, %s355
      %s358 = sphi 0, %s357
      %s372 = sphi 0, %s358
      %s376 = sphi 0, %s376
      %s378 = sphi 0, %s376
      %s379 = sphi 0, %s378
      %s393 = sphi 0, %s379
      %s399 = sphi 0, %s401
      %s402 = sphi 0, %s399
      %s403 = sphi 0, %s402
      %s419 = sphi 0, %s403
    $region4: #{t2m_forward.2} parent=1 // loop_header_branch
      %30 = sbr.rel (%p28) target = $region8
    $region5: #{t2m_forward.2} parent=1 // loop_body
      %s32 = ssub.s32 %s27, 1
      %s33 = ssub.s32 %s27, 2
      %s34 = sadd.s32 %s27, 1
      %s35 = ssub.s32 %s27, %s34
      %p36 = scmp.eq.s32.totalorder %s35, 0
      %s38 = sadd.s32 %s37, 1
      %s39 = scalar_select %p36, %s37, %s38
      %p42 = pneg %p36
      %p43 = scmp.eq.s32.totalorder %s27, 1
      %p44 = por %p42, %p43
      %p45 = scmp.ne.s32.totalorder %s37, %s40
      %p46 = scmp.eq.s32.totalorder %s27, 0
      %p47 = por %p45, %p46
      %p48 = scmp.ne.s32.totalorder %s37, %s40
      %p49 = scmp.eq.s32.totalorder %s32, 1
      %p50 = por %p48, %p49
      %p51 = scmp.ne.s32.totalorder %s40, %s41
      %p52 = scmp.eq.s32.totalorder %s32, 0
      %p53 = por %p51, %p52
      %p54 = scmp.ne.s32.totalorder %s40, %s41
      %p55 = scmp.eq.s32.totalorder %s33, 1
      %p56 = por %p54, %p55
      %p58 = scmp.ne.s32.totalorder %s41, %s57
      %p59 = scmp.eq.s32.totalorder %s33, 0
      %p60 = por %p58, %p59
      %s62 = sadd.s32 %s61, 1
      %p65 = scmp.eq.s32.totalorder %s27, 1
      %p66 = scmp.ne.s32.totalorder %s61, %s63
      %p67 = scmp.eq.s32.totalorder %s27, 0
      %p68 = por %p66, %p67
      %p69 = scmp.ne.s32.totalorder %s61, %s63
      %p70 = scmp.eq.s32.totalorder %s32, 1
      %p71 = por %p69, %p70
      %p72 = scmp.ne.s32.totalorder %s63, %s64
      %p73 = scmp.eq.s32.totalorder %s32, 0
      %p74 = por %p72, %p73
      %p75 = scmp.ne.s32.totalorder %s63, %s64
      %p76 = scmp.eq.s32.totalorder %s33, 1
      %p77 = por %p75, %p76
      %p79 = scmp.ne.s32.totalorder %s64, %s78
      %p80 = scmp.eq.s32.totalorder %s33, 0
      %p81 = por %p79, %p80
      %s83 = sadd.s32 %s82, 1
      %p86 = scmp.eq.s32.totalorder %s27, 1
      %p87 = scmp.ne.s32.totalorder %s82, %s84
      %p88 = scmp.eq.s32.totalorder %s27, 0
      %p89 = por %p87, %p88
      %p90 = scmp.ne.s32.totalorder %s82, %s84
      %p91 = scmp.eq.s32.totalorder %s32, 1
      %p92 = por %p90, %p91
      %p93 = scmp.ne.s32.totalorder %s84, %s85
      %p94 = scmp.eq.s32.totalorder %s32, 0
      %p95 = por %p93, %p94
      %p96 = scmp.ne.s32.totalorder %s84, %s85
      %p97 = scmp.eq.s32.totalorder %s33, 1
      %p98 = por %p96, %p97
      %p100 = scmp.ne.s32.totalorder %s85, %s99
      %p101 = scmp.eq.s32.totalorder %s33, 0
      %p102 = por %p100, %p101
      %s104 = sadd.s32 %s103, 1
      %p107 = scmp.eq.s32.totalorder %s27, 1
      %p108 = scmp.ne.s32.totalorder %s103, %s105
      %p109 = scmp.eq.s32.totalorder %s27, 0
      %p110 = por %p108, %p109
      %p111 = scmp.ne.s32.totalorder %s103, %s105
      %p112 = scmp.eq.s32.totalorder %s32, 1
      %p113 = por %p111, %p112
      %p114 = scmp.ne.s32.totalorder %s105, %s106
      %p115 = scmp.eq.s32.totalorder %s32, 0
      %p116 = por %p114, %p115
      %p117 = scmp.ne.s32.totalorder %s105, %s106
      %p118 = scmp.eq.s32.totalorder %s33, 1
      %p119 = por %p117, %p118
      %p121 = scmp.ne.s32.totalorder %s106, %s120
      %p122 = scmp.eq.s32.totalorder %s33, 0
      %p123 = por %p121, %p122
      %s125 = sadd.s32 %s124, 1
      %p128 = scmp.eq.s32.totalorder %s27, 1
      %p129 = scmp.ne.s32.totalorder %s124, %s126
      %p130 = scmp.eq.s32.totalorder %s27, 0
      %p131 = por %p129, %p130
      %p132 = scmp.ne.s32.totalorder %s124, %s126
      %p133 = scmp.eq.s32.totalorder %s32, 1
      %p134 = por %p132, %p133
      %p135 = scmp.ne.s32.totalorder %s126, %s127
      %p136 = scmp.eq.s32.totalorder %s32, 0
      %p137 = por %p135, %p136
      %p138 = scmp.ne.s32.totalorder %s126, %s127
      %p139 = scmp.eq.s32.totalorder %s33, 1
      %p140 = por %p138, %p139
      %p142 = scmp.ne.s32.totalorder %s127, %s141
      %p143 = scmp.eq.s32.totalorder %s33, 0
      %p144 = por %p142, %p143
      %s146 = sadd.s32 %s145, 1
      %p149 = scmp.eq.s32.totalorder %s27, 1
      %p150 = scmp.ne.s32.totalorder %s145, %s147
      %p151 = scmp.eq.s32.totalorder %s27, 0
      %p152 = por %p150, %p151
      %p153 = scmp.ne.s32.totalorder %s145, %s147
      %p154 = scmp.eq.s32.totalorder %s32, 1
      %p155 = por %p153, %p154
      %p156 = scmp.ne.s32.totalorder %s147, %s148
      %p157 = scmp.eq.s32.totalorder %s32, 0
      %p158 = por %p156, %p157
      %p159 = scmp.ne.s32.totalorder %s147, %s148
      %p160 = scmp.eq.s32.totalorder %s33, 1
      %p161 = por %p159, %p160
      %p163 = scmp.ne.s32.totalorder %s148, %s162
      %p164 = scmp.eq.s32.totalorder %s33, 0
      %p165 = por %p163, %p164
      %s167 = sadd.s32 %s166, 1
      %p170 = scmp.eq.s32.totalorder %s27, 1
      %p171 = scmp.ne.s32.totalorder %s166, %s168
      %p172 = scmp.eq.s32.totalorder %s27, 0
      %p173 = por %p171, %p172
      %p174 = scmp.ne.s32.totalorder %s166, %s168
      %p175 = scmp.eq.s32.totalorder %s32, 1
      %p176 = por %p174, %p175
      %p177 = scmp.ne.s32.totalorder %s168, %s169
      %p178 = scmp.eq.s32.totalorder %s32, 0
      %p179 = por %p177, %p178
      %p180 = scmp.ne.s32.totalorder %s168, %s169
      %p181 = scmp.eq.s32.totalorder %s33, 1
      %p182 = por %p180, %p181
      %p184 = scmp.ne.s32.totalorder %s169, %s183
      %p185 = scmp.eq.s32.totalorder %s33, 0
      %p186 = por %p184, %p185
      %s188 = sadd.s32 %s187, 1
      %p191 = scmp.eq.s32.totalorder %s27, 1
      %p192 = scmp.ne.s32.totalorder %s187, %s189
      %p193 = scmp.eq.s32.totalorder %s27, 0
      %p194 = por %p192, %p193
      %p195 = scmp.ne.s32.totalorder %s187, %s189
      %p196 = scmp.eq.s32.totalorder %s32, 1
      %p197 = por %p195, %p196
      %p198 = scmp.ne.s32.totalorder %s189, %s190
      %p199 = scmp.eq.s32.totalorder %s32, 0
      %p200 = por %p198, %p199
      %p201 = scmp.ne.s32.totalorder %s189, %s190
      %p202 = scmp.eq.s32.totalorder %s33, 1
      %p203 = por %p201, %p202
      %p205 = scmp.ne.s32.totalorder %s190, %s204
      %p206 = scmp.eq.s32.totalorder %s33, 0
      %p207 = por %p205, %p206
      %s209 = sadd.s32 %s208, 1
      %p212 = scmp.eq.s32.totalorder %s27, 1
      %p213 = scmp.ne.s32.totalorder %s208, %s210
      %p214 = scmp.eq.s32.totalorder %s27, 0
      %p215 = por %p213, %p214
      %p216 = scmp.ne.s32.totalorder %s208, %s210
      %p217 = scmp.eq.s32.totalorder %s32, 1
      %p218 = por %p216, %p217
      %p219 = scmp.ne.s32.totalorder %s210, %s211
      %p220 = scmp.eq.s32.totalorder %s32, 0
      %p221 = por %p219, %p220
      %p222 = scmp.ne.s32.totalorder %s210, %s211
      %p223 = scmp.eq.s32.totalorder %s33, 1
      %p224 = por %p222, %p223
      %p226 = scmp.ne.s32.totalorder %s211, %s225
      %p227 = scmp.eq.s32.totalorder %s33, 0
      %p228 = por %p226, %p227
      %s230 = sadd.s32 %s229, 1
      %p233 = scmp.eq.s32.totalorder %s27, 1
      %p234 = scmp.ne.s32.totalorder %s229, %s231
      %p235 = scmp.eq.s32.totalorder %s27, 0
      %p236 = por %p234, %p235
      %p237 = scmp.ne.s32.totalorder %s229, %s231
      %p238 = scmp.eq.s32.totalorder %s32, 1
      %p239 = por %p237, %p238
      %p240 = scmp.ne.s32.totalorder %s231, %s232
      %p241 = scmp.eq.s32.totalorder %s32, 0
      %p242 = por %p240, %p241
      %p243 = scmp.ne.s32.totalorder %s231, %s232
      %p244 = scmp.eq.s32.totalorder %s33, 1
      %p245 = por %p243, %p244
      %p247 = scmp.ne.s32.totalorder %s232, %s246
      %p248 = scmp.eq.s32.totalorder %s33, 0
      %p249 = por %p247, %p248
      %s251 = sadd.s32 %s250, 1
      %p254 = scmp.eq.s32.totalorder %s27, 1
      %p255 = scmp.ne.s32.totalorder %s250, %s252
      %p256 = scmp.eq.s32.totalorder %s27, 0
      %p257 = por %p255, %p256
      %p258 = scmp.ne.s32.totalorder %s250, %s252
      %p259 = scmp.eq.s32.totalorder %s32, 1
      %p260 = por %p258, %p259
      %p261 = scmp.ne.s32.totalorder %s252, %s253
      %p262 = scmp.eq.s32.totalorder %s32, 0
      %p263 = por %p261, %p262
      %p264 = scmp.ne.s32.totalorder %s252, %s253
      %p265 = scmp.eq.s32.totalorder %s33, 1
      %p266 = por %p264, %p265
      %p268 = scmp.ne.s32.totalorder %s253, %s267
      %p269 = scmp.eq.s32.totalorder %s33, 0
      %p270 = por %p268, %p269
      %s272 = sadd.s32 %s271, 1
      %p275 = scmp.eq.s32.totalorder %s27, 1
      %p276 = scmp.ne.s32.totalorder %s271, %s273
      %p277 = scmp.eq.s32.totalorder %s27, 0
      %p278 = por %p276, %p277
      %p279 = scmp.ne.s32.totalorder %s271, %s273
      %p280 = scmp.eq.s32.totalorder %s32, 1
      %p281 = por %p279, %p280
      %p282 = scmp.ne.s32.totalorder %s273, %s274
      %p283 = scmp.eq.s32.totalorder %s32, 0
      %p284 = por %p282, %p283
      %p285 = scmp.ne.s32.totalorder %s273, %s274
      %p286 = scmp.eq.s32.totalorder %s33, 1
      %p287 = por %p285, %p286
      %p289 = scmp.ne.s32.totalorder %s274, %s288
      %p290 = scmp.eq.s32.totalorder %s33, 0
      %p291 = por %p289, %p290
      %s293 = sadd.s32 %s292, 1
      %p296 = scmp.eq.s32.totalorder %s27, 1
      %p297 = scmp.ne.s32.totalorder %s292, %s294
      %p298 = scmp.eq.s32.totalorder %s27, 0
      %p299 = por %p297, %p298
      %p300 = scmp.ne.s32.totalorder %s292, %s294
      %p301 = scmp.eq.s32.totalorder %s32, 1
      %p302 = por %p300, %p301
      %p303 = scmp.ne.s32.totalorder %s294, %s295
      %p304 = scmp.eq.s32.totalorder %s32, 0
      %p305 = por %p303, %p304
      %p306 = scmp.ne.s32.totalorder %s294, %s295
      %p307 = scmp.eq.s32.totalorder %s33, 1
      %p308 = por %p306, %p307
      %p310 = scmp.ne.s32.totalorder %s295, %s309
      %p311 = scmp.eq.s32.totalorder %s33, 0
      %p312 = por %p310, %p311
      %s314 = sadd.s32 %s313, 1
      %p317 = scmp.eq.s32.totalorder %s27, 1
      %p318 = scmp.ne.s32.totalorder %s313, %s315
      %p319 = scmp.eq.s32.totalorder %s27, 0
      %p320 = por %p318, %p319
      %p321 = scmp.ne.s32.totalorder %s313, %s315
      %p322 = scmp.eq.s32.totalorder %s32, 1
      %p323 = por %p321, %p322
      %p324 = scmp.ne.s32.totalorder %s315, %s316
      %p325 = scmp.eq.s32.totalorder %s32, 0
      %p326 = por %p324, %p325
      %p327 = scmp.ne.s32.totalorder %s315, %s316
      %p328 = scmp.eq.s32.totalorder %s33, 1
      %p329 = por %p327, %p328
      %p331 = scmp.ne.s32.totalorder %s316, %s330
      %p332 = scmp.eq.s32.totalorder %s33, 0
      %p333 = por %p331, %p332
      %s335 = sadd.s32 %s334, 1
      %p338 = scmp.eq.s32.totalorder %s27, 1
      %p339 = scmp.ne.s32.totalorder %s334, %s336
      %p340 = scmp.eq.s32.totalorder %s27, 0
      %p341 = por %p339, %p340
      %p342 = scmp.ne.s32.totalorder %s334, %s336
      %p343 = scmp.eq.s32.totalorder %s32, 1
      %p344 = por %p342, %p343
      %p345 = scmp.ne.s32.totalorder %s336, %s337
      %p346 = scmp.eq.s32.totalorder %s32, 0
      %p347 = por %p345, %p346
      %p348 = scmp.ne.s32.totalorder %s336, %s337
      %p349 = scmp.eq.s32.totalorder %s33, 1
      %p350 = por %p348, %p349
      %p352 = scmp.ne.s32.totalorder %s337, %s351
      %p353 = scmp.eq.s32.totalorder %s33, 0
      %p354 = por %p352, %p353
      %s356 = sadd.s32 %s355, 1
      %p359 = scmp.eq.s32.totalorder %s27, 1
      %p360 = scmp.ne.s32.totalorder %s355, %s357
      %p361 = scmp.eq.s32.totalorder %s27, 0
      %p362 = por %p360, %p361
      %p363 = scmp.ne.s32.totalorder %s355, %s357
      %p364 = scmp.eq.s32.totalorder %s32, 1
      %p365 = por %p363, %p364
      %p366 = scmp.ne.s32.totalorder %s357, %s358
      %p367 = scmp.eq.s32.totalorder %s32, 0
      %p368 = por %p366, %p367
      %p369 = scmp.ne.s32.totalorder %s357, %s358
      %p370 = scmp.eq.s32.totalorder %s33, 1
      %p371 = por %p369, %p370
      %p373 = scmp.ne.s32.totalorder %s358, %s372
      %p374 = scmp.eq.s32.totalorder %s33, 0
      %p375 = por %p373, %p374
      %s377 = sadd.s32 %s376, 1
      %p380 = scmp.eq.s32.totalorder %s27, 1
      %p381 = scmp.ne.s32.totalorder %s376, %s378
      %p382 = scmp.eq.s32.totalorder %s27, 0
      %p383 = por %p381, %p382
      %p384 = scmp.ne.s32.totalorder %s376, %s378
      %p385 = scmp.eq.s32.totalorder %s32, 1
      %p386 = por %p384, %p385
      %p387 = scmp.ne.s32.totalorder %s378, %s379
      %p388 = scmp.eq.s32.totalorder %s32, 0
      %p389 = por %p387, %p388
      %p390 = scmp.ne.s32.totalorder %s378, %s379
      %p391 = scmp.eq.s32.totalorder %s33, 1
      %p392 = por %p390, %p391
      %p394 = scmp.ne.s32.totalorder %s379, %s393
      %p395 = scmp.eq.s32.totalorder %s33, 0
      %p396 = por %p394, %p395
      %s397 = ssub.s32 %s27, %s34
      %p398 = scmp.eq.s32.totalorder %s397, 0
      %s400 = sadd.s32 %s399, 1
      %s401 = scalar_select %p398, %s399, %s400
      %p404 = pneg %p398
      %p405 = scmp.eq.s32.totalorder %s27, 1
      %p406 = por %p404, %p405
      %p407 = scmp.ne.s32.totalorder %s399, %s402
      %p408 = scmp.eq.s32.totalorder %s27, 0
      %p409 = por %p407, %p408
      %p410 = scmp.ne.s32.totalorder %s399, %s402
      %p411 = scmp.eq.s32.totalorder %s32, 1
      %p412 = por %p410, %p411
      %p413 = scmp.ne.s32.totalorder %s402, %s403
      %p414 = scmp.eq.s32.totalorder %s32, 0
      %p415 = por %p413, %p414
      %p416 = scmp.ne.s32.totalorder %s402, %s403
      %p417 = scmp.eq.s32.totalorder %s33, 1
      %p418 = por %p416, %p417
      %p420 = scmp.ne.s32.totalorder %s403, %s419
      %p421 = scmp.eq.s32.totalorder %s33, 0
      %p422 = por %p420, %p421
      %p423 = scmp.le.s32.totalorder 1, %s27
      %p424 = scmp.lt.s32.totalorder %s27, 3
      %p425 = pnand %p423, %p424
      %p426 = pneg %p425
      // Predicated region
      $region9: #{t2m_forward.2} parent=5 // pred_check
        _
      $region10: #{t2m_forward.2} parent=5 // pred_check_branch
        %428 = sbr.rel (%p425) target = $region12
      $region11: #{t2m_forward.2} parent=5 // pred_region
        %s429 = ssub.s32 %s27, 1
        // Predicated region
        $region13: #{t2m_forward.2} parent=11 // pred_check
          %p430 = pneg %p74
        $region14: #{t2m_forward.2} parent=11 // pred_check_branch
          %432 = sbr.rel (%p430) target = $region16
        $region15: #{t2m_forward.2} parent=11 // pred_region
          _
        $region16: #{t2m_forward.2} parent=11 // pred_fallthru
          _
        // Predicated region
        $region17: #{t2m_forward.2} parent=11 // pred_check
          %p433 = pneg %p95
        $region18: #{t2m_forward.2} parent=11 // pred_check_branch
          %435 = sbr.rel (%p433) target = $region20
        $region19: #{t2m_forward.2} parent=11 // pred_region
          _
        $region20: #{t2m_forward.2} parent=11 // pred_fallthru
          _
        // Predicated region
        $region21: #{t2m_forward.2} parent=11 // pred_check
          %p436 = pneg %p116
        $region22: #{t2m_forward.2} parent=11 // pred_check_branch
          %438 = sbr.rel (%p436) target = $region24
        $region23: #{t2m_forward.2} parent=11 // pred_region
          %440 = vsyncadd [#allocation3], 0
          %s441 = sshll.u32 %s3, 4
          %s442 = int_to_ptr.hbm [resolvable:$true] %s441
          %s443 = sshll.u32 [#allocation2], 4
          %s444 = int_to_ptr.vmem [resolvable:$true] %s443
          %449 = dma.hbm_to_vmem [thread:$0]  %s442, 2048, %s444, [#allocation3], 64, 64, 4
        $region24: #{t2m_forward.2} parent=11 // pred_fallthru
          _
        // Predicated region
        $region25: #{t2m_forward.2} parent=11 // pred_check
          %p450 = pneg %p137
        $region26: #{t2m_forward.2} parent=11 // pred_check_branch
          %452 = sbr.rel (%p450) target = $region28
        $region27: #{t2m_forward.2} parent=11 // pred_region
          _
        $region28: #{t2m_forward.2} parent=11 // pred_fallthru
          _
        // Predicated region
        $region29: #{t2m_forward.2} parent=11 // pred_check
          %p453 = pneg %p158
        $region30: #{t2m_forward.2} parent=11 // pred_check_branch
          %455 = sbr.rel (%p453) target = $region32
        $region31: #{t2m_forward.2} parent=11 // pred_region
          %457 = vsyncadd [#allocation5], 0
          %s458 = sshll.u32 %s5, 4
          %s459 = int_to_ptr.hbm [resolvable:$true] %s458
          %s460 = sshll.u32 [#allocation4], 4
          %s461 = int_to_ptr.vmem [resolvable:$true] %s460
          %466 = dma.hbm_to_vmem [thread:$0]  %s459, 1536, %s461, [#allocation5], 64, 64, 4
        $region32: #{t2m_forward.2} parent=11 // pred_fallthru
          _
        // Predicated region
        $region33: #{t2m_forward.2} parent=11 // pred_check
          %p467 = pneg %p179
        $region34: #{t2m_forward.2} parent=11 // pred_check_branch
          %469 = sbr.rel (%p467) target = $region36
        $region35: #{t2m_forward.2} parent=11 // pred_region
          _
        $region36: #{t2m_forward.2} parent=11 // pred_fallthru
          _
        // Predicated region
        $region37: #{t2m_forward.2} parent=11 // pred_check
          %p470 = pneg %p200
        $region38: #{t2m_forward.2} parent=11 // pred_check_branch
          %472 = sbr.rel (%p470) target = $region40
        $region39: #{t2m_forward.2} parent=11 // pred_region
          _
        $region40: #{t2m_forward.2} parent=11 // pred_fallthru
          _
        // Predicated region
        $region41: #{t2m_forward.2} parent=11 // pred_check
          %p473 = pneg %p221
        $region42: #{t2m_forward.2} parent=11 // pred_check_branch
          %475 = sbr.rel (%p473) target = $region44
        $region43: #{t2m_forward.2} parent=11 // pred_region
          _
        $region44: #{t2m_forward.2} parent=11 // pred_fallthru
          _
        // Predicated region
        $region45: #{t2m_forward.2} parent=11 // pred_check
          %p476 = pneg %p242
        $region46: #{t2m_forward.2} parent=11 // pred_check_branch
          %478 = sbr.rel (%p476) target = $region48
        $region47: #{t2m_forward.2} parent=11 // pred_region
          %480 = vsyncadd [#allocation5], 0
          %s481 = sshll.u32 %s9, 4
          %s482 = int_to_ptr.hbm [resolvable:$true] %s481
          %s483 = sshll.u32 [#allocation6], 4
          %s484 = int_to_ptr.vmem [resolvable:$true] %s483
          %489 = dma.hbm_to_vmem [thread:$0]  %s482, 2048, %s484, [#allocation5], 64, 64, 4
        $region48: #{t2m_forward.2} parent=11 // pred_fallthru
          _
        // Predicated region
        $region49: #{t2m_forward.2} parent=11 // pred_check
          %p490 = pneg %p263
        $region50: #{t2m_forward.2} parent=11 // pred_check_branch
          %492 = sbr.rel (%p490) target = $region52
        $region51: #{t2m_forward.2} parent=11 // pred_region
          _
        $region52: #{t2m_forward.2} parent=11 // pred_fallthru
          _
        // Predicated region
        $region53: #{t2m_forward.2} parent=11 // pred_check
          %p493 = pneg %p284
        $region54: #{t2m_forward.2} parent=11 // pred_check_branch
          %495 = sbr.rel (%p493) target = $region56
        $region55: #{t2m_forward.2} parent=11 // pred_region
          %497 = vsyncadd [#allocation8], 0
          %s498 = sshll.u32 %s11, 4
          %s499 = int_to_ptr.hbm [resolvable:$true] %s498
          %s500 = sshll.u32 [#allocation7], 4
          %s501 = int_to_ptr.vmem [resolvable:$true] %s500
          %506 = dma.hbm_to_vmem [thread:$0]  %s499, 1536, %s501, [#allocation8], 64, 64, 4
        $region56: #{t2m_forward.2} parent=11 // pred_fallthru
          _
        // Predicated region
        $region57: #{t2m_forward.2} parent=11 // pred_check
          %p507 = pneg %p305
        $region58: #{t2m_forward.2} parent=11 // pred_check_branch
          %509 = sbr.rel (%p507) target = $region60
        $region59: #{t2m_forward.2} parent=11 // pred_region
          _
        $region60: #{t2m_forward.2} parent=11 // pred_fallthru
          _
        // Predicated region
        $region61: #{t2m_forward.2} parent=11 // pred_check
          %p510 = pneg %p326
        $region62: #{t2m_forward.2} parent=11 // pred_check_branch
          %512 = sbr.rel (%p510) target = $region64
        $region63: #{t2m_forward.2} parent=11 // pred_region
          %514 = vsyncadd [#allocation8], 0
          %s515 = sshll.u32 %s13, 4
          %s516 = int_to_ptr.hbm [resolvable:$true] %s515
          %s517 = sshll.u32 [#allocation9], 4
          %s518 = int_to_ptr.vmem [resolvable:$true] %s517
          %523 = dma.hbm_to_vmem [thread:$0]  %s516, 512, %s518, [#allocation8], 64, 64, 4
        $region64: #{t2m_forward.2} parent=11 // pred_fallthru
          _
        // Predicated region
        $region65: #{t2m_forward.2} parent=11 // pred_check
          %p524 = pneg %p347
        $region66: #{t2m_forward.2} parent=11 // pred_check_branch
          %526 = sbr.rel (%p524) target = $region68
        $region67: #{t2m_forward.2} parent=11 // pred_region
          _
        $region68: #{t2m_forward.2} parent=11 // pred_fallthru
          _
        // Predicated region
        $region69: #{t2m_forward.2} parent=11 // pred_check
          %p527 = pneg %p368
        $region70: #{t2m_forward.2} parent=11 // pred_check_branch
          %529 = sbr.rel (%p527) target = $region72
        $region71: #{t2m_forward.2} parent=11 // pred_region
          %531 = vsyncadd [#allocation11], 0
          %s532 = sshll.u32 %s15, 4
          %s533 = int_to_ptr.hbm [resolvable:$true] %s532
          %s534 = sshll.u32 [#allocation10], 4
          %s535 = int_to_ptr.vmem [resolvable:$true] %s534
          %540 = dma.hbm_to_vmem [thread:$0]  %s533, 1536, %s535, [#allocation11], 64, 64, 4
        $region72: #{t2m_forward.2} parent=11 // pred_fallthru
          _
        // Predicated region
        $region73: #{t2m_forward.2} parent=11 // pred_check
          %p541 = pneg %p389
        $region74: #{t2m_forward.2} parent=11 // pred_check_branch
          %543 = sbr.rel (%p541) target = $region76
        $region75: #{t2m_forward.2} parent=11 // pred_region
          _
        $region76: #{t2m_forward.2} parent=11 // pred_fallthru
          _
      $region12: #{t2m_forward.2} parent=5 // pred_fallthru
        _
      %p544 = scmp.lt.s32.totalorder %s27, 2
      // Predicated region
      $region77: #{t2m_forward.2} parent=5 // pred_check
        %p545 = pneg %p544
      $region78: #{t2m_forward.2} parent=5 // pred_check_branch
        %547 = sbr.rel (%p545) target = $region80
      $region79: #{t2m_forward.2} parent=5 // pred_region
        // Predicated region
        $region81: #{t2m_forward.2} parent=79 // pred_check
          %p548 = pneg %p47
        $region82: #{t2m_forward.2} parent=79 // pred_check_branch
          %550 = sbr.rel (%p548) target = $region84
        $region83: #{t2m_forward.2} parent=79 // pred_region
          %p551 = scmp.lt.s32.totalorder %s27, 1
          %s552 = scalar_select %p551, %s27, 1
          %s553 = smul.addr %s552, 2
          %s554 = smul.addr %s553, 8
          %s555 = scalar_lea.vmem %s0, %s554
        $region84: #{t2m_forward.2} parent=79 // pred_fallthru
          _
      $region80: #{t2m_forward.2} parent=5 // pred_fallthru
        _
      %p556 = scmp.le.s32.totalorder 1, %s27
      %p557 = scmp.lt.s32.totalorder %s27, 3
      %p558 = pnand %p556, %p557
      %p559 = pneg %p558
      // Predicated region
      $region85: #{t2m_forward.2} parent=5 // pred_check
        _
      $region86: #{t2m_forward.2} parent=5 // pred_check_branch
        %561 = sbr.rel (%p558) target = $region88
      $region87: #{t2m_forward.2} parent=5 // pred_region
        %s562 = ssub.s32 %s27, 1
        // Predicated region
        $region89: #{t2m_forward.2} parent=87 // pred_check
          %p563 = pneg %p116
        $region90: #{t2m_forward.2} parent=87 // pred_check_branch
          %565 = sbr.rel (%p563) target = $region92
        $region91: #{t2m_forward.2} parent=87 // pred_region
          %567 = dma.done [#allocation3], 2048
        $region92: #{t2m_forward.2} parent=87 // pred_fallthru
          _
        // Predicated region
        $region93: #{t2m_forward.2} parent=87 // pred_check
          %p568 = pneg %p158
        $region94: #{t2m_forward.2} parent=87 // pred_check_branch
          %570 = sbr.rel (%p568) target = $region96
        $region95: #{t2m_forward.2} parent=87 // pred_region
          %572 = dma.done [#allocation5], 1536
        $region96: #{t2m_forward.2} parent=87 // pred_fallthru
          _
        // Predicated region
        $region97: #{t2m_forward.2} parent=87 // pred_check
          %p573 = pneg %p242
        $region98: #{t2m_forward.2} parent=87 // pred_check_branch
          %575 = sbr.rel (%p573) target = $region100
        $region99: #{t2m_forward.2} parent=87 // pred_region
          %577 = dma.done [#allocation5], 2048
        $region100: #{t2m_forward.2} parent=87 // pred_fallthru
          _
        // Predicated region
        $region101: #{t2m_forward.2} parent=87 // pred_check
          %p578 = pneg %p284
        $region102: #{t2m_forward.2} parent=87 // pred_check_branch
          %580 = sbr.rel (%p578) target = $region104
        $region103: #{t2m_forward.2} parent=87 // pred_region
          %582 = dma.done [#allocation8], 1536
        $region104: #{t2m_forward.2} parent=87 // pred_fallthru
          _
        // Predicated region
        $region105: #{t2m_forward.2} parent=87 // pred_check
          %p583 = pneg %p326
        $region106: #{t2m_forward.2} parent=87 // pred_check_branch
          %585 = sbr.rel (%p583) target = $region108
        $region107: #{t2m_forward.2} parent=87 // pred_region
          %587 = dma.done [#allocation8], 512
        $region108: #{t2m_forward.2} parent=87 // pred_fallthru
          _
        // Predicated region
        $region109: #{t2m_forward.2} parent=87 // pred_check
          %p588 = pneg %p368
        $region110: #{t2m_forward.2} parent=87 // pred_check_branch
          %590 = sbr.rel (%p588) target = $region112
        $region111: #{t2m_forward.2} parent=87 // pred_region
          %592 = dma.done [#allocation11], 1536
        $region112: #{t2m_forward.2} parent=87 // pred_fallthru
          _
        %p593 = scmp.lt.s32.totalorder %s32, 1
        %s594 = scalar_select %p593, %s32, 1
        %s595 = smul.addr %s594, 2
        %s596 = smul.addr %s595, 8
        %s597 = scalar_lea.vmem %s0, %s596
        %p598 = pneg %p53
        %p599 = pneg %p50
        %p600 = pneg %p74
        %p601 = pneg %p71
        %p602 = pneg %p95
        %p603 = pneg %p92
        %p604 = pneg %p116
        %p605 = pneg %p113
        %p606 = pneg %p137
        %p607 = pneg %p134
        %p608 = pneg %p158
        %p609 = pneg %p155
        %p610 = pneg %p179
        %p611 = pneg %p176
        %p612 = pneg %p200
        %p613 = pneg %p197
        %p614 = pneg %p221
        %p615 = pneg %p218
        %p616 = pneg %p242
        %p617 = pneg %p239
        %p618 = pneg %p263
        %p619 = pneg %p260
        %p620 = pneg %p284
        %p621 = pneg %p281
        %p622 = pneg %p305
        %p623 = pneg %p302
        %p624 = pneg %p326
        %p625 = pneg %p323
        %p626 = pneg %p347
        %p627 = pneg %p344
        %p628 = pneg %p368
        %p629 = pneg %p365
        %p630 = pneg %p389
        %p631 = pneg %p386
        %p632 = pneg %p415
        %p633 = pneg %p412
        %p634 = scmp.lt.s32.totalorder %s32, 1
        %s635 = scalar_select %p634, %s32, 1
        %s636 = smul.addr %s635, 4
        %s637 = scalar_lea.vmem %s17, %s636
        %p638 = scmp.lt.s32.totalorder %s32, 1
        %s639 = scalar_select %p638, %s32, 1
        %s640 = smul.addr %s639, 2
        %s641 = smul.addr %s640, 8
        %s642 = scalar_lea.vmem %s0, %s641
        %p643 = scmp.lt.s32.totalorder %s32, 1
        %s644 = scalar_select %p643, %s32, 1
        %s645 = smul.addr %s644, 4
        %s646 = scalar_lea.vmem %s17, %s645
        %v648 = vld [vmem:[%s642] sm:$0xff]
        %v649 = vld [vmem:[%s642 + $0x8] sm:$0xff]
        %v650 = vpack.c.bf16 %v648, %v648
        %v651 = vpack.c.bf16 %v649, %v649
        %v652 = vld [vmem:[%s2] sm:$0x1]
        %v655 = vunpack.c.l.b16 %v650
        %v656 = vunpack.c.l.b16 %v651
        %v657 = vpack.c.b16 %v656, %v655
        %v659 = vshrl.u32 %v657, 16
        %v661 = vrot.slane %v659, 7
        %v662 = vshll.u32 %v657, 16
        %v664 = vor.u32 %v661, %v662
        %vm666 = vcmask 1040384
        %vm667 = vsmask.f32 256
        %vm668 = vmand %vm666, %vm667
        %v669 = vsel %vm668, 0, %v664
        %v670 = vld [vmem:[%s1] sm:$0x3]
        %vm671 = vcmask 31744
        %v673 = vsel %vm671, %v669, 0
        %vm675 = vcmask 1041408
        %v677 = vsel %vm675, %v670, 0
        %679 = vmatpush.bf16.msra.mxu0 0
        %680 = vmatpush.bf16.msra.mxu0 0
        %681 = vmatpush.bf16.msra.mxu0 0
        %682 = vmatpush.bf16.msra.mxu0 0
        %683 = vmatpush.bf16.msra.mxu0 0
        %684 = vmatpush.bf16.msra.mxu0 0
        %685 = vmatpush.bf16.msra.mxu0 0
        %686 = vmatpush.bf16.msra.mxu0 %v677
        %687 = vmatmul.bf16.gmra.mxu0 %v673
        %v688 = vpop.f32.mrf.mxu0
        %v689 = vadd.f32 0.0, %v688
        %v690 = vpop.f32.mrf.mxu0
        %v691 = vadd.f32 0.0, %v690
        %692 = vdwg.mxu0
        %v694 = vperm.slane %v652, 0
        %v696 = vadd.f32 %v694, %v689
        %v697 = vadd.f32 %v694, %v691
        %s698 = scalar_lea.vmem %s1, 2
        %v699 = vld [vmem:[%s698] sm:$0x3]
        %v700 = vsel %vm671, %v657, 0
        %v703 = vsel %vm675, %v699, 0
        %705 = vmatpush.bf16.msra.mxu0 0
        %706 = vmatpush.bf16.msra.mxu0 0
        %707 = vmatpush.bf16.msra.mxu0 0
        %708 = vmatpush.bf16.msra.mxu0 0
        %709 = vmatpush.bf16.msra.mxu0 0
        %710 = vmatpush.bf16.msra.mxu0 0
        %711 = vmatpush.bf16.msra.mxu0 0
        %712 = vmatpush.bf16.msra.mxu0 %v703
        %713 = vmatmul.bf16.gmra.mxu0 %v700
        %v714 = vpop.f32.mrf.mxu0
        %v715 = vadd.f32 0.0, %v714
        %v716 = vpop.f32.mrf.mxu0
        %v717 = vadd.f32 0.0, %v716
        %718 = vdwg.mxu0
        %v719 = vadd.f32 %v696, %v715
        %v720 = vadd.f32 %v697, %v717
        %v721 = vrot.slane %v662, 1
        %v722 = vor.u32 %v659, %v721
        %vm724 = vcmask 1047552
        %vm725 = vsmask.f32 7424
        %vm726 = vmand %vm724, %vm725
        %v727 = vsel %vm726, %v722, 0
        %s728 = scalar_lea.vmem %s1, 4
        %v729 = vld [vmem:[%s728] sm:$0x3]
        %v731 = vsel %vm671, %v727, 0
        %v734 = vsel %vm675, %v729, 0
        %736 = vmatpush.bf16.msra.mxu0 0
        %737 = vmatpush.bf16.msra.mxu0 0
        %738 = vmatpush.bf16.msra.mxu0 0
        %739 = vmatpush.bf16.msra.mxu0 0
        %740 = vmatpush.bf16.msra.mxu0 0
        %741 = vmatpush.bf16.msra.mxu0 0
        %742 = vmatpush.bf16.msra.mxu0 0
        %743 = vmatpush.bf16.msra.mxu0 %v734
        %744 = vmatmul.bf16.gmra.mxu0 %v731
        %v745 = vpop.f32.mrf.mxu0
        %v746 = vadd.f32 0.0, %v745
        %v747 = vpop.f32.mrf.mxu0
        %v748 = vadd.f32 0.0, %v747
        %749 = vdwg.mxu0
        %v750 = vadd.f32 %v719, %v746
        %v751 = vadd.f32 %v720, %v748
        %v752 = vmax.f32 %v750, 0.0
        %v753 = vmax.f32 %v751, 0.0
        %v754 = vpack.c.bf16 %v752, %v752
        %v755 = vpack.c.bf16 %v753, %v753
        %v756 = vld [vmem:[%s4] sm:$0x1]
        %v759 = vunpack.c.l.b16 %v754
        %v760 = vunpack.c.l.b16 %v755
        %v761 = vpack.c.b16 %v760, %v759
        %v763 = vshrl.u32 %v761, 16
        %v765 = vrot.slane %v763, 7
        %v766 = vshll.u32 %v761, 16
        %v768 = vor.u32 %v765, %v766
        %v770 = vsel %vm668, 0, %v768
        %v771 = vld [vmem:[#allocation2] sm:$0xf]
        %v772 = vld [vmem:[#allocation2 + $0x4] sm:$0xf]
        %v773 = vld [vmem:[#allocation2 + $0x8] sm:$0xf]
        %v774 = vld [vmem:[#allocation2 + $0xc] sm:$0xf]
        %v775 = vld [vmem:[#allocation2 + $0x10] sm:$0xf]
        %v776 = vld [vmem:[#allocation2 + $0x14] sm:$0xf]
        %v777 = vld [vmem:[#allocation2 + $0x18] sm:$0xf]
        %v778 = vld [vmem:[#allocation2 + $0x1c] sm:$0xf]
        %v787 = vunpack.c.l.b16 %v771
        %v788 = vunpack.c.l.b16 %v772
        %v789 = vunpack.c.l.b16 %v773
        %v790 = vunpack.c.l.b16 %v774
        %v791 = vunpack.c.l.b16 %v775
        %v792 = vunpack.c.l.b16 %v776
        %v793 = vunpack.c.l.b16 %v777
        %v794 = vunpack.c.l.b16 %v778
        %v795 = vpack.c.b16 %v788, %v787
        %v796 = vpack.c.b16 %v790, %v789
        %v797 = vpack.c.b16 %v792, %v791
        %v798 = vpack.c.b16 %v794, %v793
        %vm803 = vcmask 523264
        %v805 = vsel %vm803, %v770, 0
        %807 = vmatpush.bf16.msra.mxu0 0
        %808 = vmatpush.bf16.msra.mxu0 0
        %809 = vmatpush.bf16.msra.mxu0 0
        %810 = vmatpush.bf16.msra.mxu0 0
        %811 = vmatpush.bf16.msra.mxu0 %v798
        %812 = vmatpush.bf16.msra.mxu0 %v797
        %813 = vmatpush.bf16.msra.mxu0 %v796
        %814 = vmatpush.bf16.msra.mxu0 %v795
        %815 = vmatmul.bf16.gmra.mxu0 %v805
        %v816 = vpop.f32.mrf.mxu0
        %v817 = vadd.f32 0.0, %v816
        %v818 = vpop.f32.mrf.mxu0
        %v819 = vadd.f32 0.0, %v818
        %820 = vdwg.mxu0
        %v822 = vperm.slane %v756, 0
        %v824 = vadd.f32 %v822, %v817
        %v825 = vadd.f32 %v822, %v819
        %s826 = scalar_lea.vmem [#allocation2], 32
        %v827 = vld [vmem:[%s826] sm:$0xf]
        %v828 = vld [vmem:[%s826 + $0x4] sm:$0xf]
        %v829 = vld [vmem:[%s826 + $0x8] sm:$0xf]
        %v830 = vld [vmem:[%s826 + $0xc] sm:$0xf]
        %v831 = vld [vmem:[%s826 + $0x10] sm:$0xf]
        %v832 = vld [vmem:[%s826 + $0x14] sm:$0xf]
        %v833 = vld [vmem:[%s826 + $0x18] sm:$0xf]
        %v834 = vld [vmem:[%s826 + $0x1c] sm:$0xf]
        %v843 = vunpack.c.l.b16 %v827
        %v844 = vunpack.c.l.b16 %v828
        %v845 = vunpack.c.l.b16 %v829
        %v846 = vunpack.c.l.b16 %v830
        %v847 = vunpack.c.l.b16 %v831
        %v848 = vunpack.c.l.b16 %v832
        %v849 = vunpack.c.l.b16 %v833
        %v850 = vunpack.c.l.b16 %v834
        %v851 = vpack.c.b16 %v844, %v843
        %v852 = vpack.c.b16 %v846, %v845
        %v853 = vpack.c.b16 %v848, %v847
        %v854 = vpack.c.b16 %v850, %v849
        %v859 = vsel %vm803, %v761, 0
        %861 = vmatpush.bf16.msra.mxu0 0
        %862 = vmatpush.bf16.msra.mxu0 0
        %863 = vmatpush.bf16.msra.mxu0 0
        %864 = vmatpush.bf16.msra.mxu0 0
        %865 = vmatpush.bf16.msra.mxu0 %v854
        %866 = vmatpush.bf16.msra.mxu0 %v853
        %867 = vmatpush.bf16.msra.mxu0 %v852
        %868 = vmatpush.bf16.msra.mxu0 %v851
        %869 = vmatmul.bf16.gmra.mxu0 %v859
        %v870 = vpop.f32.mrf.mxu0
        %v871 = vadd.f32 0.0, %v870
        %v872 = vpop.f32.mrf.mxu0
        %v873 = vadd.f32 0.0, %v872
        %874 = vdwg.mxu0
        %v875 = vadd.f32 %v824, %v871
        %v876 = vadd.f32 %v825, %v873
        %v877 = vrot.slane %v766, 1
        %v878 = vor.u32 %v763, %v877
        %v880 = vsel %vm726, %v878, 0
        %s881 = scalar_lea.vmem [#allocation2], 64
        %v882 = vld [vmem:[%s881] sm:$0xf]
        %v883 = vld [vmem:[%s881 + $0x4] sm:$0xf]
        %v884 = vld [vmem:[%s881 + $0x8] sm:$0xf]
        %v885 = vld [vmem:[%s881 + $0xc] sm:$0xf]
        %v886 = vld [vmem:[%s881 + $0x10] sm:$0xf]
        %v887 = vld [vmem:[%s881 + $0x14] sm:$0xf]
        %v888 = vld [vmem:[%s881 + $0x18] sm:$0xf]
        %v889 = vld [vmem:[%s881 + $0x1c] sm:$0xf]
        %v898 = vunpack.c.l.b16 %v882
        %v899 = vunpack.c.l.b16 %v883
        %v900 = vunpack.c.l.b16 %v884
        %v901 = vunpack.c.l.b16 %v885
        %v902 = vunpack.c.l.b16 %v886
        %v903 = vunpack.c.l.b16 %v887
        %v904 = vunpack.c.l.b16 %v888
        %v905 = vunpack.c.l.b16 %v889
        %v906 = vpack.c.b16 %v899, %v898
        %v907 = vpack.c.b16 %v901, %v900
        %v908 = vpack.c.b16 %v903, %v902
        %v909 = vpack.c.b16 %v905, %v904
        %v915 = vsel %vm803, %v880, 0
        %917 = vmatpush.bf16.msra.mxu0 0
        %918 = vmatpush.bf16.msra.mxu0 0
        %919 = vmatpush.bf16.msra.mxu0 0
        %920 = vmatpush.bf16.msra.mxu0 0
        %921 = vmatpush.bf16.msra.mxu0 %v909
        %922 = vmatpush.bf16.msra.mxu0 %v908
        %923 = vmatpush.bf16.msra.mxu0 %v907
        %924 = vmatpush.bf16.msra.mxu0 %v906
        %925 = vmatmul.bf16.gmra.mxu0 %v915
        %v926 = vpop.f32.mrf.mxu0
        %v927 = vadd.f32 0.0, %v926
        %v928 = vpop.f32.mrf.mxu0
        %v929 = vadd.f32 0.0, %v928
        %930 = vdwg.mxu0
        %v931 = vadd.f32 %v875, %v927
        %v932 = vadd.f32 %v876, %v929
        %v933 = vrot.slane %v761, 1
        %vm934 = vcmask 1046528
        %v937 = vsel %vm934, %v933, 0
        %s938 = scalar_lea.vmem [#allocation2], 96
        %v939 = vld [vmem:[%s938] sm:$0xf]
        %v940 = vld [vmem:[%s938 + $0x4] sm:$0xf]
        %v941 = vld [vmem:[%s938 + $0x8] sm:$0xf]
        %v942 = vld [vmem:[%s938 + $0xc] sm:$0xf]
        %v943 = vld [vmem:[%s938 + $0x10] sm:$0xf]
        %v944 = vld [vmem:[%s938 + $0x14] sm:$0xf]
        %v945 = vld [vmem:[%s938 + $0x18] sm:$0xf]
        %v946 = vld [vmem:[%s938 + $0x1c] sm:$0xf]
        %v955 = vunpack.c.l.b16 %v939
        %v956 = vunpack.c.l.b16 %v940
        %v957 = vunpack.c.l.b16 %v941
        %v958 = vunpack.c.l.b16 %v942
        %v959 = vunpack.c.l.b16 %v943
        %v960 = vunpack.c.l.b16 %v944
        %v961 = vunpack.c.l.b16 %v945
        %v962 = vunpack.c.l.b16 %v946
        %v963 = vpack.c.b16 %v956, %v955
        %v964 = vpack.c.b16 %v958, %v957
        %v965 = vpack.c.b16 %v960, %v959
        %v966 = vpack.c.b16 %v962, %v961
        %v971 = vsel %vm803, %v937, 0
        %973 = vmatpush.bf16.msra.mxu0 0
        %974 = vmatpush.bf16.msra.mxu0 0
        %975 = vmatpush.bf16.msra.mxu0 0
        %976 = vmatpush.bf16.msra.mxu0 0
        %977 = vmatpush.bf16.msra.mxu0 %v966
        %978 = vmatpush.bf16.msra.mxu0 %v965
        %979 = vmatpush.bf16.msra.mxu0 %v964
        %980 = vmatpush.bf16.msra.mxu0 %v963
        %981 = vmatmul.bf16.gmra.mxu0 %v971
        %v982 = vpop.f32.mrf.mxu0
        %v983 = vadd.f32 0.0, %v982
        %v984 = vpop.f32.mrf.mxu0
        %v985 = vadd.f32 0.0, %v984
        %986 = vdwg.mxu0
        %v987 = vadd.f32 %v931, %v983
        %v988 = vadd.f32 %v932, %v985
        %v991 = vrot.slane %v987, 2
        %v992 = vrot.slane %v987, 4
        %v993 = vrot.slane %v987, 6
        %v994 = vrot.slane %v988, 2
        %v995 = vrot.slane %v988, 4
        %v996 = vrot.slane %v988, 6
        %v1003 = vmax.f32 %v987, 0.0
        %v1004 = vmax.f32 %v991, 0.0
        %v1005 = vmax.f32 %v992, 0.0
        %v1006 = vmax.f32 %v993, 0.0
        %v1007 = vmax.f32 %v988, 0.0
        %v1008 = vmax.f32 %v994, 0.0
        %v1009 = vmax.f32 %v995, 0.0
        %v1010 = vmax.f32 %v996, 0.0
        %v1011 = vpack.c.bf16 %v1003, %v1003
        %v1012 = vpack.c.bf16 %v1004, %v1004
        %v1013 = vpack.c.bf16 %v1005, %v1005
        %v1014 = vpack.c.bf16 %v1006, %v1006
        %v1015 = vpack.c.bf16 %v1007, %v1007
        %v1016 = vpack.c.bf16 %v1008, %v1008
        %v1017 = vpack.c.bf16 %v1009, %v1009
        %v1018 = vpack.c.bf16 %v1010, %v1010
        %v1019 = vld [vmem:[%s6] sm:$0x1]
        %v1027 = vunpack.c.l.b16 %v1011
        %v1028 = vunpack.c.l.b16 %v1012
        %v1029 = vunpack.c.l.b16 %v1013
        %v1030 = vunpack.c.l.b16 %v1014
        %v1031 = vunpack.c.l.b16 %v1015
        %v1032 = vunpack.c.l.b16 %v1016
        %v1033 = vunpack.c.l.b16 %v1017
        %v1034 = vpack.c.b16 %v1027, %v1027
        %v1035 = vpack.c.b16 %v1028, %v1028
        %v1036 = vpack.c.b16 %v1029, %v1029
        %v1037 = vpack.c.b16 %v1030, %v1030
        %v1038 = vpack.c.b16 %v1031, %v1031
        %v1039 = vpack.c.b16 %v1032, %v1032
        %v1040 = vpack.c.b16 %v1033, %v1033
        %v1041 = vunpack.c.l.b16 %v1034
        %v1042 = vunpack.c.l.b16 %v1035
        %v1043 = vunpack.c.l.b16 %v1036
        %v1044 = vunpack.c.l.b16 %v1037
        %v1045 = vunpack.c.l.b16 %v1038
        %v1046 = vunpack.c.l.b16 %v1039
        %v1047 = vunpack.c.l.b16 %v1040
        %v1048 = vrot.slane %v1041, 7
        %v1049 = vrot.slane %v1042, 6
        %vm1050 = vcmask 1042434
        %v1051 = vsel %vm1050, %v1049, %v1048
        %v1052 = vrot.slane %v1043, 5
        %vm1053 = vcmask 1043459
        %v1054 = vsel %vm1053, %v1052, %v1051
        %v1055 = vrot.slane %v1044, 4
        %vm1056 = vcmask 1044484
        %v1057 = vsel %vm1056, %v1055, %v1054
        %v1058 = vrot.slane %v1045, 3
        %vm1059 = vcmask 1045509
        %v1060 = vsel %vm1059, %v1058, %v1057
        %v1061 = vrot.slane %v1046, 2
        %vm1062 = vcmask 1046534
        %v1063 = vsel %vm1062, %v1061, %v1060
        %v1064 = vrot.slane %v1047, 1
        %vm1065 = vcmask 1047559
        %v1066 = vsel %vm1065, %v1064, %v1063
        %v1067 = vpack.c.b16 %v1066, %v1066
        %v1069 = vsel %vm668, 0, %v1067
        %v1070 = vld [vmem:[#allocation4] sm:$0xf]
        %v1071 = vld [vmem:[#allocation4 + $0x4] sm:$0xf]
        %v1072 = vld [vmem:[#allocation4 + $0x8] sm:$0xf]
        %v1073 = vld [vmem:[#allocation4 + $0xc] sm:$0xf]
        %v1074 = vld [vmem:[#allocation4 + $0x10] sm:$0xf]
        %v1075 = vld [vmem:[#allocation4 + $0x14] sm:$0xf]
        %v1076 = vld [vmem:[#allocation4 + $0x18] sm:$0xf]
        %v1077 = vld [vmem:[#allocation4 + $0x1c] sm:$0xf]
        %v1086 = vunpack.c.l.b16 %v1070
        %v1087 = vunpack.c.l.b16 %v1071
        %v1088 = vunpack.c.l.b16 %v1072
        %v1089 = vunpack.c.l.b16 %v1073
        %v1090 = vunpack.c.l.b16 %v1074
        %v1091 = vunpack.c.l.b16 %v1075
        %v1092 = vunpack.c.l.b16 %v1076
        %v1093 = vunpack.c.l.b16 %v1077
        %v1094 = vpack.c.b16 %v1087, %v1086
        %v1095 = vpack.c.b16 %v1089, %v1088
        %v1096 = vpack.c.b16 %v1091, %v1090
        %v1097 = vpack.c.b16 %v1093, %v1092
        %v1103 = vsel %vm803, %v1069, 0
        %1105 = vmatpush.bf16.msra.mxu0 0
        %1106 = vmatpush.bf16.msra.mxu0 0
        %1107 = vmatpush.bf16.msra.mxu0 0
        %1108 = vmatpush.bf16.msra.mxu0 0
        %1109 = vmatpush.bf16.msra.mxu0 %v1097
        %1110 = vmatpush.bf16.msra.mxu0 %v1096
        %1111 = vmatpush.bf16.msra.mxu0 %v1095
        %1112 = vmatpush.bf16.msra.mxu0 %v1094
        %1113 = vmatmul.bf16.gmra.mxu0 %v1103
        %v1114 = vpop.f32.mrf.mxu0
        %v1115 = vadd.f32 0.0, %v1114
        %v1116 = vpop.f32.mrf.mxu0
        %1117 = vdwg.mxu0
        %v1119 = vperm.slane %v1019, 0
        %v1121 = vadd.f32 %v1119, %v1115
        %s1122 = scalar_lea.vmem [#allocation4], 32
        %v1123 = vld [vmem:[%s1122] sm:$0xf]
        %v1124 = vld [vmem:[%s1122 + $0x4] sm:$0xf]
        %v1125 = vld [vmem:[%s1122 + $0x8] sm:$0xf]
        %v1126 = vld [vmem:[%s1122 + $0xc] sm:$0xf]
        %v1127 = vld [vmem:[%s1122 + $0x10] sm:$0xf]
        %v1128 = vld [vmem:[%s1122 + $0x14] sm:$0xf]
        %v1129 = vld [vmem:[%s1122 + $0x18] sm:$0xf]
        %v1130 = vld [vmem:[%s1122 + $0x1c] sm:$0xf]
        %v1132 = vunpack.c.l.b16 %v1018
        %v1133 = vpack.c.b16 %v1132, %v1132
        %v1134 = vunpack.c.l.b16 %v1133
        %v1135 = vrot.slane %v1042, 7
        %vm1136 = vcmask 1041409
        %v1137 = vsel %vm1136, %v1135, %v1041
        %v1138 = vrot.slane %v1043, 6
        %v1139 = vsel %vm1050, %v1138, %v1137
        %v1140 = vrot.slane %v1044, 5
        %v1141 = vsel %vm1053, %v1140, %v1139
        %v1142 = vrot.slane %v1045, 4
        %v1143 = vsel %vm1056, %v1142, %v1141
        %v1144 = vrot.slane %v1046, 3
        %v1145 = vsel %vm1059, %v1144, %v1143
        %v1146 = vrot.slane %v1047, 2
        %v1147 = vsel %vm1062, %v1146, %v1145
        %v1148 = vrot.slane %v1134, 1
        %v1149 = vsel %vm1065, %v1148, %v1147
        %v1150 = vpack.c.b16 %v1149, %v1149
        %v1159 = vunpack.c.l.b16 %v1123
        %v1160 = vunpack.c.l.b16 %v1124
        %v1161 = vunpack.c.l.b16 %v1125
        %v1162 = vunpack.c.l.b16 %v1126
        %v1163 = vunpack.c.l.b16 %v1127
        %v1164 = vunpack.c.l.b16 %v1128
        %v1165 = vunpack.c.l.b16 %v1129
        %v1166 = vunpack.c.l.b16 %v1130
        %v1167 = vpack.c.b16 %v1160, %v1159
        %v1168 = vpack.c.b16 %v1162, %v1161
        %v1169 = vpack.c.b16 %v1164, %v1163
        %v1170 = vpack.c.b16 %v1166, %v1165
        %v1176 = vsel %vm803, %v1150, 0
        %1178 = vmatpush.bf16.msra.mxu0 0
        %1179 = vmatpush.bf16.msra.mxu0 0
        %1180 = vmatpush.bf16.msra.mxu0 0
        %1181 = vmatpush.bf16.msra.mxu0 0
        %1182 = vmatpush.bf16.msra.mxu0 %v1170
        %1183 = vmatpush.bf16.msra.mxu0 %v1169
        %1184 = vmatpush.bf16.msra.mxu0 %v1168
        %1185 = vmatpush.bf16.msra.mxu0 %v1167
        %1186 = vmatmul.bf16.gmra.mxu0 %v1176
        %v1187 = vpop.f32.mrf.mxu0
        %v1188 = vadd.f32 0.0, %v1187
        %v1189 = vpop.f32.mrf.mxu0
        %1190 = vdwg.mxu0
        %v1191 = vadd.f32 %v1121, %v1188
        %v1192 = vrot.slane %v1043, 7
        %v1193 = vsel %vm1136, %v1192, %v1042
        %v1194 = vrot.slane %v1044, 6
        %v1195 = vsel %vm1050, %v1194, %v1193
        %v1196 = vrot.slane %v1045, 5
        %v1197 = vsel %vm1053, %v1196, %v1195
        %v1198 = vrot.slane %v1046, 4
        %v1199 = vsel %vm1056, %v1198, %v1197
        %v1200 = vrot.slane %v1047, 3
        %v1201 = vsel %vm1059, %v1200, %v1199
        %v1202 = vrot.slane %v1134, 2
        %v1203 = vsel %vm1062, %v1202, %v1201
        %v1204 = vpack.c.b16 %v1203, %v1203
        %vm1206 = vcmask 1043456
        %vm1207 = vsmask.f32 3328
        %vm1208 = vmand %vm1206, %vm1207
        %v1209 = vsel %vm1208, %v1204, 0
        %s1210 = scalar_lea.vmem [#allocation4], 64
        %v1211 = vld [vmem:[%s1210] sm:$0xf]
        %v1212 = vld [vmem:[%s1210 + $0x4] sm:$0xf]
        %v1213 = vld [vmem:[%s1210 + $0x8] sm:$0xf]
        %v1214 = vld [vmem:[%s1210 + $0xc] sm:$0xf]
        %v1215 = vld [vmem:[%s1210 + $0x10] sm:$0xf]
        %v1216 = vld [vmem:[%s1210 + $0x14] sm:$0xf]
        %v1217 = vld [vmem:[%s1210 + $0x18] sm:$0xf]
        %v1218 = vld [vmem:[%s1210 + $0x1c] sm:$0xf]
        %v1227 = vunpack.c.l.b16 %v1211
        %v1228 = vunpack.c.l.b16 %v1212
        %v1229 = vunpack.c.l.b16 %v1213
        %v1230 = vunpack.c.l.b16 %v1214
        %v1231 = vunpack.c.l.b16 %v1215
        %v1232 = vunpack.c.l.b16 %v1216
        %v1233 = vunpack.c.l.b16 %v1217
        %v1234 = vunpack.c.l.b16 %v1218
        %v1235 = vpack.c.b16 %v1228, %v1227
        %v1236 = vpack.c.b16 %v1230, %v1229
        %v1237 = vpack.c.b16 %v1232, %v1231
        %v1238 = vpack.c.b16 %v1234, %v1233
        %v1244 = vsel %vm803, %v1209, 0
        %1246 = vmatpush.bf16.msra.mxu0 0
        %1247 = vmatpush.bf16.msra.mxu0 0
        %1248 = vmatpush.bf16.msra.mxu0 0
        %1249 = vmatpush.bf16.msra.mxu0 0
        %1250 = vmatpush.bf16.msra.mxu0 %v1238
        %1251 = vmatpush.bf16.msra.mxu0 %v1237
        %1252 = vmatpush.bf16.msra.mxu0 %v1236
        %1253 = vmatpush.bf16.msra.mxu0 %v1235
        %1254 = vmatmul.bf16.gmra.mxu0 %v1244
        %v1255 = vpop.f32.mrf.mxu0
        %v1256 = vadd.f32 0.0, %v1255
        %v1257 = vpop.f32.mrf.mxu0
        %1258 = vdwg.mxu0
        %v1259 = vadd.f32 %v1191, %v1256
        %v1260 = vmax.f32 %v1259, 0.0
        %v1261 = vpack.c.bf16 %v1260, %v1260
        %v1262 = vld [vmem:[%s8] sm:$0x1]
        %v1263 = vld [vmem:[%s7] sm:$0xf]
        %v1264 = vld [vmem:[%s7 + $0x4] sm:$0xf]
        %v1265 = vld [vmem:[%s7 + $0x8] sm:$0xf]
        %v1266 = vld [vmem:[%s7 + $0xc] sm:$0xf]
        %v1267 = vld [vmem:[%s7 + $0x10] sm:$0xf]
        %v1268 = vld [vmem:[%s7 + $0x14] sm:$0xf]
        %v1269 = vld [vmem:[%s7 + $0x18] sm:$0xf]
        %v1270 = vld [vmem:[%s7 + $0x1c] sm:$0xf]
        %v1279 = vunpack.c.l.b16 %v1263
        %v1280 = vunpack.c.l.b16 %v1264
        %v1281 = vunpack.c.l.b16 %v1265
        %v1282 = vunpack.c.l.b16 %v1266
        %v1283 = vunpack.c.l.b16 %v1267
        %v1284 = vunpack.c.l.b16 %v1268
        %v1285 = vunpack.c.l.b16 %v1269
        %v1286 = vunpack.c.l.b16 %v1270
        %v1287 = vpack.c.b16 %v1280, %v1279
        %v1288 = vpack.c.b16 %v1282, %v1281
        %v1289 = vpack.c.b16 %v1284, %v1283
        %v1290 = vpack.c.b16 %v1286, %v1285
        %v1296 = vsel %vm803, %v1261, 0
        %1298 = vmatpush.bf16.msra.mxu0 0
        %1299 = vmatpush.bf16.msra.mxu0 0
        %1300 = vmatpush.bf16.msra.mxu0 0
        %1301 = vmatpush.bf16.msra.mxu0 0
        %1302 = vmatpush.bf16.msra.mxu0 %v1290
        %1303 = vmatpush.bf16.msra.mxu0 %v1289
        %1304 = vmatpush.bf16.msra.mxu0 %v1288
        %1305 = vmatpush.bf16.msra.mxu0 %v1287
        %1306 = vmatmul.bf16.gmra.mxu0 %v1296
        %v1307 = vpop.f32.mrf.mxu0
        %v1308 = vadd.f32 0.0, %v1307
        %v1309 = vpop.f32.mrf.mxu0
        %1310 = vdwg.mxu0
        %v1312 = vperm.slane %v1262, 0
        %v1314 = vadd.f32 %v1312, %v1308
        %v1316 = vrot.slane %v1314, 2
        %v1317 = vrot.slane %v1314, 4
        %v1318 = vrot.slane %v1314, 6
        %v1319 = vrot.slane %v1314, 1
        %v1320 = vrot.slane %v1316, 1
        %v1321 = vrot.slane %v1317, 1
        %v1322 = vrot.slane %v1318, 1
        %v1331 = vadd.f32 %v987, %v1314
        %v1332 = vadd.f32 %v991, %v1319
        %v1333 = vadd.f32 %v992, %v1316
        %v1334 = vadd.f32 %v993, %v1320
        %v1335 = vadd.f32 %v988, %v1317
        %v1336 = vadd.f32 %v994, %v1321
        %v1337 = vadd.f32 %v995, %v1318
        %v1338 = vadd.f32 %v996, %v1322
        %v1339 = vpack.c.bf16 %v1331, %v1331
        %v1340 = vpack.c.bf16 %v1332, %v1332
        %v1341 = vpack.c.bf16 %v1333, %v1333
        %v1342 = vpack.c.bf16 %v1334, %v1334
        %v1343 = vpack.c.bf16 %v1335, %v1335
        %v1344 = vpack.c.bf16 %v1336, %v1336
        %v1345 = vpack.c.bf16 %v1337, %v1337
        %v1346 = vpack.c.bf16 %v1338, %v1338
        %v1347 = vld [vmem:[%s10] sm:$0x1]
        %v1355 = vunpack.c.l.b16 %v1339
        %v1356 = vunpack.c.l.b16 %v1340
        %v1357 = vunpack.c.l.b16 %v1341
        %v1358 = vunpack.c.l.b16 %v1342
        %v1359 = vunpack.c.l.b16 %v1343
        %v1360 = vunpack.c.l.b16 %v1344
        %v1361 = vunpack.c.l.b16 %v1345
        %v1362 = vpack.c.b16 %v1355, %v1355
        %v1363 = vpack.c.b16 %v1356, %v1356
        %v1364 = vpack.c.b16 %v1357, %v1357
        %v1365 = vpack.c.b16 %v1358, %v1358
        %v1366 = vpack.c.b16 %v1359, %v1359
        %v1367 = vpack.c.b16 %v1360, %v1360
        %v1368 = vpack.c.b16 %v1361, %v1361
        %v1369 = vunpack.c.l.b16 %v1362
        %v1370 = vunpack.c.l.b16 %v1363
        %v1371 = vunpack.c.l.b16 %v1364
        %v1372 = vunpack.c.l.b16 %v1365
        %v1373 = vunpack.c.l.b16 %v1366
        %v1374 = vunpack.c.l.b16 %v1367
        %v1375 = vunpack.c.l.b16 %v1368
        %v1376 = vrot.slane %v1369, 7
        %v1377 = vrot.slane %v1370, 6
        %v1378 = vsel %vm1050, %v1377, %v1376
        %v1379 = vrot.slane %v1371, 5
        %v1380 = vsel %vm1053, %v1379, %v1378
        %v1381 = vrot.slane %v1372, 4
        %v1382 = vsel %vm1056, %v1381, %v1380
        %v1383 = vrot.slane %v1373, 3
        %v1384 = vsel %vm1059, %v1383, %v1382
        %v1385 = vrot.slane %v1374, 2
        %v1386 = vsel %vm1062, %v1385, %v1384
        %v1387 = vrot.slane %v1375, 1
        %v1388 = vsel %vm1065, %v1387, %v1386
        %v1389 = vpack.c.b16 %v1388, %v1388
        %v1391 = vsel %vm668, 0, %v1389
        %v1392 = vld [vmem:[#allocation6] sm:$0xf]
        %v1393 = vld [vmem:[#allocation6 + $0x4] sm:$0xf]
        %v1394 = vld [vmem:[#allocation6 + $0x8] sm:$0xf]
        %v1395 = vld [vmem:[#allocation6 + $0xc] sm:$0xf]
        %v1396 = vld [vmem:[#allocation6 + $0x10] sm:$0xf]
        %v1397 = vld [vmem:[#allocation6 + $0x14] sm:$0xf]
        %v1398 = vld [vmem:[#allocation6 + $0x18] sm:$0xf]
        %v1399 = vld [vmem:[#allocation6 + $0x1c] sm:$0xf]
        %v1408 = vunpack.c.l.b16 %v1392
        %v1409 = vunpack.c.l.b16 %v1393
        %v1410 = vunpack.c.l.b16 %v1394
        %v1411 = vunpack.c.l.b16 %v1395
        %v1412 = vunpack.c.l.b16 %v1396
        %v1413 = vunpack.c.l.b16 %v1397
        %v1414 = vunpack.c.l.b16 %v1398
        %v1415 = vunpack.c.l.b16 %v1399
        %v1416 = vpack.c.b16 %v1409, %v1408
        %v1417 = vpack.c.b16 %v1411, %v1410
        %v1418 = vpack.c.b16 %v1413, %v1412
        %v1419 = vpack.c.b16 %v1415, %v1414
        %v1425 = vsel %vm803, %v1391, 0
        %1427 = vmatpush.bf16.msra.mxu0 0
        %1428 = vmatpush.bf16.msra.mxu0 0
        %1429 = vmatpush.bf16.msra.mxu0 0
        %1430 = vmatpush.bf16.msra.mxu0 0
        %1431 = vmatpush.bf16.msra.mxu0 %v1419
        %1432 = vmatpush.bf16.msra.mxu0 %v1418
        %1433 = vmatpush.bf16.msra.mxu0 %v1417
        %1434 = vmatpush.bf16.msra.mxu0 %v1416
        %1435 = vmatmul.bf16.gmra.mxu0 %v1425
        %v1436 = vpop.f32.mrf.mxu0
        %v1437 = vadd.f32 0.0, %v1436
        %v1438 = vpop.f32.mrf.mxu0
        %1439 = vdwg.mxu0
        %v1441 = vperm.slane %v1347, 0
        %v1443 = vadd.f32 %v1441, %v1437
        %s1444 = scalar_lea.vmem [#allocation6], 32
        %v1445 = vld [vmem:[%s1444] sm:$0xf]
        %v1446 = vld [vmem:[%s1444 + $0x4] sm:$0xf]
        %v1447 = vld [vmem:[%s1444 + $0x8] sm:$0xf]
        %v1448 = vld [vmem:[%s1444 + $0xc] sm:$0xf]
        %v1449 = vld [vmem:[%s1444 + $0x10] sm:$0xf]
        %v1450 = vld [vmem:[%s1444 + $0x14] sm:$0xf]
        %v1451 = vld [vmem:[%s1444 + $0x18] sm:$0xf]
        %v1452 = vld [vmem:[%s1444 + $0x1c] sm:$0xf]
        %v1454 = vunpack.c.l.b16 %v1346
        %v1455 = vpack.c.b16 %v1454, %v1454
        %v1456 = vunpack.c.l.b16 %v1455
        %v1457 = vrot.slane %v1370, 7
        %v1458 = vsel %vm1136, %v1457, %v1369
        %v1459 = vrot.slane %v1371, 6
        %v1460 = vsel %vm1050, %v1459, %v1458
        %v1461 = vrot.slane %v1372, 5
        %v1462 = vsel %vm1053, %v1461, %v1460
        %v1463 = vrot.slane %v1373, 4
        %v1464 = vsel %vm1056, %v1463, %v1462
        %v1465 = vrot.slane %v1374, 3
        %v1466 = vsel %vm1059, %v1465, %v1464
        %v1467 = vrot.slane %v1375, 2
        %v1468 = vsel %vm1062, %v1467, %v1466
        %v1469 = vrot.slane %v1456, 1
        %v1470 = vsel %vm1065, %v1469, %v1468
        %v1471 = vpack.c.b16 %v1470, %v1470
        %v1480 = vunpack.c.l.b16 %v1445
        %v1481 = vunpack.c.l.b16 %v1446
        %v1482 = vunpack.c.l.b16 %v1447
        %v1483 = vunpack.c.l.b16 %v1448
        %v1484 = vunpack.c.l.b16 %v1449
        %v1485 = vunpack.c.l.b16 %v1450
        %v1486 = vunpack.c.l.b16 %v1451
        %v1487 = vunpack.c.l.b16 %v1452
        %v1488 = vpack.c.b16 %v1481, %v1480
        %v1489 = vpack.c.b16 %v1483, %v1482
        %v1490 = vpack.c.b16 %v1485, %v1484
        %v1491 = vpack.c.b16 %v1487, %v1486
        %v1497 = vsel %vm803, %v1471, 0
        %1499 = vmatpush.bf16.msra.mxu0 0
        %1500 = vmatpush.bf16.msra.mxu0 0
        %1501 = vmatpush.bf16.msra.mxu0 0
        %1502 = vmatpush.bf16.msra.mxu0 0
        %1503 = vmatpush.bf16.msra.mxu0 %v1491
        %1504 = vmatpush.bf16.msra.mxu0 %v1490
        %1505 = vmatpush.bf16.msra.mxu0 %v1489
        %1506 = vmatpush.bf16.msra.mxu0 %v1488
        %1507 = vmatmul.bf16.gmra.mxu0 %v1497
        %v1508 = vpop.f32.mrf.mxu0
        %v1509 = vadd.f32 0.0, %v1508
        %v1510 = vpop.f32.mrf.mxu0
        %1511 = vdwg.mxu0
        %v1512 = vadd.f32 %v1443, %v1509
        %v1513 = vrot.slane %v1371, 7
        %v1514 = vsel %vm1136, %v1513, %v1370
        %v1515 = vrot.slane %v1372, 6
        %v1516 = vsel %vm1050, %v1515, %v1514
        %v1517 = vrot.slane %v1373, 5
        %v1518 = vsel %vm1053, %v1517, %v1516
        %v1519 = vrot.slane %v1374, 4
        %v1520 = vsel %vm1056, %v1519, %v1518
        %v1521 = vrot.slane %v1375, 3
        %v1522 = vsel %vm1059, %v1521, %v1520
        %v1523 = vrot.slane %v1456, 2
        %v1524 = vsel %vm1062, %v1523, %v1522
        %v1525 = vpack.c.b16 %v1524, %v1524
        %v1527 = vsel %vm1208, %v1525, 0
        %s1528 = scalar_lea.vmem [#allocation6], 64
        %v1529 = vld [vmem:[%s1528] sm:$0xf]
        %v1530 = vld [vmem:[%s1528 + $0x4] sm:$0xf]
        %v1531 = vld [vmem:[%s1528 + $0x8] sm:$0xf]
        %v1532 = vld [vmem:[%s1528 + $0xc] sm:$0xf]
        %v1533 = vld [vmem:[%s1528 + $0x10] sm:$0xf]
        %v1534 = vld [vmem:[%s1528 + $0x14] sm:$0xf]
        %v1535 = vld [vmem:[%s1528 + $0x18] sm:$0xf]
        %v1536 = vld [vmem:[%s1528 + $0x1c] sm:$0xf]
        %v1545 = vunpack.c.l.b16 %v1529
        %v1546 = vunpack.c.l.b16 %v1530
        %v1547 = vunpack.c.l.b16 %v1531
        %v1548 = vunpack.c.l.b16 %v1532
        %v1549 = vunpack.c.l.b16 %v1533
        %v1550 = vunpack.c.l.b16 %v1534
        %v1551 = vunpack.c.l.b16 %v1535
        %v1552 = vunpack.c.l.b16 %v1536
        %v1553 = vpack.c.b16 %v1546, %v1545
        %v1554 = vpack.c.b16 %v1548, %v1547
        %v1555 = vpack.c.b16 %v1550, %v1549
        %v1556 = vpack.c.b16 %v1552, %v1551
        %v1562 = vsel %vm803, %v1527, 0
        %1564 = vmatpush.bf16.msra.mxu0 0
        %1565 = vmatpush.bf16.msra.mxu0 0
        %1566 = vmatpush.bf16.msra.mxu0 0
        %1567 = vmatpush.bf16.msra.mxu0 0
        %1568 = vmatpush.bf16.msra.mxu0 %v1556
        %1569 = vmatpush.bf16.msra.mxu0 %v1555
        %1570 = vmatpush.bf16.msra.mxu0 %v1554
        %1571 = vmatpush.bf16.msra.mxu0 %v1553
        %1572 = vmatmul.bf16.gmra.mxu0 %v1562
        %v1573 = vpop.f32.mrf.mxu0
        %v1574 = vadd.f32 0.0, %v1573
        %v1575 = vpop.f32.mrf.mxu0
        %1576 = vdwg.mxu0
        %v1577 = vadd.f32 %v1512, %v1574
        %v1578 = vrot.slane %v1372, 7
        %v1579 = vsel %vm1136, %v1578, %v1371
        %v1580 = vrot.slane %v1373, 6
        %v1581 = vsel %vm1050, %v1580, %v1579
        %v1582 = vrot.slane %v1374, 5
        %v1583 = vsel %vm1053, %v1582, %v1581
        %v1584 = vrot.slane %v1375, 4
        %v1585 = vsel %vm1056, %v1584, %v1583
        %v1586 = vrot.slane %v1456, 3
        %v1587 = vsel %vm1059, %v1586, %v1585
        %v1588 = vpack.c.b16 %v1587, %v1587
        %vm1589 = vcmask 1042432
        %v1591 = vsel %vm1589, %v1588, 0
        %s1592 = scalar_lea.vmem [#allocation6], 96
        %v1593 = vld [vmem:[%s1592] sm:$0xf]
        %v1594 = vld [vmem:[%s1592 + $0x4] sm:$0xf]
        %v1595 = vld [vmem:[%s1592 + $0x8] sm:$0xf]
        %v1596 = vld [vmem:[%s1592 + $0xc] sm:$0xf]
        %v1597 = vld [vmem:[%s1592 + $0x10] sm:$0xf]
        %v1598 = vld [vmem:[%s1592 + $0x14] sm:$0xf]
        %v1599 = vld [vmem:[%s1592 + $0x18] sm:$0xf]
        %v1600 = vld [vmem:[%s1592 + $0x1c] sm:$0xf]
        %v1609 = vunpack.c.l.b16 %v1593
        %v1610 = vunpack.c.l.b16 %v1594
        %v1611 = vunpack.c.l.b16 %v1595
        %v1612 = vunpack.c.l.b16 %v1596
        %v1613 = vunpack.c.l.b16 %v1597
        %v1614 = vunpack.c.l.b16 %v1598
        %v1615 = vunpack.c.l.b16 %v1599
        %v1616 = vunpack.c.l.b16 %v1600
        %v1617 = vpack.c.b16 %v1610, %v1609
        %v1618 = vpack.c.b16 %v1612, %v1611
        %v1619 = vpack.c.b16 %v1614, %v1613
        %v1620 = vpack.c.b16 %v1616, %v1615
        %v1625 = vsel %vm803, %v1591, 0
        %1627 = vmatpush.bf16.msra.mxu0 0
        %1628 = vmatpush.bf16.msra.mxu0 0
        %1629 = vmatpush.bf16.msra.mxu0 0
        %1630 = vmatpush.bf16.msra.mxu0 0
        %1631 = vmatpush.bf16.msra.mxu0 %v1620
        %1632 = vmatpush.bf16.msra.mxu0 %v1619
        %1633 = vmatpush.bf16.msra.mxu0 %v1618
        %1634 = vmatpush.bf16.msra.mxu0 %v1617
        %1635 = vmatmul.bf16.gmra.mxu0 %v1625
        %v1636 = vpop.f32.mrf.mxu0
        %v1637 = vadd.f32 0.0, %v1636
        %v1638 = vpop.f32.mrf.mxu0
        %1639 = vdwg.mxu0
        %v1640 = vadd.f32 %v1577, %v1637
        %v1642 = vrot.slane %v1640, 2
        %v1643 = vrot.slane %v1640, 4
        %v1644 = vrot.slane %v1640, 6
        %v1648 = vmax.f32 %v1640, 0.0
        %v1649 = vmax.f32 %v1642, 0.0
        %v1650 = vmax.f32 %v1643, 0.0
        %v1651 = vmax.f32 %v1644, 0.0
        %v1652 = vpack.c.bf16 %v1648, %v1648
        %v1653 = vpack.c.bf16 %v1649, %v1649
        %v1654 = vpack.c.bf16 %v1650, %v1650
        %v1655 = vpack.c.bf16 %v1651, %v1651
        %v1656 = vld [vmem:[%s12] sm:$0x1]
        %v1660 = vunpack.c.l.b16 %v1652
        %v1661 = vunpack.c.l.b16 %v1653
        %v1662 = vunpack.c.l.b16 %v1654
        %v1663 = vpack.c.b16 %v1660, %v1660
        %v1664 = vpack.c.b16 %v1661, %v1661
        %v1665 = vpack.c.b16 %v1662, %v1662
        %v1666 = vunpack.c.l.b16 %v1663
        %v1667 = vunpack.c.l.b16 %v1664
        %v1668 = vunpack.c.l.b16 %v1665
        %v1669 = vrot.slane %v1666, 7
        %v1670 = vrot.slane %v1667, 6
        %v1671 = vsel %vm1050, %v1670, %v1669
        %v1672 = vrot.slane %v1668, 5
        %v1673 = vsel %vm1053, %v1672, %v1671
        %v1674 = vpack.c.b16 %v1673, %v1673
        %v1676 = vsel %vm668, 0, %v1674
        %v1677 = vld [vmem:[#allocation7] sm:$0xf]
        %v1678 = vld [vmem:[#allocation7 + $0x4] sm:$0xf]
        %v1679 = vld [vmem:[#allocation7 + $0x8] sm:$0xf]
        %v1680 = vld [vmem:[#allocation7 + $0xc] sm:$0xf]
        %v1681 = vld [vmem:[#allocation7 + $0x10] sm:$0xf]
        %v1682 = vld [vmem:[#allocation7 + $0x14] sm:$0xf]
        %v1683 = vld [vmem:[#allocation7 + $0x18] sm:$0xf]
        %v1684 = vld [vmem:[#allocation7 + $0x1c] sm:$0xf]
        %v1693 = vunpack.c.l.b16 %v1677
        %v1694 = vunpack.c.l.b16 %v1678
        %v1695 = vunpack.c.l.b16 %v1679
        %v1696 = vunpack.c.l.b16 %v1680
        %v1697 = vunpack.c.l.b16 %v1681
        %v1698 = vunpack.c.l.b16 %v1682
        %v1699 = vunpack.c.l.b16 %v1683
        %v1700 = vunpack.c.l.b16 %v1684
        %v1701 = vpack.c.b16 %v1694, %v1693
        %v1702 = vpack.c.b16 %v1696, %v1695
        %v1703 = vpack.c.b16 %v1698, %v1697
        %v1704 = vpack.c.b16 %v1700, %v1699
        %v1710 = vsel %vm803, %v1676, 0
        %1712 = vmatpush.bf16.msra.mxu0 0
        %1713 = vmatpush.bf16.msra.mxu0 0
        %1714 = vmatpush.bf16.msra.mxu0 0
        %1715 = vmatpush.bf16.msra.mxu0 0
        %1716 = vmatpush.bf16.msra.mxu0 %v1704
        %1717 = vmatpush.bf16.msra.mxu0 %v1703
        %1718 = vmatpush.bf16.msra.mxu0 %v1702
        %1719 = vmatpush.bf16.msra.mxu0 %v1701
        %1720 = vmatmul.bf16.gmra.mxu0 %v1710
        %v1721 = vpop.f32.mrf.mxu0
        %v1722 = vadd.f32 0.0, %v1721
        %v1723 = vpop.f32.mrf.mxu0
        %1724 = vdwg.mxu0
        %v1726 = vperm.slane %v1656, 0
        %v1728 = vadd.f32 %v1726, %v1722
        %s1729 = scalar_lea.vmem [#allocation7], 32
        %v1730 = vld [vmem:[%s1729] sm:$0xf]
        %v1731 = vld [vmem:[%s1729 + $0x4] sm:$0xf]
        %v1732 = vld [vmem:[%s1729 + $0x8] sm:$0xf]
        %v1733 = vld [vmem:[%s1729 + $0xc] sm:$0xf]
        %v1734 = vld [vmem:[%s1729 + $0x10] sm:$0xf]
        %v1735 = vld [vmem:[%s1729 + $0x14] sm:$0xf]
        %v1736 = vld [vmem:[%s1729 + $0x18] sm:$0xf]
        %v1737 = vld [vmem:[%s1729 + $0x1c] sm:$0xf]
        %v1739 = vunpack.c.l.b16 %v1655
        %v1740 = vpack.c.b16 %v1739, %v1739
        %v1741 = vunpack.c.l.b16 %v1740
        %v1742 = vrot.slane %v1667, 7
        %v1743 = vsel %vm1136, %v1742, %v1666
        %v1744 = vrot.slane %v1668, 6
        %v1745 = vsel %vm1050, %v1744, %v1743
        %v1746 = vrot.slane %v1741, 5
        %v1747 = vsel %vm1053, %v1746, %v1745
        %v1748 = vpack.c.b16 %v1747, %v1747
        %v1757 = vunpack.c.l.b16 %v1730
        %v1758 = vunpack.c.l.b16 %v1731
        %v1759 = vunpack.c.l.b16 %v1732
        %v1760 = vunpack.c.l.b16 %v1733
        %v1761 = vunpack.c.l.b16 %v1734
        %v1762 = vunpack.c.l.b16 %v1735
        %v1763 = vunpack.c.l.b16 %v1736
        %v1764 = vunpack.c.l.b16 %v1737
        %v1765 = vpack.c.b16 %v1758, %v1757
        %v1766 = vpack.c.b16 %v1760, %v1759
        %v1767 = vpack.c.b16 %v1762, %v1761
        %v1768 = vpack.c.b16 %v1764, %v1763
        %v1774 = vsel %vm803, %v1748, 0
        %1776 = vmatpush.bf16.msra.mxu0 0
        %1777 = vmatpush.bf16.msra.mxu0 0
        %1778 = vmatpush.bf16.msra.mxu0 0
        %1779 = vmatpush.bf16.msra.mxu0 0
        %1780 = vmatpush.bf16.msra.mxu0 %v1768
        %1781 = vmatpush.bf16.msra.mxu0 %v1767
        %1782 = vmatpush.bf16.msra.mxu0 %v1766
        %1783 = vmatpush.bf16.msra.mxu0 %v1765
        %1784 = vmatmul.bf16.gmra.mxu0 %v1774
        %v1785 = vpop.f32.mrf.mxu0
        %v1786 = vadd.f32 0.0, %v1785
        %v1787 = vpop.f32.mrf.mxu0
        %1788 = vdwg.mxu0
        %v1789 = vadd.f32 %v1728, %v1786
        %v1790 = vrot.slane %v1668, 7
        %v1791 = vsel %vm1136, %v1790, %v1667
        %v1792 = vrot.slane %v1741, 6
        %v1793 = vsel %vm1050, %v1792, %v1791
        %v1794 = vpack.c.b16 %v1793, %v1793
        %vm1796 = vcmask 1041408
        %vm1797 = vsmask.f32 1280
        %vm1798 = vmand %vm1796, %vm1797
        %v1799 = vsel %vm1798, %v1794, 0
        %s1800 = scalar_lea.vmem [#allocation7], 64
        %v1801 = vld [vmem:[%s1800] sm:$0xf]
        %v1802 = vld [vmem:[%s1800 + $0x4] sm:$0xf]
        %v1803 = vld [vmem:[%s1800 + $0x8] sm:$0xf]
        %v1804 = vld [vmem:[%s1800 + $0xc] sm:$0xf]
        %v1805 = vld [vmem:[%s1800 + $0x10] sm:$0xf]
        %v1806 = vld [vmem:[%s1800 + $0x14] sm:$0xf]
        %v1807 = vld [vmem:[%s1800 + $0x18] sm:$0xf]
        %v1808 = vld [vmem:[%s1800 + $0x1c] sm:$0xf]
        %v1817 = vunpack.c.l.b16 %v1801
        %v1818 = vunpack.c.l.b16 %v1802
        %v1819 = vunpack.c.l.b16 %v1803
        %v1820 = vunpack.c.l.b16 %v1804
        %v1821 = vunpack.c.l.b16 %v1805
        %v1822 = vunpack.c.l.b16 %v1806
        %v1823 = vunpack.c.l.b16 %v1807
        %v1824 = vunpack.c.l.b16 %v1808
        %v1825 = vpack.c.b16 %v1818, %v1817
        %v1826 = vpack.c.b16 %v1820, %v1819
        %v1827 = vpack.c.b16 %v1822, %v1821
        %v1828 = vpack.c.b16 %v1824, %v1823
        %v1834 = vsel %vm803, %v1799, 0
        %1836 = vmatpush.bf16.msra.mxu0 0
        %1837 = vmatpush.bf16.msra.mxu0 0
        %1838 = vmatpush.bf16.msra.mxu0 0
        %1839 = vmatpush.bf16.msra.mxu0 0
        %1840 = vmatpush.bf16.msra.mxu0 %v1828
        %1841 = vmatpush.bf16.msra.mxu0 %v1827
        %1842 = vmatpush.bf16.msra.mxu0 %v1826
        %1843 = vmatpush.bf16.msra.mxu0 %v1825
        %1844 = vmatmul.bf16.gmra.mxu0 %v1834
        %v1845 = vpop.f32.mrf.mxu0
        %v1846 = vadd.f32 0.0, %v1845
        %v1847 = vpop.f32.mrf.mxu0
        %1848 = vdwg.mxu0
        %v1849 = vadd.f32 %v1789, %v1846
        %v1850 = vmax.f32 %v1849, 0.0
        %v1851 = vpack.c.bf16 %v1850, %v1850
        %v1852 = vld [vmem:[%s14] sm:$0x1]
        %v1853 = vld [vmem:[#allocation9] sm:$0xf]
        %v1854 = vld [vmem:[#allocation9 + $0x4] sm:$0xf]
        %v1855 = vld [vmem:[#allocation9 + $0x8] sm:$0xf]
        %v1856 = vld [vmem:[#allocation9 + $0xc] sm:$0xf]
        %v1857 = vld [vmem:[#allocation9 + $0x10] sm:$0xf]
        %v1858 = vld [vmem:[#allocation9 + $0x14] sm:$0xf]
        %v1859 = vld [vmem:[#allocation9 + $0x18] sm:$0xf]
        %v1860 = vld [vmem:[#allocation9 + $0x1c] sm:$0xf]
        %v1869 = vunpack.c.l.b16 %v1853
        %v1870 = vunpack.c.l.b16 %v1854
        %v1871 = vunpack.c.l.b16 %v1855
        %v1872 = vunpack.c.l.b16 %v1856
        %v1873 = vunpack.c.l.b16 %v1857
        %v1874 = vunpack.c.l.b16 %v1858
        %v1875 = vunpack.c.l.b16 %v1859
        %v1876 = vunpack.c.l.b16 %v1860
        %v1877 = vpack.c.b16 %v1870, %v1869
        %v1878 = vpack.c.b16 %v1872, %v1871
        %v1879 = vpack.c.b16 %v1874, %v1873
        %v1880 = vpack.c.b16 %v1876, %v1875
        %v1886 = vsel %vm803, %v1851, 0
        %1888 = vmatpush.bf16.msra.mxu0 0
        %1889 = vmatpush.bf16.msra.mxu0 0
        %1890 = vmatpush.bf16.msra.mxu0 0
        %1891 = vmatpush.bf16.msra.mxu0 0
        %1892 = vmatpush.bf16.msra.mxu0 %v1880
        %1893 = vmatpush.bf16.msra.mxu0 %v1879
        %1894 = vmatpush.bf16.msra.mxu0 %v1878
        %1895 = vmatpush.bf16.msra.mxu0 %v1877
        %1896 = vmatmul.bf16.gmra.mxu0 %v1886
        %v1897 = vpop.f32.mrf.mxu0
        %v1898 = vadd.f32 0.0, %v1897
        %v1899 = vpop.f32.mrf.mxu0
        %1900 = vdwg.mxu0
        %v1902 = vperm.slane %v1852, 0
        %v1904 = vadd.f32 %v1902, %v1898
        %v1906 = vrot.slane %v1904, 2
        %v1907 = vrot.slane %v1904, 1
        %v1908 = vrot.slane %v1906, 1
        %v1913 = vadd.f32 %v1640, %v1904
        %v1914 = vadd.f32 %v1642, %v1907
        %v1915 = vadd.f32 %v1643, %v1906
        %v1916 = vadd.f32 %v1644, %v1908
        %v1917 = vpack.c.bf16 %v1913, %v1913
        %v1918 = vpack.c.bf16 %v1914, %v1914
        %v1919 = vpack.c.bf16 %v1915, %v1915
        %v1920 = vpack.c.bf16 %v1916, %v1916
        %v1921 = vld [vmem:[%s16] sm:$0x1]
        %v1925 = vunpack.c.l.b16 %v1917
        %v1926 = vunpack.c.l.b16 %v1918
        %v1927 = vunpack.c.l.b16 %v1919
        %v1928 = vpack.c.b16 %v1925, %v1925
        %v1929 = vpack.c.b16 %v1926, %v1926
        %v1930 = vpack.c.b16 %v1927, %v1927
        %v1931 = vunpack.c.l.b16 %v1928
        %v1932 = vunpack.c.l.b16 %v1929
        %v1933 = vunpack.c.l.b16 %v1930
        %v1934 = vrot.slane %v1931, 7
        %v1935 = vrot.slane %v1932, 6
        %v1936 = vsel %vm1050, %v1935, %v1934
        %v1937 = vrot.slane %v1933, 5
        %v1938 = vsel %vm1053, %v1937, %v1936
        %v1939 = vpack.c.b16 %v1938, %v1938
        %v1941 = vsel %vm668, 0, %v1939
        %v1942 = vld [vmem:[#allocation10] sm:$0xf]
        %v1943 = vld [vmem:[#allocation10 + $0x4] sm:$0xf]
        %v1944 = vld [vmem:[#allocation10 + $0x8] sm:$0xf]
        %v1945 = vld [vmem:[#allocation10 + $0xc] sm:$0xf]
        %v1946 = vld [vmem:[#allocation10 + $0x10] sm:$0xf]
        %v1947 = vld [vmem:[#allocation10 + $0x14] sm:$0xf]
        %v1948 = vld [vmem:[#allocation10 + $0x18] sm:$0xf]
        %v1949 = vld [vmem:[#allocation10 + $0x1c] sm:$0xf]
        %v1958 = vunpack.c.l.b16 %v1942
        %v1959 = vunpack.c.l.b16 %v1943
        %v1960 = vunpack.c.l.b16 %v1944
        %v1961 = vunpack.c.l.b16 %v1945
        %v1962 = vunpack.c.l.b16 %v1946
        %v1963 = vunpack.c.l.b16 %v1947
        %v1964 = vunpack.c.l.b16 %v1948
        %v1965 = vunpack.c.l.b16 %v1949
        %v1966 = vpack.c.b16 %v1959, %v1958
        %v1967 = vpack.c.b16 %v1961, %v1960
        %v1968 = vpack.c.b16 %v1963, %v1962
        %v1969 = vpack.c.b16 %v1965, %v1964
        %v1975 = vsel %vm803, %v1941, 0
        %1977 = vmatpush.bf16.msra.mxu0 0
        %1978 = vmatpush.bf16.msra.mxu0 0
        %1979 = vmatpush.bf16.msra.mxu0 0
        %1980 = vmatpush.bf16.msra.mxu0 0
        %1981 = vmatpush.bf16.msra.mxu0 %v1969
        %1982 = vmatpush.bf16.msra.mxu0 %v1968
        %1983 = vmatpush.bf16.msra.mxu0 %v1967
        %1984 = vmatpush.bf16.msra.mxu0 %v1966
        %1985 = vmatmul.bf16.gmra.mxu0 %v1975
        %v1986 = vpop.f32.mrf.mxu0
        %v1987 = vadd.f32 0.0, %v1986
        %v1988 = vpop.f32.mrf.mxu0
        %1989 = vdwg.mxu0
        %v1991 = vperm.slane %v1921, 0
        %v1993 = vadd.f32 %v1991, %v1987
        %s1994 = scalar_lea.vmem [#allocation10], 32
        %v1995 = vld [vmem:[%s1994] sm:$0xf]
        %v1996 = vld [vmem:[%s1994 + $0x4] sm:$0xf]
        %v1997 = vld [vmem:[%s1994 + $0x8] sm:$0xf]
        %v1998 = vld [vmem:[%s1994 + $0xc] sm:$0xf]
        %v1999 = vld [vmem:[%s1994 + $0x10] sm:$0xf]
        %v2000 = vld [vmem:[%s1994 + $0x14] sm:$0xf]
        %v2001 = vld [vmem:[%s1994 + $0x18] sm:$0xf]
        %v2002 = vld [vmem:[%s1994 + $0x1c] sm:$0xf]
        %v2004 = vunpack.c.l.b16 %v1920
        %v2005 = vpack.c.b16 %v2004, %v2004
        %v2006 = vunpack.c.l.b16 %v2005
        %v2007 = vrot.slane %v1932, 7
        %v2008 = vsel %vm1136, %v2007, %v1931
        %v2009 = vrot.slane %v1933, 6
        %v2010 = vsel %vm1050, %v2009, %v2008
        %v2011 = vrot.slane %v2006, 5
        %v2012 = vsel %vm1053, %v2011, %v2010
        %v2013 = vpack.c.b16 %v2012, %v2012
        %v2022 = vunpack.c.l.b16 %v1995
        %v2023 = vunpack.c.l.b16 %v1996
        %v2024 = vunpack.c.l.b16 %v1997
        %v2025 = vunpack.c.l.b16 %v1998
        %v2026 = vunpack.c.l.b16 %v1999
        %v2027 = vunpack.c.l.b16 %v2000
        %v2028 = vunpack.c.l.b16 %v2001
        %v2029 = vunpack.c.l.b16 %v2002
        %v2030 = vpack.c.b16 %v2023, %v2022
        %v2031 = vpack.c.b16 %v2025, %v2024
        %v2032 = vpack.c.b16 %v2027, %v2026
        %v2033 = vpack.c.b16 %v2029, %v2028
        %v2039 = vsel %vm803, %v2013, 0
        %2041 = vmatpush.bf16.msra.mxu0 0
        %2042 = vmatpush.bf16.msra.mxu0 0
        %2043 = vmatpush.bf16.msra.mxu0 0
        %2044 = vmatpush.bf16.msra.mxu0 0
        %2045 = vmatpush.bf16.msra.mxu0 %v2033
        %2046 = vmatpush.bf16.msra.mxu0 %v2032
        %2047 = vmatpush.bf16.msra.mxu0 %v2031
        %2048 = vmatpush.bf16.msra.mxu0 %v2030
        %2049 = vmatmul.bf16.gmra.mxu0 %v2039
        %v2050 = vpop.f32.mrf.mxu0
        %v2051 = vadd.f32 0.0, %v2050
        %v2052 = vpop.f32.mrf.mxu0
        %2053 = vdwg.mxu0
        %v2054 = vadd.f32 %v1993, %v2051
        %v2055 = vrot.slane %v1933, 7
        %v2056 = vsel %vm1136, %v2055, %v1932
        %v2057 = vrot.slane %v2006, 6
        %v2058 = vsel %vm1050, %v2057, %v2056
        %v2059 = vpack.c.b16 %v2058, %v2058
        %v2061 = vsel %vm1798, %v2059, 0
        %s2062 = scalar_lea.vmem [#allocation10], 64
        %v2063 = vld [vmem:[%s2062] sm:$0xf]
        %v2064 = vld [vmem:[%s2062 + $0x4] sm:$0xf]
        %v2065 = vld [vmem:[%s2062 + $0x8] sm:$0xf]
        %v2066 = vld [vmem:[%s2062 + $0xc] sm:$0xf]
        %v2067 = vld [vmem:[%s2062 + $0x10] sm:$0xf]
        %v2068 = vld [vmem:[%s2062 + $0x14] sm:$0xf]
        %v2069 = vld [vmem:[%s2062 + $0x18] sm:$0xf]
        %v2070 = vld [vmem:[%s2062 + $0x1c] sm:$0xf]
        %v2079 = vunpack.c.l.b16 %v2063
        %v2080 = vunpack.c.l.b16 %v2064
        %v2081 = vunpack.c.l.b16 %v2065
        %v2082 = vunpack.c.l.b16 %v2066
        %v2083 = vunpack.c.l.b16 %v2067
        %v2084 = vunpack.c.l.b16 %v2068
        %v2085 = vunpack.c.l.b16 %v2069
        %v2086 = vunpack.c.l.b16 %v2070
        %v2087 = vpack.c.b16 %v2080, %v2079
        %v2088 = vpack.c.b16 %v2082, %v2081
        %v2089 = vpack.c.b16 %v2084, %v2083
        %v2090 = vpack.c.b16 %v2086, %v2085
        %v2096 = vsel %vm803, %v2061, 0
        %2098 = vmatpush.bf16.msra.mxu0 0
        %2099 = vmatpush.bf16.msra.mxu0 0
        %2100 = vmatpush.bf16.msra.mxu0 0
        %2101 = vmatpush.bf16.msra.mxu0 0
        %2102 = vmatpush.bf16.msra.mxu0 %v2090
        %2103 = vmatpush.bf16.msra.mxu0 %v2089
        %2104 = vmatpush.bf16.msra.mxu0 %v2088
        %2105 = vmatpush.bf16.msra.mxu0 %v2087
        %2106 = vmatmul.bf16.gmra.mxu0 %v2096
        %v2107 = vpop.f32.mrf.mxu0
        %v2108 = vadd.f32 0.0, %v2107
        %v2109 = vpop.f32.mrf.mxu0
        %2110 = vdwg.mxu0
        %v2111 = vadd.f32 %v2054, %v2108
        %vm2112 = vcmask 519168
        %2113 = vst.msk [vmem:[%s646] sm:$0xf] %vm2112, %v2111
        %p2114 = scmp.lt.s32.totalorder %s32, 1
        %s2115 = scalar_select %p2114, %s32, 1
        %s2116 = smul.addr %s2115, 4
        %s2117 = scalar_lea.vmem %s17, %s2116
        // Predicated region
        $region113: #{t2m_forward.2} parent=87 // pred_check
          %p2118 = pneg %p412
        $region114: #{t2m_forward.2} parent=87 // pred_check_branch
          %2120 = sbr.rel (%p2118) target = $region116
        $region115: #{t2m_forward.2} parent=87 // pred_region
          _
        $region116: #{t2m_forward.2} parent=87 // pred_fallthru
          _
      $region88: #{t2m_forward.2} parent=5 // pred_fallthru
        _
      %p2121 = scmp.le.s32.totalorder 2, %s27
      // Predicated region
      $region117: #{t2m_forward.2} parent=5 // pred_check
        %p2122 = pneg %p2121
      $region118: #{t2m_forward.2} parent=5 // pred_check_branch
        %2124 = sbr.rel (%p2122) target = $region120
      $region119: #{t2m_forward.2} parent=5 // pred_region
        %s2125 = ssub.s32 %s27, 2
        // Predicated region
        $region121: #{t2m_forward.2} parent=119 // pred_check
          %p2126 = pneg %p418
        $region122: #{t2m_forward.2} parent=119 // pred_check_branch
          %2128 = sbr.rel (%p2126) target = $region124
        $region123: #{t2m_forward.2} parent=119 // pred_region
          %p2129 = scmp.lt.s32.totalorder %s33, 1
          %s2130 = scalar_select %p2129, %s33, 1
          %s2131 = smul.addr %s2130, 4
          %s2132 = scalar_lea.vmem %s17, %s2131
        $region124: #{t2m_forward.2} parent=119 // pred_fallthru
          _
      $region120: #{t2m_forward.2} parent=5 // pred_fallthru
        _
    $region6: #{t2m_forward.2} parent=1 // loop_footer
      %s31 = sadd.s32 1, %s27
    $region7: #{t2m_forward.2} parent=1 // loop_footer_branch
      %26 = sbr.rel target = $region3
    $region8: #{t2m_forward.2} parent=1 // loop_exit
      _
    %2133 = vsyncpa [#allocation3], 1
    %s2134 = scalar_lea.sflag [#allocation3], 1
    %2135 = vsyncpa %s2134, 1
    %2136 = vsyncpa [#allocation5], 1
    %2137 = vsyncpa [#allocation8], 1
    %2138 = vsyncpa [#allocation11], 1

// kernel: t2m_forward.3
$region0: #{t2m_forward.3}
  #allocation0 [shape = 'u32[]', space=smem, size = 0x4, offset = 0x4, fixed_abs, tag = 'smem constant byte address 0x4 - core index']
  #allocation1 [shape = 'u32[72,128]{1,0:T(1,128)}', space=vmem, size = 0x9000, scoped, tag = 'internal scratch']
  #allocation2 [shape = 'f32[9,64]{1,0:T(8,128)}', space=vmem, size = 0x2000, scoped, tag = 'scratch operand']
  %s0 = inlined_call_operand.vmem [shape: f32[2,9,64], index: 0, kind: input, shape index: {}]
  %s1 = inlined_call_operand.vmem [shape: f32[4,1,64], index: 1, kind: input, shape index: {}, may-alias: {1,3}]
  %s2 = inlined_call_operand.vmem [shape: f32[4,1,64], index: 2, kind: input, shape index: {}, may-alias: {2,4,8,12}]
  %s3 = inlined_call_operand.vmem [shape: f32[4,1,64], index: 3, kind: input, shape index: {}, may-alias: {1,3}]
  %s4 = inlined_call_operand.vmem [shape: f32[4,1,64], index: 4, kind: input, shape index: {}, may-alias: {2,4,8,12}]
  %s5 = inlined_call_operand.hbm [shape: bf16[4,64,192], index: 5, kind: input, shape index: {}]
  %s6 = inlined_call_operand.vmem [shape: f32[4,1,192], index: 6, kind: input, shape index: {}]
  %s7 = inlined_call_operand.vmem [shape: bf16[4,64,64], index: 7, kind: input, shape index: {}]
  %s8 = inlined_call_operand.vmem [shape: f32[4,1,64], index: 8, kind: input, shape index: {}, may-alias: {2,4,8,12}]
  %s9 = inlined_call_operand.hbm [shape: bf16[4,64,256], index: 9, kind: input, shape index: {}]
  %s10 = inlined_call_operand.vmem [shape: f32[4,1,256], index: 10, kind: input, shape index: {}]
  %s11 = inlined_call_operand.hbm [shape: bf16[4,256,64], index: 11, kind: input, shape index: {}]
  %s12 = inlined_call_operand.vmem [shape: f32[4,1,64], index: 12, kind: input, shape index: {}, may-alias: {2,4,8,12}]
  %s13 = inlined_call_operand.vmem [shape: f32[1,64], index: 13, kind: input, shape index: {}]
  %s14 = inlined_call_operand.vmem [shape: f32[1,64], index: 14, kind: input, shape index: {}]
  %s15 = inlined_call_operand.vmem [shape: bf16[64,128], index: 15, kind: input, shape index: {}]
  %s16 = inlined_call_operand.vmem [shape: f32[2,9,128], index: 16, kind: output, shape index: {}]
  %s17 = sld [smem:[#allocation0]]
  $region117: #{t2m_forward.3} parent=0
    _
  %s19 = ssub.s32 1, %s17
  %s20 = scalar_select 0, %s19, %s17
  $region1: #{t2m_forward.3} parent=0
    #allocation3 [shape = 'u8[65536]{0}', space=vmem, size = 0x10000, scoped, tag = 'input window, operand 5']
    #allocation4 [shape = 's32[2]{0}', space=sflag, size = 0x8, scoped, tag = 'scoped memory for t2m_forward.3']
    #allocation5 [shape = 'u8[65536]{0}', space=vmem, size = 0x10000, scoped, tag = 'input window, operand 9']
    #allocation6 [shape = 's32[2]{0}', space=sflag, size = 0x8, scoped, tag = 'scoped memory for t2m_forward.3']
    #allocation7 [shape = 'u8[131072]{0}', space=vmem, size = 0x20000, scoped, tag = 'input window, operand 11']
    %21 = vsyncpa [#allocation4], 0
    %s22 = scalar_lea.sflag [#allocation4], 1
    %23 = vsyncpa %s22, 0
    %24 = vsyncpa [#allocation6], 0
    %s25 = scalar_lea.sflag [#allocation6], 1
    %26 = vsyncpa %s25, 0
    loop: start=0, step=1, limit=10
    $region2: #{t2m_forward.3} parent=1 // loop_pre_header
      _
    $region3: #{t2m_forward.3} parent=1 // loop_header
      %s28 = sphi 0, %s32
      %p29 = scmp.ge.s32.totalorder %s28, 10
      %s35 = sphi 0, %s47
      %s36 = sphi 0, %s43
      %s37 = sphi 0, %s35
      %s38 = sphi 0, %s36
      %s39 = sphi 0, %s37
      %s40 = sphi 0, %s38
      %s50 = sphi 0, %s52
      %s53 = sphi 0, %s50
      %s54 = sphi 0, %s53
      %s70 = sphi 0, %s54
      %s76 = sphi 0, %s78
      %s79 = sphi 0, %s76
      %s80 = sphi 0, %s79
      %s96 = sphi 0, %s80
      %s102 = sphi 0, %s104
      %s105 = sphi 0, %s102
      %s106 = sphi 0, %s105
      %s122 = sphi 0, %s106
      %s128 = sphi 0, %s130
      %s131 = sphi 0, %s128
      %s132 = sphi 0, %s131
      %s148 = sphi 0, %s132
      %s154 = sphi 0, %s156
      %s157 = sphi 0, %s154
      %s158 = sphi 0, %s157
      %s174 = sphi 0, %s158
      %s180 = sphi 0, %s182
      %s183 = sphi 0, %s180
      %s184 = sphi 0, %s183
      %s200 = sphi 0, %s184
      %s206 = sphi 0, %s208
      %s209 = sphi 0, %s206
      %s210 = sphi 0, %s209
      %s226 = sphi 0, %s210
      %s232 = sphi 0, %s234
      %s235 = sphi 0, %s232
      %s236 = sphi 0, %s235
      %s252 = sphi 0, %s236
      %s258 = sphi 0, %s260
      %s261 = sphi 0, %s258
      %s262 = sphi 0, %s261
      %s278 = sphi 0, %s262
      %s284 = sphi 0, %s286
      %s287 = sphi 0, %s284
      %s288 = sphi 0, %s287
      %s304 = sphi 0, %s288
      %s310 = sphi 0, %s312
      %s313 = sphi 0, %s310
      %s314 = sphi 0, %s313
      %s330 = sphi 0, %s314
      %s336 = sphi 0, %s338
      %s339 = sphi 0, %s336
      %s340 = sphi 0, %s339
      %s356 = sphi 0, %s340
      %s362 = sphi 0, %s364
      %s365 = sphi 0, %s362
      %s366 = sphi 0, %s365
      %s382 = sphi 0, %s366
      %s386 = sphi 0, %s386
      %s388 = sphi 0, %s386
      %s389 = sphi 0, %s388
      %s403 = sphi 0, %s389
      %s407 = sphi 0, %s407
      %s409 = sphi 0, %s407
      %s410 = sphi 0, %s409
      %s424 = sphi 0, %s410
      %s428 = sphi 0, %s428
      %s430 = sphi 0, %s428
      %s431 = sphi 0, %s430
      %s445 = sphi 0, %s431
      %s451 = sphi 0, %s453
      %s454 = sphi 0, %s451
      %s455 = sphi 0, %s454
      %s471 = sphi 0, %s455
    $region4: #{t2m_forward.3} parent=1 // loop_header_branch
      %31 = sbr.rel (%p29) target = $region8
    $region5: #{t2m_forward.3} parent=1 // loop_body
      %s33 = ssub.s32 %s28, 1
      %s34 = ssub.s32 %s28, 2
      %s41 = sadd.s32 1, %s36
      %p42 = scmp.ge.s32.totalorder %s41, 4
      %s43 = scalar_select %p42, 0, %s41
      %s44 = sadd.s32 1, %s35
      %s45 = scalar_select %p42, %s44, %s35
      %p46 = scmp.ge.s32.totalorder %s45, 2
      %s47 = scalar_select %p46, 0, %s45
      %s48 = ssub.s32 %s35, %s47
      %p49 = scmp.eq.s32.totalorder %s48, 0
      %s51 = sadd.s32 %s50, 1
      %s52 = scalar_select %p49, %s50, %s51
      %p55 = pneg %p49
      %p56 = scmp.eq.s32.totalorder %s28, 7
      %p57 = por %p55, %p56
      %p58 = scmp.ne.s32.totalorder %s50, %s53
      %p59 = scmp.eq.s32.totalorder %s28, 0
      %p60 = por %p58, %p59
      %p61 = scmp.ne.s32.totalorder %s50, %s53
      %p62 = scmp.eq.s32.totalorder %s33, 7
      %p63 = por %p61, %p62
      %p64 = scmp.ne.s32.totalorder %s53, %s54
      %p65 = scmp.eq.s32.totalorder %s33, 0
      %p66 = por %p64, %p65
      %p67 = scmp.ne.s32.totalorder %s53, %s54
      %p68 = scmp.eq.s32.totalorder %s34, 7
      %p69 = por %p67, %p68
      %p71 = scmp.ne.s32.totalorder %s54, %s70
      %p72 = scmp.eq.s32.totalorder %s34, 0
      %p73 = por %p71, %p72
      %s74 = ssub.s32 %s36, %s43
      %p75 = scmp.eq.s32.totalorder %s74, 0
      %s77 = sadd.s32 %s76, 1
      %s78 = scalar_select %p75, %s76, %s77
      %p81 = pneg %p75
      %p82 = scmp.eq.s32.totalorder %s28, 7
      %p83 = por %p81, %p82
      %p84 = scmp.ne.s32.totalorder %s76, %s79
      %p85 = scmp.eq.s32.totalorder %s28, 0
      %p86 = por %p84, %p85
      %p87 = scmp.ne.s32.totalorder %s76, %s79
      %p88 = scmp.eq.s32.totalorder %s33, 7
      %p89 = por %p87, %p88
      %p90 = scmp.ne.s32.totalorder %s79, %s80
      %p91 = scmp.eq.s32.totalorder %s33, 0
      %p92 = por %p90, %p91
      %p93 = scmp.ne.s32.totalorder %s79, %s80
      %p94 = scmp.eq.s32.totalorder %s34, 7
      %p95 = por %p93, %p94
      %p97 = scmp.ne.s32.totalorder %s80, %s96
      %p98 = scmp.eq.s32.totalorder %s34, 0
      %p99 = por %p97, %p98
      %s100 = ssub.s32 %s36, %s43
      %p101 = scmp.eq.s32.totalorder %s100, 0
      %s103 = sadd.s32 %s102, 1
      %s104 = scalar_select %p101, %s102, %s103
      %p107 = pneg %p101
      %p108 = scmp.eq.s32.totalorder %s28, 7
      %p109 = por %p107, %p108
      %p110 = scmp.ne.s32.totalorder %s102, %s105
      %p111 = scmp.eq.s32.totalorder %s28, 0
      %p112 = por %p110, %p111
      %p113 = scmp.ne.s32.totalorder %s102, %s105
      %p114 = scmp.eq.s32.totalorder %s33, 7
      %p115 = por %p113, %p114
      %p116 = scmp.ne.s32.totalorder %s105, %s106
      %p117 = scmp.eq.s32.totalorder %s33, 0
      %p118 = por %p116, %p117
      %p119 = scmp.ne.s32.totalorder %s105, %s106
      %p120 = scmp.eq.s32.totalorder %s34, 7
      %p121 = por %p119, %p120
      %p123 = scmp.ne.s32.totalorder %s106, %s122
      %p124 = scmp.eq.s32.totalorder %s34, 0
      %p125 = por %p123, %p124
      %s126 = ssub.s32 %s36, %s43
      %p127 = scmp.eq.s32.totalorder %s126, 0
      %s129 = sadd.s32 %s128, 1
      %s130 = scalar_select %p127, %s128, %s129
      %p133 = pneg %p127
      %p134 = scmp.eq.s32.totalorder %s28, 7
      %p135 = por %p133, %p134
      %p136 = scmp.ne.s32.totalorder %s128, %s131
      %p137 = scmp.eq.s32.totalorder %s28, 0
      %p138 = por %p136, %p137
      %p139 = scmp.ne.s32.totalorder %s128, %s131
      %p140 = scmp.eq.s32.totalorder %s33, 7
      %p141 = por %p139, %p140
      %p142 = scmp.ne.s32.totalorder %s131, %s132
      %p143 = scmp.eq.s32.totalorder %s33, 0
      %p144 = por %p142, %p143
      %p145 = scmp.ne.s32.totalorder %s131, %s132
      %p146 = scmp.eq.s32.totalorder %s34, 7
      %p147 = por %p145, %p146
      %p149 = scmp.ne.s32.totalorder %s132, %s148
      %p150 = scmp.eq.s32.totalorder %s34, 0
      %p151 = por %p149, %p150
      %s152 = ssub.s32 %s36, %s43
      %p153 = scmp.eq.s32.totalorder %s152, 0
      %s155 = sadd.s32 %s154, 1
      %s156 = scalar_select %p153, %s154, %s155
      %p159 = pneg %p153
      %p160 = scmp.eq.s32.totalorder %s28, 7
      %p161 = por %p159, %p160
      %p162 = scmp.ne.s32.totalorder %s154, %s157
      %p163 = scmp.eq.s32.totalorder %s28, 0
      %p164 = por %p162, %p163
      %p165 = scmp.ne.s32.totalorder %s154, %s157
      %p166 = scmp.eq.s32.totalorder %s33, 7
      %p167 = por %p165, %p166
      %p168 = scmp.ne.s32.totalorder %s157, %s158
      %p169 = scmp.eq.s32.totalorder %s33, 0
      %p170 = por %p168, %p169
      %p171 = scmp.ne.s32.totalorder %s157, %s158
      %p172 = scmp.eq.s32.totalorder %s34, 7
      %p173 = por %p171, %p172
      %p175 = scmp.ne.s32.totalorder %s158, %s174
      %p176 = scmp.eq.s32.totalorder %s34, 0
      %p177 = por %p175, %p176
      %s178 = ssub.s32 %s36, %s43
      %p179 = scmp.eq.s32.totalorder %s178, 0
      %s181 = sadd.s32 %s180, 1
      %s182 = scalar_select %p179, %s180, %s181
      %p185 = pneg %p179
      %p186 = scmp.eq.s32.totalorder %s28, 7
      %p187 = por %p185, %p186
      %p188 = scmp.ne.s32.totalorder %s180, %s183
      %p189 = scmp.eq.s32.totalorder %s28, 0
      %p190 = por %p188, %p189
      %p191 = scmp.ne.s32.totalorder %s180, %s183
      %p192 = scmp.eq.s32.totalorder %s33, 7
      %p193 = por %p191, %p192
      %p194 = scmp.ne.s32.totalorder %s183, %s184
      %p195 = scmp.eq.s32.totalorder %s33, 0
      %p196 = por %p194, %p195
      %p197 = scmp.ne.s32.totalorder %s183, %s184
      %p198 = scmp.eq.s32.totalorder %s34, 7
      %p199 = por %p197, %p198
      %p201 = scmp.ne.s32.totalorder %s184, %s200
      %p202 = scmp.eq.s32.totalorder %s34, 0
      %p203 = por %p201, %p202
      %s204 = ssub.s32 %s36, %s43
      %p205 = scmp.eq.s32.totalorder %s204, 0
      %s207 = sadd.s32 %s206, 1
      %s208 = scalar_select %p205, %s206, %s207
      %p211 = pneg %p205
      %p212 = scmp.eq.s32.totalorder %s28, 7
      %p213 = por %p211, %p212
      %p214 = scmp.ne.s32.totalorder %s206, %s209
      %p215 = scmp.eq.s32.totalorder %s28, 0
      %p216 = por %p214, %p215
      %p217 = scmp.ne.s32.totalorder %s206, %s209
      %p218 = scmp.eq.s32.totalorder %s33, 7
      %p219 = por %p217, %p218
      %p220 = scmp.ne.s32.totalorder %s209, %s210
      %p221 = scmp.eq.s32.totalorder %s33, 0
      %p222 = por %p220, %p221
      %p223 = scmp.ne.s32.totalorder %s209, %s210
      %p224 = scmp.eq.s32.totalorder %s34, 7
      %p225 = por %p223, %p224
      %p227 = scmp.ne.s32.totalorder %s210, %s226
      %p228 = scmp.eq.s32.totalorder %s34, 0
      %p229 = por %p227, %p228
      %s230 = ssub.s32 %s36, %s43
      %p231 = scmp.eq.s32.totalorder %s230, 0
      %s233 = sadd.s32 %s232, 1
      %s234 = scalar_select %p231, %s232, %s233
      %p237 = pneg %p231
      %p238 = scmp.eq.s32.totalorder %s28, 7
      %p239 = por %p237, %p238
      %p240 = scmp.ne.s32.totalorder %s232, %s235
      %p241 = scmp.eq.s32.totalorder %s28, 0
      %p242 = por %p240, %p241
      %p243 = scmp.ne.s32.totalorder %s232, %s235
      %p244 = scmp.eq.s32.totalorder %s33, 7
      %p245 = por %p243, %p244
      %p246 = scmp.ne.s32.totalorder %s235, %s236
      %p247 = scmp.eq.s32.totalorder %s33, 0
      %p248 = por %p246, %p247
      %p249 = scmp.ne.s32.totalorder %s235, %s236
      %p250 = scmp.eq.s32.totalorder %s34, 7
      %p251 = por %p249, %p250
      %p253 = scmp.ne.s32.totalorder %s236, %s252
      %p254 = scmp.eq.s32.totalorder %s34, 0
      %p255 = por %p253, %p254
      %s256 = ssub.s32 %s36, %s43
      %p257 = scmp.eq.s32.totalorder %s256, 0
      %s259 = sadd.s32 %s258, 1
      %s260 = scalar_select %p257, %s258, %s259
      %p263 = pneg %p257
      %p264 = scmp.eq.s32.totalorder %s28, 7
      %p265 = por %p263, %p264
      %p266 = scmp.ne.s32.totalorder %s258, %s261
      %p267 = scmp.eq.s32.totalorder %s28, 0
      %p268 = por %p266, %p267
      %p269 = scmp.ne.s32.totalorder %s258, %s261
      %p270 = scmp.eq.s32.totalorder %s33, 7
      %p271 = por %p269, %p270
      %p272 = scmp.ne.s32.totalorder %s261, %s262
      %p273 = scmp.eq.s32.totalorder %s33, 0
      %p274 = por %p272, %p273
      %p275 = scmp.ne.s32.totalorder %s261, %s262
      %p276 = scmp.eq.s32.totalorder %s34, 7
      %p277 = por %p275, %p276
      %p279 = scmp.ne.s32.totalorder %s262, %s278
      %p280 = scmp.eq.s32.totalorder %s34, 0
      %p281 = por %p279, %p280
      %s282 = ssub.s32 %s36, %s43
      %p283 = scmp.eq.s32.totalorder %s282, 0
      %s285 = sadd.s32 %s284, 1
      %s286 = scalar_select %p283, %s284, %s285
      %p289 = pneg %p283
      %p290 = scmp.eq.s32.totalorder %s28, 7
      %p291 = por %p289, %p290
      %p292 = scmp.ne.s32.totalorder %s284, %s287
      %p293 = scmp.eq.s32.totalorder %s28, 0
      %p294 = por %p292, %p293
      %p295 = scmp.ne.s32.totalorder %s284, %s287
      %p296 = scmp.eq.s32.totalorder %s33, 7
      %p297 = por %p295, %p296
      %p298 = scmp.ne.s32.totalorder %s287, %s288
      %p299 = scmp.eq.s32.totalorder %s33, 0
      %p300 = por %p298, %p299
      %p301 = scmp.ne.s32.totalorder %s287, %s288
      %p302 = scmp.eq.s32.totalorder %s34, 7
      %p303 = por %p301, %p302
      %p305 = scmp.ne.s32.totalorder %s288, %s304
      %p306 = scmp.eq.s32.totalorder %s34, 0
      %p307 = por %p305, %p306
      %s308 = ssub.s32 %s36, %s43
      %p309 = scmp.eq.s32.totalorder %s308, 0
      %s311 = sadd.s32 %s310, 1
      %s312 = scalar_select %p309, %s310, %s311
      %p315 = pneg %p309
      %p316 = scmp.eq.s32.totalorder %s28, 7
      %p317 = por %p315, %p316
      %p318 = scmp.ne.s32.totalorder %s310, %s313
      %p319 = scmp.eq.s32.totalorder %s28, 0
      %p320 = por %p318, %p319
      %p321 = scmp.ne.s32.totalorder %s310, %s313
      %p322 = scmp.eq.s32.totalorder %s33, 7
      %p323 = por %p321, %p322
      %p324 = scmp.ne.s32.totalorder %s313, %s314
      %p325 = scmp.eq.s32.totalorder %s33, 0
      %p326 = por %p324, %p325
      %p327 = scmp.ne.s32.totalorder %s313, %s314
      %p328 = scmp.eq.s32.totalorder %s34, 7
      %p329 = por %p327, %p328
      %p331 = scmp.ne.s32.totalorder %s314, %s330
      %p332 = scmp.eq.s32.totalorder %s34, 0
      %p333 = por %p331, %p332
      %s334 = ssub.s32 %s36, %s43
      %p335 = scmp.eq.s32.totalorder %s334, 0
      %s337 = sadd.s32 %s336, 1
      %s338 = scalar_select %p335, %s336, %s337
      %p341 = pneg %p335
      %p342 = scmp.eq.s32.totalorder %s28, 7
      %p343 = por %p341, %p342
      %p344 = scmp.ne.s32.totalorder %s336, %s339
      %p345 = scmp.eq.s32.totalorder %s28, 0
      %p346 = por %p344, %p345
      %p347 = scmp.ne.s32.totalorder %s336, %s339
      %p348 = scmp.eq.s32.totalorder %s33, 7
      %p349 = por %p347, %p348
      %p350 = scmp.ne.s32.totalorder %s339, %s340
      %p351 = scmp.eq.s32.totalorder %s33, 0
      %p352 = por %p350, %p351
      %p353 = scmp.ne.s32.totalorder %s339, %s340
      %p354 = scmp.eq.s32.totalorder %s34, 7
      %p355 = por %p353, %p354
      %p357 = scmp.ne.s32.totalorder %s340, %s356
      %p358 = scmp.eq.s32.totalorder %s34, 0
      %p359 = por %p357, %p358
      %s360 = ssub.s32 %s36, %s43
      %p361 = scmp.eq.s32.totalorder %s360, 0
      %s363 = sadd.s32 %s362, 1
      %s364 = scalar_select %p361, %s362, %s363
      %p367 = pneg %p361
      %p368 = scmp.eq.s32.totalorder %s28, 7
      %p369 = por %p367, %p368
      %p370 = scmp.ne.s32.totalorder %s362, %s365
      %p371 = scmp.eq.s32.totalorder %s28, 0
      %p372 = por %p370, %p371
      %p373 = scmp.ne.s32.totalorder %s362, %s365
      %p374 = scmp.eq.s32.totalorder %s33, 7
      %p375 = por %p373, %p374
      %p376 = scmp.ne.s32.totalorder %s365, %s366
      %p377 = scmp.eq.s32.totalorder %s33, 0
      %p378 = por %p376, %p377
      %p379 = scmp.ne.s32.totalorder %s365, %s366
      %p380 = scmp.eq.s32.totalorder %s34, 7
      %p381 = por %p379, %p380
      %p383 = scmp.ne.s32.totalorder %s366, %s382
      %p384 = scmp.eq.s32.totalorder %s34, 0
      %p385 = por %p383, %p384
      %s387 = sadd.s32 %s386, 1
      %p390 = scmp.eq.s32.totalorder %s28, 7
      %p391 = scmp.ne.s32.totalorder %s386, %s388
      %p392 = scmp.eq.s32.totalorder %s28, 0
      %p393 = por %p391, %p392
      %p394 = scmp.ne.s32.totalorder %s386, %s388
      %p395 = scmp.eq.s32.totalorder %s33, 7
      %p396 = por %p394, %p395
      %p397 = scmp.ne.s32.totalorder %s388, %s389
      %p398 = scmp.eq.s32.totalorder %s33, 0
      %p399 = por %p397, %p398
      %p400 = scmp.ne.s32.totalorder %s388, %s389
      %p401 = scmp.eq.s32.totalorder %s34, 7
      %p402 = por %p400, %p401
      %p404 = scmp.ne.s32.totalorder %s389, %s403
      %p405 = scmp.eq.s32.totalorder %s34, 0
      %p406 = por %p404, %p405
      %s408 = sadd.s32 %s407, 1
      %p411 = scmp.eq.s32.totalorder %s28, 7
      %p412 = scmp.ne.s32.totalorder %s407, %s409
      %p413 = scmp.eq.s32.totalorder %s28, 0
      %p414 = por %p412, %p413
      %p415 = scmp.ne.s32.totalorder %s407, %s409
      %p416 = scmp.eq.s32.totalorder %s33, 7
      %p417 = por %p415, %p416
      %p418 = scmp.ne.s32.totalorder %s409, %s410
      %p419 = scmp.eq.s32.totalorder %s33, 0
      %p420 = por %p418, %p419
      %p421 = scmp.ne.s32.totalorder %s409, %s410
      %p422 = scmp.eq.s32.totalorder %s34, 7
      %p423 = por %p421, %p422
      %p425 = scmp.ne.s32.totalorder %s410, %s424
      %p426 = scmp.eq.s32.totalorder %s34, 0
      %p427 = por %p425, %p426
      %s429 = sadd.s32 %s428, 1
      %p432 = scmp.eq.s32.totalorder %s28, 7
      %p433 = scmp.ne.s32.totalorder %s428, %s430
      %p434 = scmp.eq.s32.totalorder %s28, 0
      %p435 = por %p433, %p434
      %p436 = scmp.ne.s32.totalorder %s428, %s430
      %p437 = scmp.eq.s32.totalorder %s33, 7
      %p438 = por %p436, %p437
      %p439 = scmp.ne.s32.totalorder %s430, %s431
      %p440 = scmp.eq.s32.totalorder %s33, 0
      %p441 = por %p439, %p440
      %p442 = scmp.ne.s32.totalorder %s430, %s431
      %p443 = scmp.eq.s32.totalorder %s34, 7
      %p444 = por %p442, %p443
      %p446 = scmp.ne.s32.totalorder %s431, %s445
      %p447 = scmp.eq.s32.totalorder %s34, 0
      %p448 = por %p446, %p447
      %s449 = ssub.s32 %s35, %s47
      %p450 = scmp.eq.s32.totalorder %s449, 0
      %s452 = sadd.s32 %s451, 1
      %s453 = scalar_select %p450, %s451, %s452
      %p456 = pneg %p450
      %p457 = scmp.eq.s32.totalorder %s28, 7
      %p458 = por %p456, %p457
      %p459 = scmp.ne.s32.totalorder %s451, %s454
      %p460 = scmp.eq.s32.totalorder %s28, 0
      %p461 = por %p459, %p460
      %p462 = scmp.ne.s32.totalorder %s451, %s454
      %p463 = scmp.eq.s32.totalorder %s33, 7
      %p464 = por %p462, %p463
      %p465 = scmp.ne.s32.totalorder %s454, %s455
      %p466 = scmp.eq.s32.totalorder %s33, 0
      %p467 = por %p465, %p466
      %p468 = scmp.ne.s32.totalorder %s454, %s455
      %p469 = scmp.eq.s32.totalorder %s34, 7
      %p470 = por %p468, %p469
      %p472 = scmp.ne.s32.totalorder %s455, %s471
      %p473 = scmp.eq.s32.totalorder %s34, 0
      %p474 = por %p472, %p473
      %p475 = scmp.le.s32.totalorder 1, %s28
      %p476 = scmp.lt.s32.totalorder %s28, 9
      %p477 = pnand %p475, %p476
      %p478 = pneg %p477
      // Predicated region
      $region9: #{t2m_forward.3} parent=5 // pred_check
        _
      $region10: #{t2m_forward.3} parent=5 // pred_check_branch
        %480 = sbr.rel (%p477) target = $region12
      $region11: #{t2m_forward.3} parent=5 // pred_region
        %s481 = ssub.s32 %s28, 1
        // Predicated region
        $region13: #{t2m_forward.3} parent=11 // pred_check
          %p482 = pneg %p399
        $region14: #{t2m_forward.3} parent=11 // pred_check_branch
          %484 = sbr.rel (%p482) target = $region16
        $region15: #{t2m_forward.3} parent=11 // pred_region
          _
        $region16: #{t2m_forward.3} parent=11 // pred_fallthru
          _
        // Predicated region
        $region17: #{t2m_forward.3} parent=11 // pred_check
          %p485 = pneg %p420
        $region18: #{t2m_forward.3} parent=11 // pred_check_branch
          %487 = sbr.rel (%p485) target = $region20
        $region19: #{t2m_forward.3} parent=11 // pred_region
          _
        $region20: #{t2m_forward.3} parent=11 // pred_fallthru
          _
        // Predicated region
        $region21: #{t2m_forward.3} parent=11 // pred_check
          %p488 = pneg %p441
        $region22: #{t2m_forward.3} parent=11 // pred_check_branch
          %490 = sbr.rel (%p488) target = $region24
        $region23: #{t2m_forward.3} parent=11 // pred_region
          _
        $region24: #{t2m_forward.3} parent=11 // pred_fallthru
          _
      $region12: #{t2m_forward.3} parent=5 // pred_fallthru
        _
      %p491 = scmp.lt.s32.totalorder %s28, 8
      // Predicated region
      $region25: #{t2m_forward.3} parent=5 // pred_check
        %p492 = pneg %p491
      $region26: #{t2m_forward.3} parent=5 // pred_check_branch
        %494 = sbr.rel (%p492) target = $region28
      $region27: #{t2m_forward.3} parent=5 // pred_region
        // Predicated region
        $region29: #{t2m_forward.3} parent=27 // pred_check
          %p495 = pneg %p60
        $region30: #{t2m_forward.3} parent=27 // pred_check_branch
          %497 = sbr.rel (%p495) target = $region32
        $region31: #{t2m_forward.3} parent=27 // pred_region
          %p498 = scmp.lt.s32.totalorder %s35, 1
          %s499 = scalar_select %p498, %s35, 1
          %s500 = smul.addr %s499, 2
          %s501 = smul.addr %s500, 8
          %s502 = scalar_lea.vmem %s0, %s501
        $region32: #{t2m_forward.3} parent=27 // pred_fallthru
          _
        // Predicated region
        $region33: #{t2m_forward.3} parent=27 // pred_check
          %p503 = pneg %p86
        $region34: #{t2m_forward.3} parent=27 // pred_check_branch
          %505 = sbr.rel (%p503) target = $region36
        $region35: #{t2m_forward.3} parent=27 // pred_region
          %p506 = scmp.lt.s32.totalorder %s36, 3
          %s507 = scalar_select %p506, %s36, 3
          %s508 = scalar_lea.vmem %s1, %s507
        $region36: #{t2m_forward.3} parent=27 // pred_fallthru
          _
        // Predicated region
        $region37: #{t2m_forward.3} parent=27 // pred_check
          %p509 = pneg %p112
        $region38: #{t2m_forward.3} parent=27 // pred_check_branch
          %511 = sbr.rel (%p509) target = $region40
        $region39: #{t2m_forward.3} parent=27 // pred_region
          %p512 = scmp.lt.s32.totalorder %s36, 3
          %s513 = scalar_select %p512, %s36, 3
          %s514 = scalar_lea.vmem %s2, %s513
        $region40: #{t2m_forward.3} parent=27 // pred_fallthru
          _
        // Predicated region
        $region41: #{t2m_forward.3} parent=27 // pred_check
          %p515 = pneg %p138
        $region42: #{t2m_forward.3} parent=27 // pred_check_branch
          %517 = sbr.rel (%p515) target = $region44
        $region43: #{t2m_forward.3} parent=27 // pred_region
          %p518 = scmp.lt.s32.totalorder %s36, 3
          %s519 = scalar_select %p518, %s36, 3
          %s520 = scalar_lea.vmem %s3, %s519
        $region44: #{t2m_forward.3} parent=27 // pred_fallthru
          _
        // Predicated region
        $region45: #{t2m_forward.3} parent=27 // pred_check
          %p521 = pneg %p164
        $region46: #{t2m_forward.3} parent=27 // pred_check_branch
          %523 = sbr.rel (%p521) target = $region48
        $region47: #{t2m_forward.3} parent=27 // pred_region
          %p524 = scmp.lt.s32.totalorder %s36, 3
          %s525 = scalar_select %p524, %s36, 3
          %s526 = scalar_lea.vmem %s4, %s525
        $region48: #{t2m_forward.3} parent=27 // pred_fallthru
          _
        // Predicated region
        $region49: #{t2m_forward.3} parent=27 // pred_check
          %p527 = pneg %p190
        $region50: #{t2m_forward.3} parent=27 // pred_check_branch
          %529 = sbr.rel (%p527) target = $region52
        $region51: #{t2m_forward.3} parent=27 // pred_region
          %s530 = sand.u32 %s180, 1
          %s531 = scalar_lea.sflag [#allocation4], %s530
          %s532 = sand.u32 %s180, 1
          %s533 = smul.addr %s532, 64
          %s534 = scalar_lea.vmem [#allocation3], %s533
          %536 = vsyncadd %s531, 0
          %s537 = smul.addr %s36, 16
          %s538 = smul.addr %s537, 4
          %s539 = scalar_lea.hbm %s5, %s538
          %s540 = sshll.u32 %s539, 4
          %s541 = int_to_ptr.hbm [resolvable:$true] %s540
          %s542 = sshll.u32 %s534, 4
          %s543 = int_to_ptr.vmem [resolvable:$true] %s542
          %548 = dma.hbm_to_vmem [thread:$0]  %s541, 1024, %s543, %s531, 128, 128, 8
        $region52: #{t2m_forward.3} parent=27 // pred_fallthru
          _
        // Predicated region
        $region53: #{t2m_forward.3} parent=27 // pred_check
          %p549 = pneg %p216
        $region54: #{t2m_forward.3} parent=27 // pred_check_branch
          %551 = sbr.rel (%p549) target = $region56
        $region55: #{t2m_forward.3} parent=27 // pred_region
          %p552 = scmp.lt.s32.totalorder %s36, 3
          %s553 = scalar_select %p552, %s36, 3
          %s554 = smul.addr %s553, 2
          %s555 = scalar_lea.vmem %s6, %s554
        $region56: #{t2m_forward.3} parent=27 // pred_fallthru
          _
        // Predicated region
        $region57: #{t2m_forward.3} parent=27 // pred_check
          %p556 = pneg %p242
        $region58: #{t2m_forward.3} parent=27 // pred_check_branch
          %558 = sbr.rel (%p556) target = $region60
        $region59: #{t2m_forward.3} parent=27 // pred_region
          %p559 = scmp.lt.s32.totalorder %s36, 3
          %s560 = scalar_select %p559, %s36, 3
          %s561 = smul.addr %s560, 8
          %s562 = smul.addr %s561, 4
          %s563 = scalar_lea.vmem %s7, %s562
        $region60: #{t2m_forward.3} parent=27 // pred_fallthru
          _
        // Predicated region
        $region61: #{t2m_forward.3} parent=27 // pred_check
          %p564 = pneg %p268
        $region62: #{t2m_forward.3} parent=27 // pred_check_branch
          %566 = sbr.rel (%p564) target = $region64
        $region63: #{t2m_forward.3} parent=27 // pred_region
          %p567 = scmp.lt.s32.totalorder %s36, 3
          %s568 = scalar_select %p567, %s36, 3
          %s569 = scalar_lea.vmem %s8, %s568
        $region64: #{t2m_forward.3} parent=27 // pred_fallthru
          _
        // Predicated region
        $region65: #{t2m_forward.3} parent=27 // pred_check
          %p570 = pneg %p294
        $region66: #{t2m_forward.3} parent=27 // pred_check_branch
          %572 = sbr.rel (%p570) target = $region68
        $region67: #{t2m_forward.3} parent=27 // pred_region
          %s573 = sand.u32 %s28, 1
          %s574 = scalar_lea.sflag [#allocation6], %s573
          %s575 = sand.u32 %s284, 1
          %s576 = smul.addr %s575, 64
          %s577 = scalar_lea.vmem [#allocation5], %s576
          %579 = vsyncadd %s574, 0
          %s580 = smul.addr %s36, 16
          %s581 = smul.addr %s580, 4
          %s582 = scalar_lea.hbm %s9, %s581
          %s583 = sshll.u32 %s582, 4
          %s584 = int_to_ptr.hbm [resolvable:$true] %s583
          %s585 = sshll.u32 %s577, 4
          %s586 = int_to_ptr.vmem [resolvable:$true] %s585
          %591 = dma.hbm_to_vmem [thread:$0]  %s584, 1024, %s586, %s574, 128, 128, 8
        $region68: #{t2m_forward.3} parent=27 // pred_fallthru
          _
        // Predicated region
        $region69: #{t2m_forward.3} parent=27 // pred_check
          %p592 = pneg %p320
        $region70: #{t2m_forward.3} parent=27 // pred_check_branch
          %594 = sbr.rel (%p592) target = $region72
        $region71: #{t2m_forward.3} parent=27 // pred_region
          %p595 = scmp.lt.s32.totalorder %s36, 3
          %s596 = scalar_select %p595, %s36, 3
          %s597 = smul.addr %s596, 2
          %s598 = scalar_lea.vmem %s10, %s597
        $region72: #{t2m_forward.3} parent=27 // pred_fallthru
          _
        // Predicated region
        $region73: #{t2m_forward.3} parent=27 // pred_check
          %p599 = pneg %p346
        $region74: #{t2m_forward.3} parent=27 // pred_check_branch
          %601 = sbr.rel (%p599) target = $region76
        $region75: #{t2m_forward.3} parent=27 // pred_region
          %s602 = sand.u32 %s28, 1
          %s603 = scalar_lea.sflag [#allocation6], %s602
          %s604 = sand.u32 %s336, 1
          %s605 = smul.addr %s604, 128
          %s606 = scalar_lea.vmem [#allocation7], %s605
          %608 = vsyncadd %s603, 0
          %s609 = smul.addr %s36, 32
          %s610 = smul.addr %s609, 4
          %s611 = scalar_lea.hbm %s11, %s610
          %s612 = sshll.u32 %s611, 4
          %s613 = int_to_ptr.hbm [resolvable:$true] %s612
          %s614 = sshll.u32 %s606, 4
          %s615 = int_to_ptr.vmem [resolvable:$true] %s614
          %620 = dma.hbm_to_vmem [thread:$0]  %s613, 2048, %s615, %s603, 64, 64, 4
        $region76: #{t2m_forward.3} parent=27 // pred_fallthru
          _
        // Predicated region
        $region77: #{t2m_forward.3} parent=27 // pred_check
          %p621 = pneg %p372
        $region78: #{t2m_forward.3} parent=27 // pred_check_branch
          %623 = sbr.rel (%p621) target = $region80
        $region79: #{t2m_forward.3} parent=27 // pred_region
          %p624 = scmp.lt.s32.totalorder %s36, 3
          %s625 = scalar_select %p624, %s36, 3
          %s626 = scalar_lea.vmem %s12, %s625
        $region80: #{t2m_forward.3} parent=27 // pred_fallthru
          _
      $region28: #{t2m_forward.3} parent=5 // pred_fallthru
        _
      %p627 = scmp.le.s32.totalorder 1, %s28
      %p628 = scmp.lt.s32.totalorder %s28, 9
      %p629 = pnand %p627, %p628
      %p630 = pneg %p629
      // Predicated region
      $region81: #{t2m_forward.3} parent=5 // pred_check
        _
      $region82: #{t2m_forward.3} parent=5 // pred_check_branch
        %632 = sbr.rel (%p629) target = $region84
      $region83: #{t2m_forward.3} parent=5 // pred_region
        %s633 = ssub.s32 %s28, 1
        %s634 = sand.u32 %s183, 1
        %s635 = scalar_lea.sflag [#allocation4], %s634
        %s636 = sand.u32 %s183, 1
        %s637 = smul.addr %s636, 64
        %s638 = scalar_lea.vmem [#allocation3], %s637
        // Predicated region
        $region85: #{t2m_forward.3} parent=83 // pred_check
          %p639 = pneg %p196
        $region86: #{t2m_forward.3} parent=83 // pred_check_branch
          %641 = sbr.rel (%p639) target = $region88
        $region87: #{t2m_forward.3} parent=83 // pred_region
          %643 = dma.done %s635, 1024
        $region88: #{t2m_forward.3} parent=83 // pred_fallthru
          _
        %s644 = sand.u32 %s33, 1
        %s645 = scalar_lea.sflag [#allocation6], %s644
        %s646 = sand.u32 %s287, 1
        %s647 = smul.addr %s646, 64
        %s648 = scalar_lea.vmem [#allocation5], %s647
        // Predicated region
        $region89: #{t2m_forward.3} parent=83 // pred_check
          %p649 = pneg %p300
        $region90: #{t2m_forward.3} parent=83 // pred_check_branch
          %651 = sbr.rel (%p649) target = $region92
        $region91: #{t2m_forward.3} parent=83 // pred_region
          %653 = dma.done %s645, 1024
        $region92: #{t2m_forward.3} parent=83 // pred_fallthru
          _
        %s654 = sand.u32 %s33, 1
        %s655 = scalar_lea.sflag [#allocation6], %s654
        %s656 = sand.u32 %s339, 1
        %s657 = smul.addr %s656, 128
        %s658 = scalar_lea.vmem [#allocation7], %s657
        // Predicated region
        $region93: #{t2m_forward.3} parent=83 // pred_check
          %p659 = pneg %p352
        $region94: #{t2m_forward.3} parent=83 // pred_check_branch
          %661 = sbr.rel (%p659) target = $region96
        $region95: #{t2m_forward.3} parent=83 // pred_region
          %663 = dma.done %s655, 2048
        $region96: #{t2m_forward.3} parent=83 // pred_fallthru
          _
        %p664 = scmp.lt.s32.totalorder %s37, 1
        %s665 = scalar_select %p664, %s37, 1
        %s666 = smul.addr %s665, 2
        %s667 = smul.addr %s666, 8
        %s668 = scalar_lea.vmem %s0, %s667
        %p669 = pneg %p66
        %p670 = pneg %p63
        %p671 = scmp.lt.s32.totalorder %s38, 3
        %s672 = scalar_select %p671, %s38, 3
        %s673 = scalar_lea.vmem %s1, %s672
        %p674 = pneg %p92
        %p675 = pneg %p89
        %p676 = scmp.lt.s32.totalorder %s38, 3
        %s677 = scalar_select %p676, %s38, 3
        %s678 = scalar_lea.vmem %s2, %s677
        %p679 = pneg %p118
        %p680 = pneg %p115
        %p681 = scmp.lt.s32.totalorder %s38, 3
        %s682 = scalar_select %p681, %s38, 3
        %s683 = scalar_lea.vmem %s3, %s682
        %p684 = pneg %p144
        %p685 = pneg %p141
        %p686 = scmp.lt.s32.totalorder %s38, 3
        %s687 = scalar_select %p686, %s38, 3
        %s688 = scalar_lea.vmem %s4, %s687
        %p689 = pneg %p170
        %p690 = pneg %p167
        %s691 = sand.u32 %s183, 1
        %s692 = scalar_lea.sflag [#allocation4], %s691
        %s693 = sand.u32 %s183, 1
        %s694 = smul.addr %s693, 64
        %s695 = scalar_lea.vmem [#allocation3], %s694
        %p696 = pneg %p196
        %p697 = pneg %p193
        %p698 = scmp.lt.s32.totalorder %s38, 3
        %s699 = scalar_select %p698, %s38, 3
        %s700 = smul.addr %s699, 2
        %s701 = scalar_lea.vmem %s6, %s700
        %p702 = pneg %p222
        %p703 = pneg %p219
        %p704 = scmp.lt.s32.totalorder %s38, 3
        %s705 = scalar_select %p704, %s38, 3
        %s706 = smul.addr %s705, 8
        %s707 = smul.addr %s706, 4
        %s708 = scalar_lea.vmem %s7, %s707
        %p709 = pneg %p248
        %p710 = pneg %p245
        %p711 = scmp.lt.s32.totalorder %s38, 3
        %s712 = scalar_select %p711, %s38, 3
        %s713 = scalar_lea.vmem %s8, %s712
        %p714 = pneg %p274
        %p715 = pneg %p271
        %s716 = sand.u32 %s33, 1
        %s717 = scalar_lea.sflag [#allocation6], %s716
        %s718 = sand.u32 %s287, 1
        %s719 = smul.addr %s718, 64
        %s720 = scalar_lea.vmem [#allocation5], %s719
        %p721 = pneg %p300
        %p722 = pneg %p297
        %p723 = scmp.lt.s32.totalorder %s38, 3
        %s724 = scalar_select %p723, %s38, 3
        %s725 = smul.addr %s724, 2
        %s726 = scalar_lea.vmem %s10, %s725
        %p727 = pneg %p326
        %p728 = pneg %p323
        %s729 = sand.u32 %s33, 1
        %s730 = scalar_lea.sflag [#allocation6], %s729
        %s731 = sand.u32 %s339, 1
        %s732 = smul.addr %s731, 128
        %s733 = scalar_lea.vmem [#allocation7], %s732
        %p734 = pneg %p352
        %p735 = pneg %p349
        %p736 = scmp.lt.s32.totalorder %s38, 3
        %s737 = scalar_select %p736, %s38, 3
        %s738 = scalar_lea.vmem %s12, %s737
        %p739 = pneg %p378
        %p740 = pneg %p375
        %p741 = pneg %p399
        %p742 = pneg %p396
        %p743 = pneg %p420
        %p744 = pneg %p417
        %p745 = pneg %p441
        %p746 = pneg %p438
        %p747 = pneg %p467
        %p748 = pneg %p464
        %p749 = scmp.lt.s32.totalorder %s37, 1
        %s750 = scalar_select %p749, %s37, 1
        %s751 = smul.addr %s750, 2
        %s752 = smul.addr %s751, 8
        %s753 = scalar_lea.vmem %s16, %s752
        %p754 = scmp.lt.s32.totalorder %s37, 1
        %s755 = scalar_select %p754, %s37, 1
        %s756 = smul.addr %s755, 2
        %s757 = smul.addr %s756, 8
        %s758 = scalar_lea.vmem %s0, %s757
        %p759 = scmp.lt.s32.totalorder %s38, 3
        %s760 = scalar_select %p759, %s38, 3
        %s761 = scalar_lea.vmem %s1, %s760
        %p762 = scmp.lt.s32.totalorder %s38, 3
        %s763 = scalar_select %p762, %s38, 3
        %s764 = scalar_lea.vmem %s2, %s763
        %p765 = scmp.lt.s32.totalorder %s38, 3
        %s766 = scalar_select %p765, %s38, 3
        %s767 = scalar_lea.vmem %s3, %s766
        %p768 = scmp.lt.s32.totalorder %s38, 3
        %s769 = scalar_select %p768, %s38, 3
        %s770 = scalar_lea.vmem %s4, %s769
        %p771 = scmp.lt.s32.totalorder %s38, 3
        %s772 = scalar_select %p771, %s38, 3
        %s773 = smul.addr %s772, 2
        %s774 = scalar_lea.vmem %s6, %s773
        %p775 = scmp.lt.s32.totalorder %s38, 3
        %s776 = scalar_select %p775, %s38, 3
        %s777 = smul.addr %s776, 8
        %s778 = smul.addr %s777, 4
        %s779 = scalar_lea.vmem %s7, %s778
        %p780 = scmp.lt.s32.totalorder %s38, 3
        %s781 = scalar_select %p780, %s38, 3
        %s782 = scalar_lea.vmem %s8, %s781
        %p783 = scmp.lt.s32.totalorder %s38, 3
        %s784 = scalar_select %p783, %s38, 3
        %s785 = smul.addr %s784, 2
        %s786 = scalar_lea.vmem %s10, %s785
        %p787 = scmp.lt.s32.totalorder %s38, 3
        %s788 = scalar_select %p787, %s38, 3
        %s789 = scalar_lea.vmem %s12, %s788
        %p790 = scmp.lt.s32.totalorder %s37, 1
        %s791 = scalar_select %p790, %s37, 1
        %s792 = smul.addr %s791, 2
        %s793 = smul.addr %s792, 8
        %s794 = scalar_lea.vmem %s16, %s793
        %p796 = scmp.eq.s32.totalorder %s38, 0
        // Predicated region
        $region97: #{t2m_forward.3} parent=83 // pred_check
          %p797 = pneg %p796
        $region98: #{t2m_forward.3} parent=83 // pred_check_branch
          %799 = sbr.rel (%p797) target = $region100
        $region99: #{t2m_forward.3} parent=83 // pred_region
          %v800 = vld [vmem:[%s758] sm:$0xff]
          %v801 = vld [vmem:[%s758 + $0x8] sm:$0x1]
          %vm802 = vcmask 523264
          %803 = vst.msk [vmem:[#allocation2] sm:$0xff] %vm802, %v800
          %vm804 = vcmask 516096
          %805 = vst.msk [vmem:[#allocation2 + $0x8] sm:$0x1] %vm804, %v801
        $region100: #{t2m_forward.3} parent=83 // pred_fallthru
          _
        %v806 = vld [vmem:[#allocation2] sm:$0xff]
        %v807 = vld [vmem:[#allocation2 + $0x8] sm:$0x1]
        %v808 = vlaneseq
        %v809 = vshrl.u32 %v808, 7
        %v810 = vadd.s32 %v809, 8
        %v811 = vlaneseq
        %v812 = vand.u32 %v811, 127
        %vm813 = vcmp.le.s32.totalorder %v812, %v809
        %vm814 = vcmp.le.s32.totalorder %v812, %v810
        %v815 = vsel %vm813, 0.0, -1e+09
        %v816 = vsel %vm814, 0.0, -1e+09
        %v817 = vld [vmem:[%s761] sm:$0x1]
        %v818 = vld [vmem:[%s764] sm:$0x1]
        %vm819 = vcmask 523264
        %v820 = vsel %vm819, %v806, 0.0
        %821 = vadd.xlane.f32.xlu0 %v820
        %v822 = vpop.xlane.xlu0 %821
        %vm823 = vcmask 516096
        %v824 = vsel %vm823, %v807, 0.0
        %825 = vadd.xlane.f32.xlu0 %v824
        %v826 = vpop.xlane.xlu0 %825
        %v827 = vrcp.pop 64.0
        %v828 = vmul.f32 64.0, %v827
        %v829 = vsub.f32 1.0, %v828
        %v830 = vmul.f32 %v827, %v829
        %v831 = vadd.f32 %v827, %v830
        %vm832 = vweird.f32 %v827
        %v833 = vsel %vm832, %v827, %v831
        %v834 = vmul.f32 %v822, %v833
        %v835 = vmul.f32 %v826, %v833
        %v836 = vsub.f32 %v806, %v834
        %v837 = vsub.f32 %v807, %v835
        %v838 = vmul.f32 %v836, %v836
        %v839 = vmul.f32 %v837, %v837
        %v840 = vsel %vm819, %v838, 0.0
        %841 = vadd.xlane.f32.xlu0 %v840
        %v842 = vpop.xlane.xlu0 %841
        %v843 = vsel %vm823, %v839, 0.0
        %844 = vadd.xlane.f32.xlu0 %v843
        %v845 = vpop.xlane.xlu0 %844
        %v846 = vmul.f32 %v842, %v833
        %v847 = vmul.f32 %v845, %v833
        %v848 = vadd.f32 %v846, 1e-05
        %v849 = vadd.f32 %v847, 1e-05
        %v850 = vrsqrt.pop %v848
        %v851 = vmul.f32 %v850, %v848
        %v852 = vmul.f32 %v851, %v850
        %v853 = vmul.f32 0.5, %v852
        %v854 = vsub.f32 1.5, %v853
        %v855 = vmul.f32 %v850, %v854
        %vm856 = vweird.f32 %v848
        %vm857 = vweird.f32 %v850
        %vm858 = vmor %vm856, %vm857
        %v859 = vsel %vm858, %v850, %v855
        %v860 = vrsqrt.pop %v849
        %v861 = vmul.f32 %v860, %v849
        %v862 = vmul.f32 %v861, %v860
        %v863 = vmul.f32 0.5, %v862
        %v864 = vsub.f32 1.5, %v863
        %v865 = vmul.f32 %v860, %v864
        %vm866 = vweird.f32 %v849
        %vm867 = vweird.f32 %v860
        %vm868 = vmor %vm866, %vm867
        %v869 = vsel %vm868, %v860, %v865
        %v870 = vmul.f32 %v836, %v859
        %v871 = vmul.f32 %v837, %v869
        %v873 = vperm.slane %v817, 0
        %v875 = vmul.f32 %v870, %v873
        %v876 = vmul.f32 %v871, %v873
        %v878 = vperm.slane %v818, 0
        %v880 = vadd.f32 %v875, %v878
        %v881 = vadd.f32 %v876, %v878
        %v882 = vld [vmem:[%s638] sm:$0xff]
        %v883 = vld [vmem:[%s638 + $0x8] sm:$0xff]
        %v884 = vld [vmem:[%s638 + $0x10] sm:$0xff]
        %v885 = vld [vmem:[%s638 + $0x18] sm:$0xff]
        %v886 = vld [vmem:[%s638 + $0x20] sm:$0xff]
        %v887 = vld [vmem:[%s638 + $0x28] sm:$0xff]
        %v888 = vld [vmem:[%s638 + $0x30] sm:$0xff]
        %v889 = vld [vmem:[%s638 + $0x38] sm:$0xff]
        %v890 = vpack.c.bf16 %v881, %v880
        %v891 = vld [vmem:[%s774] sm:$0x3]
        %v893 = vperm.slane %v891, 0
        %v894 = vperm.slane %v891, 1
        %v905 = vunpack.c.l.b16 %v882
        %v906 = vunpack.c.h.b16 %v882
        %v907 = vunpack.c.l.b16 %v883
        %v908 = vunpack.c.h.b16 %v883
        %v909 = vunpack.c.l.b16 %v884
        %v910 = vunpack.c.h.b16 %v884
        %v911 = vunpack.c.l.b16 %v885
        %v912 = vunpack.c.h.b16 %v885
        %v913 = vunpack.c.l.b16 %v886
        %v914 = vunpack.c.h.b16 %v886
        %v915 = vunpack.c.l.b16 %v887
        %v916 = vunpack.c.h.b16 %v887
        %v917 = vunpack.c.l.b16 %v888
        %v918 = vunpack.c.h.b16 %v888
        %v919 = vunpack.c.l.b16 %v889
        %v920 = vunpack.c.h.b16 %v889
        %v921 = vpack.c.b16 %v907, %v905
        %v922 = vpack.c.b16 %v908, %v906
        %v923 = vpack.c.b16 %v911, %v909
        %v924 = vpack.c.b16 %v912, %v910
        %v925 = vpack.c.b16 %v915, %v913
        %v926 = vpack.c.b16 %v916, %v914
        %v927 = vpack.c.b16 %v919, %v917
        %v928 = vpack.c.b16 %v920, %v918
        %v938 = vsel %vm819, %v890, 0
        %940 = vmatpush.bf16.msra.mxu0 0
        %941 = vmatpush.bf16.msra.mxu0 0
        %942 = vmatpush.bf16.msra.mxu0 0
        %943 = vmatpush.bf16.msra.mxu0 0
        %944 = vmatpush.bf16.msra.mxu0 %v927
        %945 = vmatpush.bf16.msra.mxu0 %v925
        %946 = vmatpush.bf16.msra.mxu0 %v923
        %947 = vmatpush.bf16.msra.mxu0 %v921
        %948 = vmatmul.bf16.gmra.mxu0 %v938
        %v949 = vpop.f32.mrf.mxu0
        %v950 = vadd.f32 %v893, %v949
        %v951 = vpop.f32.mrf.mxu0
        %v952 = vadd.f32 %v893, %v951
        %953 = vdwg.mxu0
        %954 = vmatpush.bf16.msra.mxu0 0
        %955 = vmatpush.bf16.msra.mxu0 0
        %956 = vmatpush.bf16.msra.mxu0 0
        %957 = vmatpush.bf16.msra.mxu0 0
        %958 = vmatpush.bf16.msra.mxu0 %v928
        %959 = vmatpush.bf16.msra.mxu0 %v926
        %960 = vmatpush.bf16.msra.mxu0 %v924
        %961 = vmatpush.bf16.msra.mxu0 %v922
        %962 = vmatmul.bf16.gmra.mxu0 %v938
        %v963 = vpop.f32.mrf.mxu0
        %v964 = vadd.f32 %v894, %v963
        %v965 = vpop.f32.mrf.mxu0
        %v966 = vadd.f32 %v894, %v965
        %967 = vdwg.mxu0
        %970 = vrot.lane.b32.xlu0 %v950, 120
        %v971 = vpop.permute.xlu0 %970
        %972 = vrot.lane.b32.xlu0 %v952, 120
        %v973 = vpop.permute.xlu0 %972
        %976 = vrot.lane.b32.xlu0 %v950, 112
        %v977 = vpop.permute.xlu0 %976
        %978 = vrot.lane.b32.xlu0 %v952, 112
        %v979 = vpop.permute.xlu0 %978
        %982 = vrot.lane.b32.xlu0 %v950, 104
        %v983 = vpop.permute.xlu0 %982
        %984 = vrot.lane.b32.xlu0 %v952, 104
        %v985 = vpop.permute.xlu0 %984
        %988 = vrot.lane.b32.xlu0 %v950, 96
        %v989 = vpop.permute.xlu0 %988
        %990 = vrot.lane.b32.xlu0 %v952, 96
        %v991 = vpop.permute.xlu0 %990
        %994 = vrot.lane.b32.xlu0 %v950, 88
        %v995 = vpop.permute.xlu0 %994
        %996 = vrot.lane.b32.xlu0 %v952, 88
        %v997 = vpop.permute.xlu0 %996
        %1000 = vrot.lane.b32.xlu0 %v950, 80
        %v1001 = vpop.permute.xlu0 %1000
        %1002 = vrot.lane.b32.xlu0 %v952, 80
        %v1003 = vpop.permute.xlu0 %1002
        %1006 = vrot.lane.b32.xlu0 %v950, 72
        %v1007 = vpop.permute.xlu0 %1006
        %1008 = vrot.lane.b32.xlu0 %v952, 72
        %v1009 = vpop.permute.xlu0 %1008
        %v1012 = vrot.slane %v977, 4
        %vm1013 = vcmask 1047556
        %v1014 = vsel %vm1013, %v1012, %v950
        %v1015 = vrot.slane %v950, 4
        %v1016 = vsel %vm1013, %v977, %v1015
        %v1018 = vunpack.c.l.s4 1983009808
        %v1019 = vunpack.c.0.s8 %v1018
        %v1020 = vperm.slane %v1014, %v1019
        %v1022 = vunpack.c.l.s4 1983009808
        %v1023 = vunpack.c.0.s8 %v1022
        %v1024 = vperm.slane %v1016, %v1023
        %v1025 = vrot.slane %v983, 4
        %v1026 = vsel %vm1013, %v1025, %v971
        %v1027 = vrot.slane %v971, 4
        %v1028 = vsel %vm1013, %v983, %v1027
        %v1030 = vunpack.c.l.s4 1983009808
        %v1031 = vunpack.c.0.s8 %v1030
        %v1032 = vperm.slane %v1026, %v1031
        %v1034 = vunpack.c.l.s4 1983009808
        %v1035 = vunpack.c.0.s8 %v1034
        %v1036 = vperm.slane %v1028, %v1035
        %v1037 = vrot.slane %v1001, 4
        %v1038 = vsel %vm1013, %v1037, %v989
        %v1039 = vrot.slane %v989, 4
        %v1040 = vsel %vm1013, %v1001, %v1039
        %v1042 = vunpack.c.l.s4 1983009808
        %v1043 = vunpack.c.0.s8 %v1042
        %v1044 = vperm.slane %v1038, %v1043
        %v1046 = vunpack.c.l.s4 1983009808
        %v1047 = vunpack.c.0.s8 %v1046
        %v1048 = vperm.slane %v1040, %v1047
        %v1049 = vrot.slane %v1007, 4
        %v1050 = vsel %vm1013, %v1049, %v995
        %v1051 = vrot.slane %v995, 4
        %v1052 = vsel %vm1013, %v1007, %v1051
        %v1054 = vunpack.c.l.s4 1983009808
        %v1055 = vunpack.c.0.s8 %v1054
        %v1056 = vperm.slane %v1050, %v1055
        %v1058 = vunpack.c.l.s4 1983009808
        %v1059 = vunpack.c.0.s8 %v1058
        %v1060 = vperm.slane %v1052, %v1059
        %v1061 = vrot.slane %v1032, 4
        %v1062 = vsel %vm1013, %v1061, %v1020
        %v1063 = vrot.slane %v1020, 4
        %v1064 = vsel %vm1013, %v1032, %v1063
        %v1066 = vunpack.c.l.s4 1934713408
        %v1067 = vunpack.c.0.s8 %v1066
        %v1068 = vperm.slane %v1062, %v1067
        %v1070 = vunpack.c.l.s4 1934713408
        %v1071 = vunpack.c.0.s8 %v1070
        %v1072 = vperm.slane %v1064, %v1071
        %v1073 = vrot.slane %v1036, 4
        %v1074 = vsel %vm1013, %v1073, %v1024
        %v1075 = vrot.slane %v1024, 4
        %v1076 = vsel %vm1013, %v1036, %v1075
        %v1078 = vunpack.c.l.s4 1934713408
        %v1079 = vunpack.c.0.s8 %v1078
        %v1080 = vperm.slane %v1074, %v1079
        %v1082 = vunpack.c.l.s4 1934713408
        %v1083 = vunpack.c.0.s8 %v1082
        %v1084 = vperm.slane %v1076, %v1083
        %v1085 = vrot.slane %v1056, 4
        %v1086 = vsel %vm1013, %v1085, %v1044
        %v1087 = vrot.slane %v1044, 4
        %v1088 = vsel %vm1013, %v1056, %v1087
        %v1090 = vunpack.c.l.s4 1934713408
        %v1091 = vunpack.c.0.s8 %v1090
        %v1092 = vperm.slane %v1086, %v1091
        %v1094 = vunpack.c.l.s4 1934713408
        %v1095 = vunpack.c.0.s8 %v1094
        %v1096 = vperm.slane %v1088, %v1095
        %v1097 = vrot.slane %v1060, 4
        %v1098 = vsel %vm1013, %v1097, %v1048
        %v1099 = vrot.slane %v1048, 4
        %v1100 = vsel %vm1013, %v1060, %v1099
        %v1102 = vunpack.c.l.s4 1934713408
        %v1103 = vunpack.c.0.s8 %v1102
        %v1104 = vperm.slane %v1098, %v1103
        %v1106 = vunpack.c.l.s4 1934713408
        %v1107 = vunpack.c.0.s8 %v1106
        %v1108 = vperm.slane %v1100, %v1107
        %v1109 = vrot.slane %v1092, 4
        %v1110 = vsel %vm1013, %v1109, %v1068
        %v1111 = vrot.slane %v1068, 4
        %v1112 = vsel %vm1013, %v1092, %v1111
        %v1113 = vrot.slane %v1096, 4
        %v1114 = vsel %vm1013, %v1113, %v1072
        %v1115 = vrot.slane %v1072, 4
        %v1116 = vsel %vm1013, %v1096, %v1115
        %v1117 = vrot.slane %v1104, 4
        %v1118 = vsel %vm1013, %v1117, %v1080
        %v1119 = vrot.slane %v1080, 4
        %v1120 = vsel %vm1013, %v1104, %v1119
        %v1121 = vrot.slane %v1108, 4
        %v1122 = vsel %vm1013, %v1121, %v1084
        %v1123 = vrot.slane %v1084, 4
        %v1124 = vsel %vm1013, %v1108, %v1123
        %v1125 = vrot.slane %v979, 4
        %v1126 = vsel %vm1013, %v1125, %v952
        %v1128 = vunpack.c.l.s4 1983009808
        %v1129 = vunpack.c.0.s8 %v1128
        %v1130 = vperm.slane %v1126, %v1129
        %v1131 = vrot.slane %v985, 4
        %v1132 = vsel %vm1013, %v1131, %v973
        %v1134 = vunpack.c.l.s4 1983009808
        %v1135 = vunpack.c.0.s8 %v1134
        %v1136 = vperm.slane %v1132, %v1135
        %v1137 = vrot.slane %v1003, 4
        %v1138 = vsel %vm1013, %v1137, %v991
        %v1140 = vunpack.c.l.s4 1983009808
        %v1141 = vunpack.c.0.s8 %v1140
        %v1142 = vperm.slane %v1138, %v1141
        %v1143 = vrot.slane %v1009, 4
        %v1144 = vsel %vm1013, %v1143, %v997
        %v1146 = vunpack.c.l.s4 1983009808
        %v1147 = vunpack.c.0.s8 %v1146
        %v1148 = vperm.slane %v1144, %v1147
        %v1149 = vrot.slane %v1136, 4
        %v1150 = vsel %vm1013, %v1149, %v1130
        %v1152 = vunpack.c.l.s4 1934713408
        %v1153 = vunpack.c.0.s8 %v1152
        %v1154 = vperm.slane %v1150, %v1153
        %v1155 = vrot.slane %v1148, 4
        %v1156 = vsel %vm1013, %v1155, %v1142
        %v1158 = vunpack.c.l.s4 1934713408
        %v1159 = vunpack.c.0.s8 %v1158
        %v1160 = vperm.slane %v1156, %v1159
        %v1161 = vrot.slane %v1160, 4
        %v1162 = vsel %vm1013, %v1161, %v1154
        %v1163 = vpack.c.bf16 %v1110, %v1110
        %v1164 = vpack.c.bf16 %v1112, %v1112
        %v1165 = vpack.c.bf16 %v1114, %v1114
        %v1166 = vpack.c.bf16 %v1116, %v1116
        %v1167 = vpack.c.bf16 %v1118, %v1118
        %v1168 = vpack.c.bf16 %v1120, %v1120
        %v1169 = vpack.c.bf16 %v1122, %v1122
        %v1170 = vpack.c.bf16 %v1124, %v1124
        %v1171 = vpack.c.bf16 %v1162, %v1162
        %1172 = vrot.lane.b32.xlu0 %v950, 64
        %v1173 = vpop.permute.xlu0 %1172
        %1174 = vrot.lane.b32.xlu0 %v952, 64
        %v1175 = vpop.permute.xlu0 %1174
        %1176 = vrot.lane.b32.xlu0 %v971, 64
        %v1177 = vpop.permute.xlu0 %1176
        %1178 = vrot.lane.b32.xlu0 %v973, 64
        %v1179 = vpop.permute.xlu0 %1178
        %1180 = vrot.lane.b32.xlu0 %v977, 64
        %v1181 = vpop.permute.xlu0 %1180
        %1182 = vrot.lane.b32.xlu0 %v979, 64
        %v1183 = vpop.permute.xlu0 %1182
        %1184 = vrot.lane.b32.xlu0 %v983, 64
        %v1185 = vpop.permute.xlu0 %1184
        %1186 = vrot.lane.b32.xlu0 %v985, 64
        %v1187 = vpop.permute.xlu0 %1186
        %1188 = vrot.lane.b32.xlu0 %v989, 64
        %v1189 = vpop.permute.xlu0 %1188
        %1190 = vrot.lane.b32.xlu0 %v991, 64
        %v1191 = vpop.permute.xlu0 %1190
        %1192 = vrot.lane.b32.xlu0 %v995, 64
        %v1193 = vpop.permute.xlu0 %1192
        %1194 = vrot.lane.b32.xlu0 %v997, 64
        %v1195 = vpop.permute.xlu0 %1194
        %1196 = vrot.lane.b32.xlu0 %v1001, 64
        %v1197 = vpop.permute.xlu0 %1196
        %1198 = vrot.lane.b32.xlu0 %v1003, 64
        %v1199 = vpop.permute.xlu0 %1198
        %1200 = vrot.lane.b32.xlu0 %v1007, 64
        %v1201 = vpop.permute.xlu0 %1200
        %1202 = vrot.lane.b32.xlu0 %v1009, 64
        %v1203 = vpop.permute.xlu0 %1202
        %v1220 = vrot.slane %v1181, 4
        %v1221 = vsel %vm1013, %v1220, %v1173
        %v1222 = vrot.slane %v1173, 4
        %v1223 = vsel %vm1013, %v1181, %v1222
        %v1225 = vunpack.c.l.s4 1983009808
        %v1226 = vunpack.c.0.s8 %v1225
        %v1227 = vperm.slane %v1221, %v1226
        %v1229 = vunpack.c.l.s4 1983009808
        %v1230 = vunpack.c.0.s8 %v1229
        %v1231 = vperm.slane %v1223, %v1230
        %v1232 = vrot.slane %v1185, 4
        %v1233 = vsel %vm1013, %v1232, %v1177
        %v1234 = vrot.slane %v1177, 4
        %v1235 = vsel %vm1013, %v1185, %v1234
        %v1237 = vunpack.c.l.s4 1983009808
        %v1238 = vunpack.c.0.s8 %v1237
        %v1239 = vperm.slane %v1233, %v1238
        %v1241 = vunpack.c.l.s4 1983009808
        %v1242 = vunpack.c.0.s8 %v1241
        %v1243 = vperm.slane %v1235, %v1242
        %v1244 = vrot.slane %v1197, 4
        %v1245 = vsel %vm1013, %v1244, %v1189
        %v1246 = vrot.slane %v1189, 4
        %v1247 = vsel %vm1013, %v1197, %v1246
        %v1249 = vunpack.c.l.s4 1983009808
        %v1250 = vunpack.c.0.s8 %v1249
        %v1251 = vperm.slane %v1245, %v1250
        %v1253 = vunpack.c.l.s4 1983009808
        %v1254 = vunpack.c.0.s8 %v1253
        %v1255 = vperm.slane %v1247, %v1254
        %v1256 = vrot.slane %v1201, 4
        %v1257 = vsel %vm1013, %v1256, %v1193
        %v1258 = vrot.slane %v1193, 4
        %v1259 = vsel %vm1013, %v1201, %v1258
        %v1261 = vunpack.c.l.s4 1983009808
        %v1262 = vunpack.c.0.s8 %v1261
        %v1263 = vperm.slane %v1257, %v1262
        %v1265 = vunpack.c.l.s4 1983009808
        %v1266 = vunpack.c.0.s8 %v1265
        %v1267 = vperm.slane %v1259, %v1266
        %v1268 = vrot.slane %v1239, 4
        %v1269 = vsel %vm1013, %v1268, %v1227
        %v1270 = vrot.slane %v1227, 4
        %v1271 = vsel %vm1013, %v1239, %v1270
        %v1273 = vunpack.c.l.s4 1934713408
        %v1274 = vunpack.c.0.s8 %v1273
        %v1275 = vperm.slane %v1269, %v1274
        %v1277 = vunpack.c.l.s4 1934713408
        %v1278 = vunpack.c.0.s8 %v1277
        %v1279 = vperm.slane %v1271, %v1278
        %v1280 = vrot.slane %v1243, 4
        %v1281 = vsel %vm1013, %v1280, %v1231
        %v1282 = vrot.slane %v1231, 4
        %v1283 = vsel %vm1013, %v1243, %v1282
        %v1285 = vunpack.c.l.s4 1934713408
        %v1286 = vunpack.c.0.s8 %v1285
        %v1287 = vperm.slane %v1281, %v1286
        %v1289 = vunpack.c.l.s4 1934713408
        %v1290 = vunpack.c.0.s8 %v1289
        %v1291 = vperm.slane %v1283, %v1290
        %v1292 = vrot.slane %v1263, 4
        %v1293 = vsel %vm1013, %v1292, %v1251
        %v1294 = vrot.slane %v1251, 4
        %v1295 = vsel %vm1013, %v1263, %v1294
        %v1297 = vunpack.c.l.s4 1934713408
        %v1298 = vunpack.c.0.s8 %v1297
        %v1299 = vperm.slane %v1293, %v1298
        %v1301 = vunpack.c.l.s4 1934713408
        %v1302 = vunpack.c.0.s8 %v1301
        %v1303 = vperm.slane %v1295, %v1302
        %v1304 = vrot.slane %v1267, 4
        %v1305 = vsel %vm1013, %v1304, %v1255
        %v1306 = vrot.slane %v1255, 4
        %v1307 = vsel %vm1013, %v1267, %v1306
        %v1309 = vunpack.c.l.s4 1934713408
        %v1310 = vunpack.c.0.s8 %v1309
        %v1311 = vperm.slane %v1305, %v1310
        %v1313 = vunpack.c.l.s4 1934713408
        %v1314 = vunpack.c.0.s8 %v1313
        %v1315 = vperm.slane %v1307, %v1314
        %v1316 = vrot.slane %v1299, 4
        %v1317 = vsel %vm1013, %v1316, %v1275
        %v1318 = vrot.slane %v1275, 4
        %v1319 = vsel %vm1013, %v1299, %v1318
        %v1320 = vrot.slane %v1303, 4
        %v1321 = vsel %vm1013, %v1320, %v1279
        %v1322 = vrot.slane %v1279, 4
        %v1323 = vsel %vm1013, %v1303, %v1322
        %v1324 = vrot.slane %v1311, 4
        %v1325 = vsel %vm1013, %v1324, %v1287
        %v1326 = vrot.slane %v1287, 4
        %v1327 = vsel %vm1013, %v1311, %v1326
        %v1328 = vrot.slane %v1315, 4
        %v1329 = vsel %vm1013, %v1328, %v1291
        %v1330 = vrot.slane %v1291, 4
        %v1331 = vsel %vm1013, %v1315, %v1330
        %v1332 = vrot.slane %v1183, 4
        %v1333 = vsel %vm1013, %v1332, %v1175
        %v1335 = vunpack.c.l.s4 1983009808
        %v1336 = vunpack.c.0.s8 %v1335
        %v1337 = vperm.slane %v1333, %v1336
        %v1338 = vrot.slane %v1187, 4
        %v1339 = vsel %vm1013, %v1338, %v1179
        %v1341 = vunpack.c.l.s4 1983009808
        %v1342 = vunpack.c.0.s8 %v1341
        %v1343 = vperm.slane %v1339, %v1342
        %v1344 = vrot.slane %v1199, 4
        %v1345 = vsel %vm1013, %v1344, %v1191
        %v1347 = vunpack.c.l.s4 1983009808
        %v1348 = vunpack.c.0.s8 %v1347
        %v1349 = vperm.slane %v1345, %v1348
        %v1350 = vrot.slane %v1203, 4
        %v1351 = vsel %vm1013, %v1350, %v1195
        %v1353 = vunpack.c.l.s4 1983009808
        %v1354 = vunpack.c.0.s8 %v1353
        %v1355 = vperm.slane %v1351, %v1354
        %v1356 = vrot.slane %v1343, 4
        %v1357 = vsel %vm1013, %v1356, %v1337
        %v1359 = vunpack.c.l.s4 1934713408
        %v1360 = vunpack.c.0.s8 %v1359
        %v1361 = vperm.slane %v1357, %v1360
        %v1362 = vrot.slane %v1355, 4
        %v1363 = vsel %vm1013, %v1362, %v1349
        %v1365 = vunpack.c.l.s4 1934713408
        %v1366 = vunpack.c.0.s8 %v1365
        %v1367 = vperm.slane %v1363, %v1366
        %v1368 = vrot.slane %v1367, 4
        %v1369 = vsel %vm1013, %v1368, %v1361
        %v1370 = vpack.c.bf16 %v1317, %v1317
        %v1371 = vpack.c.bf16 %v1319, %v1319
        %v1372 = vpack.c.bf16 %v1321, %v1321
        %v1373 = vpack.c.bf16 %v1323, %v1323
        %v1374 = vpack.c.bf16 %v1325, %v1325
        %v1375 = vpack.c.bf16 %v1327, %v1327
        %v1376 = vpack.c.bf16 %v1329, %v1329
        %v1377 = vpack.c.bf16 %v1331, %v1331
        %v1378 = vpack.c.bf16 %v1369, %v1369
        %1381 = vrot.lane.b32.xlu0 %v964, 120
        %v1382 = vpop.permute.xlu0 %1381
        %1383 = vrot.lane.b32.xlu0 %v966, 120
        %v1384 = vpop.permute.xlu0 %1383
        %1387 = vrot.lane.b32.xlu0 %v964, 112
        %v1388 = vpop.permute.xlu0 %1387
        %1389 = vrot.lane.b32.xlu0 %v966, 112
        %v1390 = vpop.permute.xlu0 %1389
        %1393 = vrot.lane.b32.xlu0 %v964, 104
        %v1394 = vpop.permute.xlu0 %1393
        %1395 = vrot.lane.b32.xlu0 %v966, 104
        %v1396 = vpop.permute.xlu0 %1395
        %1399 = vrot.lane.b32.xlu0 %v964, 96
        %v1400 = vpop.permute.xlu0 %1399
        %1401 = vrot.lane.b32.xlu0 %v966, 96
        %v1402 = vpop.permute.xlu0 %1401
        %1405 = vrot.lane.b32.xlu0 %v964, 88
        %v1406 = vpop.permute.xlu0 %1405
        %1407 = vrot.lane.b32.xlu0 %v966, 88
        %v1408 = vpop.permute.xlu0 %1407
        %1411 = vrot.lane.b32.xlu0 %v964, 80
        %v1412 = vpop.permute.xlu0 %1411
        %1413 = vrot.lane.b32.xlu0 %v966, 80
        %v1414 = vpop.permute.xlu0 %1413
        %1417 = vrot.lane.b32.xlu0 %v964, 72
        %v1418 = vpop.permute.xlu0 %1417
        %1419 = vrot.lane.b32.xlu0 %v966, 72
        %v1420 = vpop.permute.xlu0 %1419
        %v1423 = vrot.slane %v1388, 4
        %v1424 = vsel %vm1013, %v1423, %v964
        %v1425 = vrot.slane %v964, 4
        %v1426 = vsel %vm1013, %v1388, %v1425
        %v1428 = vunpack.c.l.s4 1983009808
        %v1429 = vunpack.c.0.s8 %v1428
        %v1430 = vperm.slane %v1424, %v1429
        %v1432 = vunpack.c.l.s4 1983009808
        %v1433 = vunpack.c.0.s8 %v1432
        %v1434 = vperm.slane %v1426, %v1433
        %v1435 = vrot.slane %v1394, 4
        %v1436 = vsel %vm1013, %v1435, %v1382
        %v1437 = vrot.slane %v1382, 4
        %v1438 = vsel %vm1013, %v1394, %v1437
        %v1440 = vunpack.c.l.s4 1983009808
        %v1441 = vunpack.c.0.s8 %v1440
        %v1442 = vperm.slane %v1436, %v1441
        %v1444 = vunpack.c.l.s4 1983009808
        %v1445 = vunpack.c.0.s8 %v1444
        %v1446 = vperm.slane %v1438, %v1445
        %v1447 = vrot.slane %v1412, 4
        %v1448 = vsel %vm1013, %v1447, %v1400
        %v1449 = vrot.slane %v1400, 4
        %v1450 = vsel %vm1013, %v1412, %v1449
        %v1452 = vunpack.c.l.s4 1983009808
        %v1453 = vunpack.c.0.s8 %v1452
        %v1454 = vperm.slane %v1448, %v1453
        %v1456 = vunpack.c.l.s4 1983009808
        %v1457 = vunpack.c.0.s8 %v1456
        %v1458 = vperm.slane %v1450, %v1457
        %v1459 = vrot.slane %v1418, 4
        %v1460 = vsel %vm1013, %v1459, %v1406
        %v1461 = vrot.slane %v1406, 4
        %v1462 = vsel %vm1013, %v1418, %v1461
        %v1464 = vunpack.c.l.s4 1983009808
        %v1465 = vunpack.c.0.s8 %v1464
        %v1466 = vperm.slane %v1460, %v1465
        %v1468 = vunpack.c.l.s4 1983009808
        %v1469 = vunpack.c.0.s8 %v1468
        %v1470 = vperm.slane %v1462, %v1469
        %v1471 = vrot.slane %v1442, 4
        %v1472 = vsel %vm1013, %v1471, %v1430
        %v1473 = vrot.slane %v1430, 4
        %v1474 = vsel %vm1013, %v1442, %v1473
        %v1476 = vunpack.c.l.s4 1934713408
        %v1477 = vunpack.c.0.s8 %v1476
        %v1478 = vperm.slane %v1472, %v1477
        %v1480 = vunpack.c.l.s4 1934713408
        %v1481 = vunpack.c.0.s8 %v1480
        %v1482 = vperm.slane %v1474, %v1481
        %v1483 = vrot.slane %v1446, 4
        %v1484 = vsel %vm1013, %v1483, %v1434
        %v1485 = vrot.slane %v1434, 4
        %v1486 = vsel %vm1013, %v1446, %v1485
        %v1488 = vunpack.c.l.s4 1934713408
        %v1489 = vunpack.c.0.s8 %v1488
        %v1490 = vperm.slane %v1484, %v1489
        %v1492 = vunpack.c.l.s4 1934713408
        %v1493 = vunpack.c.0.s8 %v1492
        %v1494 = vperm.slane %v1486, %v1493
        %v1495 = vrot.slane %v1466, 4
        %v1496 = vsel %vm1013, %v1495, %v1454
        %v1497 = vrot.slane %v1454, 4
        %v1498 = vsel %vm1013, %v1466, %v1497
        %v1500 = vunpack.c.l.s4 1934713408
        %v1501 = vunpack.c.0.s8 %v1500
        %v1502 = vperm.slane %v1496, %v1501
        %v1504 = vunpack.c.l.s4 1934713408
        %v1505 = vunpack.c.0.s8 %v1504
        %v1506 = vperm.slane %v1498, %v1505
        %v1507 = vrot.slane %v1470, 4
        %v1508 = vsel %vm1013, %v1507, %v1458
        %v1509 = vrot.slane %v1458, 4
        %v1510 = vsel %vm1013, %v1470, %v1509
        %v1512 = vunpack.c.l.s4 1934713408
        %v1513 = vunpack.c.0.s8 %v1512
        %v1514 = vperm.slane %v1508, %v1513
        %v1516 = vunpack.c.l.s4 1934713408
        %v1517 = vunpack.c.0.s8 %v1516
        %v1518 = vperm.slane %v1510, %v1517
        %v1519 = vrot.slane %v1502, 4
        %v1520 = vsel %vm1013, %v1519, %v1478
        %v1521 = vrot.slane %v1478, 4
        %v1522 = vsel %vm1013, %v1502, %v1521
        %v1523 = vrot.slane %v1506, 4
        %v1524 = vsel %vm1013, %v1523, %v1482
        %v1525 = vrot.slane %v1482, 4
        %v1526 = vsel %vm1013, %v1506, %v1525
        %v1527 = vrot.slane %v1514, 4
        %v1528 = vsel %vm1013, %v1527, %v1490
        %v1529 = vrot.slane %v1490, 4
        %v1530 = vsel %vm1013, %v1514, %v1529
        %v1531 = vrot.slane %v1518, 4
        %v1532 = vsel %vm1013, %v1531, %v1494
        %v1533 = vrot.slane %v1494, 4
        %v1534 = vsel %vm1013, %v1518, %v1533
        %v1535 = vrot.slane %v1390, 4
        %v1536 = vsel %vm1013, %v1535, %v966
        %v1538 = vunpack.c.l.s4 1983009808
        %v1539 = vunpack.c.0.s8 %v1538
        %v1540 = vperm.slane %v1536, %v1539
        %v1541 = vrot.slane %v1396, 4
        %v1542 = vsel %vm1013, %v1541, %v1384
        %v1544 = vunpack.c.l.s4 1983009808
        %v1545 = vunpack.c.0.s8 %v1544
        %v1546 = vperm.slane %v1542, %v1545
        %v1547 = vrot.slane %v1414, 4
        %v1548 = vsel %vm1013, %v1547, %v1402
        %v1550 = vunpack.c.l.s4 1983009808
        %v1551 = vunpack.c.0.s8 %v1550
        %v1552 = vperm.slane %v1548, %v1551
        %v1553 = vrot.slane %v1420, 4
        %v1554 = vsel %vm1013, %v1553, %v1408
        %v1556 = vunpack.c.l.s4 1983009808
        %v1557 = vunpack.c.0.s8 %v1556
        %v1558 = vperm.slane %v1554, %v1557
        %v1559 = vrot.slane %v1546, 4
        %v1560 = vsel %vm1013, %v1559, %v1540
        %v1562 = vunpack.c.l.s4 1934713408
        %v1563 = vunpack.c.0.s8 %v1562
        %v1564 = vperm.slane %v1560, %v1563
        %v1565 = vrot.slane %v1558, 4
        %v1566 = vsel %vm1013, %v1565, %v1552
        %v1568 = vunpack.c.l.s4 1934713408
        %v1569 = vunpack.c.0.s8 %v1568
        %v1570 = vperm.slane %v1566, %v1569
        %v1571 = vrot.slane %v1570, 4
        %v1572 = vsel %vm1013, %v1571, %v1564
        %v1573 = vpack.c.bf16 %v1520, %v1520
        %v1574 = vpack.c.bf16 %v1522, %v1522
        %v1575 = vpack.c.bf16 %v1524, %v1524
        %v1576 = vpack.c.bf16 %v1526, %v1526
        %v1577 = vpack.c.bf16 %v1528, %v1528
        %v1578 = vpack.c.bf16 %v1530, %v1530
        %v1579 = vpack.c.bf16 %v1532, %v1532
        %v1580 = vpack.c.bf16 %v1534, %v1534
        %v1581 = vpack.c.bf16 %v1572, %v1572
        %v1584 = vpack.i.b16 %v1164, %v1163
        %v1586 = vshrl.u32 %v1163, 16
        %v1587 = vshrl.u32 %v1164, 16
        %v1588 = vpack.i.b16 %v1587, %v1586
        %v1592 = vpack.i.b16 %v1166, %v1165
        %v1594 = vshrl.u32 %v1165, 16
        %v1595 = vshrl.u32 %v1166, 16
        %v1596 = vpack.i.b16 %v1595, %v1594
        %v1600 = vpack.i.b16 %v1168, %v1167
        %v1602 = vshrl.u32 %v1167, 16
        %v1603 = vshrl.u32 %v1168, 16
        %v1604 = vpack.i.b16 %v1603, %v1602
        %v1608 = vpack.i.b16 %v1170, %v1169
        %v1610 = vshrl.u32 %v1169, 16
        %v1611 = vshrl.u32 %v1170, 16
        %v1612 = vpack.i.b16 %v1611, %v1610
        %v1616 = vpack.i.b16 0, %v1171
        %v1617 = vshrl.u32 %v1171, 16
        %v1618 = vshrl.u32 0, 16
        %v1619 = vpack.i.b16 %v1618, %v1617
        %v1620 = vrot.slane %v1600, 4
        %vm1621 = vcmask 1047556
        %v1622 = vsel %vm1621, %v1620, %v1584
        %v1624 = vunpack.c.l.s4 1983009808
        %v1625 = vunpack.c.0.s8 %v1624
        %v1626 = vperm.slane %v1622, %v1625
        %v1627 = vrot.slane %v1608, 4
        %v1628 = vsel %vm1621, %v1627, %v1592
        %v1630 = vunpack.c.l.s4 1983009808
        %v1631 = vunpack.c.0.s8 %v1630
        %v1632 = vperm.slane %v1628, %v1631
        %v1633 = vrot.slane %v1632, 4
        %v1634 = vsel %vm1621, %v1633, %v1626
        %v1635 = vrot.slane %v1626, 4
        %v1636 = vsel %vm1621, %v1632, %v1635
        %v1638 = vunpack.c.l.s4 1934713408
        %v1639 = vunpack.c.0.s8 %v1638
        %v1640 = vperm.slane %v1634, %v1639
        %v1642 = vunpack.c.l.s4 1934713408
        %v1643 = vunpack.c.0.s8 %v1642
        %v1644 = vperm.slane %v1636, %v1643
        %v1645 = vrot.slane %v1640, 4
        %v1646 = vsel %vm1621, 0, %v1645
        %v1647 = vrot.slane %v1644, 4
        %v1648 = vsel %vm1621, 0, %v1647
        %v1649 = vrot.slane %v1604, 4
        %v1650 = vsel %vm1621, %v1649, %v1588
        %v1652 = vunpack.c.l.s4 1983009808
        %v1653 = vunpack.c.0.s8 %v1652
        %v1654 = vperm.slane %v1650, %v1653
        %v1655 = vrot.slane %v1612, 4
        %v1656 = vsel %vm1621, %v1655, %v1596
        %v1658 = vunpack.c.l.s4 1983009808
        %v1659 = vunpack.c.0.s8 %v1658
        %v1660 = vperm.slane %v1656, %v1659
        %v1661 = vrot.slane %v1660, 4
        %v1662 = vsel %vm1621, %v1661, %v1654
        %v1663 = vrot.slane %v1654, 4
        %v1664 = vsel %vm1621, %v1660, %v1663
        %v1666 = vunpack.c.l.s4 1934713408
        %v1667 = vunpack.c.0.s8 %v1666
        %v1668 = vperm.slane %v1662, %v1667
        %v1670 = vunpack.c.l.s4 1934713408
        %v1671 = vunpack.c.0.s8 %v1670
        %v1672 = vperm.slane %v1664, %v1671
        %v1673 = vrot.slane %v1668, 4
        %v1674 = vsel %vm1621, 0, %v1673
        %v1675 = vrot.slane %v1672, 4
        %v1676 = vsel %vm1621, 0, %v1675
        %v1679 = vunpack.c.l.s4 1983009808
        %v1680 = vunpack.c.0.s8 %v1679
        %v1681 = vperm.slane %v1616, %v1680
        %v1682 = vrot.slane %v1681, 4
        %v1683 = vsel %vm1621, 0, %v1682
        %v1685 = vunpack.c.l.s4 1934713408
        %v1686 = vunpack.c.0.s8 %v1685
        %v1687 = vperm.slane %v1681, %v1686
        %v1689 = vunpack.c.l.s4 1934713408
        %v1690 = vunpack.c.0.s8 %v1689
        %v1691 = vperm.slane %v1683, %v1690
        %v1692 = vrot.slane %v1687, 4
        %v1693 = vsel %vm1621, 0, %v1692
        %v1694 = vrot.slane %v1691, 4
        %v1695 = vsel %vm1621, 0, %v1694
        %v1698 = vunpack.c.l.s4 1983009808
        %v1699 = vunpack.c.0.s8 %v1698
        %v1700 = vperm.slane %v1619, %v1699
        %v1701 = vrot.slane %v1700, 4
        %v1702 = vsel %vm1621, 0, %v1701
        %v1704 = vunpack.c.l.s4 1934713408
        %v1705 = vunpack.c.0.s8 %v1704
        %v1706 = vperm.slane %v1700, %v1705
        %v1708 = vunpack.c.l.s4 1934713408
        %v1709 = vunpack.c.0.s8 %v1708
        %v1710 = vperm.slane %v1702, %v1709
        %v1711 = vrot.slane %v1706, 4
        %v1712 = vsel %vm1621, 0, %v1711
        %v1713 = vrot.slane %v1710, 4
        %v1714 = vsel %vm1621, 0, %v1713
        %1715 = vxpose.xlu0.c.b16.start [1/8] %v1370, 128
        %1716 = vxpose.xlu0.c.b16.cont [2/8] 0, 128
        %1717 = vxpose.xlu0.c.b16.cont [3/8] 0, 128
        %1718 = vxpose.xlu0.c.b16.cont [4/8] 0, 128
        %1719 = vxpose.xlu0.c.b16.cont [5/8] 0, 128
        %1720 = vxpose.xlu0.c.b16.cont [6/8] 0, 128
        %1721 = vxpose.xlu0.c.b16.cont [7/8] 0, 128
        %1722 = vxpose.xlu0.c.b16.end [8/8] 0, 128
        %v1723 = vpop.trf.xlu0
        %v1724 = vpop.trf.xlu0
        %v1725 = vpop.trf.xlu0
        %v1726 = vpop.trf.xlu0
        %v1727 = vpop.trf.xlu0
        %v1728 = vpop.trf.xlu0
        %v1729 = vpop.trf.xlu0
        %v1730 = vpop.trf.xlu0
        %1731 = vxpose.xlu0.c.b16.start [1/8] %v1371, 128
        %1732 = vxpose.xlu0.c.b16.cont [2/8] 0, 128
        %1733 = vxpose.xlu0.c.b16.cont [3/8] 0, 128
        %1734 = vxpose.xlu0.c.b16.cont [4/8] 0, 128
        %1735 = vxpose.xlu0.c.b16.cont [5/8] 0, 128
        %1736 = vxpose.xlu0.c.b16.cont [6/8] 0, 128
        %1737 = vxpose.xlu0.c.b16.cont [7/8] 0, 128
        %1738 = vxpose.xlu0.c.b16.end [8/8] 0, 128
        %v1739 = vpop.trf.xlu0
        %v1740 = vpop.trf.xlu0
        %v1741 = vpop.trf.xlu0
        %v1742 = vpop.trf.xlu0
        %v1743 = vpop.trf.xlu0
        %v1744 = vpop.trf.xlu0
        %v1745 = vpop.trf.xlu0
        %v1746 = vpop.trf.xlu0
        %1747 = vxpose.xlu0.c.b16.start [1/8] %v1372, 128
        %1748 = vxpose.xlu0.c.b16.cont [2/8] 0, 128
        %1749 = vxpose.xlu0.c.b16.cont [3/8] 0, 128
        %1750 = vxpose.xlu0.c.b16.cont [4/8] 0, 128
        %1751 = vxpose.xlu0.c.b16.cont [5/8] 0, 128
        %1752 = vxpose.xlu0.c.b16.cont [6/8] 0, 128
        %1753 = vxpose.xlu0.c.b16.cont [7/8] 0, 128
        %1754 = vxpose.xlu0.c.b16.end [8/8] 0, 128
        %v1755 = vpop.trf.xlu0
        %v1756 = vpop.trf.xlu0
        %v1757 = vpop.trf.xlu0
        %v1758 = vpop.trf.xlu0
        %v1759 = vpop.trf.xlu0
        %v1760 = vpop.trf.xlu0
        %v1761 = vpop.trf.xlu0
        %v1762 = vpop.trf.xlu0
        %1763 = vxpose.xlu0.c.b16.start [1/8] %v1373, 128
        %1764 = vxpose.xlu0.c.b16.cont [2/8] 0, 128
        %1765 = vxpose.xlu0.c.b16.cont [3/8] 0, 128
        %1766 = vxpose.xlu0.c.b16.cont [4/8] 0, 128
        %1767 = vxpose.xlu0.c.b16.cont [5/8] 0, 128
        %1768 = vxpose.xlu0.c.b16.cont [6/8] 0, 128
        %1769 = vxpose.xlu0.c.b16.cont [7/8] 0, 128
        %1770 = vxpose.xlu0.c.b16.end [8/8] 0, 128
        %v1771 = vpop.trf.xlu0
        %v1772 = vpop.trf.xlu0
        %v1773 = vpop.trf.xlu0
        %v1774 = vpop.trf.xlu0
        %v1775 = vpop.trf.xlu0
        %v1776 = vpop.trf.xlu0
        %v1777 = vpop.trf.xlu0
        %v1778 = vpop.trf.xlu0
        %1779 = vxpose.xlu0.c.b16.start [1/8] %v1374, 128
        %1780 = vxpose.xlu0.c.b16.cont [2/8] 0, 128
        %1781 = vxpose.xlu0.c.b16.cont [3/8] 0, 128
        %1782 = vxpose.xlu0.c.b16.cont [4/8] 0, 128
        %1783 = vxpose.xlu0.c.b16.cont [5/8] 0, 128
        %1784 = vxpose.xlu0.c.b16.cont [6/8] 0, 128
        %1785 = vxpose.xlu0.c.b16.cont [7/8] 0, 128
        %1786 = vxpose.xlu0.c.b16.end [8/8] 0, 128
        %v1787 = vpop.trf.xlu0
        %v1788 = vpop.trf.xlu0
        %v1789 = vpop.trf.xlu0
        %v1790 = vpop.trf.xlu0
        %v1791 = vpop.trf.xlu0
        %v1792 = vpop.trf.xlu0
        %v1793 = vpop.trf.xlu0
        %v1794 = vpop.trf.xlu0
        %1795 = vxpose.xlu0.c.b16.start [1/8] %v1375, 128
        %1796 = vxpose.xlu0.c.b16.cont [2/8] 0, 128
        %1797 = vxpose.xlu0.c.b16.cont [3/8] 0, 128
        %1798 = vxpose.xlu0.c.b16.cont [4/8] 0, 128
        %1799 = vxpose.xlu0.c.b16.cont [5/8] 0, 128
        %1800 = vxpose.xlu0.c.b16.cont [6/8] 0, 128
        %1801 = vxpose.xlu0.c.b16.cont [7/8] 0, 128
        %1802 = vxpose.xlu0.c.b16.end [8/8] 0, 128
        %v1803 = vpop.trf.xlu0
        %v1804 = vpop.trf.xlu0
        %v1805 = vpop.trf.xlu0
        %v1806 = vpop.trf.xlu0
        %v1807 = vpop.trf.xlu0
        %v1808 = vpop.trf.xlu0
        %v1809 = vpop.trf.xlu0
        %v1810 = vpop.trf.xlu0
        %1811 = vxpose.xlu0.c.b16.start [1/8] %v1376, 128
        %1812 = vxpose.xlu0.c.b16.cont [2/8] 0, 128
        %1813 = vxpose.xlu0.c.b16.cont [3/8] 0, 128
        %1814 = vxpose.xlu0.c.b16.cont [4/8] 0, 128
        %1815 = vxpose.xlu0.c.b16.cont [5/8] 0, 128
        %1816 = vxpose.xlu0.c.b16.cont [6/8] 0, 128
        %1817 = vxpose.xlu0.c.b16.cont [7/8] 0, 128
        %1818 = vxpose.xlu0.c.b16.end [8/8] 0, 128
        %v1819 = vpop.trf.xlu0
        %v1820 = vpop.trf.xlu0
        %v1821 = vpop.trf.xlu0
        %v1822 = vpop.trf.xlu0
        %v1823 = vpop.trf.xlu0
        %v1824 = vpop.trf.xlu0
        %v1825 = vpop.trf.xlu0
        %v1826 = vpop.trf.xlu0
        %1827 = vxpose.xlu0.c.b16.start [1/8] %v1377, 128
        %1828 = vxpose.xlu0.c.b16.cont [2/8] 0, 128
        %1829 = vxpose.xlu0.c.b16.cont [3/8] 0, 128
        %1830 = vxpose.xlu0.c.b16.cont [4/8] 0, 128
        %1831 = vxpose.xlu0.c.b16.cont [5/8] 0, 128
        %1832 = vxpose.xlu0.c.b16.cont [6/8] 0, 128
        %1833 = vxpose.xlu0.c.b16.cont [7/8] 0, 128
        %1834 = vxpose.xlu0.c.b16.end [8/8] 0, 128
        %v1835 = vpop.trf.xlu0
        %v1836 = vpop.trf.xlu0
        %v1837 = vpop.trf.xlu0
        %v1838 = vpop.trf.xlu0
        %v1839 = vpop.trf.xlu0
        %v1840 = vpop.trf.xlu0
        %v1841 = vpop.trf.xlu0
        %v1842 = vpop.trf.xlu0
        %1843 = vxpose.xlu0.c.b16.start [1/8] %v1378, 128
        %1844 = vxpose.xlu0.c.b16.cont [2/8] 0, 128
        %1845 = vxpose.xlu0.c.b16.cont [3/8] 0, 128
        %1846 = vxpose.xlu0.c.b16.cont [4/8] 0, 128
        %1847 = vxpose.xlu0.c.b16.cont [5/8] 0, 128
        %1848 = vxpose.xlu0.c.b16.cont [6/8] 0, 128
        %1849 = vxpose.xlu0.c.b16.cont [7/8] 0, 128
        %1850 = vxpose.xlu0.c.b16.end [8/8] 0, 128
        %v1851 = vpop.trf.xlu0
        %v1852 = vpop.trf.xlu0
        %v1853 = vpop.trf.xlu0
        %v1854 = vpop.trf.xlu0
        %v1855 = vpop.trf.xlu0
        %v1856 = vpop.trf.xlu0
        %v1857 = vpop.trf.xlu0
        %v1858 = vpop.trf.xlu0
        %v1859 = vrot.slane %v1787, 4
        %v1860 = vsel %vm1621, %v1859, %v1723
        %v1862 = vunpack.c.l.s4 1983009808
        %v1863 = vunpack.c.0.s8 %v1862
        %v1864 = vperm.slane %v1860, %v1863
        %v1865 = vrot.slane %v1819, 4
        %v1866 = vsel %vm1621, %v1865, %v1755
        %v1868 = vunpack.c.l.s4 1983009808
        %v1869 = vunpack.c.0.s8 %v1868
        %v1870 = vperm.slane %v1866, %v1869
        %v1872 = vunpack.c.l.s4 1983009808
        %v1873 = vunpack.c.0.s8 %v1872
        %v1874 = vperm.slane %v1851, %v1873
        %v1875 = vrot.slane %v1870, 4
        %v1876 = vsel %vm1621, %v1875, %v1864
        %v1877 = vrot.slane %v1864, 4
        %v1878 = vsel %vm1621, %v1870, %v1877
        %v1880 = vunpack.c.l.s4 1934713408
        %v1881 = vunpack.c.0.s8 %v1880
        %v1882 = vperm.slane %v1876, %v1881
        %v1884 = vunpack.c.l.s4 1934713408
        %v1885 = vunpack.c.0.s8 %v1884
        %v1886 = vperm.slane %v1878, %v1885
        %v1887 = vrot.slane %v1874, 4
        %v1888 = vsel %vm1621, 0, %v1887
        %v1890 = vunpack.c.l.s4 1934713408
        %v1891 = vunpack.c.0.s8 %v1890
        %v1892 = vperm.slane %v1874, %v1891
        %v1894 = vunpack.c.l.s4 1934713408
        %v1895 = vunpack.c.0.s8 %v1894
        %v1896 = vperm.slane %v1888, %v1895
        %v1897 = vrot.slane %v1892, 4
        %v1898 = vsel %vm1621, %v1897, %v1882
        %v1899 = vrot.slane %v1882, 4
        %v1900 = vsel %vm1621, %v1892, %v1899
        %v1901 = vrot.slane %v1896, 4
        %v1902 = vsel %vm1621, %v1901, %v1886
        %v1903 = vrot.slane %v1886, 4
        %v1904 = vsel %vm1621, %v1896, %v1903
        %v1905 = vrot.slane %v1803, 4
        %v1906 = vsel %vm1621, %v1905, %v1739
        %v1908 = vunpack.c.l.s4 1983009808
        %v1909 = vunpack.c.0.s8 %v1908
        %v1910 = vperm.slane %v1906, %v1909
        %v1911 = vrot.slane %v1835, 4
        %v1912 = vsel %vm1621, %v1911, %v1771
        %v1914 = vunpack.c.l.s4 1983009808
        %v1915 = vunpack.c.0.s8 %v1914
        %v1916 = vperm.slane %v1912, %v1915
        %v1917 = vrot.slane %v1916, 4
        %v1918 = vsel %vm1621, %v1917, %v1910
        %v1919 = vrot.slane %v1910, 4
        %v1920 = vsel %vm1621, %v1916, %v1919
        %v1922 = vunpack.c.l.s4 1934713408
        %v1923 = vunpack.c.0.s8 %v1922
        %v1924 = vperm.slane %v1918, %v1923
        %v1926 = vunpack.c.l.s4 1934713408
        %v1927 = vunpack.c.0.s8 %v1926
        %v1928 = vperm.slane %v1920, %v1927
        %v1929 = vrot.slane %v1924, 4
        %v1930 = vsel %vm1621, 0, %v1929
        %v1931 = vrot.slane %v1928, 4
        %v1932 = vsel %vm1621, 0, %v1931
        %v1935 = vpack.i.b16 %v1924, %v1898
        %v1937 = vshrl.u32 %v1898, 16
        %v1938 = vshrl.u32 %v1924, 16
        %v1939 = vpack.i.b16 %v1938, %v1937
        %v1943 = vpack.i.b16 %v1930, %v1900
        %v1945 = vshrl.u32 %v1900, 16
        %v1946 = vshrl.u32 %v1930, 16
        %v1947 = vpack.i.b16 %v1946, %v1945
        %v1951 = vpack.i.b16 %v1928, %v1902
        %v1953 = vshrl.u32 %v1902, 16
        %v1954 = vshrl.u32 %v1928, 16
        %v1955 = vpack.i.b16 %v1954, %v1953
        %v1959 = vpack.i.b16 %v1932, %v1904
        %v1961 = vshrl.u32 %v1904, 16
        %v1962 = vshrl.u32 %v1932, 16
        %v1963 = vpack.i.b16 %v1962, %v1961
        %1965 = vxpose.xlu0.c.b16.start [1/8] %v1935, 128
        %1966 = vxpose.xlu0.c.b16.cont [2/8] 0, 128
        %1967 = vxpose.xlu0.c.b16.cont [3/8] 0, 128
        %1968 = vxpose.xlu0.c.b16.cont [4/8] 0, 128
        %1969 = vxpose.xlu0.c.b16.cont [5/8] 0, 128
        %1970 = vxpose.xlu0.c.b16.cont [6/8] 0, 128
        %1971 = vxpose.xlu0.c.b16.cont [7/8] 0, 128
        %1972 = vxpose.xlu0.c.b16.end [8/8] 0, 128
        %v1973 = vpop.trf.xlu0
        %v1974 = vpop.trf.xlu0
        %v1975 = vpop.trf.xlu0
        %v1976 = vpop.trf.xlu0
        %v1977 = vpop.trf.xlu0
        %v1978 = vpop.trf.xlu0
        %v1979 = vpop.trf.xlu0
        %v1980 = vpop.trf.xlu0
        %1981 = vxpose.xlu0.c.b16.start [1/8] %v1939, 128
        %1982 = vxpose.xlu0.c.b16.cont [2/8] 0, 128
        %1983 = vxpose.xlu0.c.b16.cont [3/8] 0, 128
        %1984 = vxpose.xlu0.c.b16.cont [4/8] 0, 128
        %1985 = vxpose.xlu0.c.b16.cont [5/8] 0, 128
        %1986 = vxpose.xlu0.c.b16.cont [6/8] 0, 128
        %1987 = vxpose.xlu0.c.b16.cont [7/8] 0, 128
        %1988 = vxpose.xlu0.c.b16.end [8/8] 0, 128
        %v1989 = vpop.trf.xlu0
        %v1990 = vpop.trf.xlu0
        %v1991 = vpop.trf.xlu0
        %v1992 = vpop.trf.xlu0
        %v1993 = vpop.trf.xlu0
        %v1994 = vpop.trf.xlu0
        %v1995 = vpop.trf.xlu0
        %v1996 = vpop.trf.xlu0
        %1997 = vxpose.xlu0.c.b16.start [1/8] %v1943, 128
        %1998 = vxpose.xlu0.c.b16.cont [2/8] 0, 128
        %1999 = vxpose.xlu0.c.b16.cont [3/8] 0, 128
        %2000 = vxpose.xlu0.c.b16.cont [4/8] 0, 128
        %2001 = vxpose.xlu0.c.b16.cont [5/8] 0, 128
        %2002 = vxpose.xlu0.c.b16.cont [6/8] 0, 128
        %2003 = vxpose.xlu0.c.b16.cont [7/8] 0, 128
        %2004 = vxpose.xlu0.c.b16.end [8/8] 0, 128
        %v2005 = vpop.trf.xlu0
        %v2006 = vpop.trf.xlu0
        %v2007 = vpop.trf.xlu0
        %v2008 = vpop.trf.xlu0
        %v2009 = vpop.trf.xlu0
        %v2010 = vpop.trf.xlu0
        %v2011 = vpop.trf.xlu0
        %v2012 = vpop.trf.xlu0
        %2013 = vxpose.xlu0.c.b16.start [1/8] %v1947, 128
        %2014 = vxpose.xlu0.c.b16.cont [2/8] 0, 128
        %2015 = vxpose.xlu0.c.b16.cont [3/8] 0, 128
        %2016 = vxpose.xlu0.c.b16.cont [4/8] 0, 128
        %2017 = vxpose.xlu0.c.b16.cont [5/8] 0, 128
        %2018 = vxpose.xlu0.c.b16.cont [6/8] 0, 128
        %2019 = vxpose.xlu0.c.b16.cont [7/8] 0, 128
        %2020 = vxpose.xlu0.c.b16.end [8/8] 0, 128
        %v2021 = vpop.trf.xlu0
        %v2022 = vpop.trf.xlu0
        %v2023 = vpop.trf.xlu0
        %v2024 = vpop.trf.xlu0
        %v2025 = vpop.trf.xlu0
        %v2026 = vpop.trf.xlu0
        %v2027 = vpop.trf.xlu0
        %v2028 = vpop.trf.xlu0
        %2029 = vxpose.xlu0.c.b16.start [1/8] %v1951, 128
        %2030 = vxpose.xlu0.c.b16.cont [2/8] 0, 128
        %2031 = vxpose.xlu0.c.b16.cont [3/8] 0, 128
        %2032 = vxpose.xlu0.c.b16.cont [4/8] 0, 128
        %2033 = vxpose.xlu0.c.b16.cont [5/8] 0, 128
        %2034 = vxpose.xlu0.c.b16.cont [6/8] 0, 128
        %2035 = vxpose.xlu0.c.b16.cont [7/8] 0, 128
        %2036 = vxpose.xlu0.c.b16.end [8/8] 0, 128
        %v2037 = vpop.trf.xlu0
        %v2038 = vpop.trf.xlu0
        %v2039 = vpop.trf.xlu0
        %v2040 = vpop.trf.xlu0
        %v2041 = vpop.trf.xlu0
        %v2042 = vpop.trf.xlu0
        %v2043 = vpop.trf.xlu0
        %v2044 = vpop.trf.xlu0
        %2045 = vxpose.xlu0.c.b16.start [1/8] %v1955, 128
        %2046 = vxpose.xlu0.c.b16.cont [2/8] 0, 128
        %2047 = vxpose.xlu0.c.b16.cont [3/8] 0, 128
        %2048 = vxpose.xlu0.c.b16.cont [4/8] 0, 128
        %2049 = vxpose.xlu0.c.b16.cont [5/8] 0, 128
        %2050 = vxpose.xlu0.c.b16.cont [6/8] 0, 128
        %2051 = vxpose.xlu0.c.b16.cont [7/8] 0, 128
        %2052 = vxpose.xlu0.c.b16.end [8/8] 0, 128
        %v2053 = vpop.trf.xlu0
        %v2054 = vpop.trf.xlu0
        %v2055 = vpop.trf.xlu0
        %v2056 = vpop.trf.xlu0
        %v2057 = vpop.trf.xlu0
        %v2058 = vpop.trf.xlu0
        %v2059 = vpop.trf.xlu0
        %v2060 = vpop.trf.xlu0
        %2061 = vxpose.xlu0.c.b16.start [1/8] %v1959, 128
        %2062 = vxpose.xlu0.c.b16.cont [2/8] 0, 128
        %2063 = vxpose.xlu0.c.b16.cont [3/8] 0, 128
        %2064 = vxpose.xlu0.c.b16.cont [4/8] 0, 128
        %2065 = vxpose.xlu0.c.b16.cont [5/8] 0, 128
        %2066 = vxpose.xlu0.c.b16.cont [6/8] 0, 128
        %2067 = vxpose.xlu0.c.b16.cont [7/8] 0, 128
        %2068 = vxpose.xlu0.c.b16.end [8/8] 0, 128
        %v2069 = vpop.trf.xlu0
        %v2070 = vpop.trf.xlu0
        %v2071 = vpop.trf.xlu0
        %v2072 = vpop.trf.xlu0
        %v2073 = vpop.trf.xlu0
        %v2074 = vpop.trf.xlu0
        %v2075 = vpop.trf.xlu0
        %v2076 = vpop.trf.xlu0
        %2077 = vxpose.xlu0.c.b16.start [1/8] %v1963, 128
        %2078 = vxpose.xlu0.c.b16.cont [2/8] 0, 128
        %2079 = vxpose.xlu0.c.b16.cont [3/8] 0, 128
        %2080 = vxpose.xlu0.c.b16.cont [4/8] 0, 128
        %2081 = vxpose.xlu0.c.b16.cont [5/8] 0, 128
        %2082 = vxpose.xlu0.c.b16.cont [6/8] 0, 128
        %2083 = vxpose.xlu0.c.b16.cont [7/8] 0, 128
        %2084 = vxpose.xlu0.c.b16.end [8/8] 0, 128
        %v2085 = vpop.trf.xlu0
        %v2086 = vpop.trf.xlu0
        %v2087 = vpop.trf.xlu0
        %v2088 = vpop.trf.xlu0
        %v2089 = vpop.trf.xlu0
        %v2090 = vpop.trf.xlu0
        %v2091 = vpop.trf.xlu0
        %v2092 = vpop.trf.xlu0
        %v2093 = vrot.slane %v2037, 4
        %v2094 = vsel %vm1621, %v2093, %v1973
        %v2096 = vunpack.c.l.s4 1983009808
        %v2097 = vunpack.c.0.s8 %v2096
        %v2098 = vperm.slane %v2094, %v2097
        %v2099 = vrot.slane %v2069, 4
        %v2100 = vsel %vm1621, %v2099, %v2005
        %v2102 = vunpack.c.l.s4 1983009808
        %v2103 = vunpack.c.0.s8 %v2102
        %v2104 = vperm.slane %v2100, %v2103
        %v2105 = vrot.slane %v2104, 4
        %v2106 = vsel %vm1621, %v2105, %v2098
        %v2107 = vrot.slane %v2098, 4
        %v2108 = vsel %vm1621, %v2104, %v2107
        %v2110 = vunpack.c.l.s4 1934713408
        %v2111 = vunpack.c.0.s8 %v2110
        %v2112 = vperm.slane %v2106, %v2111
        %v2114 = vunpack.c.l.s4 1934713408
        %v2115 = vunpack.c.0.s8 %v2114
        %v2116 = vperm.slane %v2108, %v2115
        %v2117 = vrot.slane %v2112, 4
        %v2118 = vsel %vm1621, 0, %v2117
        %v2119 = vrot.slane %v2116, 4
        %v2120 = vsel %vm1621, 0, %v2119
        %v2121 = vrot.slane %v2053, 4
        %v2122 = vsel %vm1621, %v2121, %v1989
        %v2124 = vunpack.c.l.s4 1983009808
        %v2125 = vunpack.c.0.s8 %v2124
        %v2126 = vperm.slane %v2122, %v2125
        %v2127 = vrot.slane %v2085, 4
        %v2128 = vsel %vm1621, %v2127, %v2021
        %v2130 = vunpack.c.l.s4 1983009808
        %v2131 = vunpack.c.0.s8 %v2130
        %v2132 = vperm.slane %v2128, %v2131
        %v2133 = vrot.slane %v2132, 4
        %v2134 = vsel %vm1621, %v2133, %v2126
        %v2135 = vrot.slane %v2126, 4
        %v2136 = vsel %vm1621, %v2132, %v2135
        %v2138 = vunpack.c.l.s4 1934713408
        %v2139 = vunpack.c.0.s8 %v2138
        %v2140 = vperm.slane %v2134, %v2139
        %v2142 = vunpack.c.l.s4 1934713408
        %v2143 = vunpack.c.0.s8 %v2142
        %v2144 = vperm.slane %v2136, %v2143
        %v2145 = vrot.slane %v2140, 4
        %v2146 = vsel %vm1621, 0, %v2145
        %v2147 = vrot.slane %v2144, 4
        %v2148 = vsel %vm1621, 0, %v2147
        %v2151 = vpack.i.b16 %v2140, %v2112
        %v2152 = vshrl.u32 %v2112, 16
        %v2153 = vshrl.u32 %v2140, 16
        %v2154 = vpack.i.b16 %v2153, %v2152
        %v2157 = vpack.i.b16 %v2146, %v2118
        %v2158 = vshrl.u32 %v2118, 16
        %v2159 = vshrl.u32 %v2146, 16
        %v2160 = vpack.i.b16 %v2159, %v2158
        %v2163 = vpack.i.b16 %v2144, %v2116
        %v2164 = vshrl.u32 %v2116, 16
        %v2165 = vshrl.u32 %v2144, 16
        %v2166 = vpack.i.b16 %v2165, %v2164
        %v2169 = vpack.i.b16 %v2148, %v2120
        %v2170 = vshrl.u32 %v2120, 16
        %v2171 = vshrl.u32 %v2148, 16
        %v2172 = vpack.i.b16 %v2171, %v2170
        %v2175 = vunpack.c.l.b16 %v1640
        %v2176 = vunpack.c.l.b16 %v1687
        %v2177 = vpack.c.b16 %v2176, %v2175
        %vm2178 = vcmask 64512
        %v2180 = vsel %vm2178, %v2177, 0
        %vm2182 = vcmask 1043456
        %v2184 = vsel %vm2182, %v2151, 0
        %2186 = vmatpush.bf16.msra.mxu0 0
        %2187 = vmatpush.bf16.msra.mxu0 0
        %2188 = vmatpush.bf16.msra.mxu0 0
        %2189 = vmatpush.bf16.msra.mxu0 0
        %2190 = vmatpush.bf16.msra.mxu0 0
        %2191 = vmatpush.bf16.msra.mxu0 0
        %2192 = vmatpush.bf16.msra.mxu0 0
        %2193 = vmatpush.bf16.msra.mxu0 %v2184
        %2194 = vmatmul.bf16.gmra.mxu0 %v2180
        %v2195 = vpop.f32.mrf.mxu0
        %v2196 = vadd.f32 0.0, %v2195
        %v2197 = vpop.f32.mrf.mxu0
        %v2198 = vadd.f32 0.0, %v2197
        %2199 = vdwg.mxu0
        %v2202 = vunpack.c.l.b16 %v1668
        %v2203 = vunpack.c.l.b16 %v1706
        %v2204 = vpack.c.b16 %v2203, %v2202
        %v2206 = vsel %vm2178, %v2204, 0
        %v2209 = vsel %vm2182, %v2154, 0
        %2211 = vmatpush.bf16.msra.mxu0 0
        %2212 = vmatpush.bf16.msra.mxu0 0
        %2213 = vmatpush.bf16.msra.mxu0 0
        %2214 = vmatpush.bf16.msra.mxu0 0
        %2215 = vmatpush.bf16.msra.mxu0 0
        %2216 = vmatpush.bf16.msra.mxu0 0
        %2217 = vmatpush.bf16.msra.mxu0 0
        %2218 = vmatpush.bf16.msra.mxu0 %v2209
        %2219 = vmatmul.bf16.gmra.mxu0 %v2206
        %v2220 = vpop.f32.mrf.mxu0
        %v2221 = vadd.f32 0.0, %v2220
        %v2222 = vpop.f32.mrf.mxu0
        %v2223 = vadd.f32 0.0, %v2222
        %2224 = vdwg.mxu0
        %v2227 = vunpack.c.l.b16 %v1646
        %v2228 = vunpack.c.l.b16 %v1693
        %v2229 = vpack.c.b16 %v2228, %v2227
        %v2231 = vsel %vm2178, %v2229, 0
        %v2234 = vsel %vm2182, %v2157, 0
        %2236 = vmatpush.bf16.msra.mxu0 0
        %2237 = vmatpush.bf16.msra.mxu0 0
        %2238 = vmatpush.bf16.msra.mxu0 0
        %2239 = vmatpush.bf16.msra.mxu0 0
        %2240 = vmatpush.bf16.msra.mxu0 0
        %2241 = vmatpush.bf16.msra.mxu0 0
        %2242 = vmatpush.bf16.msra.mxu0 0
        %2243 = vmatpush.bf16.msra.mxu0 %v2234
        %2244 = vmatmul.bf16.gmra.mxu0 %v2231
        %v2245 = vpop.f32.mrf.mxu0
        %v2246 = vadd.f32 0.0, %v2245
        %v2247 = vpop.f32.mrf.mxu0
        %v2248 = vadd.f32 0.0, %v2247
        %2249 = vdwg.mxu0
        %v2252 = vunpack.c.l.b16 %v1674
        %v2253 = vunpack.c.l.b16 %v1712
        %v2254 = vpack.c.b16 %v2253, %v2252
        %v2256 = vsel %vm2178, %v2254, 0
        %v2259 = vsel %vm2182, %v2160, 0
        %2261 = vmatpush.bf16.msra.mxu0 0
        %2262 = vmatpush.bf16.msra.mxu0 0
        %2263 = vmatpush.bf16.msra.mxu0 0
        %2264 = vmatpush.bf16.msra.mxu0 0
        %2265 = vmatpush.bf16.msra.mxu0 0
        %2266 = vmatpush.bf16.msra.mxu0 0
        %2267 = vmatpush.bf16.msra.mxu0 0
        %2268 = vmatpush.bf16.msra.mxu0 %v2259
        %2269 = vmatmul.bf16.gmra.mxu0 %v2256
        %v2270 = vpop.f32.mrf.mxu0
        %v2271 = vadd.f32 0.0, %v2270
        %v2272 = vpop.f32.mrf.mxu0
        %v2273 = vadd.f32 0.0, %v2272
        %2274 = vdwg.mxu0
        %v2277 = vunpack.c.l.b16 %v1644
        %v2278 = vunpack.c.l.b16 %v1691
        %v2279 = vpack.c.b16 %v2278, %v2277
        %v2281 = vsel %vm2178, %v2279, 0
        %v2284 = vsel %vm2182, %v2163, 0
        %2286 = vmatpush.bf16.msra.mxu0 0
        %2287 = vmatpush.bf16.msra.mxu0 0
        %2288 = vmatpush.bf16.msra.mxu0 0
        %2289 = vmatpush.bf16.msra.mxu0 0
        %2290 = vmatpush.bf16.msra.mxu0 0
        %2291 = vmatpush.bf16.msra.mxu0 0
        %2292 = vmatpush.bf16.msra.mxu0 0
        %2293 = vmatpush.bf16.msra.mxu0 %v2284
        %2294 = vmatmul.bf16.gmra.mxu0 %v2281
        %v2295 = vpop.f32.mrf.mxu0
        %v2296 = vadd.f32 0.0, %v2295
        %v2297 = vpop.f32.mrf.mxu0
        %v2298 = vadd.f32 0.0, %v2297
        %2299 = vdwg.mxu0
        %v2302 = vunpack.c.l.b16 %v1672
        %v2303 = vunpack.c.l.b16 %v1710
        %v2304 = vpack.c.b16 %v2303, %v2302
        %v2306 = vsel %vm2178, %v2304, 0
        %v2309 = vsel %vm2182, %v2166, 0
        %2311 = vmatpush.bf16.msra.mxu0 0
        %2312 = vmatpush.bf16.msra.mxu0 0
        %2313 = vmatpush.bf16.msra.mxu0 0
        %2314 = vmatpush.bf16.msra.mxu0 0
        %2315 = vmatpush.bf16.msra.mxu0 0
        %2316 = vmatpush.bf16.msra.mxu0 0
        %2317 = vmatpush.bf16.msra.mxu0 0
        %2318 = vmatpush.bf16.msra.mxu0 %v2309
        %2319 = vmatmul.bf16.gmra.mxu0 %v2306
        %v2320 = vpop.f32.mrf.mxu0
        %v2321 = vadd.f32 0.0, %v2320
        %v2322 = vpop.f32.mrf.mxu0
        %v2323 = vadd.f32 0.0, %v2322
        %2324 = vdwg.mxu0
        %v2327 = vunpack.c.l.b16 %v1648
        %v2328 = vunpack.c.l.b16 %v1695
        %v2329 = vpack.c.b16 %v2328, %v2327
        %v2331 = vsel %vm2178, %v2329, 0
        %v2334 = vsel %vm2182, %v2169, 0
        %2336 = vmatpush.bf16.msra.mxu0 0
        %2337 = vmatpush.bf16.msra.mxu0 0
        %2338 = vmatpush.bf16.msra.mxu0 0
        %2339 = vmatpush.bf16.msra.mxu0 0
        %2340 = vmatpush.bf16.msra.mxu0 0
        %2341 = vmatpush.bf16.msra.mxu0 0
        %2342 = vmatpush.bf16.msra.mxu0 0
        %2343 = vmatpush.bf16.msra.mxu0 %v2334
        %2344 = vmatmul.bf16.gmra.mxu0 %v2331
        %v2345 = vpop.f32.mrf.mxu0
        %v2346 = vadd.f32 0.0, %v2345
        %v2347 = vpop.f32.mrf.mxu0
        %v2348 = vadd.f32 0.0, %v2347
        %2349 = vdwg.mxu0
        %v2352 = vunpack.c.l.b16 %v1676
        %v2353 = vunpack.c.l.b16 %v1714
        %v2354 = vpack.c.b16 %v2353, %v2352
        %v2356 = vsel %vm2178, %v2354, 0
        %v2359 = vsel %vm2182, %v2172, 0
        %2361 = vmatpush.bf16.msra.mxu0 0
        %2362 = vmatpush.bf16.msra.mxu0 0
        %2363 = vmatpush.bf16.msra.mxu0 0
        %2364 = vmatpush.bf16.msra.mxu0 0
        %2365 = vmatpush.bf16.msra.mxu0 0
        %2366 = vmatpush.bf16.msra.mxu0 0
        %2367 = vmatpush.bf16.msra.mxu0 0
        %2368 = vmatpush.bf16.msra.mxu0 %v2359
        %2369 = vmatmul.bf16.gmra.mxu0 %v2356
        %v2370 = vpop.f32.mrf.mxu0
        %v2371 = vadd.f32 0.0, %v2370
        %v2372 = vpop.f32.mrf.mxu0
        %v2373 = vadd.f32 0.0, %v2372
        %2374 = vdwg.mxu0
        %v2375 = vmul.f32 %v2196, 0.35355338
        %v2376 = vmul.f32 %v2198, 0.35355338
        %v2377 = vmul.f32 %v2221, 0.35355338
        %v2378 = vmul.f32 %v2223, 0.35355338
        %v2379 = vmul.f32 %v2246, 0.35355338
        %v2380 = vmul.f32 %v2248, 0.35355338
        %v2381 = vmul.f32 %v2271, 0.35355338
        %v2382 = vmul.f32 %v2273, 0.35355338
        %v2383 = vmul.f32 %v2296, 0.35355338
        %v2384 = vmul.f32 %v2298, 0.35355338
        %v2385 = vmul.f32 %v2321, 0.35355338
        %v2386 = vmul.f32 %v2323, 0.35355338
        %v2387 = vmul.f32 %v2346, 0.35355338
        %v2388 = vmul.f32 %v2348, 0.35355338
        %v2389 = vmul.f32 %v2371, 0.35355338
        %v2390 = vmul.f32 %v2373, 0.35355338
        %v2391 = vadd.f32 %v2375, %v815
        %v2392 = vadd.f32 %v2376, %v816
        %v2393 = vadd.f32 %v2377, %v815
        %v2394 = vadd.f32 %v2378, %v816
        %v2395 = vadd.f32 %v2379, %v815
        %v2396 = vadd.f32 %v2380, %v816
        %v2397 = vadd.f32 %v2381, %v815
        %v2398 = vadd.f32 %v2382, %v816
        %v2399 = vadd.f32 %v2383, %v815
        %v2400 = vadd.f32 %v2384, %v816
        %v2401 = vadd.f32 %v2385, %v815
        %v2402 = vadd.f32 %v2386, %v816
        %v2403 = vadd.f32 %v2387, %v815
        %v2404 = vadd.f32 %v2388, %v816
        %v2405 = vadd.f32 %v2389, %v815
        %v2406 = vadd.f32 %v2390, %v816
        %vm2407 = vcmask 72704
        %v2408 = vsel %vm2407, %v2391, -inf
        %2409 = vmax.xlane.f32.xlu0 %v2408
        %v2410 = vpop.xlane.xlu0 %2409
        %vm2411 = vcmask 65536
        %v2412 = vsel %vm2411, %v2392, -inf
        %2413 = vmax.xlane.f32.xlu0 %v2412
        %v2414 = vpop.xlane.xlu0 %2413
        %v2415 = vsel %vm2407, %v2393, -inf
        %2416 = vmax.xlane.f32.xlu0 %v2415
        %v2417 = vpop.xlane.xlu0 %2416
        %v2418 = vsel %vm2411, %v2394, -inf
        %2419 = vmax.xlane.f32.xlu0 %v2418
        %v2420 = vpop.xlane.xlu0 %2419
        %v2421 = vsel %vm2407, %v2395, -inf
        %2422 = vmax.xlane.f32.xlu0 %v2421
        %v2423 = vpop.xlane.xlu0 %2422
        %v2424 = vsel %vm2411, %v2396, -inf
        %2425 = vmax.xlane.f32.xlu0 %v2424
        %v2426 = vpop.xlane.xlu0 %2425
        %v2427 = vsel %vm2407, %v2397, -inf
        %2428 = vmax.xlane.f32.xlu0 %v2427
        %v2429 = vpop.xlane.xlu0 %2428
        %v2430 = vsel %vm2411, %v2398, -inf
        %2431 = vmax.xlane.f32.xlu0 %v2430
        %v2432 = vpop.xlane.xlu0 %2431
        %v2433 = vsel %vm2407, %v2399, -inf
        %2434 = vmax.xlane.f32.xlu0 %v2433
        %v2435 = vpop.xlane.xlu0 %2434
        %v2436 = vsel %vm2411, %v2400, -inf
        %2437 = vmax.xlane.f32.xlu0 %v2436
        %v2438 = vpop.xlane.xlu0 %2437
        %v2439 = vsel %vm2407, %v2401, -inf
        %2440 = vmax.xlane.f32.xlu0 %v2439
        %v2441 = vpop.xlane.xlu0 %2440
        %v2442 = vsel %vm2411, %v2402, -inf
        %2443 = vmax.xlane.f32.xlu0 %v2442
        %v2444 = vpop.xlane.xlu0 %2443
        %v2445 = vsel %vm2407, %v2403, -inf
        %2446 = vmax.xlane.f32.xlu0 %v2445
        %v2447 = vpop.xlane.xlu0 %2446
        %v2448 = vsel %vm2411, %v2404, -inf
        %2449 = vmax.xlane.f32.xlu0 %v2448
        %v2450 = vpop.xlane.xlu0 %2449
        %v2451 = vsel %vm2407, %v2405, -inf
        %2452 = vmax.xlane.f32.xlu0 %v2451
        %v2453 = vpop.xlane.xlu0 %2452
        %v2454 = vsel %vm2411, %v2406, -inf
        %2455 = vmax.xlane.f32.xlu0 %v2454
        %v2456 = vpop.xlane.xlu0 %2455
        %v2457 = vsub.f32 %v2391, %v2410
        %v2458 = vsub.f32 %v2392, %v2414
        %v2459 = vsub.f32 %v2393, %v2417
        %v2460 = vsub.f32 %v2394, %v2420
        %v2461 = vsub.f32 %v2395, %v2423
        %v2462 = vsub.f32 %v2396, %v2426
        %v2463 = vsub.f32 %v2397, %v2429
        %v2464 = vsub.f32 %v2398, %v2432
        %v2465 = vsub.f32 %v2399, %v2435
        %v2466 = vsub.f32 %v2400, %v2438
        %v2467 = vsub.f32 %v2401, %v2441
        %v2468 = vsub.f32 %v2402, %v2444
        %v2469 = vsub.f32 %v2403, %v2447
        %v2470 = vsub.f32 %v2404, %v2450
        %v2471 = vsub.f32 %v2405, %v2453
        %v2472 = vsub.f32 %v2406, %v2456
        %v2473 = vmul.f32 %v2457, 1.442695
        %v2474 = vpow.pop %v2473
        %v2475 = vmul.f32 %v2458, 1.442695
        %v2476 = vpow.pop %v2475
        %v2477 = vmul.f32 %v2459, 1.442695
        %v2478 = vpow.pop %v2477
        %v2479 = vmul.f32 %v2460, 1.442695
        %v2480 = vpow.pop %v2479
        %v2481 = vmul.f32 %v2461, 1.442695
        %v2482 = vpow.pop %v2481
        %v2483 = vmul.f32 %v2462, 1.442695
        %v2484 = vpow.pop %v2483
        %v2485 = vmul.f32 %v2463, 1.442695
        %v2486 = vpow.pop %v2485
        %v2487 = vmul.f32 %v2464, 1.442695
        %v2488 = vpow.pop %v2487
        %v2489 = vmul.f32 %v2465, 1.442695
        %v2490 = vpow.pop %v2489
        %v2491 = vmul.f32 %v2466, 1.442695
        %v2492 = vpow.pop %v2491
        %v2493 = vmul.f32 %v2467, 1.442695
        %v2494 = vpow.pop %v2493
        %v2495 = vmul.f32 %v2468, 1.442695
        %v2496 = vpow.pop %v2495
        %v2497 = vmul.f32 %v2469, 1.442695
        %v2498 = vpow.pop %v2497
        %v2499 = vmul.f32 %v2470, 1.442695
        %v2500 = vpow.pop %v2499
        %v2501 = vmul.f32 %v2471, 1.442695
        %v2502 = vpow.pop %v2501
        %v2503 = vmul.f32 %v2472, 1.442695
        %v2504 = vpow.pop %v2503
        %v2505 = vsel %vm2407, %v2474, 0.0
        %2506 = vadd.xlane.f32.xlu0 %v2505
        %v2507 = vpop.xlane.xlu0 %2506
        %v2508 = vsel %vm2411, %v2476, 0.0
        %2509 = vadd.xlane.f32.xlu0 %v2508
        %v2510 = vpop.xlane.xlu0 %2509
        %v2511 = vsel %vm2407, %v2478, 0.0
        %2512 = vadd.xlane.f32.xlu0 %v2511
        %v2513 = vpop.xlane.xlu0 %2512
        %v2514 = vsel %vm2411, %v2480, 0.0
        %2515 = vadd.xlane.f32.xlu0 %v2514
        %v2516 = vpop.xlane.xlu0 %2515
        %v2517 = vsel %vm2407, %v2482, 0.0
        %2518 = vadd.xlane.f32.xlu0 %v2517
        %v2519 = vpop.xlane.xlu0 %2518
        %v2520 = vsel %vm2411, %v2484, 0.0
        %2521 = vadd.xlane.f32.xlu0 %v2520
        %v2522 = vpop.xlane.xlu0 %2521
        %v2523 = vsel %vm2407, %v2486, 0.0
        %2524 = vadd.xlane.f32.xlu0 %v2523
        %v2525 = vpop.xlane.xlu0 %2524
        %v2526 = vsel %vm2411, %v2488, 0.0
        %2527 = vadd.xlane.f32.xlu0 %v2526
        %v2528 = vpop.xlane.xlu0 %2527
        %v2529 = vsel %vm2407, %v2490, 0.0
        %2530 = vadd.xlane.f32.xlu0 %v2529
        %v2531 = vpop.xlane.xlu0 %2530
        %v2532 = vsel %vm2411, %v2492, 0.0
        %2533 = vadd.xlane.f32.xlu0 %v2532
        %v2534 = vpop.xlane.xlu0 %2533
        %v2535 = vsel %vm2407, %v2494, 0.0
        %2536 = vadd.xlane.f32.xlu0 %v2535
        %v2537 = vpop.xlane.xlu0 %2536
        %v2538 = vsel %vm2411, %v2496, 0.0
        %2539 = vadd.xlane.f32.xlu0 %v2538
        %v2540 = vpop.xlane.xlu0 %2539
        %v2541 = vsel %vm2407, %v2498, 0.0
        %2542 = vadd.xlane.f32.xlu0 %v2541
        %v2543 = vpop.xlane.xlu0 %2542
        %v2544 = vsel %vm2411, %v2500, 0.0
        %2545 = vadd.xlane.f32.xlu0 %v2544
        %v2546 = vpop.xlane.xlu0 %2545
        %v2547 = vsel %vm2407, %v2502, 0.0
        %2548 = vadd.xlane.f32.xlu0 %v2547
        %v2549 = vpop.xlane.xlu0 %2548
        %v2550 = vsel %vm2411, %v2504, 0.0
        %2551 = vadd.xlane.f32.xlu0 %v2550
        %v2552 = vpop.xlane.xlu0 %2551
        %v2553 = vrcp.pop %v2507
        %v2554 = vrcp.pop %v2510
        %v2555 = vrcp.pop %v2513
        %v2556 = vrcp.pop %v2516
        %v2557 = vrcp.pop %v2519
        %v2558 = vrcp.pop %v2522
        %v2559 = vrcp.pop %v2525
        %v2560 = vrcp.pop %v2528
        %v2561 = vrcp.pop %v2531
        %v2562 = vrcp.pop %v2534
        %v2563 = vrcp.pop %v2537
        %v2564 = vrcp.pop %v2540
        %v2565 = vrcp.pop %v2543
        %v2566 = vrcp.pop %v2546
        %v2567 = vrcp.pop %v2549
        %v2568 = vrcp.pop %v2552
        %v2569 = vmul.f32 %v2474, %v2553
        %v2570 = vmul.f32 %v2476, %v2554
        %v2571 = vmul.f32 %v2478, %v2555
        %v2572 = vmul.f32 %v2480, %v2556
        %v2573 = vmul.f32 %v2482, %v2557
        %v2574 = vmul.f32 %v2484, %v2558
        %v2575 = vmul.f32 %v2486, %v2559
        %v2576 = vmul.f32 %v2488, %v2560
        %v2577 = vmul.f32 %v2490, %v2561
        %v2578 = vmul.f32 %v2492, %v2562
        %v2579 = vmul.f32 %v2494, %v2563
        %v2580 = vmul.f32 %v2496, %v2564
        %v2581 = vmul.f32 %v2498, %v2565
        %v2582 = vmul.f32 %v2500, %v2566
        %v2583 = vmul.f32 %v2502, %v2567
        %v2584 = vmul.f32 %v2504, %v2568
        %v2585 = vpack.c.bf16 %v2569, %v2569
        %v2586 = vpack.c.bf16 %v2570, %v2570
        %v2587 = vpack.c.bf16 %v2571, %v2571
        %v2588 = vpack.c.bf16 %v2572, %v2572
        %v2589 = vpack.c.bf16 %v2573, %v2573
        %v2590 = vpack.c.bf16 %v2574, %v2574
        %v2591 = vpack.c.bf16 %v2575, %v2575
        %v2592 = vpack.c.bf16 %v2576, %v2576
        %v2593 = vpack.c.bf16 %v2577, %v2577
        %v2594 = vpack.c.bf16 %v2578, %v2578
        %v2595 = vpack.c.bf16 %v2579, %v2579
        %v2596 = vpack.c.bf16 %v2580, %v2580
        %v2597 = vpack.c.bf16 %v2581, %v2581
        %v2598 = vpack.c.bf16 %v2582, %v2582
        %v2599 = vpack.c.bf16 %v2583, %v2583
        %v2600 = vpack.c.bf16 %v2584, %v2584
        %2601 = vxpose.xlu0.c.b16.start [1/8] %v1573, 128
        %2602 = vxpose.xlu0.c.b16.cont [2/8] 0, 128
        %2603 = vxpose.xlu0.c.b16.cont [3/8] 0, 128
        %2604 = vxpose.xlu0.c.b16.cont [4/8] 0, 128
        %2605 = vxpose.xlu0.c.b16.cont [5/8] 0, 128
        %2606 = vxpose.xlu0.c.b16.cont [6/8] 0, 128
        %2607 = vxpose.xlu0.c.b16.cont [7/8] 0, 128
        %2608 = vxpose.xlu0.c.b16.end [8/8] 0, 128
        %v2609 = vpop.trf.xlu0
        %v2610 = vpop.trf.xlu0
        %v2611 = vpop.trf.xlu0
        %v2612 = vpop.trf.xlu0
        %v2613 = vpop.trf.xlu0
        %v2614 = vpop.trf.xlu0
        %v2615 = vpop.trf.xlu0
        %v2616 = vpop.trf.xlu0
        %2617 = vxpose.xlu0.c.b16.start [1/8] %v1574, 128
        %2618 = vxpose.xlu0.c.b16.cont [2/8] 0, 128
        %2619 = vxpose.xlu0.c.b16.cont [3/8] 0, 128
        %2620 = vxpose.xlu0.c.b16.cont [4/8] 0, 128
        %2621 = vxpose.xlu0.c.b16.cont [5/8] 0, 128
        %2622 = vxpose.xlu0.c.b16.cont [6/8] 0, 128
        %2623 = vxpose.xlu0.c.b16.cont [7/8] 0, 128
        %2624 = vxpose.xlu0.c.b16.end [8/8] 0, 128
        %v2625 = vpop.trf.xlu0
        %v2626 = vpop.trf.xlu0
        %v2627 = vpop.trf.xlu0
        %v2628 = vpop.trf.xlu0
        %v2629 = vpop.trf.xlu0
        %v2630 = vpop.trf.xlu0
        %v2631 = vpop.trf.xlu0
        %v2632 = vpop.trf.xlu0
        %2633 = vxpose.xlu0.c.b16.start [1/8] %v1575, 128
        %2634 = vxpose.xlu0.c.b16.cont [2/8] 0, 128
        %2635 = vxpose.xlu0.c.b16.cont [3/8] 0, 128
        %2636 = vxpose.xlu0.c.b16.cont [4/8] 0, 128
        %2637 = vxpose.xlu0.c.b16.cont [5/8] 0, 128
        %2638 = vxpose.xlu0.c.b16.cont [6/8] 0, 128
        %2639 = vxpose.xlu0.c.b16.cont [7/8] 0, 128
        %2640 = vxpose.xlu0.c.b16.end [8/8] 0, 128
        %v2641 = vpop.trf.xlu0
        %v2642 = vpop.trf.xlu0
        %v2643 = vpop.trf.xlu0
        %v2644 = vpop.trf.xlu0
        %v2645 = vpop.trf.xlu0
        %v2646 = vpop.trf.xlu0
        %v2647 = vpop.trf.xlu0
        %v2648 = vpop.trf.xlu0
        %2649 = vxpose.xlu0.c.b16.start [1/8] %v1576, 128
        %2650 = vxpose.xlu0.c.b16.cont [2/8] 0, 128
        %2651 = vxpose.xlu0.c.b16.cont [3/8] 0, 128
        %2652 = vxpose.xlu0.c.b16.cont [4/8] 0, 128
        %2653 = vxpose.xlu0.c.b16.cont [5/8] 0, 128
        %2654 = vxpose.xlu0.c.b16.cont [6/8] 0, 128
        %2655 = vxpose.xlu0.c.b16.cont [7/8] 0, 128
        %2656 = vxpose.xlu0.c.b16.end [8/8] 0, 128
        %v2657 = vpop.trf.xlu0
        %v2658 = vpop.trf.xlu0
        %v2659 = vpop.trf.xlu0
        %v2660 = vpop.trf.xlu0
        %v2661 = vpop.trf.xlu0
        %v2662 = vpop.trf.xlu0
        %v2663 = vpop.trf.xlu0
        %v2664 = vpop.trf.xlu0
        %2665 = vxpose.xlu0.c.b16.start [1/8] %v1577, 128
        %2666 = vxpose.xlu0.c.b16.cont [2/8] 0, 128
        %2667 = vxpose.xlu0.c.b16.cont [3/8] 0, 128
        %2668 = vxpose.xlu0.c.b16.cont [4/8] 0, 128
        %2669 = vxpose.xlu0.c.b16.cont [5/8] 0, 128
        %2670 = vxpose.xlu0.c.b16.cont [6/8] 0, 128
        %2671 = vxpose.xlu0.c.b16.cont [7/8] 0, 128
        %2672 = vxpose.xlu0.c.b16.end [8/8] 0, 128
        %v2673 = vpop.trf.xlu0
        %v2674 = vpop.trf.xlu0
        %v2675 = vpop.trf.xlu0
        %v2676 = vpop.trf.xlu0
        %v2677 = vpop.trf.xlu0
        %v2678 = vpop.trf.xlu0
        %v2679 = vpop.trf.xlu0
        %v2680 = vpop.trf.xlu0
        %2681 = vxpose.xlu0.c.b16.start [1/8] %v1578, 128
        %2682 = vxpose.xlu0.c.b16.cont [2/8] 0, 128
        %2683 = vxpose.xlu0.c.b16.cont [3/8] 0, 128
        %2684 = vxpose.xlu0.c.b16.cont [4/8] 0, 128
        %2685 = vxpose.xlu0.c.b16.cont [5/8] 0, 128
        %2686 = vxpose.xlu0.c.b16.cont [6/8] 0, 128
        %2687 = vxpose.xlu0.c.b16.cont [7/8] 0, 128
        %2688 = vxpose.xlu0.c.b16.end [8/8] 0, 128
        %v2689 = vpop.trf.xlu0
        %v2690 = vpop.trf.xlu0
        %v2691 = vpop.trf.xlu0
        %v2692 = vpop.trf.xlu0
        %v2693 = vpop.trf.xlu0
        %v2694 = vpop.trf.xlu0
        %v2695 = vpop.trf.xlu0
        %v2696 = vpop.trf.xlu0
        %2697 = vxpose.xlu0.c.b16.start [1/8] %v1579, 128
        %2698 = vxpose.xlu0.c.b16.cont [2/8] 0, 128
        %2699 = vxpose.xlu0.c.b16.cont [3/8] 0, 128
        %2700 = vxpose.xlu0.c.b16.cont [4/8] 0, 128
        %2701 = vxpose.xlu0.c.b16.cont [5/8] 0, 128
        %2702 = vxpose.xlu0.c.b16.cont [6/8] 0, 128
        %2703 = vxpose.xlu0.c.b16.cont [7/8] 0, 128
        %2704 = vxpose.xlu0.c.b16.end [8/8] 0, 128
        %v2705 = vpop.trf.xlu0
        %v2706 = vpop.trf.xlu0
        %v2707 = vpop.trf.xlu0
        %v2708 = vpop.trf.xlu0
        %v2709 = vpop.trf.xlu0
        %v2710 = vpop.trf.xlu0
        %v2711 = vpop.trf.xlu0
        %v2712 = vpop.trf.xlu0
        %2713 = vxpose.xlu0.c.b16.start [1/8] %v1580, 128
        %2714 = vxpose.xlu0.c.b16.cont [2/8] 0, 128
        %2715 = vxpose.xlu0.c.b16.cont [3/8] 0, 128
        %2716 = vxpose.xlu0.c.b16.cont [4/8] 0, 128
        %2717 = vxpose.xlu0.c.b16.cont [5/8] 0, 128
        %2718 = vxpose.xlu0.c.b16.cont [6/8] 0, 128
        %2719 = vxpose.xlu0.c.b16.cont [7/8] 0, 128
        %2720 = vxpose.xlu0.c.b16.end [8/8] 0, 128
        %v2721 = vpop.trf.xlu0
        %v2722 = vpop.trf.xlu0
        %v2723 = vpop.trf.xlu0
        %v2724 = vpop.trf.xlu0
        %v2725 = vpop.trf.xlu0
        %v2726 = vpop.trf.xlu0
        %v2727 = vpop.trf.xlu0
        %v2728 = vpop.trf.xlu0
        %2729 = vxpose.xlu0.c.b16.start [1/8] %v1581, 128
        %2730 = vxpose.xlu0.c.b16.cont [2/8] 0, 128
        %2731 = vxpose.xlu0.c.b16.cont [3/8] 0, 128
        %2732 = vxpose.xlu0.c.b16.cont [4/8] 0, 128
        %2733 = vxpose.xlu0.c.b16.cont [5/8] 0, 128
        %2734 = vxpose.xlu0.c.b16.cont [6/8] 0, 128
        %2735 = vxpose.xlu0.c.b16.cont [7/8] 0, 128
        %2736 = vxpose.xlu0.c.b16.end [8/8] 0, 128
        %v2737 = vpop.trf.xlu0
        %v2738 = vpop.trf.xlu0
        %v2739 = vpop.trf.xlu0
        %v2740 = vpop.trf.xlu0
        %v2741 = vpop.trf.xlu0
        %v2742 = vpop.trf.xlu0
        %v2743 = vpop.trf.xlu0
        %v2744 = vpop.trf.xlu0
        %v2745 = vrot.slane %v2673, 4
        %v2746 = vsel %vm1621, %v2745, %v2609
        %v2748 = vunpack.c.l.s4 1983009808
        %v2749 = vunpack.c.0.s8 %v2748
        %v2750 = vperm.slane %v2746, %v2749
        %v2751 = vrot.slane %v2705, 4
        %v2752 = vsel %vm1621, %v2751, %v2641
        %v2754 = vunpack.c.l.s4 1983009808
        %v2755 = vunpack.c.0.s8 %v2754
        %v2756 = vperm.slane %v2752, %v2755
        %v2758 = vunpack.c.l.s4 1983009808
        %v2759 = vunpack.c.0.s8 %v2758
        %v2760 = vperm.slane %v2737, %v2759
        %v2761 = vrot.slane %v2756, 4
        %v2762 = vsel %vm1621, %v2761, %v2750
        %v2763 = vrot.slane %v2750, 4
        %v2764 = vsel %vm1621, %v2756, %v2763
        %v2766 = vunpack.c.l.s4 1934713408
        %v2767 = vunpack.c.0.s8 %v2766
        %v2768 = vperm.slane %v2762, %v2767
        %v2770 = vunpack.c.l.s4 1934713408
        %v2771 = vunpack.c.0.s8 %v2770
        %v2772 = vperm.slane %v2764, %v2771
        %v2773 = vrot.slane %v2760, 4
        %v2774 = vsel %vm1621, 0, %v2773
        %v2776 = vunpack.c.l.s4 1934713408
        %v2777 = vunpack.c.0.s8 %v2776
        %v2778 = vperm.slane %v2760, %v2777
        %v2780 = vunpack.c.l.s4 1934713408
        %v2781 = vunpack.c.0.s8 %v2780
        %v2782 = vperm.slane %v2774, %v2781
        %v2783 = vrot.slane %v2778, 4
        %v2784 = vsel %vm1621, %v2783, %v2768
        %v2785 = vrot.slane %v2768, 4
        %v2786 = vsel %vm1621, %v2778, %v2785
        %v2787 = vrot.slane %v2782, 4
        %v2788 = vsel %vm1621, %v2787, %v2772
        %v2789 = vrot.slane %v2772, 4
        %v2790 = vsel %vm1621, %v2782, %v2789
        %v2791 = vrot.slane %v2689, 4
        %v2792 = vsel %vm1621, %v2791, %v2625
        %v2794 = vunpack.c.l.s4 1983009808
        %v2795 = vunpack.c.0.s8 %v2794
        %v2796 = vperm.slane %v2792, %v2795
        %v2797 = vrot.slane %v2721, 4
        %v2798 = vsel %vm1621, %v2797, %v2657
        %v2800 = vunpack.c.l.s4 1983009808
        %v2801 = vunpack.c.0.s8 %v2800
        %v2802 = vperm.slane %v2798, %v2801
        %v2803 = vrot.slane %v2802, 4
        %v2804 = vsel %vm1621, %v2803, %v2796
        %v2805 = vrot.slane %v2796, 4
        %v2806 = vsel %vm1621, %v2802, %v2805
        %v2808 = vunpack.c.l.s4 1934713408
        %v2809 = vunpack.c.0.s8 %v2808
        %v2810 = vperm.slane %v2804, %v2809
        %v2812 = vunpack.c.l.s4 1934713408
        %v2813 = vunpack.c.0.s8 %v2812
        %v2814 = vperm.slane %v2806, %v2813
        %v2815 = vrot.slane %v2810, 4
        %v2816 = vsel %vm1621, 0, %v2815
        %v2817 = vrot.slane %v2814, 4
        %v2818 = vsel %vm1621, 0, %v2817
        %v2821 = vpack.i.b16 %v2810, %v2784
        %v2823 = vshrl.u32 %v2784, 16
        %v2824 = vshrl.u32 %v2810, 16
        %v2825 = vpack.i.b16 %v2824, %v2823
        %v2829 = vpack.i.b16 %v2816, %v2786
        %v2831 = vshrl.u32 %v2786, 16
        %v2832 = vshrl.u32 %v2816, 16
        %v2833 = vpack.i.b16 %v2832, %v2831
        %v2837 = vpack.i.b16 %v2814, %v2788
        %v2839 = vshrl.u32 %v2788, 16
        %v2840 = vshrl.u32 %v2814, 16
        %v2841 = vpack.i.b16 %v2840, %v2839
        %v2845 = vpack.i.b16 %v2818, %v2790
        %v2847 = vshrl.u32 %v2790, 16
        %v2848 = vshrl.u32 %v2818, 16
        %v2849 = vpack.i.b16 %v2848, %v2847
        %2851 = vxpose.xlu0.c.b16.start [1/8] %v2821, 128
        %2852 = vxpose.xlu0.c.b16.cont [2/8] 0, 128
        %2853 = vxpose.xlu0.c.b16.cont [3/8] 0, 128
        %2854 = vxpose.xlu0.c.b16.cont [4/8] 0, 128
        %2855 = vxpose.xlu0.c.b16.cont [5/8] 0, 128
        %2856 = vxpose.xlu0.c.b16.cont [6/8] 0, 128
        %2857 = vxpose.xlu0.c.b16.cont [7/8] 0, 128
        %2858 = vxpose.xlu0.c.b16.end [8/8] 0, 128
        %v2859 = vpop.trf.xlu0
        %v2860 = vpop.trf.xlu0
        %v2861 = vpop.trf.xlu0
        %v2862 = vpop.trf.xlu0
        %v2863 = vpop.trf.xlu0
        %v2864 = vpop.trf.xlu0
        %v2865 = vpop.trf.xlu0
        %v2866 = vpop.trf.xlu0
        %2867 = vxpose.xlu0.c.b16.start [1/8] %v2825, 128
        %2868 = vxpose.xlu0.c.b16.cont [2/8] 0, 128
        %2869 = vxpose.xlu0.c.b16.cont [3/8] 0, 128
        %2870 = vxpose.xlu0.c.b16.cont [4/8] 0, 128
        %2871 = vxpose.xlu0.c.b16.cont [5/8] 0, 128
        %2872 = vxpose.xlu0.c.b16.cont [6/8] 0, 128
        %2873 = vxpose.xlu0.c.b16.cont [7/8] 0, 128
        %2874 = vxpose.xlu0.c.b16.end [8/8] 0, 128
        %v2875 = vpop.trf.xlu0
        %v2876 = vpop.trf.xlu0
        %v2877 = vpop.trf.xlu0
        %v2878 = vpop.trf.xlu0
        %v2879 = vpop.trf.xlu0
        %v2880 = vpop.trf.xlu0
        %v2881 = vpop.trf.xlu0
        %v2882 = vpop.trf.xlu0
        %2883 = vxpose.xlu0.c.b16.start [1/8] %v2829, 128
        %2884 = vxpose.xlu0.c.b16.cont [2/8] 0, 128
        %2885 = vxpose.xlu0.c.b16.cont [3/8] 0, 128
        %2886 = vxpose.xlu0.c.b16.cont [4/8] 0, 128
        %2887 = vxpose.xlu0.c.b16.cont [5/8] 0, 128
        %2888 = vxpose.xlu0.c.b16.cont [6/8] 0, 128
        %2889 = vxpose.xlu0.c.b16.cont [7/8] 0, 128
        %2890 = vxpose.xlu0.c.b16.end [8/8] 0, 128
        %v2891 = vpop.trf.xlu0
        %v2892 = vpop.trf.xlu0
        %v2893 = vpop.trf.xlu0
        %v2894 = vpop.trf.xlu0
        %v2895 = vpop.trf.xlu0
        %v2896 = vpop.trf.xlu0
        %v2897 = vpop.trf.xlu0
        %v2898 = vpop.trf.xlu0
        %2899 = vxpose.xlu0.c.b16.start [1/8] %v2833, 128
        %2900 = vxpose.xlu0.c.b16.cont [2/8] 0, 128
        %2901 = vxpose.xlu0.c.b16.cont [3/8] 0, 128
        %2902 = vxpose.xlu0.c.b16.cont [4/8] 0, 128
        %2903 = vxpose.xlu0.c.b16.cont [5/8] 0, 128
        %2904 = vxpose.xlu0.c.b16.cont [6/8] 0, 128
        %2905 = vxpose.xlu0.c.b16.cont [7/8] 0, 128
        %2906 = vxpose.xlu0.c.b16.end [8/8] 0, 128
        %v2907 = vpop.trf.xlu0
        %v2908 = vpop.trf.xlu0
        %v2909 = vpop.trf.xlu0
        %v2910 = vpop.trf.xlu0
        %v2911 = vpop.trf.xlu0
        %v2912 = vpop.trf.xlu0
        %v2913 = vpop.trf.xlu0
        %v2914 = vpop.trf.xlu0
        %2915 = vxpose.xlu0.c.b16.start [1/8] %v2837, 128
        %2916 = vxpose.xlu0.c.b16.cont [2/8] 0, 128
        %2917 = vxpose.xlu0.c.b16.cont [3/8] 0, 128
        %2918 = vxpose.xlu0.c.b16.cont [4/8] 0, 128
        %2919 = vxpose.xlu0.c.b16.cont [5/8] 0, 128
        %2920 = vxpose.xlu0.c.b16.cont [6/8] 0, 128
        %2921 = vxpose.xlu0.c.b16.cont [7/8] 0, 128
        %2922 = vxpose.xlu0.c.b16.end [8/8] 0, 128
        %v2923 = vpop.trf.xlu0
        %v2924 = vpop.trf.xlu0
        %v2925 = vpop.trf.xlu0
        %v2926 = vpop.trf.xlu0
        %v2927 = vpop.trf.xlu0
        %v2928 = vpop.trf.xlu0
        %v2929 = vpop.trf.xlu0
        %v2930 = vpop.trf.xlu0
        %2931 = vxpose.xlu0.c.b16.start [1/8] %v2841, 128
        %2932 = vxpose.xlu0.c.b16.cont [2/8] 0, 128
        %2933 = vxpose.xlu0.c.b16.cont [3/8] 0, 128
        %2934 = vxpose.xlu0.c.b16.cont [4/8] 0, 128
        %2935 = vxpose.xlu0.c.b16.cont [5/8] 0, 128
        %2936 = vxpose.xlu0.c.b16.cont [6/8] 0, 128
        %2937 = vxpose.xlu0.c.b16.cont [7/8] 0, 128
        %2938 = vxpose.xlu0.c.b16.end [8/8] 0, 128
        %v2939 = vpop.trf.xlu0
        %v2940 = vpop.trf.xlu0
        %v2941 = vpop.trf.xlu0
        %v2942 = vpop.trf.xlu0
        %v2943 = vpop.trf.xlu0
        %v2944 = vpop.trf.xlu0
        %v2945 = vpop.trf.xlu0
        %v2946 = vpop.trf.xlu0
        %2947 = vxpose.xlu0.c.b16.start [1/8] %v2845, 128
        %2948 = vxpose.xlu0.c.b16.cont [2/8] 0, 128
        %2949 = vxpose.xlu0.c.b16.cont [3/8] 0, 128
        %2950 = vxpose.xlu0.c.b16.cont [4/8] 0, 128
        %2951 = vxpose.xlu0.c.b16.cont [5/8] 0, 128
        %2952 = vxpose.xlu0.c.b16.cont [6/8] 0, 128
        %2953 = vxpose.xlu0.c.b16.cont [7/8] 0, 128
        %2954 = vxpose.xlu0.c.b16.end [8/8] 0, 128
        %v2955 = vpop.trf.xlu0
        %v2956 = vpop.trf.xlu0
        %v2957 = vpop.trf.xlu0
        %v2958 = vpop.trf.xlu0
        %v2959 = vpop.trf.xlu0
        %v2960 = vpop.trf.xlu0
        %v2961 = vpop.trf.xlu0
        %v2962 = vpop.trf.xlu0
        %2963 = vxpose.xlu0.c.b16.start [1/8] %v2849, 128
        %2964 = vxpose.xlu0.c.b16.cont [2/8] 0, 128
        %2965 = vxpose.xlu0.c.b16.cont [3/8] 0, 128
        %2966 = vxpose.xlu0.c.b16.cont [4/8] 0, 128
        %2967 = vxpose.xlu0.c.b16.cont [5/8] 0, 128
        %2968 = vxpose.xlu0.c.b16.cont [6/8] 0, 128
        %2969 = vxpose.xlu0.c.b16.cont [7/8] 0, 128
        %2970 = vxpose.xlu0.c.b16.end [8/8] 0, 128
        %v2971 = vpop.trf.xlu0
        %v2972 = vpop.trf.xlu0
        %v2973 = vpop.trf.xlu0
        %v2974 = vpop.trf.xlu0
        %v2975 = vpop.trf.xlu0
        %v2976 = vpop.trf.xlu0
        %v2977 = vpop.trf.xlu0
        %v2978 = vpop.trf.xlu0
        %v2979 = vrot.slane %v2923, 4
        %v2980 = vsel %vm1621, %v2979, %v2859
        %v2982 = vunpack.c.l.s4 1983009808
        %v2983 = vunpack.c.0.s8 %v2982
        %v2984 = vperm.slane %v2980, %v2983
        %v2985 = vrot.slane %v2955, 4
        %v2986 = vsel %vm1621, %v2985, %v2891
        %v2988 = vunpack.c.l.s4 1983009808
        %v2989 = vunpack.c.0.s8 %v2988
        %v2990 = vperm.slane %v2986, %v2989
        %v2991 = vrot.slane %v2990, 4
        %v2992 = vsel %vm1621, %v2991, %v2984
        %v2993 = vrot.slane %v2984, 4
        %v2994 = vsel %vm1621, %v2990, %v2993
        %v2996 = vunpack.c.l.s4 1934713408
        %v2997 = vunpack.c.0.s8 %v2996
        %v2998 = vperm.slane %v2992, %v2997
        %v3000 = vunpack.c.l.s4 1934713408
        %v3001 = vunpack.c.0.s8 %v3000
        %v3002 = vperm.slane %v2994, %v3001
        %v3003 = vrot.slane %v2998, 4
        %v3004 = vsel %vm1621, 0, %v3003
        %v3005 = vrot.slane %v3002, 4
        %v3006 = vsel %vm1621, 0, %v3005
        %v3007 = vrot.slane %v2939, 4
        %v3008 = vsel %vm1621, %v3007, %v2875
        %v3010 = vunpack.c.l.s4 1983009808
        %v3011 = vunpack.c.0.s8 %v3010
        %v3012 = vperm.slane %v3008, %v3011
        %v3013 = vrot.slane %v2971, 4
        %v3014 = vsel %vm1621, %v3013, %v2907
        %v3016 = vunpack.c.l.s4 1983009808
        %v3017 = vunpack.c.0.s8 %v3016
        %v3018 = vperm.slane %v3014, %v3017
        %v3019 = vrot.slane %v3018, 4
        %v3020 = vsel %vm1621, %v3019, %v3012
        %v3021 = vrot.slane %v3012, 4
        %v3022 = vsel %vm1621, %v3018, %v3021
        %v3024 = vunpack.c.l.s4 1934713408
        %v3025 = vunpack.c.0.s8 %v3024
        %v3026 = vperm.slane %v3020, %v3025
        %v3028 = vunpack.c.l.s4 1934713408
        %v3029 = vunpack.c.0.s8 %v3028
        %v3030 = vperm.slane %v3022, %v3029
        %v3031 = vrot.slane %v3026, 4
        %v3032 = vsel %vm1621, 0, %v3031
        %v3033 = vrot.slane %v3030, 4
        %v3034 = vsel %vm1621, 0, %v3033
        %v3037 = vpack.i.b16 %v3026, %v2998
        %v3038 = vshrl.u32 %v2998, 16
        %v3039 = vshrl.u32 %v3026, 16
        %v3040 = vpack.i.b16 %v3039, %v3038
        %v3043 = vpack.i.b16 %v3032, %v3004
        %v3044 = vshrl.u32 %v3004, 16
        %v3045 = vshrl.u32 %v3032, 16
        %v3046 = vpack.i.b16 %v3045, %v3044
        %v3049 = vpack.i.b16 %v3030, %v3002
        %v3050 = vshrl.u32 %v3002, 16
        %v3051 = vshrl.u32 %v3030, 16
        %v3052 = vpack.i.b16 %v3051, %v3050
        %v3055 = vpack.i.b16 %v3034, %v3006
        %v3056 = vshrl.u32 %v3006, 16
        %v3057 = vshrl.u32 %v3034, 16
        %v3058 = vpack.i.b16 %v3057, %v3056
        %v3061 = vunpack.c.l.b16 %v2585
        %v3062 = vunpack.c.l.b16 %v2586
        %v3063 = vpack.c.b16 %v3062, %v3061
        %v3065 = vsel %vm2407, %v3037, 0
        %v3068 = vsel %vm2407, %v3063, 0
        %3070 = vmatpush.bf16.xpose.msra.mxu0 0
        %3071 = vmatpush.bf16.xpose.msra.mxu0 0
        %3072 = vmatpush.bf16.xpose.msra.mxu0 0
        %3073 = vmatpush.bf16.xpose.msra.mxu0 0
        %3074 = vmatpush.bf16.xpose.msra.mxu0 0
        %3075 = vmatpush.bf16.xpose.msra.mxu0 0
        %3076 = vmatpush.bf16.xpose.msra.mxu0 0
        %3077 = vmatpush.bf16.xpose.msra.mxu0 %v3068
        %3078 = vmatmul.bf16.gmra.mxu0 %v3065
        %v3079 = vpop.f32.mrf.mxu0
        %v3080 = vadd.f32 0.0, %v3079
        %v3081 = vpop.f32.mrf.mxu0
        %3082 = vdwg.mxu0
        %v3085 = vunpack.c.l.b16 %v2587
        %v3086 = vunpack.c.l.b16 %v2588
        %v3087 = vpack.c.b16 %v3086, %v3085
        %v3089 = vsel %vm2407, %v3040, 0
        %v3092 = vsel %vm2407, %v3087, 0
        %3094 = vmatpush.bf16.xpose.msra.mxu0 0
        %3095 = vmatpush.bf16.xpose.msra.mxu0 0
        %3096 = vmatpush.bf16.xpose.msra.mxu0 0
        %3097 = vmatpush.bf16.xpose.msra.mxu0 0
        %3098 = vmatpush.bf16.xpose.msra.mxu0 0
        %3099 = vmatpush.bf16.xpose.msra.mxu0 0
        %3100 = vmatpush.bf16.xpose.msra.mxu0 0
        %3101 = vmatpush.bf16.xpose.msra.mxu0 %v3092
        %3102 = vmatmul.bf16.gmra.mxu0 %v3089
        %v3103 = vpop.f32.mrf.mxu0
        %v3104 = vadd.f32 0.0, %v3103
        %v3105 = vpop.f32.mrf.mxu0
        %3106 = vdwg.mxu0
        %v3109 = vunpack.c.l.b16 %v2589
        %v3110 = vunpack.c.l.b16 %v2590
        %v3111 = vpack.c.b16 %v3110, %v3109
        %v3113 = vsel %vm2407, %v3043, 0
        %v3116 = vsel %vm2407, %v3111, 0
        %3118 = vmatpush.bf16.xpose.msra.mxu0 0
        %3119 = vmatpush.bf16.xpose.msra.mxu0 0
        %3120 = vmatpush.bf16.xpose.msra.mxu0 0
        %3121 = vmatpush.bf16.xpose.msra.mxu0 0
        %3122 = vmatpush.bf16.xpose.msra.mxu0 0
        %3123 = vmatpush.bf16.xpose.msra.mxu0 0
        %3124 = vmatpush.bf16.xpose.msra.mxu0 0
        %3125 = vmatpush.bf16.xpose.msra.mxu0 %v3116
        %3126 = vmatmul.bf16.gmra.mxu0 %v3113
        %v3127 = vpop.f32.mrf.mxu0
        %v3128 = vadd.f32 0.0, %v3127
        %v3129 = vpop.f32.mrf.mxu0
        %3130 = vdwg.mxu0
        %v3133 = vunpack.c.l.b16 %v2591
        %v3134 = vunpack.c.l.b16 %v2592
        %v3135 = vpack.c.b16 %v3134, %v3133
        %v3137 = vsel %vm2407, %v3046, 0
        %v3140 = vsel %vm2407, %v3135, 0
        %3142 = vmatpush.bf16.xpose.msra.mxu0 0
        %3143 = vmatpush.bf16.xpose.msra.mxu0 0
        %3144 = vmatpush.bf16.xpose.msra.mxu0 0
        %3145 = vmatpush.bf16.xpose.msra.mxu0 0
        %3146 = vmatpush.bf16.xpose.msra.mxu0 0
        %3147 = vmatpush.bf16.xpose.msra.mxu0 0
        %3148 = vmatpush.bf16.xpose.msra.mxu0 0
        %3149 = vmatpush.bf16.xpose.msra.mxu0 %v3140
        %3150 = vmatmul.bf16.gmra.mxu0 %v3137
        %v3151 = vpop.f32.mrf.mxu0
        %v3152 = vadd.f32 0.0, %v3151
        %v3153 = vpop.f32.mrf.mxu0
        %3154 = vdwg.mxu0
        %v3157 = vunpack.c.l.b16 %v2593
        %v3158 = vunpack.c.l.b16 %v2594
        %v3159 = vpack.c.b16 %v3158, %v3157
        %v3161 = vsel %vm2407, %v3049, 0
        %v3164 = vsel %vm2407, %v3159, 0
        %3166 = vmatpush.bf16.xpose.msra.mxu0 0
        %3167 = vmatpush.bf16.xpose.msra.mxu0 0
        %3168 = vmatpush.bf16.xpose.msra.mxu0 0
        %3169 = vmatpush.bf16.xpose.msra.mxu0 0
        %3170 = vmatpush.bf16.xpose.msra.mxu0 0
        %3171 = vmatpush.bf16.xpose.msra.mxu0 0
        %3172 = vmatpush.bf16.xpose.msra.mxu0 0
        %3173 = vmatpush.bf16.xpose.msra.mxu0 %v3164
        %3174 = vmatmul.bf16.gmra.mxu0 %v3161
        %v3175 = vpop.f32.mrf.mxu0
        %v3176 = vadd.f32 0.0, %v3175
        %v3177 = vpop.f32.mrf.mxu0
        %3178 = vdwg.mxu0
        %v3181 = vunpack.c.l.b16 %v2595
        %v3182 = vunpack.c.l.b16 %v2596
        %v3183 = vpack.c.b16 %v3182, %v3181
        %v3185 = vsel %vm2407, %v3052, 0
        %v3188 = vsel %vm2407, %v3183, 0
        %3190 = vmatpush.bf16.xpose.msra.mxu0 0
        %3191 = vmatpush.bf16.xpose.msra.mxu0 0
        %3192 = vmatpush.bf16.xpose.msra.mxu0 0
        %3193 = vmatpush.bf16.xpose.msra.mxu0 0
        %3194 = vmatpush.bf16.xpose.msra.mxu0 0
        %3195 = vmatpush.bf16.xpose.msra.mxu0 0
        %3196 = vmatpush.bf16.xpose.msra.mxu0 0
        %3197 = vmatpush.bf16.xpose.msra.mxu0 %v3188
        %3198 = vmatmul.bf16.gmra.mxu0 %v3185
        %v3199 = vpop.f32.mrf.mxu0
        %v3200 = vadd.f32 0.0, %v3199
        %v3201 = vpop.f32.mrf.mxu0
        %3202 = vdwg.mxu0
        %v3205 = vunpack.c.l.b16 %v2597
        %v3206 = vunpack.c.l.b16 %v2598
        %v3207 = vpack.c.b16 %v3206, %v3205
        %v3209 = vsel %vm2407, %v3055, 0
        %v3212 = vsel %vm2407, %v3207, 0
        %3214 = vmatpush.bf16.xpose.msra.mxu0 0
        %3215 = vmatpush.bf16.xpose.msra.mxu0 0
        %3216 = vmatpush.bf16.xpose.msra.mxu0 0
        %3217 = vmatpush.bf16.xpose.msra.mxu0 0
        %3218 = vmatpush.bf16.xpose.msra.mxu0 0
        %3219 = vmatpush.bf16.xpose.msra.mxu0 0
        %3220 = vmatpush.bf16.xpose.msra.mxu0 0
        %3221 = vmatpush.bf16.xpose.msra.mxu0 %v3212
        %3222 = vmatmul.bf16.gmra.mxu0 %v3209
        %v3223 = vpop.f32.mrf.mxu0
        %v3224 = vadd.f32 0.0, %v3223
        %v3225 = vpop.f32.mrf.mxu0
        %3226 = vdwg.mxu0
        %v3229 = vunpack.c.l.b16 %v2599
        %v3230 = vunpack.c.l.b16 %v2600
        %v3231 = vpack.c.b16 %v3230, %v3229
        %v3233 = vsel %vm2407, %v3058, 0
        %v3236 = vsel %vm2407, %v3231, 0
        %3238 = vmatpush.bf16.xpose.msra.mxu0 0
        %3239 = vmatpush.bf16.xpose.msra.mxu0 0
        %3240 = vmatpush.bf16.xpose.msra.mxu0 0
        %3241 = vmatpush.bf16.xpose.msra.mxu0 0
        %3242 = vmatpush.bf16.xpose.msra.mxu0 0
        %3243 = vmatpush.bf16.xpose.msra.mxu0 0
        %3244 = vmatpush.bf16.xpose.msra.mxu0 0
        %3245 = vmatpush.bf16.xpose.msra.mxu0 %v3236
        %3246 = vmatmul.bf16.gmra.mxu0 %v3233
        %v3247 = vpop.f32.mrf.mxu0
        %v3248 = vadd.f32 0.0, %v3247
        %v3249 = vpop.f32.mrf.mxu0
        %3250 = vdwg.mxu0
        %3251 = vxpose.xlu0.b32.start [1/16] %v3080, 128
        %3252 = vxpose.xlu0.b32.cont [2/16] 0.0, 128
        %3253 = vxpose.xlu0.b32.cont [3/16] 0.0, 128
        %3254 = vxpose.xlu0.b32.cont [4/16] 0.0, 128
        %3255 = vxpose.xlu0.b32.cont [5/16] 0.0, 128
        %3256 = vxpose.xlu0.b32.cont [6/16] 0.0, 128
        %3257 = vxpose.xlu0.b32.cont [7/16] 0.0, 128
        %3258 = vxpose.xlu0.b32.cont [8/16] 0.0, 128
        %3259 = vxpose.xlu0.b32.cont [9/16] 0.0, 128
        %3260 = vxpose.xlu0.b32.cont [10/16] 0.0, 128
        %3261 = vxpose.xlu0.b32.cont [11/16] 0.0, 128
        %3262 = vxpose.xlu0.b32.cont [12/16] 0.0, 128
        %3263 = vxpose.xlu0.b32.cont [13/16] 0.0, 128
        %3264 = vxpose.xlu0.b32.cont [14/16] 0.0, 128
        %3265 = vxpose.xlu0.b32.cont [15/16] 0.0, 128
        %3266 = vxpose.xlu0.b32.end [16/16] 0.0, 128
        %v3267 = vpop.trf.xlu0
        %v3268 = vpop.trf.xlu0
        %v3269 = vpop.trf.xlu0
        %v3270 = vpop.trf.xlu0
        %v3271 = vpop.trf.xlu0
        %v3272 = vpop.trf.xlu0
        %v3273 = vpop.trf.xlu0
        %v3274 = vpop.trf.xlu0
        %v3275 = vpop.trf.xlu0
        %v3276 = vpop.trf.xlu0
        %v3277 = vpop.trf.xlu0
        %v3278 = vpop.trf.xlu0
        %v3279 = vpop.trf.xlu0
        %v3280 = vpop.trf.xlu0
        %v3281 = vpop.trf.xlu0
        %v3282 = vpop.trf.xlu0
        %3283 = vxpose.xlu0.b32.start [1/16] %v3104, 128
        %3284 = vxpose.xlu0.b32.cont [2/16] 0.0, 128
        %3285 = vxpose.xlu0.b32.cont [3/16] 0.0, 128
        %3286 = vxpose.xlu0.b32.cont [4/16] 0.0, 128
        %3287 = vxpose.xlu0.b32.cont [5/16] 0.0, 128
        %3288 = vxpose.xlu0.b32.cont [6/16] 0.0, 128
        %3289 = vxpose.xlu0.b32.cont [7/16] 0.0, 128
        %3290 = vxpose.xlu0.b32.cont [8/16] 0.0, 128
        %3291 = vxpose.xlu0.b32.cont [9/16] 0.0, 128
        %3292 = vxpose.xlu0.b32.cont [10/16] 0.0, 128
        %3293 = vxpose.xlu0.b32.cont [11/16] 0.0, 128
        %3294 = vxpose.xlu0.b32.cont [12/16] 0.0, 128
        %3295 = vxpose.xlu0.b32.cont [13/16] 0.0, 128
        %3296 = vxpose.xlu0.b32.cont [14/16] 0.0, 128
        %3297 = vxpose.xlu0.b32.cont [15/16] 0.0, 128
        %3298 = vxpose.xlu0.b32.end [16/16] 0.0, 128
        %v3299 = vpop.trf.xlu0
        %v3300 = vpop.trf.xlu0
        %v3301 = vpop.trf.xlu0
        %v3302 = vpop.trf.xlu0
        %v3303 = vpop.trf.xlu0
        %v3304 = vpop.trf.xlu0
        %v3305 = vpop.trf.xlu0
        %v3306 = vpop.trf.xlu0
        %v3307 = vpop.trf.xlu0
        %v3308 = vpop.trf.xlu0
        %v3309 = vpop.trf.xlu0
        %v3310 = vpop.trf.xlu0
        %v3311 = vpop.trf.xlu0
        %v3312 = vpop.trf.xlu0
        %v3313 = vpop.trf.xlu0
        %v3314 = vpop.trf.xlu0
        %3315 = vxpose.xlu0.b32.start [1/16] %v3128, 128
        %3316 = vxpose.xlu0.b32.cont [2/16] 0.0, 128
        %3317 = vxpose.xlu0.b32.cont [3/16] 0.0, 128
        %3318 = vxpose.xlu0.b32.cont [4/16] 0.0, 128
        %3319 = vxpose.xlu0.b32.cont [5/16] 0.0, 128
        %3320 = vxpose.xlu0.b32.cont [6/16] 0.0, 128
        %3321 = vxpose.xlu0.b32.cont [7/16] 0.0, 128
        %3322 = vxpose.xlu0.b32.cont [8/16] 0.0, 128
        %3323 = vxpose.xlu0.b32.cont [9/16] 0.0, 128
        %3324 = vxpose.xlu0.b32.cont [10/16] 0.0, 128
        %3325 = vxpose.xlu0.b32.cont [11/16] 0.0, 128
        %3326 = vxpose.xlu0.b32.cont [12/16] 0.0, 128
        %3327 = vxpose.xlu0.b32.cont [13/16] 0.0, 128
        %3328 = vxpose.xlu0.b32.cont [14/16] 0.0, 128
        %3329 = vxpose.xlu0.b32.cont [15/16] 0.0, 128
        %3330 = vxpose.xlu0.b32.end [16/16] 0.0, 128
        %v3331 = vpop.trf.xlu0
        %v3332 = vpop.trf.xlu0
        %v3333 = vpop.trf.xlu0
        %v3334 = vpop.trf.xlu0
        %v3335 = vpop.trf.xlu0
        %v3336 = vpop.trf.xlu0
        %v3337 = vpop.trf.xlu0
        %v3338 = vpop.trf.xlu0
        %v3339 = vpop.trf.xlu0
        %v3340 = vpop.trf.xlu0
        %v3341 = vpop.trf.xlu0
        %v3342 = vpop.trf.xlu0
        %v3343 = vpop.trf.xlu0
        %v3344 = vpop.trf.xlu0
        %v3345 = vpop.trf.xlu0
        %v3346 = vpop.trf.xlu0
        %3347 = vxpose.xlu0.b32.start [1/16] %v3152, 128
        %3348 = vxpose.xlu0.b32.cont [2/16] 0.0, 128
        %3349 = vxpose.xlu0.b32.cont [3/16] 0.0, 128
        %3350 = vxpose.xlu0.b32.cont [4/16] 0.0, 128
        %3351 = vxpose.xlu0.b32.cont [5/16] 0.0, 128
        %3352 = vxpose.xlu0.b32.cont [6/16] 0.0, 128
        %3353 = vxpose.xlu0.b32.cont [7/16] 0.0, 128
        %3354 = vxpose.xlu0.b32.cont [8/16] 0.0, 128
        %3355 = vxpose.xlu0.b32.cont [9/16] 0.0, 128
        %3356 = vxpose.xlu0.b32.cont [10/16] 0.0, 128
        %3357 = vxpose.xlu0.b32.cont [11/16] 0.0, 128
        %3358 = vxpose.xlu0.b32.cont [12/16] 0.0, 128
        %3359 = vxpose.xlu0.b32.cont [13/16] 0.0, 128
        %3360 = vxpose.xlu0.b32.cont [14/16] 0.0, 128
        %3361 = vxpose.xlu0.b32.cont [15/16] 0.0, 128
        %3362 = vxpose.xlu0.b32.end [16/16] 0.0, 128
        %v3363 = vpop.trf.xlu0
        %v3364 = vpop.trf.xlu0
        %v3365 = vpop.trf.xlu0
        %v3366 = vpop.trf.xlu0
        %v3367 = vpop.trf.xlu0
        %v3368 = vpop.trf.xlu0
        %v3369 = vpop.trf.xlu0
        %v3370 = vpop.trf.xlu0
        %v3371 = vpop.trf.xlu0
        %v3372 = vpop.trf.xlu0
        %v3373 = vpop.trf.xlu0
        %v3374 = vpop.trf.xlu0
        %v3375 = vpop.trf.xlu0
        %v3376 = vpop.trf.xlu0
        %v3377 = vpop.trf.xlu0
        %v3378 = vpop.trf.xlu0
        %3379 = vxpose.xlu0.b32.start [1/16] %v3176, 128
        %3380 = vxpose.xlu0.b32.cont [2/16] 0.0, 128
        %3381 = vxpose.xlu0.b32.cont [3/16] 0.0, 128
        %3382 = vxpose.xlu0.b32.cont [4/16] 0.0, 128
        %3383 = vxpose.xlu0.b32.cont [5/16] 0.0, 128
        %3384 = vxpose.xlu0.b32.cont [6/16] 0.0, 128
        %3385 = vxpose.xlu0.b32.cont [7/16] 0.0, 128
        %3386 = vxpose.xlu0.b32.cont [8/16] 0.0, 128
        %3387 = vxpose.xlu0.b32.cont [9/16] 0.0, 128
        %3388 = vxpose.xlu0.b32.cont [10/16] 0.0, 128
        %3389 = vxpose.xlu0.b32.cont [11/16] 0.0, 128
        %3390 = vxpose.xlu0.b32.cont [12/16] 0.0, 128
        %3391 = vxpose.xlu0.b32.cont [13/16] 0.0, 128
        %3392 = vxpose.xlu0.b32.cont [14/16] 0.0, 128
        %3393 = vxpose.xlu0.b32.cont [15/16] 0.0, 128
        %3394 = vxpose.xlu0.b32.end [16/16] 0.0, 128
        %v3395 = vpop.trf.xlu0
        %v3396 = vpop.trf.xlu0
        %v3397 = vpop.trf.xlu0
        %v3398 = vpop.trf.xlu0
        %v3399 = vpop.trf.xlu0
        %v3400 = vpop.trf.xlu0
        %v3401 = vpop.trf.xlu0
        %v3402 = vpop.trf.xlu0
        %v3403 = vpop.trf.xlu0
        %v3404 = vpop.trf.xlu0
        %v3405 = vpop.trf.xlu0
        %v3406 = vpop.trf.xlu0
        %v3407 = vpop.trf.xlu0
        %v3408 = vpop.trf.xlu0
        %v3409 = vpop.trf.xlu0
        %v3410 = vpop.trf.xlu0
        %3411 = vxpose.xlu0.b32.start [1/16] %v3200, 128
        %3412 = vxpose.xlu0.b32.cont [2/16] 0.0, 128
        %3413 = vxpose.xlu0.b32.cont [3/16] 0.0, 128
        %3414 = vxpose.xlu0.b32.cont [4/16] 0.0, 128
        %3415 = vxpose.xlu0.b32.cont [5/16] 0.0, 128
        %3416 = vxpose.xlu0.b32.cont [6/16] 0.0, 128
        %3417 = vxpose.xlu0.b32.cont [7/16] 0.0, 128
        %3418 = vxpose.xlu0.b32.cont [8/16] 0.0, 128
        %3419 = vxpose.xlu0.b32.cont [9/16] 0.0, 128
        %3420 = vxpose.xlu0.b32.cont [10/16] 0.0, 128
        %3421 = vxpose.xlu0.b32.cont [11/16] 0.0, 128
        %3422 = vxpose.xlu0.b32.cont [12/16] 0.0, 128
        %3423 = vxpose.xlu0.b32.cont [13/16] 0.0, 128
        %3424 = vxpose.xlu0.b32.cont [14/16] 0.0, 128
        %3425 = vxpose.xlu0.b32.cont [15/16] 0.0, 128
        %3426 = vxpose.xlu0.b32.end [16/16] 0.0, 128
        %v3427 = vpop.trf.xlu0
        %v3428 = vpop.trf.xlu0
        %v3429 = vpop.trf.xlu0
        %v3430 = vpop.trf.xlu0
        %v3431 = vpop.trf.xlu0
        %v3432 = vpop.trf.xlu0
        %v3433 = vpop.trf.xlu0
        %v3434 = vpop.trf.xlu0
        %v3435 = vpop.trf.xlu0
        %v3436 = vpop.trf.xlu0
        %v3437 = vpop.trf.xlu0
        %v3438 = vpop.trf.xlu0
        %v3439 = vpop.trf.xlu0
        %v3440 = vpop.trf.xlu0
        %v3441 = vpop.trf.xlu0
        %v3442 = vpop.trf.xlu0
        %3443 = vxpose.xlu0.b32.start [1/16] %v3224, 128
        %3444 = vxpose.xlu0.b32.cont [2/16] 0.0, 128
        %3445 = vxpose.xlu0.b32.cont [3/16] 0.0, 128
        %3446 = vxpose.xlu0.b32.cont [4/16] 0.0, 128
        %3447 = vxpose.xlu0.b32.cont [5/16] 0.0, 128
        %3448 = vxpose.xlu0.b32.cont [6/16] 0.0, 128
        %3449 = vxpose.xlu0.b32.cont [7/16] 0.0, 128
        %3450 = vxpose.xlu0.b32.cont [8/16] 0.0, 128
        %3451 = vxpose.xlu0.b32.cont [9/16] 0.0, 128
        %3452 = vxpose.xlu0.b32.cont [10/16] 0.0, 128
        %3453 = vxpose.xlu0.b32.cont [11/16] 0.0, 128
        %3454 = vxpose.xlu0.b32.cont [12/16] 0.0, 128
        %3455 = vxpose.xlu0.b32.cont [13/16] 0.0, 128
        %3456 = vxpose.xlu0.b32.cont [14/16] 0.0, 128
        %3457 = vxpose.xlu0.b32.cont [15/16] 0.0, 128
        %3458 = vxpose.xlu0.b32.end [16/16] 0.0, 128
        %v3459 = vpop.trf.xlu0
        %v3460 = vpop.trf.xlu0
        %v3461 = vpop.trf.xlu0
        %v3462 = vpop.trf.xlu0
        %v3463 = vpop.trf.xlu0
        %v3464 = vpop.trf.xlu0
        %v3465 = vpop.trf.xlu0
        %v3466 = vpop.trf.xlu0
        %v3467 = vpop.trf.xlu0
        %v3468 = vpop.trf.xlu0
        %v3469 = vpop.trf.xlu0
        %v3470 = vpop.trf.xlu0
        %v3471 = vpop.trf.xlu0
        %v3472 = vpop.trf.xlu0
        %v3473 = vpop.trf.xlu0
        %v3474 = vpop.trf.xlu0
        %3475 = vxpose.xlu0.b32.start [1/16] %v3248, 128
        %3476 = vxpose.xlu0.b32.cont [2/16] 0.0, 128
        %3477 = vxpose.xlu0.b32.cont [3/16] 0.0, 128
        %3478 = vxpose.xlu0.b32.cont [4/16] 0.0, 128
        %3479 = vxpose.xlu0.b32.cont [5/16] 0.0, 128
        %3480 = vxpose.xlu0.b32.cont [6/16] 0.0, 128
        %3481 = vxpose.xlu0.b32.cont [7/16] 0.0, 128
        %3482 = vxpose.xlu0.b32.cont [8/16] 0.0, 128
        %3483 = vxpose.xlu0.b32.cont [9/16] 0.0, 128
        %3484 = vxpose.xlu0.b32.cont [10/16] 0.0, 128
        %3485 = vxpose.xlu0.b32.cont [11/16] 0.0, 128
        %3486 = vxpose.xlu0.b32.cont [12/16] 0.0, 128
        %3487 = vxpose.xlu0.b32.cont [13/16] 0.0, 128
        %3488 = vxpose.xlu0.b32.cont [14/16] 0.0, 128
        %3489 = vxpose.xlu0.b32.cont [15/16] 0.0, 128
        %3490 = vxpose.xlu0.b32.end [16/16] 0.0, 128
        %v3491 = vpop.trf.xlu0
        %v3492 = vpop.trf.xlu0
        %v3493 = vpop.trf.xlu0
        %v3494 = vpop.trf.xlu0
        %v3495 = vpop.trf.xlu0
        %v3496 = vpop.trf.xlu0
        %v3497 = vpop.trf.xlu0
        %v3498 = vpop.trf.xlu0
        %v3499 = vpop.trf.xlu0
        %v3500 = vpop.trf.xlu0
        %v3501 = vpop.trf.xlu0
        %v3502 = vpop.trf.xlu0
        %v3503 = vpop.trf.xlu0
        %v3504 = vpop.trf.xlu0
        %v3505 = vpop.trf.xlu0
        %v3506 = vpop.trf.xlu0
        %v3507 = vrot.slane %v3331, 4
        %v3508 = vsel %vm1013, %v3507, %v3267
        %v3509 = vrot.slane %v3267, 4
        %v3510 = vsel %vm1013, %v3331, %v3509
        %v3512 = vunpack.c.l.s4 1983009808
        %v3513 = vunpack.c.0.s8 %v3512
        %v3514 = vperm.slane %v3508, %v3513
        %v3516 = vunpack.c.l.s4 1983009808
        %v3517 = vunpack.c.0.s8 %v3516
        %v3518 = vperm.slane %v3510, %v3517
        %v3519 = vrot.slane %v3363, 4
        %v3520 = vsel %vm1013, %v3519, %v3299
        %v3521 = vrot.slane %v3299, 4
        %v3522 = vsel %vm1013, %v3363, %v3521
        %v3524 = vunpack.c.l.s4 1983009808
        %v3525 = vunpack.c.0.s8 %v3524
        %v3526 = vperm.slane %v3520, %v3525
        %v3528 = vunpack.c.l.s4 1983009808
        %v3529 = vunpack.c.0.s8 %v3528
        %v3530 = vperm.slane %v3522, %v3529
        %v3531 = vrot.slane %v3459, 4
        %v3532 = vsel %vm1013, %v3531, %v3395
        %v3533 = vrot.slane %v3395, 4
        %v3534 = vsel %vm1013, %v3459, %v3533
        %v3536 = vunpack.c.l.s4 1983009808
        %v3537 = vunpack.c.0.s8 %v3536
        %v3538 = vperm.slane %v3532, %v3537
        %v3540 = vunpack.c.l.s4 1983009808
        %v3541 = vunpack.c.0.s8 %v3540
        %v3542 = vperm.slane %v3534, %v3541
        %v3543 = vrot.slane %v3491, 4
        %v3544 = vsel %vm1013, %v3543, %v3427
        %v3545 = vrot.slane %v3427, 4
        %v3546 = vsel %vm1013, %v3491, %v3545
        %v3548 = vunpack.c.l.s4 1983009808
        %v3549 = vunpack.c.0.s8 %v3548
        %v3550 = vperm.slane %v3544, %v3549
        %v3552 = vunpack.c.l.s4 1983009808
        %v3553 = vunpack.c.0.s8 %v3552
        %v3554 = vperm.slane %v3546, %v3553
        %v3555 = vrot.slane %v3526, 4
        %v3556 = vsel %vm1013, %v3555, %v3514
        %v3557 = vrot.slane %v3514, 4
        %v3558 = vsel %vm1013, %v3526, %v3557
        %v3560 = vunpack.c.l.s4 1934713408
        %v3561 = vunpack.c.0.s8 %v3560
        %v3562 = vperm.slane %v3556, %v3561
        %v3564 = vunpack.c.l.s4 1934713408
        %v3565 = vunpack.c.0.s8 %v3564
        %v3566 = vperm.slane %v3558, %v3565
        %v3567 = vrot.slane %v3530, 4
        %v3568 = vsel %vm1013, %v3567, %v3518
        %v3569 = vrot.slane %v3518, 4
        %v3570 = vsel %vm1013, %v3530, %v3569
        %v3572 = vunpack.c.l.s4 1934713408
        %v3573 = vunpack.c.0.s8 %v3572
        %v3574 = vperm.slane %v3568, %v3573
        %v3576 = vunpack.c.l.s4 1934713408
        %v3577 = vunpack.c.0.s8 %v3576
        %v3578 = vperm.slane %v3570, %v3577
        %v3579 = vrot.slane %v3550, 4
        %v3580 = vsel %vm1013, %v3579, %v3538
        %v3581 = vrot.slane %v3538, 4
        %v3582 = vsel %vm1013, %v3550, %v3581
        %v3584 = vunpack.c.l.s4 1934713408
        %v3585 = vunpack.c.0.s8 %v3584
        %v3586 = vperm.slane %v3580, %v3585
        %v3588 = vunpack.c.l.s4 1934713408
        %v3589 = vunpack.c.0.s8 %v3588
        %v3590 = vperm.slane %v3582, %v3589
        %v3591 = vrot.slane %v3554, 4
        %v3592 = vsel %vm1013, %v3591, %v3542
        %v3593 = vrot.slane %v3542, 4
        %v3594 = vsel %vm1013, %v3554, %v3593
        %v3596 = vunpack.c.l.s4 1934713408
        %v3597 = vunpack.c.0.s8 %v3596
        %v3598 = vperm.slane %v3592, %v3597
        %v3600 = vunpack.c.l.s4 1934713408
        %v3601 = vunpack.c.0.s8 %v3600
        %v3602 = vperm.slane %v3594, %v3601
        %v3603 = vrot.slane %v3586, 4
        %v3604 = vsel %vm1013, %v3603, %v3562
        %v3605 = vrot.slane %v3562, 4
        %v3606 = vsel %vm1013, %v3586, %v3605
        %v3607 = vrot.slane %v3590, 4
        %v3608 = vsel %vm1013, %v3607, %v3566
        %v3609 = vrot.slane %v3566, 4
        %v3610 = vsel %vm1013, %v3590, %v3609
        %v3611 = vrot.slane %v3598, 4
        %v3612 = vsel %vm1013, %v3611, %v3574
        %v3613 = vrot.slane %v3574, 4
        %v3614 = vsel %vm1013, %v3598, %v3613
        %v3615 = vrot.slane %v3602, 4
        %v3616 = vsel %vm1013, %v3615, %v3578
        %v3617 = vrot.slane %v3578, 4
        %v3618 = vsel %vm1013, %v3602, %v3617
        %v3619 = vrot.slane %v3332, 4
        %v3620 = vsel %vm1013, %v3619, %v3268
        %v3622 = vunpack.c.l.s4 1983009808
        %v3623 = vunpack.c.0.s8 %v3622
        %v3624 = vperm.slane %v3620, %v3623
        %v3625 = vrot.slane %v3364, 4
        %v3626 = vsel %vm1013, %v3625, %v3300
        %v3628 = vunpack.c.l.s4 1983009808
        %v3629 = vunpack.c.0.s8 %v3628
        %v3630 = vperm.slane %v3626, %v3629
        %v3631 = vrot.slane %v3460, 4
        %v3632 = vsel %vm1013, %v3631, %v3396
        %v3634 = vunpack.c.l.s4 1983009808
        %v3635 = vunpack.c.0.s8 %v3634
        %v3636 = vperm.slane %v3632, %v3635
        %v3637 = vrot.slane %v3492, 4
        %v3638 = vsel %vm1013, %v3637, %v3428
        %v3640 = vunpack.c.l.s4 1983009808
        %v3641 = vunpack.c.0.s8 %v3640
        %v3642 = vperm.slane %v3638, %v3641
        %v3643 = vrot.slane %v3630, 4
        %v3644 = vsel %vm1013, %v3643, %v3624
        %v3646 = vunpack.c.l.s4 1934713408
        %v3647 = vunpack.c.0.s8 %v3646
        %v3648 = vperm.slane %v3644, %v3647
        %v3649 = vrot.slane %v3642, 4
        %v3650 = vsel %vm1013, %v3649, %v3636
        %v3652 = vunpack.c.l.s4 1934713408
        %v3653 = vunpack.c.0.s8 %v3652
        %v3654 = vperm.slane %v3650, %v3653
        %v3655 = vrot.slane %v3654, 4
        %v3656 = vsel %vm1013, %v3655, %v3648
        %v3657 = vrot.slane %v3608, 4
        %v3658 = vsel %vm1013, %v3657, %v3604
        %v3659 = vrot.slane %v3604, 4
        %v3660 = vsel %vm1013, %v3608, %v3659
        %v3662 = vunpack.c.l.s4 1983009808
        %v3663 = vunpack.c.0.s8 %v3662
        %v3664 = vperm.slane %v3658, %v3663
        %v3666 = vunpack.c.l.s4 1983009808
        %v3667 = vunpack.c.0.s8 %v3666
        %v3668 = vperm.slane %v3660, %v3667
        %v3669 = vrot.slane %v3610, 4
        %v3670 = vsel %vm1013, %v3669, %v3606
        %v3671 = vrot.slane %v3606, 4
        %v3672 = vsel %vm1013, %v3610, %v3671
        %v3674 = vunpack.c.l.s4 1983009808
        %v3675 = vunpack.c.0.s8 %v3674
        %v3676 = vperm.slane %v3670, %v3675
        %v3678 = vunpack.c.l.s4 1983009808
        %v3679 = vunpack.c.0.s8 %v3678
        %v3680 = vperm.slane %v3672, %v3679
        %v3681 = vrot.slane %v3616, 4
        %v3682 = vsel %vm1013, %v3681, %v3612
        %v3683 = vrot.slane %v3612, 4
        %v3684 = vsel %vm1013, %v3616, %v3683
        %v3686 = vunpack.c.l.s4 1983009808
        %v3687 = vunpack.c.0.s8 %v3686
        %v3688 = vperm.slane %v3682, %v3687
        %v3690 = vunpack.c.l.s4 1983009808
        %v3691 = vunpack.c.0.s8 %v3690
        %v3692 = vperm.slane %v3684, %v3691
        %v3693 = vrot.slane %v3618, 4
        %v3694 = vsel %vm1013, %v3693, %v3614
        %v3695 = vrot.slane %v3614, 4
        %v3696 = vsel %vm1013, %v3618, %v3695
        %v3698 = vunpack.c.l.s4 1983009808
        %v3699 = vunpack.c.0.s8 %v3698
        %v3700 = vperm.slane %v3694, %v3699
        %v3702 = vunpack.c.l.s4 1983009808
        %v3703 = vunpack.c.0.s8 %v3702
        %v3704 = vperm.slane %v3696, %v3703
        %v3705 = vrot.slane %v3676, 4
        %v3706 = vsel %vm1013, %v3705, %v3664
        %v3707 = vrot.slane %v3664, 4
        %v3708 = vsel %vm1013, %v3676, %v3707
        %v3710 = vunpack.c.l.s4 1934713408
        %v3711 = vunpack.c.0.s8 %v3710
        %v3712 = vperm.slane %v3706, %v3711
        %v3714 = vunpack.c.l.s4 1934713408
        %v3715 = vunpack.c.0.s8 %v3714
        %v3716 = vperm.slane %v3708, %v3715
        %v3717 = vrot.slane %v3680, 4
        %v3718 = vsel %vm1013, %v3717, %v3668
        %v3719 = vrot.slane %v3668, 4
        %v3720 = vsel %vm1013, %v3680, %v3719
        %v3722 = vunpack.c.l.s4 1934713408
        %v3723 = vunpack.c.0.s8 %v3722
        %v3724 = vperm.slane %v3718, %v3723
        %v3726 = vunpack.c.l.s4 1934713408
        %v3727 = vunpack.c.0.s8 %v3726
        %v3728 = vperm.slane %v3720, %v3727
        %v3729 = vrot.slane %v3700, 4
        %v3730 = vsel %vm1013, %v3729, %v3688
        %v3731 = vrot.slane %v3688, 4
        %v3732 = vsel %vm1013, %v3700, %v3731
        %v3734 = vunpack.c.l.s4 1934713408
        %v3735 = vunpack.c.0.s8 %v3734
        %v3736 = vperm.slane %v3730, %v3735
        %v3738 = vunpack.c.l.s4 1934713408
        %v3739 = vunpack.c.0.s8 %v3738
        %v3740 = vperm.slane %v3732, %v3739
        %v3741 = vrot.slane %v3704, 4
        %v3742 = vsel %vm1013, %v3741, %v3692
        %v3743 = vrot.slane %v3692, 4
        %v3744 = vsel %vm1013, %v3704, %v3743
        %v3746 = vunpack.c.l.s4 1934713408
        %v3747 = vunpack.c.0.s8 %v3746
        %v3748 = vperm.slane %v3742, %v3747
        %v3750 = vunpack.c.l.s4 1934713408
        %v3751 = vunpack.c.0.s8 %v3750
        %v3752 = vperm.slane %v3744, %v3751
        %v3753 = vrot.slane %v3736, 4
        %v3754 = vsel %vm1013, %v3753, %v3712
        %v3755 = vrot.slane %v3712, 4
        %v3756 = vsel %vm1013, %v3736, %v3755
        %v3757 = vrot.slane %v3740, 4
        %v3758 = vsel %vm1013, %v3757, %v3716
        %v3759 = vrot.slane %v3716, 4
        %v3760 = vsel %vm1013, %v3740, %v3759
        %v3761 = vrot.slane %v3748, 4
        %v3762 = vsel %vm1013, %v3761, %v3724
        %v3763 = vrot.slane %v3724, 4
        %v3764 = vsel %vm1013, %v3748, %v3763
        %v3765 = vrot.slane %v3752, 4
        %v3766 = vsel %vm1013, %v3765, %v3728
        %v3767 = vrot.slane %v3728, 4
        %v3768 = vsel %vm1013, %v3752, %v3767
        %v3769 = vrot.slane %v3656, 4
        %v3770 = vsel %vm1013, 0.0, %v3769
        %v3772 = vunpack.c.l.s4 1983009808
        %v3773 = vunpack.c.0.s8 %v3772
        %v3774 = vperm.slane %v3656, %v3773
        %v3776 = vunpack.c.l.s4 1983009808
        %v3777 = vunpack.c.0.s8 %v3776
        %v3778 = vperm.slane %v3770, %v3777
        %v3779 = vrot.slane %v3774, 4
        %v3780 = vsel %vm1013, 0.0, %v3779
        %v3782 = vunpack.c.l.s4 1934713408
        %v3783 = vunpack.c.0.s8 %v3782
        %v3784 = vperm.slane %v3774, %v3783
        %v3786 = vunpack.c.l.s4 1934713408
        %v3787 = vunpack.c.0.s8 %v3786
        %v3788 = vperm.slane %v3780, %v3787
        %v3789 = vrot.slane %v3778, 4
        %v3790 = vsel %vm1013, 0.0, %v3789
        %v3792 = vunpack.c.l.s4 1934713408
        %v3793 = vunpack.c.0.s8 %v3792
        %v3794 = vperm.slane %v3778, %v3793
        %v3796 = vunpack.c.l.s4 1934713408
        %v3797 = vunpack.c.0.s8 %v3796
        %v3798 = vperm.slane %v3790, %v3797
        %v3799 = vrot.slane %v3784, 4
        %v3800 = vsel %vm1013, 0.0, %v3799
        %v3801 = vrot.slane %v3788, 4
        %v3802 = vsel %vm1013, 0.0, %v3801
        %v3803 = vrot.slane %v3794, 4
        %v3804 = vsel %vm1013, 0.0, %v3803
        %v3805 = vrot.slane %v3798, 4
        %v3806 = vsel %vm1013, 0.0, %v3805
        %3809 = vrot.lane.b32.xlu0 %v3756, 8
        %v3810 = vpop.permute.xlu0 %3809
        %3811 = vrot.lane.b32.xlu0 %v3800, 8
        %v3812 = vpop.permute.xlu0 %3811
        %3817 = vrot.lane.b32.xlu0 %v3758, 16
        %v3818 = vpop.permute.xlu0 %3817
        %3819 = vrot.lane.b32.xlu0 %v3788, 16
        %v3820 = vpop.permute.xlu0 %3819
        %3825 = vrot.lane.b32.xlu0 %v3760, 24
        %v3826 = vpop.permute.xlu0 %3825
        %3827 = vrot.lane.b32.xlu0 %v3802, 24
        %v3828 = vpop.permute.xlu0 %3827
        %3833 = vrot.lane.b32.xlu0 %v3762, 32
        %v3834 = vpop.permute.xlu0 %3833
        %3835 = vrot.lane.b32.xlu0 %v3794, 32
        %v3836 = vpop.permute.xlu0 %3835
        %3841 = vrot.lane.b32.xlu0 %v3764, 40
        %v3842 = vpop.permute.xlu0 %3841
        %3843 = vrot.lane.b32.xlu0 %v3804, 40
        %v3844 = vpop.permute.xlu0 %3843
        %3849 = vrot.lane.b32.xlu0 %v3766, 48
        %v3850 = vpop.permute.xlu0 %3849
        %3851 = vrot.lane.b32.xlu0 %v3798, 48
        %v3852 = vpop.permute.xlu0 %3851
        %3857 = vrot.lane.b32.xlu0 %v3768, 56
        %v3858 = vpop.permute.xlu0 %3857
        %3859 = vrot.lane.b32.xlu0 %v3806, 56
        %v3860 = vpop.permute.xlu0 %3859
        %v3863 = vsel %vm2178, %v3754, %v3810
        %v3864 = vsel %vm2178, %v3784, %v3812
        %vm3865 = vcmask 130048
        %v3866 = vsel %vm3865, %v3863, %v3818
        %v3867 = vsel %vm3865, %v3864, %v3820
        %vm3868 = vcmask 195584
        %v3869 = vsel %vm3868, %v3866, %v3826
        %v3870 = vsel %vm3868, %v3867, %v3828
        %vm3871 = vcmask 261120
        %v3872 = vsel %vm3871, %v3869, %v3834
        %v3873 = vsel %vm3871, %v3870, %v3836
        %vm3874 = vcmask 326656
        %v3875 = vsel %vm3874, %v3872, %v3842
        %v3876 = vsel %vm3874, %v3873, %v3844
        %vm3877 = vcmask 392192
        %v3878 = vsel %vm3877, %v3875, %v3850
        %v3879 = vsel %vm3877, %v3876, %v3852
        %vm3880 = vcmask 457728
        %v3881 = vsel %vm3880, %v3878, %v3858
        %v3882 = vsel %vm3880, %v3879, %v3860
        %v3883 = vld [vmem:[%s779] sm:$0xf]
        %v3884 = vld [vmem:[%s779 + $0x4] sm:$0xf]
        %v3885 = vld [vmem:[%s779 + $0x8] sm:$0xf]
        %v3886 = vld [vmem:[%s779 + $0xc] sm:$0xf]
        %v3887 = vld [vmem:[%s779 + $0x10] sm:$0xf]
        %v3888 = vld [vmem:[%s779 + $0x14] sm:$0xf]
        %v3889 = vld [vmem:[%s779 + $0x18] sm:$0xf]
        %v3890 = vld [vmem:[%s779 + $0x1c] sm:$0xf]
        %v3891 = vpack.c.bf16 %v3882, %v3881
        %v3900 = vunpack.c.l.b16 %v3883
        %v3901 = vunpack.c.l.b16 %v3884
        %v3902 = vunpack.c.l.b16 %v3885
        %v3903 = vunpack.c.l.b16 %v3886
        %v3904 = vunpack.c.l.b16 %v3887
        %v3905 = vunpack.c.l.b16 %v3888
        %v3906 = vunpack.c.l.b16 %v3889
        %v3907 = vunpack.c.l.b16 %v3890
        %v3908 = vpack.c.b16 %v3901, %v3900
        %v3909 = vpack.c.b16 %v3903, %v3902
        %v3910 = vpack.c.b16 %v3905, %v3904
        %v3911 = vpack.c.b16 %v3907, %v3906
        %v3917 = vsel %vm819, %v3891, 0
        %3919 = vmatpush.bf16.msra.mxu0 0
        %3920 = vmatpush.bf16.msra.mxu0 0
        %3921 = vmatpush.bf16.msra.mxu0 0
        %3922 = vmatpush.bf16.msra.mxu0 0
        %3923 = vmatpush.bf16.msra.mxu0 %v3911
        %3924 = vmatpush.bf16.msra.mxu0 %v3910
        %3925 = vmatpush.bf16.msra.mxu0 %v3909
        %3926 = vmatpush.bf16.msra.mxu0 %v3908
        %3927 = vmatmul.bf16.gmra.mxu0 %v3917
        %v3928 = vpop.f32.mrf.mxu0
        %v3929 = vadd.f32 0.0, %v3928
        %v3930 = vpop.f32.mrf.mxu0
        %v3931 = vadd.f32 0.0, %v3930
        %3932 = vdwg.mxu0
        %v3933 = vadd.f32 %v806, %v3929
        %v3934 = vadd.f32 %v807, %v3931
        %v3935 = vld [vmem:[%s782] sm:$0x1]
        %v3937 = vperm.slane %v3935, 0
        %v3939 = vadd.f32 %v3933, %v3937
        %v3940 = vadd.f32 %v3934, %v3937
        %v3941 = vld [vmem:[%s767] sm:$0x1]
        %v3942 = vld [vmem:[%s770] sm:$0x1]
        %v3943 = vsel %vm819, %v3939, 0.0
        %3944 = vadd.xlane.f32.xlu0 %v3943
        %v3945 = vpop.xlane.xlu0 %3944
        %v3946 = vsel %vm823, %v3940, 0.0
        %3947 = vadd.xlane.f32.xlu0 %v3946
        %v3948 = vpop.xlane.xlu0 %3947
        %v3949 = vmul.f32 %v3945, %v833
        %v3950 = vmul.f32 %v3948, %v833
        %v3951 = vsub.f32 %v3939, %v3949
        %v3952 = vsub.f32 %v3940, %v3950
        %v3953 = vmul.f32 %v3951, %v3951
        %v3954 = vmul.f32 %v3952, %v3952
        %v3955 = vsel %vm819, %v3953, 0.0
        %3956 = vadd.xlane.f32.xlu0 %v3955
        %v3957 = vpop.xlane.xlu0 %3956
        %v3958 = vsel %vm823, %v3954, 0.0
        %3959 = vadd.xlane.f32.xlu0 %v3958
        %v3960 = vpop.xlane.xlu0 %3959
        %v3961 = vmul.f32 %v3957, %v833
        %v3962 = vmul.f32 %v3960, %v833
        %v3963 = vadd.f32 %v3961, 1e-05
        %v3964 = vadd.f32 %v3962, 1e-05
        %v3965 = vrsqrt.pop %v3963
        %v3966 = vmul.f32 %v3965, %v3963
        %v3967 = vmul.f32 %v3966, %v3965
        %v3968 = vmul.f32 0.5, %v3967
        %v3969 = vsub.f32 1.5, %v3968
        %v3970 = vmul.f32 %v3965, %v3969
        %vm3971 = vweird.f32 %v3963
        %vm3972 = vweird.f32 %v3965
        %vm3973 = vmor %vm3971, %vm3972
        %v3974 = vsel %vm3973, %v3965, %v3970
        %v3975 = vrsqrt.pop %v3964
        %v3976 = vmul.f32 %v3975, %v3964
        %v3977 = vmul.f32 %v3976, %v3975
        %v3978 = vmul.f32 0.5, %v3977
        %v3979 = vsub.f32 1.5, %v3978
        %v3980 = vmul.f32 %v3975, %v3979
        %vm3981 = vweird.f32 %v3964
        %vm3982 = vweird.f32 %v3975
        %vm3983 = vmor %vm3981, %vm3982
        %v3984 = vsel %vm3983, %v3975, %v3980
        %v3985 = vmul.f32 %v3951, %v3974
        %v3986 = vmul.f32 %v3952, %v3984
        %v3988 = vperm.slane %v3941, 0
        %v3990 = vmul.f32 %v3985, %v3988
        %v3991 = vmul.f32 %v3986, %v3988
        %v3993 = vperm.slane %v3942, 0
        %v3995 = vadd.f32 %v3990, %v3993
        %v3996 = vadd.f32 %v3991, %v3993
        %v3997 = vld [vmem:[%s648] sm:$0xff]
        %v3998 = vld [vmem:[%s648 + $0x8] sm:$0xff]
        %v3999 = vld [vmem:[%s648 + $0x10] sm:$0xff]
        %v4000 = vld [vmem:[%s648 + $0x18] sm:$0xff]
        %v4001 = vld [vmem:[%s648 + $0x20] sm:$0xff]
        %v4002 = vld [vmem:[%s648 + $0x28] sm:$0xff]
        %v4003 = vld [vmem:[%s648 + $0x30] sm:$0xff]
        %v4004 = vld [vmem:[%s648 + $0x38] sm:$0xff]
        %v4005 = vpack.c.bf16 %v3996, %v3995
        %v4006 = vld [vmem:[%s786] sm:$0x3]
        %v4008 = vperm.slane %v4006, 0
        %v4009 = vperm.slane %v4006, 1
        %v4020 = vunpack.c.l.b16 %v3997
        %v4021 = vunpack.c.h.b16 %v3997
        %v4022 = vunpack.c.l.b16 %v3998
        %v4023 = vunpack.c.h.b16 %v3998
        %v4024 = vunpack.c.l.b16 %v3999
        %v4025 = vunpack.c.h.b16 %v3999
        %v4026 = vunpack.c.l.b16 %v4000
        %v4027 = vunpack.c.h.b16 %v4000
        %v4028 = vunpack.c.l.b16 %v4001
        %v4029 = vunpack.c.h.b16 %v4001
        %v4030 = vunpack.c.l.b16 %v4002
        %v4031 = vunpack.c.h.b16 %v4002
        %v4032 = vunpack.c.l.b16 %v4003
        %v4033 = vunpack.c.h.b16 %v4003
        %v4034 = vunpack.c.l.b16 %v4004
        %v4035 = vunpack.c.h.b16 %v4004
        %v4036 = vpack.c.b16 %v4022, %v4020
        %v4037 = vpack.c.b16 %v4023, %v4021
        %v4038 = vpack.c.b16 %v4026, %v4024
        %v4039 = vpack.c.b16 %v4027, %v4025
        %v4040 = vpack.c.b16 %v4030, %v4028
        %v4041 = vpack.c.b16 %v4031, %v4029
        %v4042 = vpack.c.b16 %v4034, %v4032
        %v4043 = vpack.c.b16 %v4035, %v4033
        %v4053 = vsel %vm819, %v4005, 0
        %4055 = vmatpush.bf16.msra.mxu0 0
        %4056 = vmatpush.bf16.msra.mxu0 0
        %4057 = vmatpush.bf16.msra.mxu0 0
        %4058 = vmatpush.bf16.msra.mxu0 0
        %4059 = vmatpush.bf16.msra.mxu0 %v4042
        %4060 = vmatpush.bf16.msra.mxu0 %v4040
        %4061 = vmatpush.bf16.msra.mxu0 %v4038
        %4062 = vmatpush.bf16.msra.mxu0 %v4036
        %4063 = vmatmul.bf16.gmra.mxu0 %v4053
        %v4064 = vpop.f32.mrf.mxu0
        %v4065 = vadd.f32 %v4008, %v4064
        %v4066 = vpop.f32.mrf.mxu0
        %v4067 = vadd.f32 %v4008, %v4066
        %4068 = vdwg.mxu0
        %4069 = vmatpush.bf16.msra.mxu0 0
        %4070 = vmatpush.bf16.msra.mxu0 0
        %4071 = vmatpush.bf16.msra.mxu0 0
        %4072 = vmatpush.bf16.msra.mxu0 0
        %4073 = vmatpush.bf16.msra.mxu0 %v4043
        %4074 = vmatpush.bf16.msra.mxu0 %v4041
        %4075 = vmatpush.bf16.msra.mxu0 %v4039
        %4076 = vmatpush.bf16.msra.mxu0 %v4037
        %4077 = vmatmul.bf16.gmra.mxu0 %v4053
        %v4078 = vpop.f32.mrf.mxu0
        %v4079 = vadd.f32 %v4009, %v4078
        %v4080 = vpop.f32.mrf.mxu0
        %v4081 = vadd.f32 %v4009, %v4080
        %4082 = vdwg.mxu0
        %v4083 = vmul.f32 %v4065, %v4065
        %v4084 = vmul.f32 %v4079, %v4079
        %v4085 = vmul.f32 %v4067, %v4067
        %v4086 = vmul.f32 %v4081, %v4081
        %v4087 = vmul.f32 %v4065, %v4083
        %v4088 = vmul.f32 %v4079, %v4084
        %v4089 = vmul.f32 %v4067, %v4085
        %v4090 = vmul.f32 %v4081, %v4086
        %v4091 = vmul.f32 %v4087, 0.044715
        %v4092 = vmul.f32 %v4088, 0.044715
        %v4093 = vmul.f32 %v4089, 0.044715
        %v4094 = vmul.f32 %v4090, 0.044715
        %v4095 = vadd.f32 %v4065, %v4091
        %v4096 = vadd.f32 %v4079, %v4092
        %v4097 = vadd.f32 %v4067, %v4093
        %v4098 = vadd.f32 %v4081, %v4094
        %v4099 = vmul.f32 %v4095, 0.7978846
        %v4100 = vmul.f32 %v4096, 0.7978846
        %v4101 = vmul.f32 %v4097, 0.7978846
        %v4102 = vmul.f32 %v4098, 0.7978846
        %v4103 = vtanh.pop %v4099
        %v4104 = vtanh.pop %v4100
        %v4105 = vtanh.pop %v4101
        %v4106 = vtanh.pop %v4102
        %v4107 = vadd.f32 %v4103, 1.0
        %v4108 = vadd.f32 %v4104, 1.0
        %v4109 = vadd.f32 %v4105, 1.0
        %v4110 = vadd.f32 %v4106, 1.0
        %v4111 = vmul.f32 %v4107, 0.5
        %v4112 = vmul.f32 %v4108, 0.5
        %v4113 = vmul.f32 %v4109, 0.5
        %v4114 = vmul.f32 %v4110, 0.5
        %v4115 = vmul.f32 %v4065, %v4111
        %v4116 = vmul.f32 %v4079, %v4112
        %v4117 = vmul.f32 %v4067, %v4113
        %v4118 = vmul.f32 %v4081, %v4114
        %v4119 = vld [vmem:[%s658] sm:$0xf]
        %v4120 = vld [vmem:[%s658 + $0x4] sm:$0xf]
        %v4121 = vld [vmem:[%s658 + $0x8] sm:$0xf]
        %v4122 = vld [vmem:[%s658 + $0xc] sm:$0xf]
        %v4123 = vld [vmem:[%s658 + $0x10] sm:$0xf]
        %v4124 = vld [vmem:[%s658 + $0x14] sm:$0xf]
        %v4125 = vld [vmem:[%s658 + $0x18] sm:$0xf]
        %v4126 = vld [vmem:[%s658 + $0x1c] sm:$0xf]
        %v4127 = vld [vmem:[%s658 + $0x20] sm:$0xf]
        %v4128 = vld [vmem:[%s658 + $0x24] sm:$0xf]
        %v4129 = vld [vmem:[%s658 + $0x28] sm:$0xf]
        %v4130 = vld [vmem:[%s658 + $0x2c] sm:$0xf]
        %v4131 = vld [vmem:[%s658 + $0x30] sm:$0xf]
        %v4132 = vld [vmem:[%s658 + $0x34] sm:$0xf]
        %v4133 = vld [vmem:[%s658 + $0x38] sm:$0xf]
        %v4134 = vld [vmem:[%s658 + $0x3c] sm:$0xf]
        %v4135 = vld [vmem:[%s658 + $0x40] sm:$0xf]
        %v4136 = vld [vmem:[%s658 + $0x44] sm:$0xf]
        %v4137 = vld [vmem:[%s658 + $0x48] sm:$0xf]
        %v4138 = vld [vmem:[%s658 + $0x4c] sm:$0xf]
        %v4139 = vld [vmem:[%s658 + $0x50] sm:$0xf]
        %v4140 = vld [vmem:[%s658 + $0x54] sm:$0xf]
        %v4141 = vld [vmem:[%s658 + $0x58] sm:$0xf]
        %v4142 = vld [vmem:[%s658 + $0x5c] sm:$0xf]
        %v4143 = vld [vmem:[%s658 + $0x60] sm:$0xf]
        %v4144 = vld [vmem:[%s658 + $0x64] sm:$0xf]
        %v4145 = vld [vmem:[%s658 + $0x68] sm:$0xf]
        %v4146 = vld [vmem:[%s658 + $0x6c] sm:$0xf]
        %v4147 = vld [vmem:[%s658 + $0x70] sm:$0xf]
        %v4148 = vld [vmem:[%s658 + $0x74] sm:$0xf]
        %v4149 = vld [vmem:[%s658 + $0x78] sm:$0xf]
        %v4150 = vld [vmem:[%s658 + $0x7c] sm:$0xf]
        %v4151 = vpack.c.bf16 %v4117, %v4115
        %v4152 = vpack.c.bf16 %v4118, %v4116
        %v4185 = vunpack.c.l.b16 %v4119
        %v4186 = vunpack.c.l.b16 %v4120
        %v4187 = vunpack.c.l.b16 %v4121
        %v4188 = vunpack.c.l.b16 %v4122
        %v4189 = vunpack.c.l.b16 %v4123
        %v4190 = vunpack.c.l.b16 %v4124
        %v4191 = vunpack.c.l.b16 %v4125
        %v4192 = vunpack.c.l.b16 %v4126
        %v4193 = vunpack.c.l.b16 %v4127
        %v4194 = vunpack.c.l.b16 %v4128
        %v4195 = vunpack.c.l.b16 %v4129
        %v4196 = vunpack.c.l.b16 %v4130
        %v4197 = vunpack.c.l.b16 %v4131
        %v4198 = vunpack.c.l.b16 %v4132
        %v4199 = vunpack.c.l.b16 %v4133
        %v4200 = vunpack.c.l.b16 %v4134
        %v4201 = vunpack.c.l.b16 %v4135
        %v4202 = vunpack.c.l.b16 %v4136
        %v4203 = vunpack.c.l.b16 %v4137
        %v4204 = vunpack.c.l.b16 %v4138
        %v4205 = vunpack.c.l.b16 %v4139
        %v4206 = vunpack.c.l.b16 %v4140
        %v4207 = vunpack.c.l.b16 %v4141
        %v4208 = vunpack.c.l.b16 %v4142
        %v4209 = vunpack.c.l.b16 %v4143
        %v4210 = vunpack.c.l.b16 %v4144
        %v4211 = vunpack.c.l.b16 %v4145
        %v4212 = vunpack.c.l.b16 %v4146
        %v4213 = vunpack.c.l.b16 %v4147
        %v4214 = vunpack.c.l.b16 %v4148
        %v4215 = vunpack.c.l.b16 %v4149
        %v4216 = vunpack.c.l.b16 %v4150
        %v4217 = vpack.c.b16 %v4186, %v4185
        %v4218 = vpack.c.b16 %v4188, %v4187
        %v4219 = vpack.c.b16 %v4190, %v4189
        %v4220 = vpack.c.b16 %v4192, %v4191
        %v4221 = vpack.c.b16 %v4194, %v4193
        %v4222 = vpack.c.b16 %v4196, %v4195
        %v4223 = vpack.c.b16 %v4198, %v4197
        %v4224 = vpack.c.b16 %v4200, %v4199
        %v4225 = vpack.c.b16 %v4202, %v4201
        %v4226 = vpack.c.b16 %v4204, %v4203
        %v4227 = vpack.c.b16 %v4206, %v4205
        %v4228 = vpack.c.b16 %v4208, %v4207
        %v4229 = vpack.c.b16 %v4210, %v4209
        %v4230 = vpack.c.b16 %v4212, %v4211
        %v4231 = vpack.c.b16 %v4214, %v4213
        %v4232 = vpack.c.b16 %v4216, %v4215
        %4249 = vmatpush.bf16.msra.mxu0 %v4224
        %4250 = vmatpush.bf16.msra.mxu0 %v4223
        %4251 = vmatpush.bf16.msra.mxu0 %v4222
        %4252 = vmatpush.bf16.msra.mxu0 %v4221
        %4253 = vmatpush.bf16.msra.mxu0 %v4220
        %4254 = vmatpush.bf16.msra.mxu0 %v4219
        %4255 = vmatpush.bf16.msra.mxu0 %v4218
        %4256 = vmatpush.bf16.msra.mxu0 %v4217
        %4257 = vmatmul.bf16.gmra.mxu0 %v4151
        %v4258 = vpop.f32.mrf.mxu0
        %v4259 = vadd.f32 0.0, %v4258
        %v4260 = vpop.f32.mrf.mxu0
        %v4261 = vadd.f32 0.0, %v4260
        %4262 = vdwg.mxu0
        %4263 = vmatpush.bf16.msra.mxu0 %v4232
        %4264 = vmatpush.bf16.msra.mxu0 %v4231
        %4265 = vmatpush.bf16.msra.mxu0 %v4230
        %4266 = vmatpush.bf16.msra.mxu0 %v4229
        %4267 = vmatpush.bf16.msra.mxu0 %v4228
        %4268 = vmatpush.bf16.msra.mxu0 %v4227
        %4269 = vmatpush.bf16.msra.mxu0 %v4226
        %4270 = vmatpush.bf16.msra.mxu0 %v4225
        %4271 = vmatmul.bf16.gmra.mxu0 %v4152
        %v4272 = vpop.f32.mrf.mxu0
        %v4273 = vadd.f32 %v4259, %v4272
        %v4274 = vpop.f32.mrf.mxu0
        %v4275 = vadd.f32 %v4261, %v4274
        %4276 = vdwg.mxu0
        %v4277 = vadd.f32 %v3939, %v4273
        %v4278 = vadd.f32 %v3940, %v4275
        %v4279 = vld [vmem:[%s789] sm:$0x1]
        %v4281 = vperm.slane %v4279, 0
        %v4283 = vadd.f32 %v4277, %v4281
        %v4284 = vadd.f32 %v4278, %v4281
        %4285 = vst.msk [vmem:[#allocation2] sm:$0xff] %vm819, %v4283
        %4286 = vst.msk [vmem:[#allocation2 + $0x8] sm:$0x1] %vm823, %v4284
        %p4287 = scmp.eq.s32.totalorder %s38, 3
        // Predicated region
        $region101: #{t2m_forward.3} parent=83 // pred_check
          %p4288 = pneg %p4287
        $region102: #{t2m_forward.3} parent=83 // pred_check_branch
          %4290 = sbr.rel (%p4288) target = $region104
        $region103: #{t2m_forward.3} parent=83 // pred_region
          %v4291 = vld [vmem:[%s13] sm:$0x1]
          %v4292 = vld [vmem:[%s14] sm:$0x1]
          %v4293 = vsel %vm819, %v4283, 0.0
          %4294 = vadd.xlane.f32.xlu0 %v4293
          %v4295 = vpop.xlane.xlu0 %4294
          %v4296 = vsel %vm823, %v4284, 0.0
          %4297 = vadd.xlane.f32.xlu0 %v4296
          %v4298 = vpop.xlane.xlu0 %4297
          %v4299 = vmul.f32 %v4295, %v833
          %v4300 = vmul.f32 %v4298, %v833
          %v4301 = vsub.f32 %v4283, %v4299
          %v4302 = vsub.f32 %v4284, %v4300
          %v4303 = vmul.f32 %v4301, %v4301
          %v4304 = vmul.f32 %v4302, %v4302
          %v4305 = vsel %vm819, %v4303, 0.0
          %4306 = vadd.xlane.f32.xlu0 %v4305
          %v4307 = vpop.xlane.xlu0 %4306
          %v4308 = vsel %vm823, %v4304, 0.0
          %4309 = vadd.xlane.f32.xlu0 %v4308
          %v4310 = vpop.xlane.xlu0 %4309
          %v4311 = vmul.f32 %v4307, %v833
          %v4312 = vmul.f32 %v4310, %v833
          %v4313 = vadd.f32 %v4311, 1e-05
          %v4314 = vadd.f32 %v4312, 1e-05
          %v4315 = vrsqrt.pop %v4313
          %v4316 = vmul.f32 %v4315, %v4313
          %v4317 = vmul.f32 %v4316, %v4315
          %v4318 = vmul.f32 0.5, %v4317
          %v4319 = vsub.f32 1.5, %v4318
          %v4320 = vmul.f32 %v4315, %v4319
          %vm4321 = vweird.f32 %v4313
          %vm4322 = vweird.f32 %v4315
          %vm4323 = vmor %vm4321, %vm4322
          %v4324 = vsel %vm4323, %v4315, %v4320
          %v4325 = vrsqrt.pop %v4314
          %v4326 = vmul.f32 %v4325, %v4314
          %v4327 = vmul.f32 %v4326, %v4325
          %v4328 = vmul.f32 0.5, %v4327
          %v4329 = vsub.f32 1.5, %v4328
          %v4330 = vmul.f32 %v4325, %v4329
          %vm4331 = vweird.f32 %v4314
          %vm4332 = vweird.f32 %v4325
          %vm4333 = vmor %vm4331, %vm4332
          %v4334 = vsel %vm4333, %v4325, %v4330
          %v4335 = vmul.f32 %v4301, %v4324
          %v4336 = vmul.f32 %v4302, %v4334
          %v4338 = vperm.slane %v4291, 0
          %v4340 = vmul.f32 %v4335, %v4338
          %v4341 = vmul.f32 %v4336, %v4338
          %v4343 = vperm.slane %v4292, 0
          %v4345 = vadd.f32 %v4340, %v4343
          %v4346 = vadd.f32 %v4341, %v4343
          %v4347 = vld [vmem:[%s15] sm:$0xf]
          %v4348 = vld [vmem:[%s15 + $0x4] sm:$0xf]
          %v4349 = vld [vmem:[%s15 + $0x8] sm:$0xf]
          %v4350 = vld [vmem:[%s15 + $0xc] sm:$0xf]
          %v4351 = vld [vmem:[%s15 + $0x10] sm:$0xf]
          %v4352 = vld [vmem:[%s15 + $0x14] sm:$0xf]
          %v4353 = vld [vmem:[%s15 + $0x18] sm:$0xf]
          %v4354 = vld [vmem:[%s15 + $0x1c] sm:$0xf]
          %v4355 = vpack.c.bf16 %v4346, %v4345
          %v4364 = vunpack.c.l.b16 %v4347
          %v4365 = vunpack.c.l.b16 %v4348
          %v4366 = vunpack.c.l.b16 %v4349
          %v4367 = vunpack.c.l.b16 %v4350
          %v4368 = vunpack.c.l.b16 %v4351
          %v4369 = vunpack.c.l.b16 %v4352
          %v4370 = vunpack.c.l.b16 %v4353
          %v4371 = vunpack.c.l.b16 %v4354
          %v4372 = vpack.c.b16 %v4365, %v4364
          %v4373 = vpack.c.b16 %v4367, %v4366
          %v4374 = vpack.c.b16 %v4369, %v4368
          %v4375 = vpack.c.b16 %v4371, %v4370
          %v4381 = vsel %vm819, %v4355, 0
          %4383 = vmatpush.bf16.msra.mxu0 0
          %4384 = vmatpush.bf16.msra.mxu0 0
          %4385 = vmatpush.bf16.msra.mxu0 0
          %4386 = vmatpush.bf16.msra.mxu0 0
          %4387 = vmatpush.bf16.msra.mxu0 %v4375
          %4388 = vmatpush.bf16.msra.mxu0 %v4374
          %4389 = vmatpush.bf16.msra.mxu0 %v4373
          %4390 = vmatpush.bf16.msra.mxu0 %v4372
          %4391 = vmatmul.bf16.gmra.mxu0 %v4381
          %v4392 = vpop.f32.mrf.mxu0
          %v4393 = vadd.f32 0.0, %v4392
          %v4394 = vpop.f32.mrf.mxu0
          %v4395 = vadd.f32 0.0, %v4394
          %4396 = vdwg.mxu0
          %4397 = vst [vmem:[%s794] sm:$0xff] %v4393
          %4398 = vst [vmem:[%s794 + $0x8] sm:$0x1] %v4395
        $region104: #{t2m_forward.3} parent=83 // pred_fallthru
          _
        %p4399 = scmp.lt.s32.totalorder %s37, 1
        %s4400 = scalar_select %p4399, %s37, 1
        %s4401 = smul.addr %s4400, 2
        %s4402 = smul.addr %s4401, 8
        %s4403 = scalar_lea.vmem %s16, %s4402
        // Predicated region
        $region105: #{t2m_forward.3} parent=83 // pred_check
          %p4404 = pneg %p464
        $region106: #{t2m_forward.3} parent=83 // pred_check_branch
          %4406 = sbr.rel (%p4404) target = $region108
        $region107: #{t2m_forward.3} parent=83 // pred_region
          _
        $region108: #{t2m_forward.3} parent=83 // pred_fallthru
          _
      $region84: #{t2m_forward.3} parent=5 // pred_fallthru
        _
      %p4407 = scmp.le.s32.totalorder 2, %s28
      // Predicated region
      $region109: #{t2m_forward.3} parent=5 // pred_check
        %p4408 = pneg %p4407
      $region110: #{t2m_forward.3} parent=5 // pred_check_branch
        %4410 = sbr.rel (%p4408) target = $region112
      $region111: #{t2m_forward.3} parent=5 // pred_region
        %s4411 = ssub.s32 %s28, 2
        // Predicated region
        $region113: #{t2m_forward.3} parent=111 // pred_check
          %p4412 = pneg %p470
        $region114: #{t2m_forward.3} parent=111 // pred_check_branch
          %4414 = sbr.rel (%p4412) target = $region116
        $region115: #{t2m_forward.3} parent=111 // pred_region
          %p4415 = scmp.lt.s32.totalorder %s39, 1
          %s4416 = scalar_select %p4415, %s39, 1
          %s4417 = smul.addr %s4416, 2
          %s4418 = smul.addr %s4417, 8
          %s4419 = scalar_lea.vmem %s16, %s4418
        $region116: #{t2m_forward.3} parent=111 // pred_fallthru
          _
      $region112: #{t2m_forward.3} parent=5 // pred_fallthru
        _
    $region6: #{t2m_forward.3} parent=1 // loop_footer
      %s32 = sadd.s32 1, %s28
    $region7: #{t2m_forward.3} parent=1 // loop_footer_branch
      %27 = sbr.rel target = $region3
    $region8: #{t2m_forward.3} parent=1 // loop_exit
      _
    %4420 = vsyncpa [#allocation4], 1
    %s4421 = scalar_lea.sflag [#allocation4], 1
    %4422 = vsyncpa %s4421, 1
    %4423 = vsyncpa [#allocation6], 1
    %s4424 = scalar_lea.sflag [#allocation6], 1
    %4425 = vsyncpa %s4424, 1

</llo_original>
